<compile_context>
chip_gen: v5e
topology: v5e:2x2
jax: 0.10.0
libtpu: 0.0.40
codegen_flags: <defaults>
</compile_context>

<pallas_src>
import jax
import jax.numpy as jnp
from jax import lax
from jax.experimental import pallas as pl
from jax.experimental.pallas import tpu as pltpu

BN_EPS = 1e-5


def _vmem_limit_bytes():
    """Generation-aware scoped-VMEM limit (~75% of physical).  Falls back to a
    value that is safe even on v7x's 64 MiB if the query is unavailable."""
    cap = 64 * 1024 * 1024
    try:
        cap = int(getattr(pltpu.get_tpu_info(), "vmem_capacity_bytes", cap))
    except Exception:
        pass
    return (cap * 3) // 4


_VMEM_LIMIT = _vmem_limit_bytes()


def _pick_row_tile(rows, bytes_per_row, budget_bytes=4 * 1024 * 1024):
    """Largest row tile that divides `rows`, keeps one block under a multi-MB
    byte budget, and is a multiple of 8 (or the whole array)."""
    target = max(8, budget_bytes // max(1, bytes_per_row))
    if rows <= target:
        return rows
    t = (min(rows, target) // 8) * 8
    while t >= 8:
        if rows % t == 0:
            return t
        t -= 8
    return rows  # awkward factorization: fall back to a single block


# ----------------------------- Pallas kernels ------------------------------

def stats_sc_kernel(x_ref, w_ref, b_ref, s_ref, q_ref, sc_ref):
    """One read of x: per-tile BN1 sum / sum-sq partials (combined in JAX)
    plus the low-res 1x1 shortcut conv, written in bf16."""
    x = x_ref[...]                                           # (TR, Cin) f32
    s_ref[0] = jnp.sum(x, axis=0, keepdims=True)             # (1, Cin)
    q_ref[0] = jnp.sum(x * x, axis=0, keepdims=True)
    sc = jnp.dot(x.astype(jnp.bfloat16), w_ref[...],
                 preferred_element_type=jnp.float32) + b_ref[...]
    sc_ref[...] = sc.astype(sc_ref.dtype)


def _make_conv1_kernel(h, w, cin, cout):
    """conv1 with the nearest-2x upsample folded in (sub-pixel phases), BN1
    normalize+ReLU fused on the input, BN2 sum/sumsq emitted from the f32
    accumulator, bf16 activation output."""
    hw = h * w

    def kernel(x_ref, scale_ref, shift_ref, wp_ref, bias_ref,
               c1_ref, s_ref, q_ref, pad_ref):
        # Re-zero the small padded scratch every step: no cross-iteration
        # state, so the batch grid axis stays 'parallel' (megacore-safe).
        pad_ref[...] = jnp.zeros_like(pad_ref)
        # fused BN1 normalize + ReLU at LOW resolution (f32)
        a1 = jnp.maximum(x_ref[0] * scale_ref[0] + shift_ref[0], 0.0)
        pad_ref[1:h + 1, 1:w + 1, :] = a1                    # interior only
        bias = bias_ref[...]                                 # (1, Cout)
        ssum = jnp.zeros((1, cout), jnp.float32)
        ssq = jnp.zeros((1, cout), jnp.float32)
        for py in range(2):
            for px in range(2):
                acc = jnp.zeros((hw, cout), jnp.float32)     # local accumulator
                for a in range(2):
                    for b in range(2):
                        tap = pad_ref[py + a:py + a + h, px + b:px + b + w, :]
                        tap = tap.reshape(hw, cin).astype(jnp.bfloat16)
                        acc = acc + jnp.dot(
                            tap, wp_ref[py * 2 + px, a * 2 + b],
                            preferred_element_type=jnp.float32)
                acc = acc + bias
                c1_ref[0, py * 2 + px] = acc.astype(c1_ref.dtype)
                ssum = ssum + jnp.sum(acc, axis=0, keepdims=True)
                ssq = ssq + jnp.sum(acc * acc, axis=0, keepdims=True)
        s_ref[0] = ssum
        q_ref[0] = ssq

    return kernel


def _make_conv2_kernel(h, w, c):
    """conv2 in phase space: BN2 normalize+ReLU fused on the input, in-kernel
    zero-padded phase planes, residual (low-res shortcut, shared by all four
    phases) added in the epilogue."""
    hw = h * w

    def kernel(x_ref, scale_ref, shift_ref, w_ref, bias_ref, res_ref,
               o_ref, pad_ref):
        pad_ref[...] = jnp.zeros_like(pad_ref)
        for q in range(4):                                   # fill padded phases
            t = x_ref[0, q].astype(jnp.float32)              # (hw, C) bf16->f32
            y = jnp.maximum(t * scale_ref[0] + shift_ref[0], 0.0)
            pad_ref[q, 1:h + 1, 1:w + 1, :] = y.reshape(h, w, c)
        bias = bias_ref[...]                                 # (1, C)
        res = res_ref[0].astype(jnp.float32)                 # (hw, C)
        for py in range(2):
            for px in range(2):
                acc = jnp.zeros((hw, c), jnp.float32)
                for dy in range(3):
                    qy = (py + dy - 1) % 2
                    oy = 1 + (py + dy - 1) // 2
                    for dx in range(3):
                        qx = (px + dx - 1) % 2
                        ox = 1 + (px + dx - 1) // 2
                        tap = pad_ref[qy * 2 + qx, oy:oy + h, ox:ox + w, :]
                        tap = tap.reshape(hw, c).astype(jnp.bfloat16)
                        acc = acc + jnp.dot(
                            tap, w_ref[dy, dx],
                            preferred_element_type=jnp.float32)
                o_ref[0, py * 2 + px] = acc + bias + res

    return kernel


# --------------------------- pallas_call wrappers ---------------------------

def stats_and_shortcut(x2d, wsc, bsc):
    rows, cin = x2d.shape
    cout = wsc.shape[1]
    tr = _pick_row_tile(rows, bytes_per_row=4 * cin + 2 * cout)
    g = rows // tr
    return pl.pallas_call(
        stats_sc_kernel,
        out_shape=(jax.ShapeDtypeStruct((g, 1, cin), jnp.float32),
                   jax.ShapeDtypeStruct((g, 1, cin), jnp.float32),
                   jax.ShapeDtypeStruct((rows, cout), jnp.bfloat16)),
        grid=(g,),
        in_specs=[pl.BlockSpec((tr, cin), lambda i: (i, 0)),
                  pl.BlockSpec((cin, cout), lambda i: (0, 0)),
                  pl.BlockSpec((1, cout), lambda i: (0, 0))],
        out_specs=(pl.BlockSpec((1, 1, cin), lambda i: (i, 0, 0)),
                   pl.BlockSpec((1, 1, cin), lambda i: (i, 0, 0)),
                   pl.BlockSpec((tr, cout), lambda i: (i, 0))),
        compiler_params=pltpu.CompilerParams(
            dimension_semantics=("parallel",),
            vmem_limit_bytes=_VMEM_LIMIT),
    )(x2d, wsc, bsc)


def conv1_upsample_bn_fused(x_nhwc, scale1, shift1, wp4, b1):
    n, h, w, cin = x_nhwc.shape
    cout = wp4.shape[-1]
    hw = h * w
    kernel = _make_conv1_kernel(h, w, cin, cout)
    # TODO(synk): for spatial maps too large for one low-res image per step,
    # add a second grid axis over low-res row tiles with a 1-row halo.
    return pl.pallas_call(
        kernel,
        out_shape=(jax.ShapeDtypeStruct((n, 4, hw, cout), jnp.bfloat16),
                   jax.ShapeDtypeStruct((n, 1, cout), jnp.float32),
                   jax.ShapeDtypeStruct((n, 1, cout), jnp.float32)),
        grid=(n,),
        in_specs=[pl.BlockSpec((1, h, w, cin), lambda b: (b, 0, 0, 0)),
                  pl.BlockSpec((1, 1, 1, cin), lambda b: (b, 0, 0, 0)),
                  pl.BlockSpec((1, 1, 1, cin), lambda b: (b, 0, 0, 0)),
                  pl.BlockSpec((4, 4, cin, cout), lambda b: (0, 0, 0, 0)),
                  pl.BlockSpec((1, cout), lambda b: (0, 0))],
        out_specs=(pl.BlockSpec((1, 4, hw, cout), lambda b: (b, 0, 0, 0)),
                   pl.BlockSpec((1, 1, cout), lambda b: (b, 0, 0)),
                   pl.BlockSpec((1, 1, cout), lambda b: (b, 0, 0))),
        scratch_shapes=[pltpu.VMEM((h + 2, w + 2, cin), jnp.float32)],
        compiler_params=pltpu.CompilerParams(
            dimension_semantics=("parallel",),
            vmem_limit_bytes=_VMEM_LIMIT),
    )(x_nhwc, scale1, shift1, wp4, b1)


def conv2_bn_residual_fused(c1, scale2, shift2, w2, b2, res, h, w):
    n = c1.shape[0]
    c = c1.shape[-1]
    hw = h * w
    kernel = _make_conv2_kernel(h, w, c)
    return pl.pallas_call(
        kernel,
        out_shape=jax.ShapeDtypeStruct((n, 4, hw, c), jnp.float32),
        grid=(n,),
        in_specs=[pl.BlockSpec((1, 4, hw, c), lambda b: (b, 0, 0, 0)),
                  pl.BlockSpec((1, 1, c), lambda b: (b, 0, 0)),
                  pl.BlockSpec((1, 1, c), lambda b: (b, 0, 0)),
                  pl.BlockSpec((3, 3, c, c), lambda b: (0, 0, 0, 0)),
                  pl.BlockSpec((1, c), lambda b: (0, 0)),
                  pl.BlockSpec((1, hw, c), lambda b: (b, 0, 0))],
        out_specs=pl.BlockSpec((1, 4, hw, c), lambda b: (b, 0, 0, 0)),
        scratch_shapes=[pltpu.VMEM((4, h + 2, w + 2, c), jnp.float32)],
        compiler_params=pltpu.CompilerParams(
            dimension_semantics=("parallel",),
            vmem_limit_bytes=_VMEM_LIMIT),
    )(c1, scale2, shift2, w2, b2, res)


# ------------------------------- block forward ------------------------------

def biggan_generator_block(x_nchw, emb, p):
    x = jnp.transpose(x_nchw, (0, 2, 3, 1)).astype(jnp.float32)    # NHWC
    n, h, w, cin = x.shape
    cout = p['w1'].shape[0]
    hw = h * w

    # -------- pass 1: BN1 stats partials + low-res 1x1 shortcut (1 read of x)
    wsc = jnp.transpose(p['wsc'][:, :, 0, 0], (1, 0)).astype(jnp.bfloat16)
    bsc = p['bsc'].reshape(1, cout).astype(jnp.float32)
    s1p, q1p, sc = stats_and_shortcut(x.reshape(n * hw, cin), wsc, bsc)
    cnt1 = float(n * hw)
    s1 = jnp.sum(s1p, axis=(0, 1))
    q1 = jnp.sum(q1p, axis=(0, 1))
    mean1 = s1 / cnt1
    # TODO(synk): single-pass E[x^2]-E[x]^2 in f32; switch to Welford/two-pass
    # if activations are far from zero-mean.
    var1 = jnp.maximum(q1 / cnt1 - mean1 * mean1, 0.0)
    inv1 = lax.rsqrt(var1 + BN_EPS)
    gamma1 = emb @ p['wg1'] + p['bg1']
    beta1 = emb @ p['wb1'] + p['bb1']
    scale1 = gamma1 * inv1
    shift1 = beta1 - mean1 * scale1
    scale1 = scale1.reshape(n, 1, 1, cin).astype(jnp.float32)
    shift1 = shift1.reshape(n, 1, 1, cin).astype(jnp.float32)

    # -------- pass 2: conv1 with nearest-2x upsample folded in (phase weights)
    comb = jnp.array([[[1., 0., 0.], [0., 1., 1.]],
                      [[1., 1., 0.], [0., 0., 1.]]], jnp.float32)   # (py,a,dy)
    w1_hwio = jnp.transpose(p['w1'], (2, 3, 1, 0))                  # (3,3,ci,co)
    wp = jnp.einsum('pad,qbe,deio->pqabio', comb, comb, w1_hwio,
                    precision=lax.Precision.HIGHEST)
    wp4 = wp.reshape(4, 4, cin, cout).astype(jnp.bfloat16)
    b1 = p['b1'].reshape(1, cout).astype(jnp.float32)
    c1, s2p, q2p = conv1_upsample_bn_fused(x, scale1, shift1, wp4, b1)

    cnt2 = float(n * 4 * hw)                      # = N * (2H) * (2W)
    s2 = jnp.sum(s2p, axis=(0, 1))
    q2 = jnp.sum(q2p, axis=(0, 1))
    mean2 = s2 / cnt2
    var2 = jnp.maximum(q2 / cnt2 - mean2 * mean2, 0.0)
    inv2 = lax.rsqrt(var2 + BN_EPS)
    gamma2 = emb @ p['wg2'] + p['bg2']
    beta2 = emb @ p['wb2'] + p['bb2']
    scale2 = gamma2 * inv2
    shift2 = beta2 - mean2 * scale2
    scale2 = scale2.reshape(n, 1, cout).astype(jnp.float32)
    shift2 = shift2.reshape(n, 1, cout).astype(jnp.float32)

    # -------- pass 3: conv2 (phase space) + fused BN2/ReLU input + residual
    w2 = jnp.transpose(p['w2'], (2, 3, 1, 0)).astype(jnp.bfloat16)  # (3,3,ci,co)
    b2 = p['b2'].reshape(1, cout).astype(jnp.float32)
    out_ph = conv2_bn_residual_fused(c1, scale2, shift2, w2, b2,
                                     sc.reshape(n, hw, cout), h, w)

    # -------- phase -> NCHW reassembly (single XLA pass; replaces the final
    #          NHWC->NCHW transpose the module would need anyway)
    o = out_ph.reshape(n, 2, 2, h, w, cout)        # (n, py, px, r, c, co)
    o = jnp.transpose(o, (0, 5, 3, 1, 4, 2))       # (n, co, r, py, c, px)
    return o.reshape(n, cout, 2 * h, 2 * w)


# ----------------------------- parameter setup ------------------------------

def spectral_normalize(w, key, n_iters=5):
    # TODO(synk): PyTorch's spectral_norm keeps a persistent `u` updated once
    # per forward; here we use a deterministic power iteration at setup time.
    out_ch = w.shape[0]
    w2 = w.reshape(out_ch, -1)
    u = jax.random.normal(key, (out_ch,), dtype=jnp.float32)
    u = u / (jnp.linalg.norm(u) + 1e-12)
    v = None
    for _ in range(n_iters):
        v = w2.T @ u
        v = v / (jnp.linalg.norm(v) + 1e-12)
        u = w2 @ v
        u = u / (jnp.linalg.norm(u) + 1e-12)
    sigma = u @ (w2 @ v)
    return w / sigma


def init_params(key, cin, cout, e):
    ks = jax.random.split(key, 12)

    def proj_bn_linear(c, kb):
        # nn.Linear(e, 2c) with the module's custom init:
        #   weight[:, :c] = 1, weight[:, c:] = 0   (weight shape (2c, e))
        wl = jnp.zeros((2 * c, e), jnp.float32)
        wl = wl.at[:, :c].set(1.0)
        bl = 0.1 * jax.random.normal(kb, (2 * c,), jnp.float32)
        wg = wl[:c].T                      # (e, c)
        wb = wl[c:].T                      # (e, c)
        bg = bl[:c].reshape(1, c)
        bb = bl[c:].reshape(1, c)
        return wg, bg, wb, bb

    wg1, bg1, wb1, bb1 = proj_bn_linear(cin, ks[0])
    wg2, bg2, wb2, bb2 = proj_bn_linear(cout, ks[1])

    w1 = 0.1 * jax.random.normal(ks[2], (cout, cin, 3, 3), jnp.float32)
    b1 = 0.05 * jax.random.normal(ks[3], (cout,), jnp.float32)
    w2 = 0.1 * jax.random.normal(ks[4], (cout, cout, 3, 3), jnp.float32)
    b2 = 0.05 * jax.random.normal(ks[5], (cout,), jnp.float32)
    wsc = 0.1 * jax.random.normal(ks[6], (cout, cin, 1, 1), jnp.float32)
    bsc = 0.05 * jax.random.normal(ks[7], (cout,), jnp.float32)

    w1 = spectral_normalize(w1, ks[8])
    w2 = spectral_normalize(w2, ks[9])
    wsc = spectral_normalize(wsc, ks[10])

    return dict(wg1=wg1, bg1=bg1, wb1=wb1, bb1=bb1,
                wg2=wg2, bg2=bg2, wb2=wb2, bb2=bb2,
                w1=w1, b1=b1, w2=w2, b2=b2, wsc=wsc, bsc=bsc)


# ------------------------------ pure-JAX reference ---------------------------

def upsample2x_nearest(x_nhwc):
    # F.interpolate(scale_factor=2) default mode='nearest'
    return jnp.repeat(jnp.repeat(x_nhwc, 2, axis=1), 2, axis=2)


def reference_forward(x_nchw, emb, p):
    x = jnp.transpose(x_nchw, (0, 2, 3, 1)).astype(jnp.float32)

    def proj_bn(t, wg, bg, wb, bb):
        mean = jnp.mean(t, axis=(0, 1, 2), keepdims=True)
        var = jnp.mean((t - mean) ** 2, axis=(0, 1, 2), keepdims=True)
        xhat = (t - mean) / jnp.sqrt(var + BN_EPS)
        gamma = emb @ wg + bg
        beta = emb @ wb + bb
        return gamma[:, None, None, :] * xhat + beta[:, None, None, :]

    def conv(t, w_oihw, b, pad):
        w = jnp.transpose(w_oihw, (2, 3, 1, 0))  # HWIO
        y = lax.conv_general_dilated(t, w, (1, 1), [(pad, pad), (pad, pad)],
                                     dimension_numbers=('NHWC', 'HWIO', 'NHWC'),
                                     precision=lax.Precision.HIGHEST)
        return y + b[None, None, None, :]

    h = jax.nn.relu(proj_bn(x, p['wg1'], p['bg1'], p['wb1'], p['bb1']))
    h = upsample2x_nearest(h)
    xu = upsample2x_nearest(x)
    h = conv(h, p['w1'], p['b1'], 1)
    h = jax.nn.relu(proj_bn(h, p['wg2'], p['bg2'], p['wb2'], p['bb2']))
    h = conv(h, p['w2'], p['b2'], 1)
    sc = conv(xu, p['wsc'], p['bsc'], 0)
    return jnp.transpose(h + sc, (0, 3, 1, 2))


# ------------------------------------ main -----------------------------------

if __name__ == "__main__":
    N, Cin, Cout, E, H, W = 2, 16, 32, 16, 8, 8
    key = jax.random.PRNGKey(0)
    kx, ke, kp = jax.random.split(key, 3)
    x = jax.random.normal(kx, (N, Cin, H, W), jnp.float32)
    emb = jax.random.normal(ke, (N, E), jnp.float32)
    params = init_params(kp, Cin, Cout, E)

    out = jax.jit(biggan_generator_block)(x, emb, params)
    out = jax.block_until_ready(out)
    assert out.shape == (N, Cout, 2 * H, 2 * W), out.shape

    ref = reference_forward(x, emb, params)
    err = float(jnp.max(jnp.abs(out - ref)))
    scale = float(jnp.max(jnp.abs(ref))) + 1.0
    assert err / scale < 2e-2, f"mismatch: max abs diff {err}, ref scale {scale}"

    print("KERNEL_OK")
</pallas_src>

<mosaic_0001>
module attributes {stable_mosaic.version = 11 : i64} {
  func.func @stats_sc_kernel(%arg0: i32, %arg1: memref<128x16xf32, #tpu.memory_space<vmem>>, %arg2: memref<16x32xbf16, #tpu.memory_space<vmem>>, %arg3: memref<1x32xf32, #tpu.memory_space<vmem>>, %arg4: memref<1x1x16xf32, #tpu.memory_space<vmem>>, %arg5: memref<1x1x16xf32, #tpu.memory_space<vmem>>, %arg6: memref<128x32xbf16, #tpu.memory_space<vmem>>) attributes {dimension_semantics = [#tpu.dimension_semantics<parallel>], iteration_bounds = array<i64: 1>, scalar_prefetch = 0 : i64, scratch_operands = 0 : i64, tpu.core_type = #tpu.core_type<tc>, window_params = [{transform_indices = @transform_0, window_bounds = array<i64: 128, 16>}, {pipeline_mode = #tpu.pipeline_mode<synchronous>, transform_indices = @transform_1, window_bounds = array<i64: 16, 32>}, {pipeline_mode = #tpu.pipeline_mode<synchronous>, transform_indices = @transform_2, window_bounds = array<i64: 1, 32>}, {transform_indices = @transform_3, window_bounds = array<i64: 1, 1, 16>}, {transform_indices = @transform_4, window_bounds = array<i64: 1, 1, 16>}, {transform_indices = @transform_5, window_bounds = array<i64: 128, 32>}]} {
    %c0 = arith.constant 0 : index
    %c0_0 = arith.constant 0 : index
    %0 = vector.load %arg1[%c0, %c0_0] : memref<128x16xf32, #tpu.memory_space<vmem>>, vector<128x16xf32>
    %cst = arith.constant dense<0.000000e+00> : vector<16xf32>
    %1 = vector.multi_reduction <add>, %0, %cst [0] : vector<128x16xf32> to vector<16xf32>
    %2 = vector.shape_cast %1 : vector<16xf32> to vector<1x16xf32>
    %c0_1 = arith.constant 0 : index
    %c0_2 = arith.constant 0 : index
    %c0_3 = arith.constant 0 : index
    %3 = vector.load %arg4[%c0_1, %c0_2, %c0_3] : memref<1x1x16xf32, #tpu.memory_space<vmem>>, vector<1x1x16xf32>
    %4 = vector.shape_cast %3 : vector<1x1x16xf32> to vector<1x16xf32>
    %5 = vector.shape_cast %2 : vector<1x16xf32> to vector<1x1x16xf32>
    tpu.vector_store %arg4[%c0_1, %c0_2, %c0_3], %5 {strides = array<i32>} : memref<1x1x16xf32, #tpu.memory_space<vmem>>, vector<1x1x16xf32>,
    %6 = arith.mulf %0, %0 : vector<128x16xf32>
    %cst_4 = arith.constant dense<0.000000e+00> : vector<16xf32>
    %7 = vector.multi_reduction <add>, %6, %cst_4 [0] : vector<128x16xf32> to vector<16xf32>
    %8 = vector.shape_cast %7 : vector<16xf32> to vector<1x16xf32>
    %c0_5 = arith.constant 0 : index
    %c0_6 = arith.constant 0 : index
    %c0_7 = arith.constant 0 : index
    %9 = vector.load %arg5[%c0_5, %c0_6, %c0_7] : memref<1x1x16xf32, #tpu.memory_space<vmem>>, vector<1x1x16xf32>
    %10 = vector.shape_cast %9 : vector<1x1x16xf32> to vector<1x16xf32>
    %11 = vector.shape_cast %8 : vector<1x16xf32> to vector<1x1x16xf32>
    tpu.vector_store %arg5[%c0_5, %c0_6, %c0_7], %11 {strides = array<i32>} : memref<1x1x16xf32, #tpu.memory_space<vmem>>, vector<1x1x16xf32>,
    %12 = arith.truncf %0 : vector<128x16xf32> to vector<128x16xbf16>
    %c0_8 = arith.constant 0 : index
    %c0_9 = arith.constant 0 : index
    %13 = vector.load %arg2[%c0_8, %c0_9] : memref<16x32xbf16, #tpu.memory_space<vmem>>, vector<16x32xbf16>
    %cst_10 = arith.constant dense<0.000000e+00> : vector<128x32xf32>
    %14 = tpu.matmul %12, %13, %cst_10 {dimension_numbers = #tpu.dot_dimension_numbers<[1], [0], [0], [1], [0, 0, 1, 1], [], []>} : vector<128x16xbf16>, vector<16x32xbf16>, vector<128x32xf32> -> vector<128x32xf32>
    %c0_11 = arith.constant 0 : index
    %c0_12 = arith.constant 0 : index
    %15 = vector.load %arg3[%c0_11, %c0_12] : memref<1x32xf32, #tpu.memory_space<vmem>>, vector<1x32xf32>
    %16 = vector.broadcast %15 : vector<1x32xf32> to vector<128x32xf32>
    %17 = arith.addf %14, %16 : vector<128x32xf32>
    %18 = arith.truncf %17 : vector<128x32xf32> to vector<128x32xbf16>
    %c0_13 = arith.constant 0 : index
    %c0_14 = arith.constant 0 : index
    %19 = vector.load %arg6[%c0_13, %c0_14] : memref<128x32xbf16, #tpu.memory_space<vmem>>, vector<128x32xbf16>
    tpu.vector_store %arg6[%c0_13, %c0_14], %18 {strides = array<i32>} : memref<128x32xbf16, #tpu.memory_space<vmem>>, vector<128x32xbf16>,
    return
  }
  func.func @transform_0(%arg0: i32) -> (i32, i32) {
    %c0_i32 = arith.constant 0 : i32
    %c0_i32_0 = arith.constant 0 : i32
    return %arg0, %c0_i32 : i32, i32
  }
  func.func @transform_1(%arg0: i32) -> (i32, i32) {
    %c0_i32 = arith.constant 0 : i32
    %c0_i32_0 = arith.constant 0 : i32
    %c0_i32_1 = arith.constant 0 : i32
    return %c0_i32, %c0_i32_0 : i32, i32
  }
  func.func @transform_2(%arg0: i32) -> (i32, i32) {
    %c0_i32 = arith.constant 0 : i32
    %c0_i32_0 = arith.constant 0 : i32
    %c0_i32_1 = arith.constant 0 : i32
    return %c0_i32, %c0_i32_0 : i32, i32
  }
  func.func @transform_3(%arg0: i32) -> (i32, i32, i32) {
    %c0_i32 = arith.constant 0 : i32
    %c0_i32_0 = arith.constant 0 : i32
    %c0_i32_1 = arith.constant 0 : i32
    return %arg0, %c0_i32, %c0_i32_0 : i32, i32, i32
  }
  func.func @transform_4(%arg0: i32) -> (i32, i32, i32) {
    %c0_i32 = arith.constant 0 : i32
    %c0_i32_0 = arith.constant 0 : i32
    %c0_i32_1 = arith.constant 0 : i32
    return %arg0, %c0_i32, %c0_i32_0 : i32, i32, i32
  }
  func.func @transform_5(%arg0: i32) -> (i32, i32) {
    %c0_i32 = arith.constant 0 : i32
    %c0_i32_0 = arith.constant 0 : i32
    return %arg0, %c0_i32 : i32, i32
  }
}

module attributes {stable_mosaic.version = 11 : i64} {
  func.func @kernel(%arg0: i32, %arg1: memref<1x8x8x16xf32, #tpu.memory_space<vmem>>, %arg2: memref<1x1x1x16xf32, #tpu.memory_space<vmem>>, %arg3: memref<1x1x1x16xf32, #tpu.memory_space<vmem>>, %arg4: memref<4x4x16x32xbf16, #tpu.memory_space<vmem>>, %arg5: memref<1x32xf32, #tpu.memory_space<vmem>>, %arg6: memref<1x4x64x32xbf16, #tpu.memory_space<vmem>>, %arg7: memref<1x1x32xf32, #tpu.memory_space<vmem>>, %arg8: memref<1x1x32xf32, #tpu.memory_space<vmem>>, %arg9: memref<10x10x16xf32, #tpu.memory_space<vmem>>) attributes {dimension_semantics = [#tpu.dimension_semantics<parallel>], iteration_bounds = array<i64: 2>, scalar_prefetch = 0 : i64, scratch_operands = 1 : i64, tpu.core_type = #tpu.core_type<tc>, window_params = [{transform_indices = @transform_0, window_bounds = array<i64: 1, 8, 8, 16>}, {transform_indices = @transform_1, window_bounds = array<i64: 1, 1, 1, 16>}, {transform_indices = @transform_2, window_bounds = array<i64: 1, 1, 1, 16>}, {pipeline_mode = #tpu.pipeline_mode<synchronous>, transform_indices = @transform_3, window_bounds = array<i64: 4, 4, 16, 32>}, {pipeline_mode = #tpu.pipeline_mode<synchronous>, transform_indices = @transform_4, window_bounds = array<i64: 1, 32>}, {transform_indices = @transform_5, window_bounds = array<i64: 1, 4, 64, 32>}, {transform_indices = @transform_6, window_bounds = array<i64: 1, 1, 32>}, {transform_indices = @transform_7, window_bounds = array<i64: 1, 1, 32>}]} {
    %cst = arith.constant 0.000000e+00 : f32
    %0 = vector.broadcast %cst : f32 to vector<10x10x16xf32>
    %c0 = arith.constant 0 : index
    %c0_0 = arith.constant 0 : index
    %c0_1 = arith.constant 0 : index
    %1 = vector.load %arg9[%c0, %c0_0, %c0_1] : memref<10x10x16xf32, #tpu.memory_space<vmem>>, vector<10x10x16xf32>
    tpu.vector_store %arg9[%c0, %c0_0, %c0_1], %0 {strides = array<i32>} : memref<10x10x16xf32, #tpu.memory_space<vmem>>, vector<10x10x16xf32>,
    %c0_2 = arith.constant 0 : index
    %c0_3 = arith.constant 0 : index
    %c0_4 = arith.constant 0 : index
    %c0_5 = arith.constant 0 : index
    %2 = vector.load %arg1[%c0_2, %c0_3, %c0_4, %c0_5] : memref<1x8x8x16xf32, #tpu.memory_space<vmem>>, vector<1x8x8x16xf32>
    %3 = vector.shape_cast %2 : vector<1x8x8x16xf32> to vector<8x8x16xf32>
    %c0_6 = arith.constant 0 : index
    %c0_7 = arith.constant 0 : index
    %c0_8 = arith.constant 0 : index
    %c0_9 = arith.constant 0 : index
    %4 = vector.load %arg2[%c0_6, %c0_7, %c0_8, %c0_9] : memref<1x1x1x16xf32, #tpu.memory_space<vmem>>, vector<1x1x1x16xf32>
    %5 = vector.shape_cast %4 : vector<1x1x1x16xf32> to vector<1x1x16xf32>
    %6 = vector.broadcast %5 : vector<1x1x16xf32> to vector<8x8x16xf32>
    %7 = arith.mulf %3, %6 : vector<8x8x16xf32>
    %c0_10 = arith.constant 0 : index
    %c0_11 = arith.constant 0 : index
    %c0_12 = arith.constant 0 : index
    %c0_13 = arith.constant 0 : index
    %8 = vector.load %arg3[%c0_10, %c0_11, %c0_12, %c0_13] : memref<1x1x1x16xf32, #tpu.memory_space<vmem>>, vector<1x1x1x16xf32>
    %9 = vector.shape_cast %8 : vector<1x1x1x16xf32> to vector<1x1x16xf32>
    %10 = vector.broadcast %9 : vector<1x1x16xf32> to vector<8x8x16xf32>
    %11 = arith.addf %7, %10 : vector<8x8x16xf32>
    %cst_14 = arith.constant 0.000000e+00 : f32
    %12 = vector.broadcast %cst_14 : f32 to vector<8x8x16xf32>
    %13 = arith.maximumf %11, %12 : vector<8x8x16xf32>
    %c1 = arith.constant 1 : index
    %c1_15 = arith.constant 1 : index
    %c0_16 = arith.constant 0 : index
    %14 = vector.load %arg9[%c1, %c1_15, %c0_16] : memref<10x10x16xf32, #tpu.memory_space<vmem>>, vector<8x8x16xf32>
    tpu.vector_store %arg9[%c1, %c1_15, %c0_16], %13 {strides = array<i32>} : memref<10x10x16xf32, #tpu.memory_space<vmem>>, vector<8x8x16xf32>,
    %c0_17 = arith.constant 0 : index
    %c0_18 = arith.constant 0 : index
    %15 = vector.load %arg5[%c0_17, %c0_18] : memref<1x32xf32, #tpu.memory_space<vmem>>, vector<1x32xf32>
    %cst_19 = arith.constant 0.000000e+00 : f32
    %16 = vector.broadcast %cst_19 : f32 to vector<1x32xf32>
    %cst_20 = arith.constant 0.000000e+00 : f32
    %17 = vector.broadcast %cst_20 : f32 to vector<1x32xf32>
    %cst_21 = arith.constant 0.000000e+00 : f32
    %18 = vector.broadcast %cst_21 : f32 to vector<64x32xf32>
    %c0_22 = arith.constant 0 : index
    %c0_23 = arith.constant 0 : index
    %c0_24 = arith.constant 0 : index
    %19 = vector.load %arg9[%c0_22, %c0_23, %c0_24] : memref<10x10x16xf32, #tpu.memory_space<vmem>>, vector<8x8x16xf32>
    %20 = vector.shape_cast %19 : vector<8x8x16xf32> to vector<64x16xf32>
    %21 = arith.truncf %20 : vector<64x16xf32> to vector<64x16xbf16>
    %c0_25 = arith.constant 0 : index
    %c0_26 = arith.constant 0 : index
    %c0_27 = arith.constant 0 : index
    %c0_28 = arith.constant 0 : index
    %22 = vector.load %arg4[%c0_25, %c0_26, %c0_27, %c0_28] : memref<4x4x16x32xbf16, #tpu.memory_space<vmem>>, vector<1x1x16x32xbf16>
    %23 = vector.shape_cast %22 : vector<1x1x16x32xbf16> to vector<16x32xbf16>
    %cst_29 = arith.constant dense<0.000000e+00> : vector<64x32xf32>
    %24 = tpu.matmul %21, %23, %cst_29 {dimension_numbers = #tpu.dot_dimension_numbers<[1], [0], [0], [1], [0, 0, 1, 1], [], []>} : vector<64x16xbf16>, vector<16x32xbf16>, vector<64x32xf32> -> vector<64x32xf32>
    %25 = arith.addf %18, %24 : vector<64x32xf32>
    %c0_30 = arith.constant 0 : index
    %c1_31 = arith.constant 1 : index
    %c0_32 = arith.constant 0 : index
    %26 = vector.load %arg9[%c0_30, %c1_31, %c0_32] : memref<10x10x16xf32, #tpu.memory_space<vmem>>, vector<8x8x16xf32>
    %27 = vector.shape_cast %26 : vector<8x8x16xf32> to vector<64x16xf32>
    %28 = arith.truncf %27 : vector<64x16xf32> to vector<64x16xbf16>
    %c0_33 = arith.constant 0 : index
    %c1_34 = arith.constant 1 : index
    %c0_35 = arith.constant 0 : index
    %c0_36 = arith.constant 0 : index
    %29 = vector.load %arg4[%c0_33, %c1_34, %c0_35, %c0_36] : memref<4x4x16x32xbf16, #tpu.memory_space<vmem>>, vector<1x1x16x32xbf16>
    %30 = vector.shape_cast %29 : vector<1x1x16x32xbf16> to vector<16x32xbf16>
    %cst_37 = arith.constant dense<0.000000e+00> : vector<64x32xf32>
    %31 = tpu.matmul %28, %30, %cst_37 {dimension_numbers = #tpu.dot_dimension_numbers<[1], [0], [0], [1], [0, 0, 1, 1], [], []>} : vector<64x16xbf16>, vector<16x32xbf16>, vector<64x32xf32> -> vector<64x32xf32>
    %32 = arith.addf %25, %31 : vector<64x32xf32>
    %c1_38 = arith.constant 1 : index
    %c0_39 = arith.constant 0 : index
    %c0_40 = arith.constant 0 : index
    %33 = vector.load %arg9[%c1_38, %c0_39, %c0_40] : memref<10x10x16xf32, #tpu.memory_space<vmem>>, vector<8x8x16xf32>
    %34 = vector.shape_cast %33 : vector<8x8x16xf32> to vector<64x16xf32>
    %35 = arith.truncf %34 : vector<64x16xf32> to vector<64x16xbf16>
    %c0_41 = arith.constant 0 : index
    %c2 = arith.constant 2 : index
    %c0_42 = arith.constant 0 : index
    %c0_43 = arith.constant 0 : index
    %36 = vector.load %arg4[%c0_41, %c2, %c0_42, %c0_43] : memref<4x4x16x32xbf16, #tpu.memory_space<vmem>>, vector<1x1x16x32xbf16>
    %37 = vector.shape_cast %36 : vector<1x1x16x32xbf16> to vector<16x32xbf16>
    %cst_44 = arith.constant dense<0.000000e+00> : vector<64x32xf32>
    %38 = tpu.matmul %35, %37, %cst_44 {dimension_numbers = #tpu.dot_dimension_numbers<[1], [0], [0], [1], [0, 0, 1, 1], [], []>} : vector<64x16xbf16>, vector<16x32xbf16>, vector<64x32xf32> -> vector<64x32xf32>
    %39 = arith.addf %32, %38 : vector<64x32xf32>
    %c1_45 = arith.constant 1 : index
    %c1_46 = arith.constant 1 : index
    %c0_47 = arith.constant 0 : index
    %40 = vector.load %arg9[%c1_45, %c1_46, %c0_47] : memref<10x10x16xf32, #tpu.memory_space<vmem>>, vector<8x8x16xf32>
    %41 = vector.shape_cast %40 : vector<8x8x16xf32> to vector<64x16xf32>
    %42 = arith.truncf %41 : vector<64x16xf32> to vector<64x16xbf16>
    %c0_48 = arith.constant 0 : index
    %c3 = arith.constant 3 : index
    %c0_49 = arith.constant 0 : index
    %c0_50 = arith.constant 0 : index
    %43 = vector.load %arg4[%c0_48, %c3, %c0_49, %c0_50] : memref<4x4x16x32xbf16, #tpu.memory_space<vmem>>, vector<1x1x16x32xbf16>
    %44 = vector.shape_cast %43 : vector<1x1x16x32xbf16> to vector<16x32xbf16>
    %cst_51 = arith.constant dense<0.000000e+00> : vector<64x32xf32>
    %45 = tpu.matmul %42, %44, %cst_51 {dimension_numbers = #tpu.dot_dimension_numbers<[1], [0], [0], [1], [0, 0, 1, 1], [], []>} : vector<64x16xbf16>, vector<16x32xbf16>, vector<64x32xf32> -> vector<64x32xf32>
    %46 = arith.addf %39, %45 : vector<64x32xf32>
    %47 = vector.broadcast %15 : vector<1x32xf32> to vector<64x32xf32>
    %48 = arith.addf %46, %47 : vector<64x32xf32>
    %49 = arith.truncf %48 : vector<64x32xf32> to vector<64x32xbf16>
    %c0_52 = arith.constant 0 : index
    %c0_53 = arith.constant 0 : index
    %c0_54 = arith.constant 0 : index
    %c0_55 = arith.constant 0 : index
    %50 = vector.load %arg6[%c0_52, %c0_53, %c0_54, %c0_55] : memref<1x4x64x32xbf16, #tpu.memory_space<vmem>>, vector<1x1x64x32xbf16>
    %51 = vector.shape_cast %50 : vector<1x1x64x32xbf16> to vector<64x32xbf16>
    %52 = vector.shape_cast %49 : vector<64x32xbf16> to vector<1x1x64x32xbf16>
    tpu.vector_store %arg6[%c0_52, %c0_53, %c0_54, %c0_55], %52 {strides = array<i32>} : memref<1x4x64x32xbf16, #tpu.memory_space<vmem>>, vector<1x1x64x32xbf16>,
    %cst_56 = arith.constant dense<0.000000e+00> : vector<32xf32>
    %53 = vector.multi_reduction <add>, %48, %cst_56 [0] : vector<64x32xf32> to vector<32xf32>
    %54 = vector.shape_cast %53 : vector<32xf32> to vector<1x32xf32>
    %55 = arith.addf %16, %54 : vector<1x32xf32>
    %56 = arith.mulf %48, %48 : vector<64x32xf32>
    %cst_57 = arith.constant dense<0.000000e+00> : vector<32xf32>
    %57 = vector.multi_reduction <add>, %56, %cst_57 [0] : vector<64x32xf32> to vector<32xf32>
    %58 = vector.shape_cast %57 : vector<32xf32> to vector<1x32xf32>
    %59 = arith.addf %17, %58 : vector<1x32xf32>
    %cst_58 = arith.constant 0.000000e+00 : f32
    %60 = vector.broadcast %cst_58 : f32 to vector<64x32xf32>
    %c0_59 = arith.constant 0 : index
    %c1_60 = arith.constant 1 : index
    %c0_61 = arith.constant 0 : index
    %61 = vector.load %arg9[%c0_59, %c1_60, %c0_61] : memref<10x10x16xf32, #tpu.memory_space<vmem>>, vector<8x8x16xf32>
    %62 = vector.shape_cast %61 : vector<8x8x16xf32> to vector<64x16xf32>
    %63 = arith.truncf %62 : vector<64x16xf32> to vector<64x16xbf16>
    %c1_62 = arith.constant 1 : index
    %c0_63 = arith.constant 0 : index
    %c0_64 = arith.constant 0 : index
    %c0_65 = arith.constant 0 : index
    %64 = vector.load %arg4[%c1_62, %c0_63, %c0_64, %c0_65] : memref<4x4x16x32xbf16, #tpu.memory_space<vmem>>, vector<1x1x16x32xbf16>
    %65 = vector.shape_cast %64 : vector<1x1x16x32xbf16> to vector<16x32xbf16>
    %cst_66 = arith.constant dense<0.000000e+00> : vector<64x32xf32>
    %66 = tpu.matmul %63, %65, %cst_66 {dimension_numbers = #tpu.dot_dimension_numbers<[1], [0], [0], [1], [0, 0, 1, 1], [], []>} : vector<64x16xbf16>, vector<16x32xbf16>, vector<64x32xf32> -> vector<64x32xf32>
    %67 = arith.addf %60, %66 : vector<64x32xf32>
    %c0_67 = arith.constant 0 : index
    %c2_68 = arith.constant 2 : index
    %c0_69 = arith.constant 0 : index
    %68 = vector.load %arg9[%c0_67, %c2_68, %c0_69] : memref<10x10x16xf32, #tpu.memory_space<vmem>>, vector<8x8x16xf32>
    %69 = vector.shape_cast %68 : vector<8x8x16xf32> to vector<64x16xf32>
    %70 = arith.truncf %69 : vector<64x16xf32> to vector<64x16xbf16>
    %c1_70 = arith.constant 1 : index
    %c1_71 = arith.constant 1 : index
    %c0_72 = arith.constant 0 : index
    %c0_73 = arith.constant 0 : index
    %71 = vector.load %arg4[%c1_70, %c1_71, %c0_72, %c0_73] : memref<4x4x16x32xbf16, #tpu.memory_space<vmem>>, vector<1x1x16x32xbf16>
    %72 = vector.shape_cast %71 : vector<1x1x16x32xbf16> to vector<16x32xbf16>
    %cst_74 = arith.constant dense<0.000000e+00> : vector<64x32xf32>
    %73 = tpu.matmul %70, %72, %cst_74 {dimension_numbers = #tpu.dot_dimension_numbers<[1], [0], [0], [1], [0, 0, 1, 1], [], []>} : vector<64x16xbf16>, vector<16x32xbf16>, vector<64x32xf32> -> vector<64x32xf32>
    %74 = arith.addf %67, %73 : vector<64x32xf32>
    %c1_75 = arith.constant 1 : index
    %c1_76 = arith.constant 1 : index
    %c0_77 = arith.constant 0 : index
    %75 = vector.load %arg9[%c1_75, %c1_76, %c0_77] : memref<10x10x16xf32, #tpu.memory_space<vmem>>, vector<8x8x16xf32>
    %76 = vector.shape_cast %75 : vector<8x8x16xf32> to vector<64x16xf32>
    %77 = arith.truncf %76 : vector<64x16xf32> to vector<64x16xbf16>
    %c1_78 = arith.constant 1 : index
    %c2_79 = arith.constant 2 : index
    %c0_80 = arith.constant 0 : index
    %c0_81 = arith.constant 0 : index
    %78 = vector.load %arg4[%c1_78, %c2_79, %c0_80, %c0_81] : memref<4x4x16x32xbf16, #tpu.memory_space<vmem>>, vector<1x1x16x32xbf16>
    %79 = vector.shape_cast %78 : vector<1x1x16x32xbf16> to vector<16x32xbf16>
    %cst_82 = arith.constant dense<0.000000e+00> : vector<64x32xf32>
    %80 = tpu.matmul %77, %79, %cst_82 {dimension_numbers = #tpu.dot_dimension_numbers<[1], [0], [0], [1], [0, 0, 1, 1], [], []>} : vector<64x16xbf16>, vector<16x32xbf16>, vector<64x32xf32> -> vector<64x32xf32>
    %81 = arith.addf %74, %80 : vector<64x32xf32>
    %c1_83 = arith.constant 1 : index
    %c2_84 = arith.constant 2 : index
    %c0_85 = arith.constant 0 : index
    %82 = vector.load %arg9[%c1_83, %c2_84, %c0_85] : memref<10x10x16xf32, #tpu.memory_space<vmem>>, vector<8x8x16xf32>
    %83 = vector.shape_cast %82 : vector<8x8x16xf32> to vector<64x16xf32>
    %84 = arith.truncf %83 : vector<64x16xf32> to vector<64x16xbf16>
    %c1_86 = arith.constant 1 : index
    %c3_87 = arith.constant 3 : index
    %c0_88 = arith.constant 0 : index
    %c0_89 = arith.constant 0 : index
    %85 = vector.load %arg4[%c1_86, %c3_87, %c0_88, %c0_89] : memref<4x4x16x32xbf16, #tpu.memory_space<vmem>>, vector<1x1x16x32xbf16>
    %86 = vector.shape_cast %85 : vector<1x1x16x32xbf16> to vector<16x32xbf16>
    %cst_90 = arith.constant dense<0.000000e+00> : vector<64x32xf32>
    %87 = tpu.matmul %84, %86, %cst_90 {dimension_numbers = #tpu.dot_dimension_numbers<[1], [0], [0], [1], [0, 0, 1, 1], [], []>} : vector<64x16xbf16>, vector<16x32xbf16>, vector<64x32xf32> -> vector<64x32xf32>
    %88 = arith.addf %81, %87 : vector<64x32xf32>
    %89 = vector.broadcast %15 : vector<1x32xf32> to vector<64x32xf32>
    %90 = arith.addf %88, %89 : vector<64x32xf32>
    %91 = arith.truncf %90 : vector<64x32xf32> to vector<64x32xbf16>
    %c0_91 = arith.constant 0 : index
    %c1_92 = arith.constant 1 : index
    %c0_93 = arith.constant 0 : index
    %c0_94 = arith.constant 0 : index
    %92 = vector.load %arg6[%c0_91, %c1_92, %c0_93, %c0_94] : memref<1x4x64x32xbf16, #tpu.memory_space<vmem>>, vector<1x1x64x32xbf16>
    %93 = vector.shape_cast %92 : vector<1x1x64x32xbf16> to vector<64x32xbf16>
    %94 = vector.shape_cast %91 : vector<64x32xbf16> to vector<1x1x64x32xbf16>
    tpu.vector_store %arg6[%c0_91, %c1_92, %c0_93, %c0_94], %94 {strides = array<i32>} : memref<1x4x64x32xbf16, #tpu.memory_space<vmem>>, vector<1x1x64x32xbf16>,
    %cst_95 = arith.constant dense<0.000000e+00> : vector<32xf32>
    %95 = vector.multi_reduction <add>, %90, %cst_95 [0] : vector<64x32xf32> to vector<32xf32>
    %96 = vector.shape_cast %95 : vector<32xf32> to vector<1x32xf32>
    %97 = arith.addf %55, %96 : vector<1x32xf32>
    %98 = arith.mulf %90, %90 : vector<64x32xf32>
    %cst_96 = arith.constant dense<0.000000e+00> : vector<32xf32>
    %99 = vector.multi_reduction <add>, %98, %cst_96 [0] : vector<64x32xf32> to vector<32xf32>
    %100 = vector.shape_cast %99 : vector<32xf32> to vector<1x32xf32>
    %101 = arith.addf %59, %100 : vector<1x32xf32>
    %cst_97 = arith.constant 0.000000e+00 : f32
    %102 = vector.broadcast %cst_97 : f32 to vector<64x32xf32>
    %c1_98 = arith.constant 1 : index
    %c0_99 = arith.constant 0 : index
    %c0_100 = arith.constant 0 : index
    %103 = vector.load %arg9[%c1_98, %c0_99, %c0_100] : memref<10x10x16xf32, #tpu.memory_space<vmem>>, vector<8x8x16xf32>
    %104 = vector.shape_cast %103 : vector<8x8x16xf32> to vector<64x16xf32>
    %105 = arith.truncf %104 : vector<64x16xf32> to vector<64x16xbf16>
    %c2_101 = arith.constant 2 : index
    %c0_102 = arith.constant 0 : index
    %c0_103 = arith.constant 0 : index
    %c0_104 = arith.constant 0 : index
    %106 = vector.load %arg4[%c2_101, %c0_102, %c0_103, %c0_104] : memref<4x4x16x32xbf16, #tpu.memory_space<vmem>>, vector<1x1x16x32xbf16>
    %107 = vector.shape_cast %106 : vector<1x1x16x32xbf16> to vector<16x32xbf16>
    %cst_105 = arith.constant dense<0.000000e+00> : vector<64x32xf32>
    %108 = tpu.matmul %105, %107, %cst_105 {dimension_numbers = #tpu.dot_dimension_numbers<[1], [0], [0], [1], [0, 0, 1, 1], [], []>} : vector<64x16xbf16>, vector<16x32xbf16>, vector<64x32xf32> -> vector<64x32xf32>
    %109 = arith.addf %102, %108 : vector<64x32xf32>
    %c1_106 = arith.constant 1 : index
    %c1_107 = arith.constant 1 : index
    %c0_108 = arith.constant 0 : index
    %110 = vector.load %arg9[%c1_106, %c1_107, %c0_108] : memref<10x10x16xf32, #tpu.memory_space<vmem>>, vector<8x8x16xf32>
    %111 = vector.shape_cast %110 : vector<8x8x16xf32> to vector<64x16xf32>
    %112 = arith.truncf %111 : vector<64x16xf32> to vector<64x16xbf16>
    %c2_109 = arith.constant 2 : index
    %c1_110 = arith.constant 1 : index
    %c0_111 = arith.constant 0 : index
    %c0_112 = arith.constant 0 : index
    %113 = vector.load %arg4[%c2_109, %c1_110, %c0_111, %c0_112] : memref<4x4x16x32xbf16, #tpu.memory_space<vmem>>, vector<1x1x16x32xbf16>
    %114 = vector.shape_cast %113 : vector<1x1x16x32xbf16> to vector<16x32xbf16>
    %cst_113 = arith.constant dense<0.000000e+00> : vector<64x32xf32>
    %115 = tpu.matmul %112, %114, %cst_113 {dimension_numbers = #tpu.dot_dimension_numbers<[1], [0], [0], [1], [0, 0, 1, 1], [], []>} : vector<64x16xbf16>, vector<16x32xbf16>, vector<64x32xf32> -> vector<64x32xf32>
    %116 = arith.addf %109, %115 : vector<64x32xf32>
    %c2_114 = arith.constant 2 : index
    %c0_115 = arith.constant 0 : index
    %c0_116 = arith.constant 0 : index
    %117 = vector.load %arg9[%c2_114, %c0_115, %c0_116] : memref<10x10x16xf32, #tpu.memory_space<vmem>>, vector<8x8x16xf32>
    %118 = vector.shape_cast %117 : vector<8x8x16xf32> to vector<64x16xf32>
    %119 = arith.truncf %118 : vector<64x16xf32> to vector<64x16xbf16>
    %c2_117 = arith.constant 2 : index
    %c2_118 = arith.constant 2 : index
    %c0_119 = arith.constant 0 : index
    %c0_120 = arith.constant 0 : index
    %120 = vector.load %arg4[%c2_117, %c2_118, %c0_119, %c0_120] : memref<4x4x16x32xbf16, #tpu.memory_space<vmem>>, vector<1x1x16x32xbf16>
    %121 = vector.shape_cast %120 : vector<1x1x16x32xbf16> to vector<16x32xbf16>
    %cst_121 = arith.constant dense<0.000000e+00> : vector<64x32xf32>
    %122 = tpu.matmul %119, %121, %cst_121 {dimension_numbers = #tpu.dot_dimension_numbers<[1], [0], [0], [1], [0, 0, 1, 1], [], []>} : vector<64x16xbf16>, vector<16x32xbf16>, vector<64x32xf32> -> vector<64x32xf32>
    %123 = arith.addf %116, %122 : vector<64x32xf32>
    %c2_122 = arith.constant 2 : index
    %c1_123 = arith.constant 1 : index
    %c0_124 = arith.constant 0 : index
    %124 = vector.load %arg9[%c2_122, %c1_123, %c0_124] : memref<10x10x16xf32, #tpu.memory_space<vmem>>, vector<8x8x16xf32>
    %125 = vector.shape_cast %124 : vector<8x8x16xf32> to vector<64x16xf32>
    %126 = arith.truncf %125 : vector<64x16xf32> to vector<64x16xbf16>
    %c2_125 = arith.constant 2 : index
    %c3_126 = arith.constant 3 : index
    %c0_127 = arith.constant 0 : index
    %c0_128 = arith.constant 0 : index
    %127 = vector.load %arg4[%c2_125, %c3_126, %c0_127, %c0_128] : memref<4x4x16x32xbf16, #tpu.memory_space<vmem>>, vector<1x1x16x32xbf16>
    %128 = vector.shape_cast %127 : vector<1x1x16x32xbf16> to vector<16x32xbf16>
    %cst_129 = arith.constant dense<0.000000e+00> : vector<64x32xf32>
    %129 = tpu.matmul %126, %128, %cst_129 {dimension_numbers = #tpu.dot_dimension_numbers<[1], [0], [0], [1], [0, 0, 1, 1], [], []>} : vector<64x16xbf16>, vector<16x32xbf16>, vector<64x32xf32> -> vector<64x32xf32>
    %130 = arith.addf %123, %129 : vector<64x32xf32>
    %131 = vector.broadcast %15 : vector<1x32xf32> to vector<64x32xf32>
    %132 = arith.addf %130, %131 : vector<64x32xf32>
    %133 = arith.truncf %132 : vector<64x32xf32> to vector<64x32xbf16>
    %c0_130 = arith.constant 0 : index
    %c2_131 = arith.constant 2 : index
    %c0_132 = arith.constant 0 : index
    %c0_133 = arith.constant 0 : index
    %134 = vector.load %arg6[%c0_130, %c2_131, %c0_132, %c0_133] : memref<1x4x64x32xbf16, #tpu.memory_space<vmem>>, vector<1x1x64x32xbf16>
    %135 = vector.shape_cast %134 : vector<1x1x64x32xbf16> to vector<64x32xbf16>
    %136 = vector.shape_cast %133 : vector<64x32xbf16> to vector<1x1x64x32xbf16>
    tpu.vector_store %arg6[%c0_130, %c2_131, %c0_132, %c0_133], %136 {strides = array<i32>} : memref<1x4x64x32xbf16, #tpu.memory_space<vmem>>, vector<1x1x64x32xbf16>,
    %cst_134 = arith.constant dense<0.000000e+00> : vector<32xf32>
    %137 = vector.multi_reduction <add>, %132, %cst_134 [0] : vector<64x32xf32> to vector<32xf32>
    %138 = vector.shape_cast %137 : vector<32xf32> to vector<1x32xf32>
    %139 = arith.addf %97, %138 : vector<1x32xf32>
    %140 = arith.mulf %132, %132 : vector<64x32xf32>
    %cst_135 = arith.constant dense<0.000000e+00> : vector<32xf32>
    %141 = vector.multi_reduction <add>, %140, %cst_135 [0] : vector<64x32xf32> to vector<32xf32>
    %142 = vector.shape_cast %141 : vector<32xf32> to vector<1x32xf32>
    %143 = arith.addf %101, %142 : vector<1x32xf32>
    %cst_136 = arith.constant 0.000000e+00 : f32
    %144 = vector.broadcast %cst_136 : f32 to vector<64x32xf32>
    %c1_137 = arith.constant 1 : index
    %c1_138 = arith.constant 1 : index
    %c0_139 = arith.constant 0 : index
    %145 = vector.load %arg9[%c1_137, %c1_138, %c0_139] : memref<10x10x16xf32, #tpu.memory_space<vmem>>, vector<8x8x16xf32>
    %146 = vector.shape_cast %145 : vector<8x8x16xf32> to vector<64x16xf32>
    %147 = arith.truncf %146 : vector<64x16xf32> to vector<64x16xbf16>
    %c3_140 = arith.constant 3 : index
    %c0_141 = arith.constant 0 : index
    %c0_142 = arith.constant 0 : index
    %c0_143 = arith.constant 0 : index
    %148 = vector.load %arg4[%c3_140, %c0_141, %c0_142, %c0_143] : memref<4x4x16x32xbf16, #tpu.memory_space<vmem>>, vector<1x1x16x32xbf16>
    %149 = vector.shape_cast %148 : vector<1x1x16x32xbf16> to vector<16x32xbf16>
    %cst_144 = arith.constant dense<0.000000e+00> : vector<64x32xf32>
    %150 = tpu.matmul %147, %149, %cst_144 {dimension_numbers = #tpu.dot_dimension_numbers<[1], [0], [0], [1], [0, 0, 1, 1], [], []>} : vector<64x16xbf16>, vector<16x32xbf16>, vector<64x32xf32> -> vector<64x32xf32>
    %151 = arith.addf %144, %150 : vector<64x32xf32>
    %c1_145 = arith.constant 1 : index
    %c2_146 = arith.constant 2 : index
    %c0_147 = arith.constant 0 : index
    %152 = vector.load %arg9[%c1_145, %c2_146, %c0_147] : memref<10x10x16xf32, #tpu.memory_space<vmem>>, vector<8x8x16xf32>
    %153 = vector.shape_cast %152 : vector<8x8x16xf32> to vector<64x16xf32>
    %154 = arith.truncf %153 : vector<64x16xf32> to vector<64x16xbf16>
    %c3_148 = arith.constant 3 : index
    %c1_149 = arith.constant 1 : index
    %c0_150 = arith.constant 0 : index
    %c0_151 = arith.constant 0 : index
    %155 = vector.load %arg4[%c3_148, %c1_149, %c0_150, %c0_151] : memref<4x4x16x32xbf16, #tpu.memory_space<vmem>>, vector<1x1x16x32xbf16>
    %156 = vector.shape_cast %155 : vector<1x1x16x32xbf16> to vector<16x32xbf16>
    %cst_152 = arith.constant dense<0.000000e+00> : vector<64x32xf32>
    %157 = tpu.matmul %154, %156, %cst_152 {dimension_numbers = #tpu.dot_dimension_numbers<[1], [0], [0], [1], [0, 0, 1, 1], [], []>} : vector<64x16xbf16>, vector<16x32xbf16>, vector<64x32xf32> -> vector<64x32xf32>
    %158 = arith.addf %151, %157 : vector<64x32xf32>
    %c2_153 = arith.constant 2 : index
    %c1_154 = arith.constant 1 : index
    %c0_155 = arith.constant 0 : index
    %159 = vector.load %arg9[%c2_153, %c1_154, %c0_155] : memref<10x10x16xf32, #tpu.memory_space<vmem>>, vector<8x8x16xf32>
    %160 = vector.shape_cast %159 : vector<8x8x16xf32> to vector<64x16xf32>
    %161 = arith.truncf %160 : vector<64x16xf32> to vector<64x16xbf16>
    %c3_156 = arith.constant 3 : index
    %c2_157 = arith.constant 2 : index
    %c0_158 = arith.constant 0 : index
    %c0_159 = arith.constant 0 : index
    %162 = vector.load %arg4[%c3_156, %c2_157, %c0_158, %c0_159] : memref<4x4x16x32xbf16, #tpu.memory_space<vmem>>, vector<1x1x16x32xbf16>
    %163 = vector.shape_cast %162 : vector<1x1x16x32xbf16> to vector<16x32xbf16>
    %cst_160 = arith.constant dense<0.000000e+00> : vector<64x32xf32>
    %164 = tpu.matmul %161, %163, %cst_160 {dimension_numbers = #tpu.dot_dimension_numbers<[1], [0], [0], [1], [0, 0, 1, 1], [], []>} : vector<64x16xbf16>, vector<16x32xbf16>, vector<64x32xf32> -> vector<64x32xf32>
    %165 = arith.addf %158, %164 : vector<64x32xf32>
    %c2_161 = arith.constant 2 : index
    %c2_162 = arith.constant 2 : index
    %c0_163 = arith.constant 0 : index
    %166 = vector.load %arg9[%c2_161, %c2_162, %c0_163] : memref<10x10x16xf32, #tpu.memory_space<vmem>>, vector<8x8x16xf32>
    %167 = vector.shape_cast %166 : vector<8x8x16xf32> to vector<64x16xf32>
    %168 = arith.truncf %167 : vector<64x16xf32> to vector<64x16xbf16>
    %c3_164 = arith.constant 3 : index
    %c3_165 = arith.constant 3 : index
    %c0_166 = arith.constant 0 : index
    %c0_167 = arith.constant 0 : index
    %169 = vector.load %arg4[%c3_164, %c3_165, %c0_166, %c0_167] : memref<4x4x16x32xbf16, #tpu.memory_space<vmem>>, vector<1x1x16x32xbf16>
    %170 = vector.shape_cast %169 : vector<1x1x16x32xbf16> to vector<16x32xbf16>
    %cst_168 = arith.constant dense<0.000000e+00> : vector<64x32xf32>
    %171 = tpu.matmul %168, %170, %cst_168 {dimension_numbers = #tpu.dot_dimension_numbers<[1], [0], [0], [1], [0, 0, 1, 1], [], []>} : vector<64x16xbf16>, vector<16x32xbf16>, vector<64x32xf32> -> vector<64x32xf32>
    %172 = arith.addf %165, %171 : vector<64x32xf32>
    %173 = vector.broadcast %15 : vector<1x32xf32> to vector<64x32xf32>
    %174 = arith.addf %172, %173 : vector<64x32xf32>
    %175 = arith.truncf %174 : vector<64x32xf32> to vector<64x32xbf16>
    %c0_169 = arith.constant 0 : index
    %c3_170 = arith.constant 3 : index
    %c0_171 = arith.constant 0 : index
    %c0_172 = arith.constant 0 : index
    %176 = vector.load %arg6[%c0_169, %c3_170, %c0_171, %c0_172] : memref<1x4x64x32xbf16, #tpu.memory_space<vmem>>, vector<1x1x64x32xbf16>
    %177 = vector.shape_cast %176 : vector<1x1x64x32xbf16> to vector<64x32xbf16>
    %178 = vector.shape_cast %175 : vector<64x32xbf16> to vector<1x1x64x32xbf16>
    tpu.vector_store %arg6[%c0_169, %c3_170, %c0_171, %c0_172], %178 {strides = array<i32>} : memref<1x4x64x32xbf16, #tpu.memory_space<vmem>>, vector<1x1x64x32xbf16>,
    %cst_173 = arith.constant dense<0.000000e+00> : vector<32xf32>
    %179 = vector.multi_reduction <add>, %174, %cst_173 [0] : vector<64x32xf32> to vector<32xf32>
    %180 = vector.shape_cast %179 : vector<32xf32> to vector<1x32xf32>
    %181 = arith.addf %139, %180 : vector<1x32xf32>
    %182 = arith.mulf %174, %174 : vector<64x32xf32>
    %cst_174 = arith.constant dense<0.000000e+00> : vector<32xf32>
    %183 = vector.multi_reduction <add>, %182, %cst_174 [0] : vector<64x32xf32> to vector<32xf32>
    %184 = vector.shape_cast %183 : vector<32xf32> to vector<1x32xf32>
    %185 = arith.addf %143, %184 : vector<1x32xf32>
    %c0_175 = arith.constant 0 : index
    %c0_176 = arith.constant 0 : index
    %c0_177 = arith.constant 0 : index
    %186 = vector.load %arg7[%c0_175, %c0_176, %c0_177] : memref<1x1x32xf32, #tpu.memory_space<vmem>>, vector<1x1x32xf32>
    %187 = vector.shape_cast %186 : vector<1x1x32xf32> to vector<1x32xf32>
    %188 = vector.shape_cast %181 : vector<1x32xf32> to vector<1x1x32xf32>
    tpu.vector_store %arg7[%c0_175, %c0_176, %c0_177], %188 {strides = array<i32>} : memref<1x1x32xf32, #tpu.memory_space<vmem>>, vector<1x1x32xf32>,
    %c0_178 = arith.constant 0 : index
    %c0_179 = arith.constant 0 : index
    %c0_180 = arith.constant 0 : index
    %189 = vector.load %arg8[%c0_178, %c0_179, %c0_180] : memref<1x1x32xf32, #tpu.memory_space<vmem>>, vector<1x1x32xf32>
    %190 = vector.shape_cast %189 : vector<1x1x32xf32> to vector<1x32xf32>
    %191 = vector.shape_cast %185 : vector<1x32xf32> to vector<1x1x32xf32>
    tpu.vector_store %arg8[%c0_178, %c0_179, %c0_180], %191 {strides = array<i32>} : memref<1x1x32xf32, #tpu.memory_space<vmem>>, vector<1x1x32xf32>,
    return
  }
  func.func @transform_0(%arg0: i32) -> (i32, i32, i32, i32) {
    %c0_i32 = arith.constant 0 : i32
    %c0_i32_0 = arith.constant 0 : i32
    %c0_i32_1 = arith.constant 0 : i32
    %c0_i32_2 = arith.constant 0 : i32
    return %arg0, %c0_i32, %c0_i32_0, %c0_i32_1 : i32, i32, i32, i32
  }
  func.func @transform_1(%arg0: i32) -> (i32, i32, i32, i32) {
    %c0_i32 = arith.constant 0 : i32
    %c0_i32_0 = arith.constant 0 : i32
    %c0_i32_1 = arith.constant 0 : i32
    %c0_i32_2 = arith.constant 0 : i32
    return %arg0, %c0_i32, %c0_i32_0, %c0_i32_1 : i32, i32, i32, i32
  }
  func.func @transform_2(%arg0: i32) -> (i32, i32, i32, i32) {
    %c0_i32 = arith.constant 0 : i32
    %c0_i32_0 = arith.constant 0 : i32
    %c0_i32_1 = arith.constant 0 : i32
    %c0_i32_2 = arith.constant 0 : i32
    return %arg0, %c0_i32, %c0_i32_0, %c0_i32_1 : i32, i32, i32, i32
  }
  func.func @transform_3(%arg0: i32) -> (i32, i32, i32, i32) {
    %c0_i32 = arith.constant 0 : i32
    %c0_i32_0 = arith.constant 0 : i32
    %c0_i32_1 = arith.constant 0 : i32
    %c0_i32_2 = arith.constant 0 : i32
    %c0_i32_3 = arith.constant 0 : i32
    return %c0_i32, %c0_i32_0, %c0_i32_1, %c0_i32_2 : i32, i32, i32, i32
  }
  func.func @transform_4(%arg0: i32) -> (i32, i32) {
    %c0_i32 = arith.constant 0 : i32
    %c0_i32_0 = arith.constant 0 : i32
    %c0_i32_1 = arith.constant 0 : i32
    return %c0_i32, %c0_i32_0 : i32, i32
  }
  func.func @transform_5(%arg0: i32) -> (i32, i32, i32, i32) {
    %c0_i32 = arith.constant 0 : i32
    %c0_i32_0 = arith.constant 0 : i32
    %c0_i32_1 = arith.constant 0 : i32
    %c0_i32_2 = arith.constant 0 : i32
    return %arg0, %c0_i32, %c0_i32_0, %c0_i32_1 : i32, i32, i32, i32
  }
  func.func @transform_6(%arg0: i32) -> (i32, i32, i32) {
    %c0_i32 = arith.constant 0 : i32
    %c0_i32_0 = arith.constant 0 : i32
    %c0_i32_1 = arith.constant 0 : i32
    return %arg0, %c0_i32, %c0_i32_0 : i32, i32, i32
  }
  func.func @transform_7(%arg0: i32) -> (i32, i32, i32) {
    %c0_i32 = arith.constant 0 : i32
    %c0_i32_0 = arith.constant 0 : i32
    %c0_i32_1 = arith.constant 0 : i32
    return %arg0, %c0_i32, %c0_i32_0 : i32, i32, i32
  }
}

module attributes {stable_mosaic.version = 11 : i64} {
  func.func @kernel(%arg0: i32, %arg1: memref<1x4x64x32xbf16, #tpu.memory_space<vmem>>, %arg2: memref<1x1x32xf32, #tpu.memory_space<vmem>>, %arg3: memref<1x1x32xf32, #tpu.memory_space<vmem>>, %arg4: memref<3x3x32x32xbf16, #tpu.memory_space<vmem>>, %arg5: memref<1x32xf32, #tpu.memory_space<vmem>>, %arg6: memref<1x64x32xbf16, #tpu.memory_space<vmem>>, %arg7: memref<1x4x64x32xf32, #tpu.memory_space<vmem>>, %arg8: memref<4x10x10x32xf32, #tpu.memory_space<vmem>>) attributes {dimension_semantics = [#tpu.dimension_semantics<parallel>], iteration_bounds = array<i64: 2>, scalar_prefetch = 0 : i64, scratch_operands = 1 : i64, tpu.core_type = #tpu.core_type<tc>, window_params = [{transform_indices = @transform_0, window_bounds = array<i64: 1, 4, 64, 32>}, {transform_indices = @transform_1, window_bounds = array<i64: 1, 1, 32>}, {transform_indices = @transform_2, window_bounds = array<i64: 1, 1, 32>}, {pipeline_mode = #tpu.pipeline_mode<synchronous>, transform_indices = @transform_3, window_bounds = array<i64: 3, 3, 32, 32>}, {pipeline_mode = #tpu.pipeline_mode<synchronous>, transform_indices = @transform_4, window_bounds = array<i64: 1, 32>}, {transform_indices = @transform_5, window_bounds = array<i64: 1, 64, 32>}, {transform_indices = @transform_6, window_bounds = array<i64: 1, 4, 64, 32>}]} {
    %cst = arith.constant 0.000000e+00 : f32
    %0 = vector.broadcast %cst : f32 to vector<4x10x10x32xf32>
    %c0 = arith.constant 0 : index
    %c0_0 = arith.constant 0 : index
    %c0_1 = arith.constant 0 : index
    %c0_2 = arith.constant 0 : index
    %1 = vector.load %arg8[%c0, %c0_0, %c0_1, %c0_2] : memref<4x10x10x32xf32, #tpu.memory_space<vmem>>, vector<4x10x10x32xf32>
    tpu.vector_store %arg8[%c0, %c0_0, %c0_1, %c0_2], %0 {strides = array<i32>} : memref<4x10x10x32xf32, #tpu.memory_space<vmem>>, vector<4x10x10x32xf32>,
    %c0_3 = arith.constant 0 : index
    %c0_4 = arith.constant 0 : index
    %c0_5 = arith.constant 0 : index
    %c0_6 = arith.constant 0 : index
    %2 = vector.load %arg1[%c0_3, %c0_4, %c0_5, %c0_6] : memref<1x4x64x32xbf16, #tpu.memory_space<vmem>>, vector<1x1x64x32xbf16>
    %3 = vector.shape_cast %2 : vector<1x1x64x32xbf16> to vector<64x32xbf16>
    %4 = arith.extf %3 : vector<64x32xbf16> to vector<64x32xf32>
    %c0_7 = arith.constant 0 : index
    %c0_8 = arith.constant 0 : index
    %c0_9 = arith.constant 0 : index
    %5 = vector.load %arg2[%c0_7, %c0_8, %c0_9] : memref<1x1x32xf32, #tpu.memory_space<vmem>>, vector<1x1x32xf32>
    %6 = vector.shape_cast %5 : vector<1x1x32xf32> to vector<1x32xf32>
    %7 = vector.broadcast %6 : vector<1x32xf32> to vector<64x32xf32>
    %8 = arith.mulf %4, %7 : vector<64x32xf32>
    %c0_10 = arith.constant 0 : index
    %c0_11 = arith.constant 0 : index
    %c0_12 = arith.constant 0 : index
    %9 = vector.load %arg3[%c0_10, %c0_11, %c0_12] : memref<1x1x32xf32, #tpu.memory_space<vmem>>, vector<1x1x32xf32>
    %10 = vector.shape_cast %9 : vector<1x1x32xf32> to vector<1x32xf32>
    %11 = vector.broadcast %10 : vector<1x32xf32> to vector<64x32xf32>
    %12 = arith.addf %8, %11 : vector<64x32xf32>
    %cst_13 = arith.constant 0.000000e+00 : f32
    %13 = vector.broadcast %cst_13 : f32 to vector<64x32xf32>
    %14 = arith.maximumf %12, %13 : vector<64x32xf32>
    %15 = vector.shape_cast %14 : vector<64x32xf32> to vector<8x8x32xf32>
    %c0_14 = arith.constant 0 : index
    %c1 = arith.constant 1 : index
    %c1_15 = arith.constant 1 : index
    %c0_16 = arith.constant 0 : index
    %16 = vector.load %arg8[%c0_14, %c1, %c1_15, %c0_16] : memref<4x10x10x32xf32, #tpu.memory_space<vmem>>, vector<1x8x8x32xf32>
    %17 = vector.shape_cast %16 : vector<1x8x8x32xf32> to vector<8x8x32xf32>
    %18 = vector.shape_cast %15 : vector<8x8x32xf32> to vector<1x8x8x32xf32>
    tpu.vector_store %arg8[%c0_14, %c1, %c1_15, %c0_16], %18 {strides = array<i32>} : memref<4x10x10x32xf32, #tpu.memory_space<vmem>>, vector<1x8x8x32xf32>,
    %c0_17 = arith.constant 0 : index
    %c1_18 = arith.constant 1 : index
    %c0_19 = arith.constant 0 : index
    %c0_20 = arith.constant 0 : index
    %19 = vector.load %arg1[%c0_17, %c1_18, %c0_19, %c0_20] : memref<1x4x64x32xbf16, #tpu.memory_space<vmem>>, vector<1x1x64x32xbf16>
    %20 = vector.shape_cast %19 : vector<1x1x64x32xbf16> to vector<64x32xbf16>
    %21 = arith.extf %20 : vector<64x32xbf16> to vector<64x32xf32>
    %c0_21 = arith.constant 0 : index
    %c0_22 = arith.constant 0 : index
    %c0_23 = arith.constant 0 : index
    %22 = vector.load %arg2[%c0_21, %c0_22, %c0_23] : memref<1x1x32xf32, #tpu.memory_space<vmem>>, vector<1x1x32xf32>
    %23 = vector.shape_cast %22 : vector<1x1x32xf32> to vector<1x32xf32>
    %24 = vector.broadcast %23 : vector<1x32xf32> to vector<64x32xf32>
    %25 = arith.mulf %21, %24 : vector<64x32xf32>
    %c0_24 = arith.constant 0 : index
    %c0_25 = arith.constant 0 : index
    %c0_26 = arith.constant 0 : index
    %26 = vector.load %arg3[%c0_24, %c0_25, %c0_26] : memref<1x1x32xf32, #tpu.memory_space<vmem>>, vector<1x1x32xf32>
    %27 = vector.shape_cast %26 : vector<1x1x32xf32> to vector<1x32xf32>
    %28 = vector.broadcast %27 : vector<1x32xf32> to vector<64x32xf32>
    %29 = arith.addf %25, %28 : vector<64x32xf32>
    %cst_27 = arith.constant 0.000000e+00 : f32
    %30 = vector.broadcast %cst_27 : f32 to vector<64x32xf32>
    %31 = arith.maximumf %29, %30 : vector<64x32xf32>
    %32 = vector.shape_cast %31 : vector<64x32xf32> to vector<8x8x32xf32>
    %c1_28 = arith.constant 1 : index
    %c1_29 = arith.constant 1 : index
    %c1_30 = arith.constant 1 : index
    %c0_31 = arith.constant 0 : index
    %33 = vector.load %arg8[%c1_28, %c1_29, %c1_30, %c0_31] : memref<4x10x10x32xf32, #tpu.memory_space<vmem>>, vector<1x8x8x32xf32>
    %34 = vector.shape_cast %33 : vector<1x8x8x32xf32> to vector<8x8x32xf32>
    %35 = vector.shape_cast %32 : vector<8x8x32xf32> to vector<1x8x8x32xf32>
    tpu.vector_store %arg8[%c1_28, %c1_29, %c1_30, %c0_31], %35 {strides = array<i32>} : memref<4x10x10x32xf32, #tpu.memory_space<vmem>>, vector<1x8x8x32xf32>,
    %c0_32 = arith.constant 0 : index
    %c2 = arith.constant 2 : index
    %c0_33 = arith.constant 0 : index
    %c0_34 = arith.constant 0 : index
    %36 = vector.load %arg1[%c0_32, %c2, %c0_33, %c0_34] : memref<1x4x64x32xbf16, #tpu.memory_space<vmem>>, vector<1x1x64x32xbf16>
    %37 = vector.shape_cast %36 : vector<1x1x64x32xbf16> to vector<64x32xbf16>
    %38 = arith.extf %37 : vector<64x32xbf16> to vector<64x32xf32>
    %c0_35 = arith.constant 0 : index
    %c0_36 = arith.constant 0 : index
    %c0_37 = arith.constant 0 : index
    %39 = vector.load %arg2[%c0_35, %c0_36, %c0_37] : memref<1x1x32xf32, #tpu.memory_space<vmem>>, vector<1x1x32xf32>
    %40 = vector.shape_cast %39 : vector<1x1x32xf32> to vector<1x32xf32>
    %41 = vector.broadcast %40 : vector<1x32xf32> to vector<64x32xf32>
    %42 = arith.mulf %38, %41 : vector<64x32xf32>
    %c0_38 = arith.constant 0 : index
    %c0_39 = arith.constant 0 : index
    %c0_40 = arith.constant 0 : index
    %43 = vector.load %arg3[%c0_38, %c0_39, %c0_40] : memref<1x1x32xf32, #tpu.memory_space<vmem>>, vector<1x1x32xf32>
    %44 = vector.shape_cast %43 : vector<1x1x32xf32> to vector<1x32xf32>
    %45 = vector.broadcast %44 : vector<1x32xf32> to vector<64x32xf32>
    %46 = arith.addf %42, %45 : vector<64x32xf32>
    %cst_41 = arith.constant 0.000000e+00 : f32
    %47 = vector.broadcast %cst_41 : f32 to vector<64x32xf32>
    %48 = arith.maximumf %46, %47 : vector<64x32xf32>
    %49 = vector.shape_cast %48 : vector<64x32xf32> to vector<8x8x32xf32>
    %c2_42 = arith.constant 2 : index
    %c1_43 = arith.constant 1 : index
    %c1_44 = arith.constant 1 : index
    %c0_45 = arith.constant 0 : index
    %50 = vector.load %arg8[%c2_42, %c1_43, %c1_44, %c0_45] : memref<4x10x10x32xf32, #tpu.memory_space<vmem>>, vector<1x8x8x32xf32>
    %51 = vector.shape_cast %50 : vector<1x8x8x32xf32> to vector<8x8x32xf32>
    %52 = vector.shape_cast %49 : vector<8x8x32xf32> to vector<1x8x8x32xf32>
    tpu.vector_store %arg8[%c2_42, %c1_43, %c1_44, %c0_45], %52 {strides = array<i32>} : memref<4x10x10x32xf32, #tpu.memory_space<vmem>>, vector<1x8x8x32xf32>,
    %c0_46 = arith.constant 0 : index
    %c3 = arith.constant 3 : index
    %c0_47 = arith.constant 0 : index
    %c0_48 = arith.constant 0 : index
    %53 = vector.load %arg1[%c0_46, %c3, %c0_47, %c0_48] : memref<1x4x64x32xbf16, #tpu.memory_space<vmem>>, vector<1x1x64x32xbf16>
    %54 = vector.shape_cast %53 : vector<1x1x64x32xbf16> to vector<64x32xbf16>
    %55 = arith.extf %54 : vector<64x32xbf16> to vector<64x32xf32>
    %c0_49 = arith.constant 0 : index
    %c0_50 = arith.constant 0 : index
    %c0_51 = arith.constant 0 : index
    %56 = vector.load %arg2[%c0_49, %c0_50, %c0_51] : memref<1x1x32xf32, #tpu.memory_space<vmem>>, vector<1x1x32xf32>
    %57 = vector.shape_cast %56 : vector<1x1x32xf32> to vector<1x32xf32>
    %58 = vector.broadcast %57 : vector<1x32xf32> to vector<64x32xf32>
    %59 = arith.mulf %55, %58 : vector<64x32xf32>
    %c0_52 = arith.constant 0 : index
    %c0_53 = arith.constant 0 : index
    %c0_54 = arith.constant 0 : index
    %60 = vector.load %arg3[%c0_52, %c0_53, %c0_54] : memref<1x1x32xf32, #tpu.memory_space<vmem>>, vector<1x1x32xf32>
    %61 = vector.shape_cast %60 : vector<1x1x32xf32> to vector<1x32xf32>
    %62 = vector.broadcast %61 : vector<1x32xf32> to vector<64x32xf32>
    %63 = arith.addf %59, %62 : vector<64x32xf32>
    %cst_55 = arith.constant 0.000000e+00 : f32
    %64 = vector.broadcast %cst_55 : f32 to vector<64x32xf32>
    %65 = arith.maximumf %63, %64 : vector<64x32xf32>
    %66 = vector.shape_cast %65 : vector<64x32xf32> to vector<8x8x32xf32>
    %c3_56 = arith.constant 3 : index
    %c1_57 = arith.constant 1 : index
    %c1_58 = arith.constant 1 : index
    %c0_59 = arith.constant 0 : index
    %67 = vector.load %arg8[%c3_56, %c1_57, %c1_58, %c0_59] : memref<4x10x10x32xf32, #tpu.memory_space<vmem>>, vector<1x8x8x32xf32>
    %68 = vector.shape_cast %67 : vector<1x8x8x32xf32> to vector<8x8x32xf32>
    %69 = vector.shape_cast %66 : vector<8x8x32xf32> to vector<1x8x8x32xf32>
    tpu.vector_store %arg8[%c3_56, %c1_57, %c1_58, %c0_59], %69 {strides = array<i32>} : memref<4x10x10x32xf32, #tpu.memory_space<vmem>>, vector<1x8x8x32xf32>,
    %c0_60 = arith.constant 0 : index
    %c0_61 = arith.constant 0 : index
    %70 = vector.load %arg5[%c0_60, %c0_61] : memref<1x32xf32, #tpu.memory_space<vmem>>, vector<1x32xf32>
    %c0_62 = arith.constant 0 : index
    %c0_63 = arith.constant 0 : index
    %c0_64 = arith.constant 0 : index
    %71 = vector.load %arg6[%c0_62, %c0_63, %c0_64] : memref<1x64x32xbf16, #tpu.memory_space<vmem>>, vector<1x64x32xbf16>
    %72 = vector.shape_cast %71 : vector<1x64x32xbf16> to vector<64x32xbf16>
    %73 = arith.extf %72 : vector<64x32xbf16> to vector<64x32xf32>
    %cst_65 = arith.constant 0.000000e+00 : f32
    %74 = vector.broadcast %cst_65 : f32 to vector<64x32xf32>
    %c3_66 = arith.constant 3 : index
    %c0_67 = arith.constant 0 : index
    %c0_68 = arith.constant 0 : index
    %c0_69 = arith.constant 0 : index
    %75 = vector.load %arg8[%c3_66, %c0_67, %c0_68, %c0_69] : memref<4x10x10x32xf32, #tpu.memory_space<vmem>>, vector<1x8x8x32xf32>
    %76 = vector.shape_cast %75 : vector<1x8x8x32xf32> to vector<8x8x32xf32>
    %77 = vector.shape_cast %76 : vector<8x8x32xf32> to vector<64x32xf32>
    %78 = arith.truncf %77 : vector<64x32xf32> to vector<64x32xbf16>
    %c0_70 = arith.constant 0 : index
    %c0_71 = arith.constant 0 : index
    %c0_72 = arith.constant 0 : index
    %c0_73 = arith.constant 0 : index
    %79 = vector.load %arg4[%c0_70, %c0_71, %c0_72, %c0_73] : memref<3x3x32x32xbf16, #tpu.memory_space<vmem>>, vector<1x1x32x32xbf16>
    %80 = vector.shape_cast %79 : vector<1x1x32x32xbf16> to vector<32x32xbf16>
    %cst_74 = arith.constant dense<0.000000e+00> : vector<64x32xf32>
    %81 = tpu.matmul %78, %80, %cst_74 {dimension_numbers = #tpu.dot_dimension_numbers<[1], [0], [0], [1], [0, 0, 1, 1], [], []>} : vector<64x32xbf16>, vector<32x32xbf16>, vector<64x32xf32> -> vector<64x32xf32>
    %82 = arith.addf %74, %81 : vector<64x32xf32>
    %c2_75 = arith.constant 2 : index
    %c0_76 = arith.constant 0 : index
    %c1_77 = arith.constant 1 : index
    %c0_78 = arith.constant 0 : index
    %83 = vector.load %arg8[%c2_75, %c0_76, %c1_77, %c0_78] : memref<4x10x10x32xf32, #tpu.memory_space<vmem>>, vector<1x8x8x32xf32>
    %84 = vector.shape_cast %83 : vector<1x8x8x32xf32> to vector<8x8x32xf32>
    %85 = vector.shape_cast %84 : vector<8x8x32xf32> to vector<64x32xf32>
    %86 = arith.truncf %85 : vector<64x32xf32> to vector<64x32xbf16>
    %c0_79 = arith.constant 0 : index
    %c1_80 = arith.constant 1 : index
    %c0_81 = arith.constant 0 : index
    %c0_82 = arith.constant 0 : index
    %87 = vector.load %arg4[%c0_79, %c1_80, %c0_81, %c0_82] : memref<3x3x32x32xbf16, #tpu.memory_space<vmem>>, vector<1x1x32x32xbf16>
    %88 = vector.shape_cast %87 : vector<1x1x32x32xbf16> to vector<32x32xbf16>
    %cst_83 = arith.constant dense<0.000000e+00> : vector<64x32xf32>
    %89 = tpu.matmul %86, %88, %cst_83 {dimension_numbers = #tpu.dot_dimension_numbers<[1], [0], [0], [1], [0, 0, 1, 1], [], []>} : vector<64x32xbf16>, vector<32x32xbf16>, vector<64x32xf32> -> vector<64x32xf32>
    %90 = arith.addf %82, %89 : vector<64x32xf32>
    %c3_84 = arith.constant 3 : index
    %c0_85 = arith.constant 0 : index
    %c1_86 = arith.constant 1 : index
    %c0_87 = arith.constant 0 : index
    %91 = vector.load %arg8[%c3_84, %c0_85, %c1_86, %c0_87] : memref<4x10x10x32xf32, #tpu.memory_space<vmem>>, vector<1x8x8x32xf32>
    %92 = vector.shape_cast %91 : vector<1x8x8x32xf32> to vector<8x8x32xf32>
    %93 = vector.shape_cast %92 : vector<8x8x32xf32> to vector<64x32xf32>
    %94 = arith.truncf %93 : vector<64x32xf32> to vector<64x32xbf16>
    %c0_88 = arith.constant 0 : index
    %c2_89 = arith.constant 2 : index
    %c0_90 = arith.constant 0 : index
    %c0_91 = arith.constant 0 : index
    %95 = vector.load %arg4[%c0_88, %c2_89, %c0_90, %c0_91] : memref<3x3x32x32xbf16, #tpu.memory_space<vmem>>, vector<1x1x32x32xbf16>
    %96 = vector.shape_cast %95 : vector<1x1x32x32xbf16> to vector<32x32xbf16>
    %cst_92 = arith.constant dense<0.000000e+00> : vector<64x32xf32>
    %97 = tpu.matmul %94, %96, %cst_92 {dimension_numbers = #tpu.dot_dimension_numbers<[1], [0], [0], [1], [0, 0, 1, 1], [], []>} : vector<64x32xbf16>, vector<32x32xbf16>, vector<64x32xf32> -> vector<64x32xf32>
    %98 = arith.addf %90, %97 : vector<64x32xf32>
    %c1_93 = arith.constant 1 : index
    %c1_94 = arith.constant 1 : index
    %c0_95 = arith.constant 0 : index
    %c0_96 = arith.constant 0 : index
    %99 = vector.load %arg8[%c1_93, %c1_94, %c0_95, %c0_96] : memref<4x10x10x32xf32, #tpu.memory_space<vmem>>, vector<1x8x8x32xf32>
    %100 = vector.shape_cast %99 : vector<1x8x8x32xf32> to vector<8x8x32xf32>
    %101 = vector.shape_cast %100 : vector<8x8x32xf32> to vector<64x32xf32>
    %102 = arith.truncf %101 : vector<64x32xf32> to vector<64x32xbf16>
    %c1_97 = arith.constant 1 : index
    %c0_98 = arith.constant 0 : index
    %c0_99 = arith.constant 0 : index
    %c0_100 = arith.constant 0 : index
    %103 = vector.load %arg4[%c1_97, %c0_98, %c0_99, %c0_100] : memref<3x3x32x32xbf16, #tpu.memory_space<vmem>>, vector<1x1x32x32xbf16>
    %104 = vector.shape_cast %103 : vector<1x1x32x32xbf16> to vector<32x32xbf16>
    %cst_101 = arith.constant dense<0.000000e+00> : vector<64x32xf32>
    %105 = tpu.matmul %102, %104, %cst_101 {dimension_numbers = #tpu.dot_dimension_numbers<[1], [0], [0], [1], [0, 0, 1, 1], [], []>} : vector<64x32xbf16>, vector<32x32xbf16>, vector<64x32xf32> -> vector<64x32xf32>
    %106 = arith.addf %98, %105 : vector<64x32xf32>
    %c0_102 = arith.constant 0 : index
    %c1_103 = arith.constant 1 : index
    %c1_104 = arith.constant 1 : index
    %c0_105 = arith.constant 0 : index
    %107 = vector.load %arg8[%c0_102, %c1_103, %c1_104, %c0_105] : memref<4x10x10x32xf32, #tpu.memory_space<vmem>>, vector<1x8x8x32xf32>
    %108 = vector.shape_cast %107 : vector<1x8x8x32xf32> to vector<8x8x32xf32>
    %109 = vector.shape_cast %108 : vector<8x8x32xf32> to vector<64x32xf32>
    %110 = arith.truncf %109 : vector<64x32xf32> to vector<64x32xbf16>
    %c1_106 = arith.constant 1 : index
    %c1_107 = arith.constant 1 : index
    %c0_108 = arith.constant 0 : index
    %c0_109 = arith.constant 0 : index
    %111 = vector.load %arg4[%c1_106, %c1_107, %c0_108, %c0_109] : memref<3x3x32x32xbf16, #tpu.memory_space<vmem>>, vector<1x1x32x32xbf16>
    %112 = vector.shape_cast %111 : vector<1x1x32x32xbf16> to vector<32x32xbf16>
    %cst_110 = arith.constant dense<0.000000e+00> : vector<64x32xf32>
    %113 = tpu.matmul %110, %112, %cst_110 {dimension_numbers = #tpu.dot_dimension_numbers<[1], [0], [0], [1], [0, 0, 1, 1], [], []>} : vector<64x32xbf16>, vector<32x32xbf16>, vector<64x32xf32> -> vector<64x32xf32>
    %114 = arith.addf %106, %113 : vector<64x32xf32>
    %c1_111 = arith.constant 1 : index
    %c1_112 = arith.constant 1 : index
    %c1_113 = arith.constant 1 : index
    %c0_114 = arith.constant 0 : index
    %115 = vector.load %arg8[%c1_111, %c1_112, %c1_113, %c0_114] : memref<4x10x10x32xf32, #tpu.memory_space<vmem>>, vector<1x8x8x32xf32>
    %116 = vector.shape_cast %115 : vector<1x8x8x32xf32> to vector<8x8x32xf32>
    %117 = vector.shape_cast %116 : vector<8x8x32xf32> to vector<64x32xf32>
    %118 = arith.truncf %117 : vector<64x32xf32> to vector<64x32xbf16>
    %c1_115 = arith.constant 1 : index
    %c2_116 = arith.constant 2 : index
    %c0_117 = arith.constant 0 : index
    %c0_118 = arith.constant 0 : index
    %119 = vector.load %arg4[%c1_115, %c2_116, %c0_117, %c0_118] : memref<3x3x32x32xbf16, #tpu.memory_space<vmem>>, vector<1x1x32x32xbf16>
    %120 = vector.shape_cast %119 : vector<1x1x32x32xbf16> to vector<32x32xbf16>
    %cst_119 = arith.constant dense<0.000000e+00> : vector<64x32xf32>
    %121 = tpu.matmul %118, %120, %cst_119 {dimension_numbers = #tpu.dot_dimension_numbers<[1], [0], [0], [1], [0, 0, 1, 1], [], []>} : vector<64x32xbf16>, vector<32x32xbf16>, vector<64x32xf32> -> vector<64x32xf32>
    %122 = arith.addf %114, %121 : vector<64x32xf32>
    %c3_120 = arith.constant 3 : index
    %c1_121 = arith.constant 1 : index
    %c0_122 = arith.constant 0 : index
    %c0_123 = arith.constant 0 : index
    %123 = vector.load %arg8[%c3_120, %c1_121, %c0_122, %c0_123] : memref<4x10x10x32xf32, #tpu.memory_space<vmem>>, vector<1x8x8x32xf32>
    %124 = vector.shape_cast %123 : vector<1x8x8x32xf32> to vector<8x8x32xf32>
    %125 = vector.shape_cast %124 : vector<8x8x32xf32> to vector<64x32xf32>
    %126 = arith.truncf %125 : vector<64x32xf32> to vector<64x32xbf16>
    %c2_124 = arith.constant 2 : index
    %c0_125 = arith.constant 0 : index
    %c0_126 = arith.constant 0 : index
    %c0_127 = arith.constant 0 : index
    %127 = vector.load %arg4[%c2_124, %c0_125, %c0_126, %c0_127] : memref<3x3x32x32xbf16, #tpu.memory_space<vmem>>, vector<1x1x32x32xbf16>
    %128 = vector.shape_cast %127 : vector<1x1x32x32xbf16> to vector<32x32xbf16>
    %cst_128 = arith.constant dense<0.000000e+00> : vector<64x32xf32>
    %129 = tpu.matmul %126, %128, %cst_128 {dimension_numbers = #tpu.dot_dimension_numbers<[1], [0], [0], [1], [0, 0, 1, 1], [], []>} : vector<64x32xbf16>, vector<32x32xbf16>, vector<64x32xf32> -> vector<64x32xf32>
    %130 = arith.addf %122, %129 : vector<64x32xf32>
    %c2_129 = arith.constant 2 : index
    %c1_130 = arith.constant 1 : index
    %c1_131 = arith.constant 1 : index
    %c0_132 = arith.constant 0 : index
    %131 = vector.load %arg8[%c2_129, %c1_130, %c1_131, %c0_132] : memref<4x10x10x32xf32, #tpu.memory_space<vmem>>, vector<1x8x8x32xf32>
    %132 = vector.shape_cast %131 : vector<1x8x8x32xf32> to vector<8x8x32xf32>
    %133 = vector.shape_cast %132 : vector<8x8x32xf32> to vector<64x32xf32>
    %134 = arith.truncf %133 : vector<64x32xf32> to vector<64x32xbf16>
    %c2_133 = arith.constant 2 : index
    %c1_134 = arith.constant 1 : index
    %c0_135 = arith.constant 0 : index
    %c0_136 = arith.constant 0 : index
    %135 = vector.load %arg4[%c2_133, %c1_134, %c0_135, %c0_136] : memref<3x3x32x32xbf16, #tpu.memory_space<vmem>>, vector<1x1x32x32xbf16>
    %136 = vector.shape_cast %135 : vector<1x1x32x32xbf16> to vector<32x32xbf16>
    %cst_137 = arith.constant dense<0.000000e+00> : vector<64x32xf32>
    %137 = tpu.matmul %134, %136, %cst_137 {dimension_numbers = #tpu.dot_dimension_numbers<[1], [0], [0], [1], [0, 0, 1, 1], [], []>} : vector<64x32xbf16>, vector<32x32xbf16>, vector<64x32xf32> -> vector<64x32xf32>
    %138 = arith.addf %130, %137 : vector<64x32xf32>
    %c3_138 = arith.constant 3 : index
    %c1_139 = arith.constant 1 : index
    %c1_140 = arith.constant 1 : index
    %c0_141 = arith.constant 0 : index
    %139 = vector.load %arg8[%c3_138, %c1_139, %c1_140, %c0_141] : memref<4x10x10x32xf32, #tpu.memory_space<vmem>>, vector<1x8x8x32xf32>
    %140 = vector.shape_cast %139 : vector<1x8x8x32xf32> to vector<8x8x32xf32>
    %141 = vector.shape_cast %140 : vector<8x8x32xf32> to vector<64x32xf32>
    %142 = arith.truncf %141 : vector<64x32xf32> to vector<64x32xbf16>
    %c2_142 = arith.constant 2 : index
    %c2_143 = arith.constant 2 : index
    %c0_144 = arith.constant 0 : index
    %c0_145 = arith.constant 0 : index
    %143 = vector.load %arg4[%c2_142, %c2_143, %c0_144, %c0_145] : memref<3x3x32x32xbf16, #tpu.memory_space<vmem>>, vector<1x1x32x32xbf16>
    %144 = vector.shape_cast %143 : vector<1x1x32x32xbf16> to vector<32x32xbf16>
    %cst_146 = arith.constant dense<0.000000e+00> : vector<64x32xf32>
    %145 = tpu.matmul %142, %144, %cst_146 {dimension_numbers = #tpu.dot_dimension_numbers<[1], [0], [0], [1], [0, 0, 1, 1], [], []>} : vector<64x32xbf16>, vector<32x32xbf16>, vector<64x32xf32> -> vector<64x32xf32>
    %146 = arith.addf %138, %145 : vector<64x32xf32>
    %147 = vector.broadcast %70 : vector<1x32xf32> to vector<64x32xf32>
    %148 = arith.addf %146, %147 : vector<64x32xf32>
    %149 = arith.addf %148, %73 : vector<64x32xf32>
    %c0_147 = arith.constant 0 : index
    %c0_148 = arith.constant 0 : index
    %c0_149 = arith.constant 0 : index
    %c0_150 = arith.constant 0 : index
    %150 = vector.load %arg7[%c0_147, %c0_148, %c0_149, %c0_150] : memref<1x4x64x32xf32, #tpu.memory_space<vmem>>, vector<1x1x64x32xf32>
    %151 = vector.shape_cast %150 : vector<1x1x64x32xf32> to vector<64x32xf32>
    %152 = vector.shape_cast %149 : vector<64x32xf32> to vector<1x1x64x32xf32>
    tpu.vector_store %arg7[%c0_147, %c0_148, %c0_149, %c0_150], %152 {strides = array<i32>} : memref<1x4x64x32xf32, #tpu.memory_space<vmem>>, vector<1x1x64x32xf32>,
    %cst_151 = arith.constant 0.000000e+00 : f32
    %153 = vector.broadcast %cst_151 : f32 to vector<64x32xf32>
    %c2_152 = arith.constant 2 : index
    %c0_153 = arith.constant 0 : index
    %c1_154 = arith.constant 1 : index
    %c0_155 = arith.constant 0 : index
    %154 = vector.load %arg8[%c2_152, %c0_153, %c1_154, %c0_155] : memref<4x10x10x32xf32, #tpu.memory_space<vmem>>, vector<1x8x8x32xf32>
    %155 = vector.shape_cast %154 : vector<1x8x8x32xf32> to vector<8x8x32xf32>
    %156 = vector.shape_cast %155 : vector<8x8x32xf32> to vector<64x32xf32>
    %157 = arith.truncf %156 : vector<64x32xf32> to vector<64x32xbf16>
    %c0_156 = arith.constant 0 : index
    %c0_157 = arith.constant 0 : index
    %c0_158 = arith.constant 0 : index
    %c0_159 = arith.constant 0 : index
    %158 = vector.load %arg4[%c0_156, %c0_157, %c0_158, %c0_159] : memref<3x3x32x32xbf16, #tpu.memory_space<vmem>>, vector<1x1x32x32xbf16>
    %159 = vector.shape_cast %158 : vector<1x1x32x32xbf16> to vector<32x32xbf16>
    %cst_160 = arith.constant dense<0.000000e+00> : vector<64x32xf32>
    %160 = tpu.matmul %157, %159, %cst_160 {dimension_numbers = #tpu.dot_dimension_numbers<[1], [0], [0], [1], [0, 0, 1, 1], [], []>} : vector<64x32xbf16>, vector<32x32xbf16>, vector<64x32xf32> -> vector<64x32xf32>
    %161 = arith.addf %153, %160 : vector<64x32xf32>
    %c3_161 = arith.constant 3 : index
    %c0_162 = arith.constant 0 : index
    %c1_163 = arith.constant 1 : index
    %c0_164 = arith.constant 0 : index
    %162 = vector.load %arg8[%c3_161, %c0_162, %c1_163, %c0_164] : memref<4x10x10x32xf32, #tpu.memory_space<vmem>>, vector<1x8x8x32xf32>
    %163 = vector.shape_cast %162 : vector<1x8x8x32xf32> to vector<8x8x32xf32>
    %164 = vector.shape_cast %163 : vector<8x8x32xf32> to vector<64x32xf32>
    %165 = arith.truncf %164 : vector<64x32xf32> to vector<64x32xbf16>
    %c0_165 = arith.constant 0 : index
    %c1_166 = arith.constant 1 : index
    %c0_167 = arith.constant 0 : index
    %c0_168 = arith.constant 0 : index
    %166 = vector.load %arg4[%c0_165, %c1_166, %c0_167, %c0_168] : memref<3x3x32x32xbf16, #tpu.memory_space<vmem>>, vector<1x1x32x32xbf16>
    %167 = vector.shape_cast %166 : vector<1x1x32x32xbf16> to vector<32x32xbf16>
    %cst_169 = arith.constant dense<0.000000e+00> : vector<64x32xf32>
    %168 = tpu.matmul %165, %167, %cst_169 {dimension_numbers = #tpu.dot_dimension_numbers<[1], [0], [0], [1], [0, 0, 1, 1], [], []>} : vector<64x32xbf16>, vector<32x32xbf16>, vector<64x32xf32> -> vector<64x32xf32>
    %169 = arith.addf %161, %168 : vector<64x32xf32>
    %c2_170 = arith.constant 2 : index
    %c0_171 = arith.constant 0 : index
    %c2_172 = arith.constant 2 : index
    %c0_173 = arith.constant 0 : index
    %170 = vector.load %arg8[%c2_170, %c0_171, %c2_172, %c0_173] : memref<4x10x10x32xf32, #tpu.memory_space<vmem>>, vector<1x8x8x32xf32>
    %171 = vector.shape_cast %170 : vector<1x8x8x32xf32> to vector<8x8x32xf32>
    %172 = vector.shape_cast %171 : vector<8x8x32xf32> to vector<64x32xf32>
    %173 = arith.truncf %172 : vector<64x32xf32> to vector<64x32xbf16>
    %c0_174 = arith.constant 0 : index
    %c2_175 = arith.constant 2 : index
    %c0_176 = arith.constant 0 : index
    %c0_177 = arith.constant 0 : index
    %174 = vector.load %arg4[%c0_174, %c2_175, %c0_176, %c0_177] : memref<3x3x32x32xbf16, #tpu.memory_space<vmem>>, vector<1x1x32x32xbf16>
    %175 = vector.shape_cast %174 : vector<1x1x32x32xbf16> to vector<32x32xbf16>
    %cst_178 = arith.constant dense<0.000000e+00> : vector<64x32xf32>
    %176 = tpu.matmul %173, %175, %cst_178 {dimension_numbers = #tpu.dot_dimension_numbers<[1], [0], [0], [1], [0, 0, 1, 1], [], []>} : vector<64x32xbf16>, vector<32x32xbf16>, vector<64x32xf32> -> vector<64x32xf32>
    %177 = arith.addf %169, %176 : vector<64x32xf32>
    %c0_179 = arith.constant 0 : index
    %c1_180 = arith.constant 1 : index
    %c1_181 = arith.constant 1 : index
    %c0_182 = arith.constant 0 : index
    %178 = vector.load %arg8[%c0_179, %c1_180, %c1_181, %c0_182] : memref<4x10x10x32xf32, #tpu.memory_space<vmem>>, vector<1x8x8x32xf32>
    %179 = vector.shape_cast %178 : vector<1x8x8x32xf32> to vector<8x8x32xf32>
    %180 = vector.shape_cast %179 : vector<8x8x32xf32> to vector<64x32xf32>
    %181 = arith.truncf %180 : vector<64x32xf32> to vector<64x32xbf16>
    %c1_183 = arith.constant 1 : index
    %c0_184 = arith.constant 0 : index
    %c0_185 = arith.constant 0 : index
    %c0_186 = arith.constant 0 : index
    %182 = vector.load %arg4[%c1_183, %c0_184, %c0_185, %c0_186] : memref<3x3x32x32xbf16, #tpu.memory_space<vmem>>, vector<1x1x32x32xbf16>
    %183 = vector.shape_cast %182 : vector<1x1x32x32xbf16> to vector<32x32xbf16>
    %cst_187 = arith.constant dense<0.000000e+00> : vector<64x32xf32>
    %184 = tpu.matmul %181, %183, %cst_187 {dimension_numbers = #tpu.dot_dimension_numbers<[1], [0], [0], [1], [0, 0, 1, 1], [], []>} : vector<64x32xbf16>, vector<32x32xbf16>, vector<64x32xf32> -> vector<64x32xf32>
    %185 = arith.addf %177, %184 : vector<64x32xf32>
    %c1_188 = arith.constant 1 : index
    %c1_189 = arith.constant 1 : index
    %c1_190 = arith.constant 1 : index
    %c0_191 = arith.constant 0 : index
    %186 = vector.load %arg8[%c1_188, %c1_189, %c1_190, %c0_191] : memref<4x10x10x32xf32, #tpu.memory_space<vmem>>, vector<1x8x8x32xf32>
    %187 = vector.shape_cast %186 : vector<1x8x8x32xf32> to vector<8x8x32xf32>
    %188 = vector.shape_cast %187 : vector<8x8x32xf32> to vector<64x32xf32>
    %189 = arith.truncf %188 : vector<64x32xf32> to vector<64x32xbf16>
    %c1_192 = arith.constant 1 : index
    %c1_193 = arith.constant 1 : index
    %c0_194 = arith.constant 0 : index
    %c0_195 = arith.constant 0 : index
    %190 = vector.load %arg4[%c1_192, %c1_193, %c0_194, %c0_195] : memref<3x3x32x32xbf16, #tpu.memory_space<vmem>>, vector<1x1x32x32xbf16>
    %191 = vector.shape_cast %190 : vector<1x1x32x32xbf16> to vector<32x32xbf16>
    %cst_196 = arith.constant dense<0.000000e+00> : vector<64x32xf32>
    %192 = tpu.matmul %189, %191, %cst_196 {dimension_numbers = #tpu.dot_dimension_numbers<[1], [0], [0], [1], [0, 0, 1, 1], [], []>} : vector<64x32xbf16>, vector<32x32xbf16>, vector<64x32xf32> -> vector<64x32xf32>
    %193 = arith.addf %185, %192 : vector<64x32xf32>
    %c0_197 = arith.constant 0 : index
    %c1_198 = arith.constant 1 : index
    %c2_199 = arith.constant 2 : index
    %c0_200 = arith.constant 0 : index
    %194 = vector.load %arg8[%c0_197, %c1_198, %c2_199, %c0_200] : memref<4x10x10x32xf32, #tpu.memory_space<vmem>>, vector<1x8x8x32xf32>
    %195 = vector.shape_cast %194 : vector<1x8x8x32xf32> to vector<8x8x32xf32>
    %196 = vector.shape_cast %195 : vector<8x8x32xf32> to vector<64x32xf32>
    %197 = arith.truncf %196 : vector<64x32xf32> to vector<64x32xbf16>
    %c1_201 = arith.constant 1 : index
    %c2_202 = arith.constant 2 : index
    %c0_203 = arith.constant 0 : index
    %c0_204 = arith.constant 0 : index
    %198 = vector.load %arg4[%c1_201, %c2_202, %c0_203, %c0_204] : memref<3x3x32x32xbf16, #tpu.memory_space<vmem>>, vector<1x1x32x32xbf16>
    %199 = vector.shape_cast %198 : vector<1x1x32x32xbf16> to vector<32x32xbf16>
    %cst_205 = arith.constant dense<0.000000e+00> : vector<64x32xf32>
    %200 = tpu.matmul %197, %199, %cst_205 {dimension_numbers = #tpu.dot_dimension_numbers<[1], [0], [0], [1], [0, 0, 1, 1], [], []>} : vector<64x32xbf16>, vector<32x32xbf16>, vector<64x32xf32> -> vector<64x32xf32>
    %201 = arith.addf %193, %200 : vector<64x32xf32>
    %c2_206 = arith.constant 2 : index
    %c1_207 = arith.constant 1 : index
    %c1_208 = arith.constant 1 : index
    %c0_209 = arith.constant 0 : index
    %202 = vector.load %arg8[%c2_206, %c1_207, %c1_208, %c0_209] : memref<4x10x10x32xf32, #tpu.memory_space<vmem>>, vector<1x8x8x32xf32>
    %203 = vector.shape_cast %202 : vector<1x8x8x32xf32> to vector<8x8x32xf32>
    %204 = vector.shape_cast %203 : vector<8x8x32xf32> to vector<64x32xf32>
    %205 = arith.truncf %204 : vector<64x32xf32> to vector<64x32xbf16>
    %c2_210 = arith.constant 2 : index
    %c0_211 = arith.constant 0 : index
    %c0_212 = arith.constant 0 : index
    %c0_213 = arith.constant 0 : index
    %206 = vector.load %arg4[%c2_210, %c0_211, %c0_212, %c0_213] : memref<3x3x32x32xbf16, #tpu.memory_space<vmem>>, vector<1x1x32x32xbf16>
    %207 = vector.shape_cast %206 : vector<1x1x32x32xbf16> to vector<32x32xbf16>
    %cst_214 = arith.constant dense<0.000000e+00> : vector<64x32xf32>
    %208 = tpu.matmul %205, %207, %cst_214 {dimension_numbers = #tpu.dot_dimension_numbers<[1], [0], [0], [1], [0, 0, 1, 1], [], []>} : vector<64x32xbf16>, vector<32x32xbf16>, vector<64x32xf32> -> vector<64x32xf32>
    %209 = arith.addf %201, %208 : vector<64x32xf32>
    %c3_215 = arith.constant 3 : index
    %c1_216 = arith.constant 1 : index
    %c1_217 = arith.constant 1 : index
    %c0_218 = arith.constant 0 : index
    %210 = vector.load %arg8[%c3_215, %c1_216, %c1_217, %c0_218] : memref<4x10x10x32xf32, #tpu.memory_space<vmem>>, vector<1x8x8x32xf32>
    %211 = vector.shape_cast %210 : vector<1x8x8x32xf32> to vector<8x8x32xf32>
    %212 = vector.shape_cast %211 : vector<8x8x32xf32> to vector<64x32xf32>
    %213 = arith.truncf %212 : vector<64x32xf32> to vector<64x32xbf16>
    %c2_219 = arith.constant 2 : index
    %c1_220 = arith.constant 1 : index
    %c0_221 = arith.constant 0 : index
    %c0_222 = arith.constant 0 : index
    %214 = vector.load %arg4[%c2_219, %c1_220, %c0_221, %c0_222] : memref<3x3x32x32xbf16, #tpu.memory_space<vmem>>, vector<1x1x32x32xbf16>
    %215 = vector.shape_cast %214 : vector<1x1x32x32xbf16> to vector<32x32xbf16>
    %cst_223 = arith.constant dense<0.000000e+00> : vector<64x32xf32>
    %216 = tpu.matmul %213, %215, %cst_223 {dimension_numbers = #tpu.dot_dimension_numbers<[1], [0], [0], [1], [0, 0, 1, 1], [], []>} : vector<64x32xbf16>, vector<32x32xbf16>, vector<64x32xf32> -> vector<64x32xf32>
    %217 = arith.addf %209, %216 : vector<64x32xf32>
    %c2_224 = arith.constant 2 : index
    %c1_225 = arith.constant 1 : index
    %c2_226 = arith.constant 2 : index
    %c0_227 = arith.constant 0 : index
    %218 = vector.load %arg8[%c2_224, %c1_225, %c2_226, %c0_227] : memref<4x10x10x32xf32, #tpu.memory_space<vmem>>, vector<1x8x8x32xf32>
    %219 = vector.shape_cast %218 : vector<1x8x8x32xf32> to vector<8x8x32xf32>
    %220 = vector.shape_cast %219 : vector<8x8x32xf32> to vector<64x32xf32>
    %221 = arith.truncf %220 : vector<64x32xf32> to vector<64x32xbf16>
    %c2_228 = arith.constant 2 : index
    %c2_229 = arith.constant 2 : index
    %c0_230 = arith.constant 0 : index
    %c0_231 = arith.constant 0 : index
    %222 = vector.load %arg4[%c2_228, %c2_229, %c0_230, %c0_231] : memref<3x3x32x32xbf16, #tpu.memory_space<vmem>>, vector<1x1x32x32xbf16>
    %223 = vector.shape_cast %222 : vector<1x1x32x32xbf16> to vector<32x32xbf16>
    %cst_232 = arith.constant dense<0.000000e+00> : vector<64x32xf32>
    %224 = tpu.matmul %221, %223, %cst_232 {dimension_numbers = #tpu.dot_dimension_numbers<[1], [0], [0], [1], [0, 0, 1, 1], [], []>} : vector<64x32xbf16>, vector<32x32xbf16>, vector<64x32xf32> -> vector<64x32xf32>
    %225 = arith.addf %217, %224 : vector<64x32xf32>
    %226 = vector.broadcast %70 : vector<1x32xf32> to vector<64x32xf32>
    %227 = arith.addf %225, %226 : vector<64x32xf32>
    %228 = arith.addf %227, %73 : vector<64x32xf32>
    %c0_233 = arith.constant 0 : index
    %c1_234 = arith.constant 1 : index
    %c0_235 = arith.constant 0 : index
    %c0_236 = arith.constant 0 : index
    %229 = vector.load %arg7[%c0_233, %c1_234, %c0_235, %c0_236] : memref<1x4x64x32xf32, #tpu.memory_space<vmem>>, vector<1x1x64x32xf32>
    %230 = vector.shape_cast %229 : vector<1x1x64x32xf32> to vector<64x32xf32>
    %231 = vector.shape_cast %228 : vector<64x32xf32> to vector<1x1x64x32xf32>
    tpu.vector_store %arg7[%c0_233, %c1_234, %c0_235, %c0_236], %231 {strides = array<i32>} : memref<1x4x64x32xf32, #tpu.memory_space<vmem>>, vector<1x1x64x32xf32>,
    %cst_237 = arith.constant 0.000000e+00 : f32
    %232 = vector.broadcast %cst_237 : f32 to vector<64x32xf32>
    %c1_238 = arith.constant 1 : index
    %c1_239 = arith.constant 1 : index
    %c0_240 = arith.constant 0 : index
    %c0_241 = arith.constant 0 : index
    %233 = vector.load %arg8[%c1_238, %c1_239, %c0_240, %c0_241] : memref<4x10x10x32xf32, #tpu.memory_space<vmem>>, vector<1x8x8x32xf32>
    %234 = vector.shape_cast %233 : vector<1x8x8x32xf32> to vector<8x8x32xf32>
    %235 = vector.shape_cast %234 : vector<8x8x32xf32> to vector<64x32xf32>
    %236 = arith.truncf %235 : vector<64x32xf32> to vector<64x32xbf16>
    %c0_242 = arith.constant 0 : index
    %c0_243 = arith.constant 0 : index
    %c0_244 = arith.constant 0 : index
    %c0_245 = arith.constant 0 : index
    %237 = vector.load %arg4[%c0_242, %c0_243, %c0_244, %c0_245] : memref<3x3x32x32xbf16, #tpu.memory_space<vmem>>, vector<1x1x32x32xbf16>
    %238 = vector.shape_cast %237 : vector<1x1x32x32xbf16> to vector<32x32xbf16>
    %cst_246 = arith.constant dense<0.000000e+00> : vector<64x32xf32>
    %239 = tpu.matmul %236, %238, %cst_246 {dimension_numbers = #tpu.dot_dimension_numbers<[1], [0], [0], [1], [0, 0, 1, 1], [], []>} : vector<64x32xbf16>, vector<32x32xbf16>, vector<64x32xf32> -> vector<64x32xf32>
    %240 = arith.addf %232, %239 : vector<64x32xf32>
    %c0_247 = arith.constant 0 : index
    %c1_248 = arith.constant 1 : index
    %c1_249 = arith.constant 1 : index
    %c0_250 = arith.constant 0 : index
    %241 = vector.load %arg8[%c0_247, %c1_248, %c1_249, %c0_250] : memref<4x10x10x32xf32, #tpu.memory_space<vmem>>, vector<1x8x8x32xf32>
    %242 = vector.shape_cast %241 : vector<1x8x8x32xf32> to vector<8x8x32xf32>
    %243 = vector.shape_cast %242 : vector<8x8x32xf32> to vector<64x32xf32>
    %244 = arith.truncf %243 : vector<64x32xf32> to vector<64x32xbf16>
    %c0_251 = arith.constant 0 : index
    %c1_252 = arith.constant 1 : index
    %c0_253 = arith.constant 0 : index
    %c0_254 = arith.constant 0 : index
    %245 = vector.load %arg4[%c0_251, %c1_252, %c0_253, %c0_254] : memref<3x3x32x32xbf16, #tpu.memory_space<vmem>>, vector<1x1x32x32xbf16>
    %246 = vector.shape_cast %245 : vector<1x1x32x32xbf16> to vector<32x32xbf16>
    %cst_255 = arith.constant dense<0.000000e+00> : vector<64x32xf32>
    %247 = tpu.matmul %244, %246, %cst_255 {dimension_numbers = #tpu.dot_dimension_numbers<[1], [0], [0], [1], [0, 0, 1, 1], [], []>} : vector<64x32xbf16>, vector<32x32xbf16>, vector<64x32xf32> -> vector<64x32xf32>
    %248 = arith.addf %240, %247 : vector<64x32xf32>
    %c1_256 = arith.constant 1 : index
    %c1_257 = arith.constant 1 : index
    %c1_258 = arith.constant 1 : index
    %c0_259 = arith.constant 0 : index
    %249 = vector.load %arg8[%c1_256, %c1_257, %c1_258, %c0_259] : memref<4x10x10x32xf32, #tpu.memory_space<vmem>>, vector<1x8x8x32xf32>
    %250 = vector.shape_cast %249 : vector<1x8x8x32xf32> to vector<8x8x32xf32>
    %251 = vector.shape_cast %250 : vector<8x8x32xf32> to vector<64x32xf32>
    %252 = arith.truncf %251 : vector<64x32xf32> to vector<64x32xbf16>
    %c0_260 = arith.constant 0 : index
    %c2_261 = arith.constant 2 : index
    %c0_262 = arith.constant 0 : index
    %c0_263 = arith.constant 0 : index
    %253 = vector.load %arg4[%c0_260, %c2_261, %c0_262, %c0_263] : memref<3x3x32x32xbf16, #tpu.memory_space<vmem>>, vector<1x1x32x32xbf16>
    %254 = vector.shape_cast %253 : vector<1x1x32x32xbf16> to vector<32x32xbf16>
    %cst_264 = arith.constant dense<0.000000e+00> : vector<64x32xf32>
    %255 = tpu.matmul %252, %254, %cst_264 {dimension_numbers = #tpu.dot_dimension_numbers<[1], [0], [0], [1], [0, 0, 1, 1], [], []>} : vector<64x32xbf16>, vector<32x32xbf16>, vector<64x32xf32> -> vector<64x32xf32>
    %256 = arith.addf %248, %255 : vector<64x32xf32>
    %c3_265 = arith.constant 3 : index
    %c1_266 = arith.constant 1 : index
    %c0_267 = arith.constant 0 : index
    %c0_268 = arith.constant 0 : index
    %257 = vector.load %arg8[%c3_265, %c1_266, %c0_267, %c0_268] : memref<4x10x10x32xf32, #tpu.memory_space<vmem>>, vector<1x8x8x32xf32>
    %258 = vector.shape_cast %257 : vector<1x8x8x32xf32> to vector<8x8x32xf32>
    %259 = vector.shape_cast %258 : vector<8x8x32xf32> to vector<64x32xf32>
    %260 = arith.truncf %259 : vector<64x32xf32> to vector<64x32xbf16>
    %c1_269 = arith.constant 1 : index
    %c0_270 = arith.constant 0 : index
    %c0_271 = arith.constant 0 : index
    %c0_272 = arith.constant 0 : index
    %261 = vector.load %arg4[%c1_269, %c0_270, %c0_271, %c0_272] : memref<3x3x32x32xbf16, #tpu.memory_space<vmem>>, vector<1x1x32x32xbf16>
    %262 = vector.shape_cast %261 : vector<1x1x32x32xbf16> to vector<32x32xbf16>
    %cst_273 = arith.constant dense<0.000000e+00> : vector<64x32xf32>
    %263 = tpu.matmul %260, %262, %cst_273 {dimension_numbers = #tpu.dot_dimension_numbers<[1], [0], [0], [1], [0, 0, 1, 1], [], []>} : vector<64x32xbf16>, vector<32x32xbf16>, vector<64x32xf32> -> vector<64x32xf32>
    %264 = arith.addf %256, %263 : vector<64x32xf32>
    %c2_274 = arith.constant 2 : index
    %c1_275 = arith.constant 1 : index
    %c1_276 = arith.constant 1 : index
    %c0_277 = arith.constant 0 : index
    %265 = vector.load %arg8[%c2_274, %c1_275, %c1_276, %c0_277] : memref<4x10x10x32xf32, #tpu.memory_space<vmem>>, vector<1x8x8x32xf32>
    %266 = vector.shape_cast %265 : vector<1x8x8x32xf32> to vector<8x8x32xf32>
    %267 = vector.shape_cast %266 : vector<8x8x32xf32> to vector<64x32xf32>
    %268 = arith.truncf %267 : vector<64x32xf32> to vector<64x32xbf16>
    %c1_278 = arith.constant 1 : index
    %c1_279 = arith.constant 1 : index
    %c0_280 = arith.constant 0 : index
    %c0_281 = arith.constant 0 : index
    %269 = vector.load %arg4[%c1_278, %c1_279, %c0_280, %c0_281] : memref<3x3x32x32xbf16, #tpu.memory_space<vmem>>, vector<1x1x32x32xbf16>
    %270 = vector.shape_cast %269 : vector<1x1x32x32xbf16> to vector<32x32xbf16>
    %cst_282 = arith.constant dense<0.000000e+00> : vector<64x32xf32>
    %271 = tpu.matmul %268, %270, %cst_282 {dimension_numbers = #tpu.dot_dimension_numbers<[1], [0], [0], [1], [0, 0, 1, 1], [], []>} : vector<64x32xbf16>, vector<32x32xbf16>, vector<64x32xf32> -> vector<64x32xf32>
    %272 = arith.addf %264, %271 : vector<64x32xf32>
    %c3_283 = arith.constant 3 : index
    %c1_284 = arith.constant 1 : index
    %c1_285 = arith.constant 1 : index
    %c0_286 = arith.constant 0 : index
    %273 = vector.load %arg8[%c3_283, %c1_284, %c1_285, %c0_286] : memref<4x10x10x32xf32, #tpu.memory_space<vmem>>, vector<1x8x8x32xf32>
    %274 = vector.shape_cast %273 : vector<1x8x8x32xf32> to vector<8x8x32xf32>
    %275 = vector.shape_cast %274 : vector<8x8x32xf32> to vector<64x32xf32>
    %276 = arith.truncf %275 : vector<64x32xf32> to vector<64x32xbf16>
    %c1_287 = arith.constant 1 : index
    %c2_288 = arith.constant 2 : index
    %c0_289 = arith.constant 0 : index
    %c0_290 = arith.constant 0 : index
    %277 = vector.load %arg4[%c1_287, %c2_288, %c0_289, %c0_290] : memref<3x3x32x32xbf16, #tpu.memory_space<vmem>>, vector<1x1x32x32xbf16>
    %278 = vector.shape_cast %277 : vector<1x1x32x32xbf16> to vector<32x32xbf16>
    %cst_291 = arith.constant dense<0.000000e+00> : vector<64x32xf32>
    %279 = tpu.matmul %276, %278, %cst_291 {dimension_numbers = #tpu.dot_dimension_numbers<[1], [0], [0], [1], [0, 0, 1, 1], [], []>} : vector<64x32xbf16>, vector<32x32xbf16>, vector<64x32xf32> -> vector<64x32xf32>
    %280 = arith.addf %272, %279 : vector<64x32xf32>
    %c1_292 = arith.constant 1 : index
    %c2_293 = arith.constant 2 : index
    %c0_294 = arith.constant 0 : index
    %c0_295 = arith.constant 0 : index
    %281 = vector.load %arg8[%c1_292, %c2_293, %c0_294, %c0_295] : memref<4x10x10x32xf32, #tpu.memory_space<vmem>>, vector<1x8x8x32xf32>
    %282 = vector.shape_cast %281 : vector<1x8x8x32xf32> to vector<8x8x32xf32>
    %283 = vector.shape_cast %282 : vector<8x8x32xf32> to vector<64x32xf32>
    %284 = arith.truncf %283 : vector<64x32xf32> to vector<64x32xbf16>
    %c2_296 = arith.constant 2 : index
    %c0_297 = arith.constant 0 : index
    %c0_298 = arith.constant 0 : index
    %c0_299 = arith.constant 0 : index
    %285 = vector.load %arg4[%c2_296, %c0_297, %c0_298, %c0_299] : memref<3x3x32x32xbf16, #tpu.memory_space<vmem>>, vector<1x1x32x32xbf16>
    %286 = vector.shape_cast %285 : vector<1x1x32x32xbf16> to vector<32x32xbf16>
    %cst_300 = arith.constant dense<0.000000e+00> : vector<64x32xf32>
    %287 = tpu.matmul %284, %286, %cst_300 {dimension_numbers = #tpu.dot_dimension_numbers<[1], [0], [0], [1], [0, 0, 1, 1], [], []>} : vector<64x32xbf16>, vector<32x32xbf16>, vector<64x32xf32> -> vector<64x32xf32>
    %288 = arith.addf %280, %287 : vector<64x32xf32>
    %c0_301 = arith.constant 0 : index
    %c2_302 = arith.constant 2 : index
    %c1_303 = arith.constant 1 : index
    %c0_304 = arith.constant 0 : index
    %289 = vector.load %arg8[%c0_301, %c2_302, %c1_303, %c0_304] : memref<4x10x10x32xf32, #tpu.memory_space<vmem>>, vector<1x8x8x32xf32>
    %290 = vector.shape_cast %289 : vector<1x8x8x32xf32> to vector<8x8x32xf32>
    %291 = vector.shape_cast %290 : vector<8x8x32xf32> to vector<64x32xf32>
    %292 = arith.truncf %291 : vector<64x32xf32> to vector<64x32xbf16>
    %c2_305 = arith.constant 2 : index
    %c1_306 = arith.constant 1 : index
    %c0_307 = arith.constant 0 : index
    %c0_308 = arith.constant 0 : index
    %293 = vector.load %arg4[%c2_305, %c1_306, %c0_307, %c0_308] : memref<3x3x32x32xbf16, #tpu.memory_space<vmem>>, vector<1x1x32x32xbf16>
    %294 = vector.shape_cast %293 : vector<1x1x32x32xbf16> to vector<32x32xbf16>
    %cst_309 = arith.constant dense<0.000000e+00> : vector<64x32xf32>
    %295 = tpu.matmul %292, %294, %cst_309 {dimension_numbers = #tpu.dot_dimension_numbers<[1], [0], [0], [1], [0, 0, 1, 1], [], []>} : vector<64x32xbf16>, vector<32x32xbf16>, vector<64x32xf32> -> vector<64x32xf32>
    %296 = arith.addf %288, %295 : vector<64x32xf32>
    %c1_310 = arith.constant 1 : index
    %c2_311 = arith.constant 2 : index
    %c1_312 = arith.constant 1 : index
    %c0_313 = arith.constant 0 : index
    %297 = vector.load %arg8[%c1_310, %c2_311, %c1_312, %c0_313] : memref<4x10x10x32xf32, #tpu.memory_space<vmem>>, vector<1x8x8x32xf32>
    %298 = vector.shape_cast %297 : vector<1x8x8x32xf32> to vector<8x8x32xf32>
    %299 = vector.shape_cast %298 : vector<8x8x32xf32> to vector<64x32xf32>
    %300 = arith.truncf %299 : vector<64x32xf32> to vector<64x32xbf16>
    %c2_314 = arith.constant 2 : index
    %c2_315 = arith.constant 2 : index
    %c0_316 = arith.constant 0 : index
    %c0_317 = arith.constant 0 : index
    %301 = vector.load %arg4[%c2_314, %c2_315, %c0_316, %c0_317] : memref<3x3x32x32xbf16, #tpu.memory_space<vmem>>, vector<1x1x32x32xbf16>
    %302 = vector.shape_cast %301 : vector<1x1x32x32xbf16> to vector<32x32xbf16>
    %cst_318 = arith.constant dense<0.000000e+00> : vector<64x32xf32>
    %303 = tpu.matmul %300, %302, %cst_318 {dimension_numbers = #tpu.dot_dimension_numbers<[1], [0], [0], [1], [0, 0, 1, 1], [], []>} : vector<64x32xbf16>, vector<32x32xbf16>, vector<64x32xf32> -> vector<64x32xf32>
    %304 = arith.addf %296, %303 : vector<64x32xf32>
    %305 = vector.broadcast %70 : vector<1x32xf32> to vector<64x32xf32>
    %306 = arith.addf %304, %305 : vector<64x32xf32>
    %307 = arith.addf %306, %73 : vector<64x32xf32>
    %c0_319 = arith.constant 0 : index
    %c2_320 = arith.constant 2 : index
    %c0_321 = arith.constant 0 : index
    %c0_322 = arith.constant 0 : index
    %308 = vector.load %arg7[%c0_319, %c2_320, %c0_321, %c0_322] : memref<1x4x64x32xf32, #tpu.memory_space<vmem>>, vector<1x1x64x32xf32>
    %309 = vector.shape_cast %308 : vector<1x1x64x32xf32> to vector<64x32xf32>
    %310 = vector.shape_cast %307 : vector<64x32xf32> to vector<1x1x64x32xf32>
    tpu.vector_store %arg7[%c0_319, %c2_320, %c0_321, %c0_322], %310 {strides = array<i32>} : memref<1x4x64x32xf32, #tpu.memory_space<vmem>>, vector<1x1x64x32xf32>,
    %cst_323 = arith.constant 0.000000e+00 : f32
    %311 = vector.broadcast %cst_323 : f32 to vector<64x32xf32>
    %c0_324 = arith.constant 0 : index
    %c1_325 = arith.constant 1 : index
    %c1_326 = arith.constant 1 : index
    %c0_327 = arith.constant 0 : index
    %312 = vector.load %arg8[%c0_324, %c1_325, %c1_326, %c0_327] : memref<4x10x10x32xf32, #tpu.memory_space<vmem>>, vector<1x8x8x32xf32>
    %313 = vector.shape_cast %312 : vector<1x8x8x32xf32> to vector<8x8x32xf32>
    %314 = vector.shape_cast %313 : vector<8x8x32xf32> to vector<64x32xf32>
    %315 = arith.truncf %314 : vector<64x32xf32> to vector<64x32xbf16>
    %c0_328 = arith.constant 0 : index
    %c0_329 = arith.constant 0 : index
    %c0_330 = arith.constant 0 : index
    %c0_331 = arith.constant 0 : index
    %316 = vector.load %arg4[%c0_328, %c0_329, %c0_330, %c0_331] : memref<3x3x32x32xbf16, #tpu.memory_space<vmem>>, vector<1x1x32x32xbf16>
    %317 = vector.shape_cast %316 : vector<1x1x32x32xbf16> to vector<32x32xbf16>
    %cst_332 = arith.constant dense<0.000000e+00> : vector<64x32xf32>
    %318 = tpu.matmul %315, %317, %cst_332 {dimension_numbers = #tpu.dot_dimension_numbers<[1], [0], [0], [1], [0, 0, 1, 1], [], []>} : vector<64x32xbf16>, vector<32x32xbf16>, vector<64x32xf32> -> vector<64x32xf32>
    %319 = arith.addf %311, %318 : vector<64x32xf32>
    %c1_333 = arith.constant 1 : index
    %c1_334 = arith.constant 1 : index
    %c1_335 = arith.constant 1 : index
    %c0_336 = arith.constant 0 : index
    %320 = vector.load %arg8[%c1_333, %c1_334, %c1_335, %c0_336] : memref<4x10x10x32xf32, #tpu.memory_space<vmem>>, vector<1x8x8x32xf32>
    %321 = vector.shape_cast %320 : vector<1x8x8x32xf32> to vector<8x8x32xf32>
    %322 = vector.shape_cast %321 : vector<8x8x32xf32> to vector<64x32xf32>
    %323 = arith.truncf %322 : vector<64x32xf32> to vector<64x32xbf16>
    %c0_337 = arith.constant 0 : index
    %c1_338 = arith.constant 1 : index
    %c0_339 = arith.constant 0 : index
    %c0_340 = arith.constant 0 : index
    %324 = vector.load %arg4[%c0_337, %c1_338, %c0_339, %c0_340] : memref<3x3x32x32xbf16, #tpu.memory_space<vmem>>, vector<1x1x32x32xbf16>
    %325 = vector.shape_cast %324 : vector<1x1x32x32xbf16> to vector<32x32xbf16>
    %cst_341 = arith.constant dense<0.000000e+00> : vector<64x32xf32>
    %326 = tpu.matmul %323, %325, %cst_341 {dimension_numbers = #tpu.dot_dimension_numbers<[1], [0], [0], [1], [0, 0, 1, 1], [], []>} : vector<64x32xbf16>, vector<32x32xbf16>, vector<64x32xf32> -> vector<64x32xf32>
    %327 = arith.addf %319, %326 : vector<64x32xf32>
    %c0_342 = arith.constant 0 : index
    %c1_343 = arith.constant 1 : index
    %c2_344 = arith.constant 2 : index
    %c0_345 = arith.constant 0 : index
    %328 = vector.load %arg8[%c0_342, %c1_343, %c2_344, %c0_345] : memref<4x10x10x32xf32, #tpu.memory_space<vmem>>, vector<1x8x8x32xf32>
    %329 = vector.shape_cast %328 : vector<1x8x8x32xf32> to vector<8x8x32xf32>
    %330 = vector.shape_cast %329 : vector<8x8x32xf32> to vector<64x32xf32>
    %331 = arith.truncf %330 : vector<64x32xf32> to vector<64x32xbf16>
    %c0_346 = arith.constant 0 : index
    %c2_347 = arith.constant 2 : index
    %c0_348 = arith.constant 0 : index
    %c0_349 = arith.constant 0 : index
    %332 = vector.load %arg4[%c0_346, %c2_347, %c0_348, %c0_349] : memref<3x3x32x32xbf16, #tpu.memory_space<vmem>>, vector<1x1x32x32xbf16>
    %333 = vector.shape_cast %332 : vector<1x1x32x32xbf16> to vector<32x32xbf16>
    %cst_350 = arith.constant dense<0.000000e+00> : vector<64x32xf32>
    %334 = tpu.matmul %331, %333, %cst_350 {dimension_numbers = #tpu.dot_dimension_numbers<[1], [0], [0], [1], [0, 0, 1, 1], [], []>} : vector<64x32xbf16>, vector<32x32xbf16>, vector<64x32xf32> -> vector<64x32xf32>
    %335 = arith.addf %327, %334 : vector<64x32xf32>
    %c2_351 = arith.constant 2 : index
    %c1_352 = arith.constant 1 : index
    %c1_353 = arith.constant 1 : index
    %c0_354 = arith.constant 0 : index
    %336 = vector.load %arg8[%c2_351, %c1_352, %c1_353, %c0_354] : memref<4x10x10x32xf32, #tpu.memory_space<vmem>>, vector<1x8x8x32xf32>
    %337 = vector.shape_cast %336 : vector<1x8x8x32xf32> to vector<8x8x32xf32>
    %338 = vector.shape_cast %337 : vector<8x8x32xf32> to vector<64x32xf32>
    %339 = arith.truncf %338 : vector<64x32xf32> to vector<64x32xbf16>
    %c1_355 = arith.constant 1 : index
    %c0_356 = arith.constant 0 : index
    %c0_357 = arith.constant 0 : index
    %c0_358 = arith.constant 0 : index
    %340 = vector.load %arg4[%c1_355, %c0_356, %c0_357, %c0_358] : memref<3x3x32x32xbf16, #tpu.memory_space<vmem>>, vector<1x1x32x32xbf16>
    %341 = vector.shape_cast %340 : vector<1x1x32x32xbf16> to vector<32x32xbf16>
    %cst_359 = arith.constant dense<0.000000e+00> : vector<64x32xf32>
    %342 = tpu.matmul %339, %341, %cst_359 {dimension_numbers = #tpu.dot_dimension_numbers<[1], [0], [0], [1], [0, 0, 1, 1], [], []>} : vector<64x32xbf16>, vector<32x32xbf16>, vector<64x32xf32> -> vector<64x32xf32>
    %343 = arith.addf %335, %342 : vector<64x32xf32>
    %c3_360 = arith.constant 3 : index
    %c1_361 = arith.constant 1 : index
    %c1_362 = arith.constant 1 : index
    %c0_363 = arith.constant 0 : index
    %344 = vector.load %arg8[%c3_360, %c1_361, %c1_362, %c0_363] : memref<4x10x10x32xf32, #tpu.memory_space<vmem>>, vector<1x8x8x32xf32>
    %345 = vector.shape_cast %344 : vector<1x8x8x32xf32> to vector<8x8x32xf32>
    %346 = vector.shape_cast %345 : vector<8x8x32xf32> to vector<64x32xf32>
    %347 = arith.truncf %346 : vector<64x32xf32> to vector<64x32xbf16>
    %c1_364 = arith.constant 1 : index
    %c1_365 = arith.constant 1 : index
    %c0_366 = arith.constant 0 : index
    %c0_367 = arith.constant 0 : index
    %348 = vector.load %arg4[%c1_364, %c1_365, %c0_366, %c0_367] : memref<3x3x32x32xbf16, #tpu.memory_space<vmem>>, vector<1x1x32x32xbf16>
    %349 = vector.shape_cast %348 : vector<1x1x32x32xbf16> to vector<32x32xbf16>
    %cst_368 = arith.constant dense<0.000000e+00> : vector<64x32xf32>
    %350 = tpu.matmul %347, %349, %cst_368 {dimension_numbers = #tpu.dot_dimension_numbers<[1], [0], [0], [1], [0, 0, 1, 1], [], []>} : vector<64x32xbf16>, vector<32x32xbf16>, vector<64x32xf32> -> vector<64x32xf32>
    %351 = arith.addf %343, %350 : vector<64x32xf32>
    %c2_369 = arith.constant 2 : index
    %c1_370 = arith.constant 1 : index
    %c2_371 = arith.constant 2 : index
    %c0_372 = arith.constant 0 : index
    %352 = vector.load %arg8[%c2_369, %c1_370, %c2_371, %c0_372] : memref<4x10x10x32xf32, #tpu.memory_space<vmem>>, vector<1x8x8x32xf32>
    %353 = vector.shape_cast %352 : vector<1x8x8x32xf32> to vector<8x8x32xf32>
    %354 = vector.shape_cast %353 : vector<8x8x32xf32> to vector<64x32xf32>
    %355 = arith.truncf %354 : vector<64x32xf32> to vector<64x32xbf16>
    %c1_373 = arith.constant 1 : index
    %c2_374 = arith.constant 2 : index
    %c0_375 = arith.constant 0 : index
    %c0_376 = arith.constant 0 : index
    %356 = vector.load %arg4[%c1_373, %c2_374, %c0_375, %c0_376] : memref<3x3x32x32xbf16, #tpu.memory_space<vmem>>, vector<1x1x32x32xbf16>
    %357 = vector.shape_cast %356 : vector<1x1x32x32xbf16> to vector<32x32xbf16>
    %cst_377 = arith.constant dense<0.000000e+00> : vector<64x32xf32>
    %358 = tpu.matmul %355, %357, %cst_377 {dimension_numbers = #tpu.dot_dimension_numbers<[1], [0], [0], [1], [0, 0, 1, 1], [], []>} : vector<64x32xbf16>, vector<32x32xbf16>, vector<64x32xf32> -> vector<64x32xf32>
    %359 = arith.addf %351, %358 : vector<64x32xf32>
    %c0_378 = arith.constant 0 : index
    %c2_379 = arith.constant 2 : index
    %c1_380 = arith.constant 1 : index
    %c0_381 = arith.constant 0 : index
    %360 = vector.load %arg8[%c0_378, %c2_379, %c1_380, %c0_381] : memref<4x10x10x32xf32, #tpu.memory_space<vmem>>, vector<1x8x8x32xf32>
    %361 = vector.shape_cast %360 : vector<1x8x8x32xf32> to vector<8x8x32xf32>
    %362 = vector.shape_cast %361 : vector<8x8x32xf32> to vector<64x32xf32>
    %363 = arith.truncf %362 : vector<64x32xf32> to vector<64x32xbf16>
    %c2_382 = arith.constant 2 : index
    %c0_383 = arith.constant 0 : index
    %c0_384 = arith.constant 0 : index
    %c0_385 = arith.constant 0 : index
    %364 = vector.load %arg4[%c2_382, %c0_383, %c0_384, %c0_385] : memref<3x3x32x32xbf16, #tpu.memory_space<vmem>>, vector<1x1x32x32xbf16>
    %365 = vector.shape_cast %364 : vector<1x1x32x32xbf16> to vector<32x32xbf16>
    %cst_386 = arith.constant dense<0.000000e+00> : vector<64x32xf32>
    %366 = tpu.matmul %363, %365, %cst_386 {dimension_numbers = #tpu.dot_dimension_numbers<[1], [0], [0], [1], [0, 0, 1, 1], [], []>} : vector<64x32xbf16>, vector<32x32xbf16>, vector<64x32xf32> -> vector<64x32xf32>
    %367 = arith.addf %359, %366 : vector<64x32xf32>
    %c1_387 = arith.constant 1 : index
    %c2_388 = arith.constant 2 : index
    %c1_389 = arith.constant 1 : index
    %c0_390 = arith.constant 0 : index
    %368 = vector.load %arg8[%c1_387, %c2_388, %c1_389, %c0_390] : memref<4x10x10x32xf32, #tpu.memory_space<vmem>>, vector<1x8x8x32xf32>
    %369 = vector.shape_cast %368 : vector<1x8x8x32xf32> to vector<8x8x32xf32>
    %370 = vector.shape_cast %369 : vector<8x8x32xf32> to vector<64x32xf32>
    %371 = arith.truncf %370 : vector<64x32xf32> to vector<64x32xbf16>
    %c2_391 = arith.constant 2 : index
    %c1_392 = arith.constant 1 : index
    %c0_393 = arith.constant 0 : index
    %c0_394 = arith.constant 0 : index
    %372 = vector.load %arg4[%c2_391, %c1_392, %c0_393, %c0_394] : memref<3x3x32x32xbf16, #tpu.memory_space<vmem>>, vector<1x1x32x32xbf16>
    %373 = vector.shape_cast %372 : vector<1x1x32x32xbf16> to vector<32x32xbf16>
    %cst_395 = arith.constant dense<0.000000e+00> : vector<64x32xf32>
    %374 = tpu.matmul %371, %373, %cst_395 {dimension_numbers = #tpu.dot_dimension_numbers<[1], [0], [0], [1], [0, 0, 1, 1], [], []>} : vector<64x32xbf16>, vector<32x32xbf16>, vector<64x32xf32> -> vector<64x32xf32>
    %375 = arith.addf %367, %374 : vector<64x32xf32>
    %c0_396 = arith.constant 0 : index
    %c2_397 = arith.constant 2 : index
    %c2_398 = arith.constant 2 : index
    %c0_399 = arith.constant 0 : index
    %376 = vector.load %arg8[%c0_396, %c2_397, %c2_398, %c0_399] : memref<4x10x10x32xf32, #tpu.memory_space<vmem>>, vector<1x8x8x32xf32>
    %377 = vector.shape_cast %376 : vector<1x8x8x32xf32> to vector<8x8x32xf32>
    %378 = vector.shape_cast %377 : vector<8x8x32xf32> to vector<64x32xf32>
    %379 = arith.truncf %378 : vector<64x32xf32> to vector<64x32xbf16>
    %c2_400 = arith.constant 2 : index
    %c2_401 = arith.constant 2 : index
    %c0_402 = arith.constant 0 : index
    %c0_403 = arith.constant 0 : index
    %380 = vector.load %arg4[%c2_400, %c2_401, %c0_402, %c0_403] : memref<3x3x32x32xbf16, #tpu.memory_space<vmem>>, vector<1x1x32x32xbf16>
    %381 = vector.shape_cast %380 : vector<1x1x32x32xbf16> to vector<32x32xbf16>
    %cst_404 = arith.constant dense<0.000000e+00> : vector<64x32xf32>
    %382 = tpu.matmul %379, %381, %cst_404 {dimension_numbers = #tpu.dot_dimension_numbers<[1], [0], [0], [1], [0, 0, 1, 1], [], []>} : vector<64x32xbf16>, vector<32x32xbf16>, vector<64x32xf32> -> vector<64x32xf32>
    %383 = arith.addf %375, %382 : vector<64x32xf32>
    %384 = vector.broadcast %70 : vector<1x32xf32> to vector<64x32xf32>
    %385 = arith.addf %383, %384 : vector<64x32xf32>
    %386 = arith.addf %385, %73 : vector<64x32xf32>
    %c0_405 = arith.constant 0 : index
    %c3_406 = arith.constant 3 : index
    %c0_407 = arith.constant 0 : index
    %c0_408 = arith.constant 0 : index
    %387 = vector.load %arg7[%c0_405, %c3_406, %c0_407, %c0_408] : memref<1x4x64x32xf32, #tpu.memory_space<vmem>>, vector<1x1x64x32xf32>
    %388 = vector.shape_cast %387 : vector<1x1x64x32xf32> to vector<64x32xf32>
    %389 = vector.shape_cast %386 : vector<64x32xf32> to vector<1x1x64x32xf32>
    tpu.vector_store %arg7[%c0_405, %c3_406, %c0_407, %c0_408], %389 {strides = array<i32>} : memref<1x4x64x32xf32, #tpu.memory_space<vmem>>, vector<1x1x64x32xf32>,
    return
  }
  func.func @transform_0(%arg0: i32) -> (i32, i32, i32, i32) {
    %c0_i32 = arith.constant 0 : i32
    %c0_i32_0 = arith.constant 0 : i32
    %c0_i32_1 = arith.constant 0 : i32
    %c0_i32_2 = arith.constant 0 : i32
    return %arg0, %c0_i32, %c0_i32_0, %c0_i32_1 : i32, i32, i32, i32
  }
  func.func @transform_1(%arg0: i32) -> (i32, i32, i32) {
    %c0_i32 = arith.constant 0 : i32
    %c0_i32_0 = arith.constant 0 : i32
    %c0_i32_1 = arith.constant 0 : i32
    return %arg0, %c0_i32, %c0_i32_0 : i32, i32, i32
  }
  func.func @transform_2(%arg0: i32) -> (i32, i32, i32) {
    %c0_i32 = arith.constant 0 : i32
    %c0_i32_0 = arith.constant 0 : i32
    %c0_i32_1 = arith.constant 0 : i32
    return %arg0, %c0_i32, %c0_i32_0 : i32, i32, i32
  }
  func.func @transform_3(%arg0: i32) -> (i32, i32, i32, i32) {
    %c0_i32 = arith.constant 0 : i32
    %c0_i32_0 = arith.constant 0 : i32
    %c0_i32_1 = arith.constant 0 : i32
    %c0_i32_2 = arith.constant 0 : i32
    %c0_i32_3 = arith.constant 0 : i32
    return %c0_i32, %c0_i32_0, %c0_i32_1, %c0_i32_2 : i32, i32, i32, i32
  }
  func.func @transform_4(%arg0: i32) -> (i32, i32) {
    %c0_i32 = arith.constant 0 : i32
    %c0_i32_0 = arith.constant 0 : i32
    %c0_i32_1 = arith.constant 0 : i32
    return %c0_i32, %c0_i32_0 : i32, i32
  }
  func.func @transform_5(%arg0: i32) -> (i32, i32, i32) {
    %c0_i32 = arith.constant 0 : i32
    %c0_i32_0 = arith.constant 0 : i32
    %c0_i32_1 = arith.constant 0 : i32
    return %arg0, %c0_i32, %c0_i32_0 : i32, i32, i32
  }
  func.func @transform_6(%arg0: i32) -> (i32, i32, i32, i32) {
    %c0_i32 = arith.constant 0 : i32
    %c0_i32_0 = arith.constant 0 : i32
    %c0_i32_1 = arith.constant 0 : i32
    %c0_i32_2 = arith.constant 0 : i32
    return %arg0, %c0_i32, %c0_i32_0, %c0_i32_1 : i32, i32, i32, i32
  }
}

</mosaic_0001>

<llo_original>
// kernel: biggan_generator_block.3
$region0: #{biggan_generator_block.3}
  #allocation0 [shape = 'u32[]', space=smem, size = 0x4, offset = 0x4, fixed_abs, tag = 'smem constant byte address 0x4 - core index']
  #allocation1 [shape = 'u32[72,128]{1,0:T(1,128)}', space=vmem, size = 0x9000, scoped, tag = 'internal scratch']
  %s0 = inlined_call_operand.hbm [shape: f32[128,16], index: 0, kind: input, shape index: {}]
  %s1 = inlined_call_operand.vmem [shape: bf16[16,32], index: 1, kind: input, shape index: {}]
  %s2 = inlined_call_operand.vmem [shape: f32[1,32], index: 2, kind: input, shape index: {}]
  %s3 = inlined_call_operand.vmem [shape: f32[1,1,16], index: 3, kind: output, shape index: {0}]
  %s4 = inlined_call_operand.vmem [shape: f32[1,1,16], index: 4, kind: output, shape index: {1}]
  %s5 = inlined_call_operand.vmem [shape: bf16[128,32], index: 5, kind: output, shape index: {2}]
  %6 = xla_tuple %s3, %s4, %s5
  %s7 = sld [smem:[#allocation0]]
  $region42: #{biggan_generator_block.3} parent=0
    _
  %s9 = ssub.s32 1, %s7
  %s10 = scalar_select 0, %s9, %s7
  $region1: #{biggan_generator_block.3} parent=0
    #allocation2 [shape = 'u8[65536]{0}', space=vmem, size = 0x10000, scoped, tag = 'input window, operand 0, single buffered']
    #allocation3 [shape = 's32[1]{0}', space=sflag, size = 0x4, scoped, tag = 'scoped memory for biggan_generator_block.3']
    %11 = vsyncpa [#allocation3], 0
    // Predicated region
    $region2: #{biggan_generator_block.3} parent=1 // pred_check
      _
    $region3: #{biggan_generator_block.3} parent=1 // pred_check_branch
      %13 = sbr.rel (0) target = $region5
    $region4: #{biggan_generator_block.3} parent=1 // pred_region
      %15 = vsyncadd [#allocation3], 0
      %s16 = sshll.u32 %s0, 4
      %s17 = int_to_ptr.hbm [resolvable:$true] %s16
      %s18 = sshll.u32 [#allocation2], 4
      %s19 = int_to_ptr.vmem [resolvable:$true] %s18
      %24 = dma.hbm_to_vmem [thread:$0]  %s17, 2048, %s19, [#allocation3], 128, 128, 8
    $region5: #{biggan_generator_block.3} parent=1 // pred_fallthru
      _
    // Predicated region
    $region6: #{biggan_generator_block.3} parent=1 // pred_check
      _
    $region7: #{biggan_generator_block.3} parent=1 // pred_check_branch
      %26 = sbr.rel (0) target = $region9
    $region8: #{biggan_generator_block.3} parent=1 // pred_region
      _
    $region9: #{biggan_generator_block.3} parent=1 // pred_fallthru
      _
    // Predicated region
    $region10: #{biggan_generator_block.3} parent=1 // pred_check
      _
    $region11: #{biggan_generator_block.3} parent=1 // pred_check_branch
      %28 = sbr.rel (0) target = $region13
    $region12: #{biggan_generator_block.3} parent=1 // pred_region
      _
    $region13: #{biggan_generator_block.3} parent=1 // pred_fallthru
      _
    // Predicated region
    $region14: #{biggan_generator_block.3} parent=1 // pred_check
      _
    $region15: #{biggan_generator_block.3} parent=1 // pred_check_branch
      %30 = sbr.rel (0) target = $region17
    $region16: #{biggan_generator_block.3} parent=1 // pred_region
      %32 = dma.done [#allocation3], 2048
    $region17: #{biggan_generator_block.3} parent=1 // pred_fallthru
      _
    %v34 = vld [vmem:[#allocation2] sm:$0xff]
    %v35 = vld [vmem:[#allocation2 + $0x8] sm:$0xff]
    %v36 = vld [vmem:[#allocation2 + $0x10] sm:$0xff]
    %v37 = vld [vmem:[#allocation2 + $0x18] sm:$0xff]
    %v38 = vld [vmem:[#allocation2 + $0x20] sm:$0xff]
    %v39 = vld [vmem:[#allocation2 + $0x28] sm:$0xff]
    %v40 = vld [vmem:[#allocation2 + $0x30] sm:$0xff]
    %v41 = vld [vmem:[#allocation2 + $0x38] sm:$0xff]
    %v42 = vld [vmem:[#allocation2 + $0x40] sm:$0xff]
    %v43 = vld [vmem:[#allocation2 + $0x48] sm:$0xff]
    %v44 = vld [vmem:[#allocation2 + $0x50] sm:$0xff]
    %v45 = vld [vmem:[#allocation2 + $0x58] sm:$0xff]
    %v46 = vld [vmem:[#allocation2 + $0x60] sm:$0xff]
    %v47 = vld [vmem:[#allocation2 + $0x68] sm:$0xff]
    %v48 = vld [vmem:[#allocation2 + $0x70] sm:$0xff]
    %v49 = vld [vmem:[#allocation2 + $0x78] sm:$0xff]
    %vm50 = vcmask 130048
    %v51 = vsel %vm50, %v34, 0.0
    %v52 = vsel %vm50, %v35, 0.0
    %v53 = vadd.f32 %v51, %v52
    %v54 = vsel %vm50, %v36, 0.0
    %v55 = vadd.f32 %v53, %v54
    %v56 = vsel %vm50, %v37, 0.0
    %v57 = vadd.f32 %v55, %v56
    %v58 = vsel %vm50, %v38, 0.0
    %v59 = vadd.f32 %v57, %v58
    %v60 = vsel %vm50, %v39, 0.0
    %v61 = vadd.f32 %v59, %v60
    %v62 = vsel %vm50, %v40, 0.0
    %v63 = vadd.f32 %v61, %v62
    %v64 = vsel %vm50, %v41, 0.0
    %v65 = vadd.f32 %v63, %v64
    %v66 = vsel %vm50, %v42, 0.0
    %v67 = vadd.f32 %v65, %v66
    %v68 = vsel %vm50, %v43, 0.0
    %v69 = vadd.f32 %v67, %v68
    %v70 = vsel %vm50, %v44, 0.0
    %v71 = vadd.f32 %v69, %v70
    %v72 = vsel %vm50, %v45, 0.0
    %v73 = vadd.f32 %v71, %v72
    %v74 = vsel %vm50, %v46, 0.0
    %v75 = vadd.f32 %v73, %v74
    %v76 = vsel %vm50, %v47, 0.0
    %v77 = vadd.f32 %v75, %v76
    %v78 = vsel %vm50, %v48, 0.0
    %v79 = vadd.f32 %v77, %v78
    %v80 = vsel %vm50, %v49, 0.0
    %v81 = vadd.f32 %v79, %v80
    %v82 = vrot.slane %v81, 4
    %v83 = vadd.f32 %v81, %v82
    %v84 = vrot.slane %v83, 2
    %v85 = vadd.f32 %v83, %v84
    %v86 = vrot.slane %v85, 1
    %v87 = vadd.f32 %v85, %v86
    %vm88 = vcmask 122880
    %89 = vst.msk [vmem:[%s3] sm:$0x1] %vm88, %v87
    %v90 = vmul.f32 %v34, %v34
    %v91 = vmul.f32 %v35, %v35
    %v92 = vmul.f32 %v36, %v36
    %v93 = vmul.f32 %v37, %v37
    %v94 = vmul.f32 %v38, %v38
    %v95 = vmul.f32 %v39, %v39
    %v96 = vmul.f32 %v40, %v40
    %v97 = vmul.f32 %v41, %v41
    %v98 = vmul.f32 %v42, %v42
    %v99 = vmul.f32 %v43, %v43
    %v100 = vmul.f32 %v44, %v44
    %v101 = vmul.f32 %v45, %v45
    %v102 = vmul.f32 %v46, %v46
    %v103 = vmul.f32 %v47, %v47
    %v104 = vmul.f32 %v48, %v48
    %v105 = vmul.f32 %v49, %v49
    %v106 = vsel %vm50, %v90, 0.0
    %v107 = vsel %vm50, %v91, 0.0
    %v108 = vadd.f32 %v106, %v107
    %v109 = vsel %vm50, %v92, 0.0
    %v110 = vadd.f32 %v108, %v109
    %v111 = vsel %vm50, %v93, 0.0
    %v112 = vadd.f32 %v110, %v111
    %v113 = vsel %vm50, %v94, 0.0
    %v114 = vadd.f32 %v112, %v113
    %v115 = vsel %vm50, %v95, 0.0
    %v116 = vadd.f32 %v114, %v115
    %v117 = vsel %vm50, %v96, 0.0
    %v118 = vadd.f32 %v116, %v117
    %v119 = vsel %vm50, %v97, 0.0
    %v120 = vadd.f32 %v118, %v119
    %v121 = vsel %vm50, %v98, 0.0
    %v122 = vadd.f32 %v120, %v121
    %v123 = vsel %vm50, %v99, 0.0
    %v124 = vadd.f32 %v122, %v123
    %v125 = vsel %vm50, %v100, 0.0
    %v126 = vadd.f32 %v124, %v125
    %v127 = vsel %vm50, %v101, 0.0
    %v128 = vadd.f32 %v126, %v127
    %v129 = vsel %vm50, %v102, 0.0
    %v130 = vadd.f32 %v128, %v129
    %v131 = vsel %vm50, %v103, 0.0
    %v132 = vadd.f32 %v130, %v131
    %v133 = vsel %vm50, %v104, 0.0
    %v134 = vadd.f32 %v132, %v133
    %v135 = vsel %vm50, %v105, 0.0
    %v136 = vadd.f32 %v134, %v135
    %v137 = vrot.slane %v136, 4
    %v138 = vadd.f32 %v136, %v137
    %v139 = vrot.slane %v138, 2
    %v140 = vadd.f32 %v138, %v139
    %v141 = vrot.slane %v140, 1
    %v142 = vadd.f32 %v140, %v141
    %143 = vst.msk [vmem:[%s4] sm:$0x1] %vm88, %v142
    %v144 = vpack.c.bf16 %v35, %v34
    %v145 = vpack.c.bf16 %v37, %v36
    %v146 = vpack.c.bf16 %v39, %v38
    %v147 = vpack.c.bf16 %v41, %v40
    %v148 = vpack.c.bf16 %v43, %v42
    %v149 = vpack.c.bf16 %v45, %v44
    %v150 = vpack.c.bf16 %v47, %v46
    %v151 = vpack.c.bf16 %v49, %v48
    %v152 = vld [vmem:[%s1] sm:$0xf]
    %v153 = vld [vmem:[%s1 + $0x4] sm:$0xf]
    %v154 = vld [vmem:[%s2] sm:$0x1]
    %v156 = vperm.slane %v154, 0
    %v160 = vunpack.c.l.b16 %v152
    %v161 = vunpack.c.l.b16 %v153
    %v162 = vpack.c.b16 %v161, %v160
    %v165 = vsel %vm50, %v144, 0
    %v168 = vsel %vm50, %v145, 0
    %v171 = vsel %vm50, %v146, 0
    %v174 = vsel %vm50, %v147, 0
    %v177 = vsel %vm50, %v148, 0
    %v180 = vsel %vm50, %v149, 0
    %v183 = vsel %vm50, %v150, 0
    %v186 = vsel %vm50, %v151, 0
    %188 = vmatpush.bf16.msra.mxu0 0
    %189 = vmatpush.bf16.msra.mxu0 0
    %190 = vmatpush.bf16.msra.mxu0 0
    %191 = vmatpush.bf16.msra.mxu0 0
    %192 = vmatpush.bf16.msra.mxu0 0
    %193 = vmatpush.bf16.msra.mxu0 0
    %194 = vmatpush.bf16.msra.mxu0 0
    %195 = vmatpush.bf16.msra.mxu0 %v162
    %196 = vmatmul.bf16.gmra.mxu0 %v165
    %v197 = vpop.f32.mrf.mxu0
    %v198 = vadd.f32 %v156, %v197
    %v199 = vpop.f32.mrf.mxu0
    %v200 = vadd.f32 %v156, %v199
    %201 = vmatmul.bf16.gmra.mxu0 %v168
    %v202 = vpop.f32.mrf.mxu0
    %v203 = vadd.f32 %v156, %v202
    %v204 = vpop.f32.mrf.mxu0
    %v205 = vadd.f32 %v156, %v204
    %206 = vmatmul.bf16.gmra.mxu0 %v171
    %v207 = vpop.f32.mrf.mxu0
    %v208 = vadd.f32 %v156, %v207
    %v209 = vpop.f32.mrf.mxu0
    %v210 = vadd.f32 %v156, %v209
    %211 = vmatmul.bf16.gmra.mxu0 %v174
    %v212 = vpop.f32.mrf.mxu0
    %v213 = vadd.f32 %v156, %v212
    %v214 = vpop.f32.mrf.mxu0
    %v215 = vadd.f32 %v156, %v214
    %216 = vmatmul.bf16.gmra.mxu0 %v177
    %v217 = vpop.f32.mrf.mxu0
    %v218 = vadd.f32 %v156, %v217
    %v219 = vpop.f32.mrf.mxu0
    %v220 = vadd.f32 %v156, %v219
    %221 = vmatmul.bf16.gmra.mxu0 %v180
    %v222 = vpop.f32.mrf.mxu0
    %v223 = vadd.f32 %v156, %v222
    %v224 = vpop.f32.mrf.mxu0
    %v225 = vadd.f32 %v156, %v224
    %226 = vmatmul.bf16.gmra.mxu0 %v183
    %v227 = vpop.f32.mrf.mxu0
    %v228 = vadd.f32 %v156, %v227
    %v229 = vpop.f32.mrf.mxu0
    %v230 = vadd.f32 %v156, %v229
    %231 = vmatmul.bf16.gmra.mxu0 %v186
    %v232 = vpop.f32.mrf.mxu0
    %v233 = vadd.f32 %v156, %v232
    %v234 = vpop.f32.mrf.mxu0
    %v235 = vadd.f32 %v156, %v234
    %236 = vdwg.mxu0
    %v237 = vpack.c.bf16 %v198, %v198
    %v238 = vpack.c.bf16 %v200, %v200
    %v239 = vpack.c.bf16 %v203, %v203
    %v240 = vpack.c.bf16 %v205, %v205
    %v241 = vpack.c.bf16 %v208, %v208
    %v242 = vpack.c.bf16 %v210, %v210
    %v243 = vpack.c.bf16 %v213, %v213
    %v244 = vpack.c.bf16 %v215, %v215
    %v245 = vpack.c.bf16 %v218, %v218
    %v246 = vpack.c.bf16 %v220, %v220
    %v247 = vpack.c.bf16 %v223, %v223
    %v248 = vpack.c.bf16 %v225, %v225
    %v249 = vpack.c.bf16 %v228, %v228
    %v250 = vpack.c.bf16 %v230, %v230
    %v251 = vpack.c.bf16 %v233, %v233
    %v252 = vpack.c.bf16 %v235, %v235
    %vm253 = vcmask 257024
    %254 = vst.msk [vmem:[%s5] sm:$0xf] %vm253, %v237
    %255 = vst.msk [vmem:[%s5 + $0x4] sm:$0xf] %vm253, %v238
    %256 = vst.msk [vmem:[%s5 + $0x8] sm:$0xf] %vm253, %v239
    %257 = vst.msk [vmem:[%s5 + $0xc] sm:$0xf] %vm253, %v240
    %258 = vst.msk [vmem:[%s5 + $0x10] sm:$0xf] %vm253, %v241
    %259 = vst.msk [vmem:[%s5 + $0x14] sm:$0xf] %vm253, %v242
    %260 = vst.msk [vmem:[%s5 + $0x18] sm:$0xf] %vm253, %v243
    %261 = vst.msk [vmem:[%s5 + $0x1c] sm:$0xf] %vm253, %v244
    %262 = vst.msk [vmem:[%s5 + $0x20] sm:$0xf] %vm253, %v245
    %263 = vst.msk [vmem:[%s5 + $0x24] sm:$0xf] %vm253, %v246
    %264 = vst.msk [vmem:[%s5 + $0x28] sm:$0xf] %vm253, %v247
    %265 = vst.msk [vmem:[%s5 + $0x2c] sm:$0xf] %vm253, %v248
    %266 = vst.msk [vmem:[%s5 + $0x30] sm:$0xf] %vm253, %v249
    %267 = vst.msk [vmem:[%s5 + $0x34] sm:$0xf] %vm253, %v250
    %268 = vst.msk [vmem:[%s5 + $0x38] sm:$0xf] %vm253, %v251
    %269 = vst.msk [vmem:[%s5 + $0x3c] sm:$0xf] %vm253, %v252
    // Predicated region
    $region18: #{biggan_generator_block.3} parent=1 // pred_check
      _
    $region19: #{biggan_generator_block.3} parent=1 // pred_check_branch
      %271 = sbr.rel (0) target = $region21
    $region20: #{biggan_generator_block.3} parent=1 // pred_region
      _
    $region21: #{biggan_generator_block.3} parent=1 // pred_fallthru
      _
    // Predicated region
    $region22: #{biggan_generator_block.3} parent=1 // pred_check
      _
    $region23: #{biggan_generator_block.3} parent=1 // pred_check_branch
      %273 = sbr.rel (0) target = $region25
    $region24: #{biggan_generator_block.3} parent=1 // pred_region
      _
    $region25: #{biggan_generator_block.3} parent=1 // pred_fallthru
      _
    // Predicated region
    $region26: #{biggan_generator_block.3} parent=1 // pred_check
      _
    $region27: #{biggan_generator_block.3} parent=1 // pred_check_branch
      %275 = sbr.rel (0) target = $region29
    $region28: #{biggan_generator_block.3} parent=1 // pred_region
      _
    $region29: #{biggan_generator_block.3} parent=1 // pred_fallthru
      _
    // Predicated region
    $region30: #{biggan_generator_block.3} parent=1 // pred_check
      _
    $region31: #{biggan_generator_block.3} parent=1 // pred_check_branch
      %277 = sbr.rel (0) target = $region33
    $region32: #{biggan_generator_block.3} parent=1 // pred_region
      _
    $region33: #{biggan_generator_block.3} parent=1 // pred_fallthru
      _
    // Predicated region
    $region34: #{biggan_generator_block.3} parent=1 // pred_check
      _
    $region35: #{biggan_generator_block.3} parent=1 // pred_check_branch
      %279 = sbr.rel (0) target = $region37
    $region36: #{biggan_generator_block.3} parent=1 // pred_region
      _
    $region37: #{biggan_generator_block.3} parent=1 // pred_fallthru
      _
    // Predicated region
    $region38: #{biggan_generator_block.3} parent=1 // pred_check
      _
    $region39: #{biggan_generator_block.3} parent=1 // pred_check_branch
      %281 = sbr.rel (0) target = $region41
    $region40: #{biggan_generator_block.3} parent=1 // pred_region
      _
    $region41: #{biggan_generator_block.3} parent=1 // pred_fallthru
      _
    %282 = vsyncpa [#allocation3], 1

// kernel: biggan_generator_block.4
$region0: #{biggan_generator_block.4}
  #allocation0 [shape = 'u32[]', space=smem, size = 0x4, offset = 0x4, fixed_abs, tag = 'smem constant byte address 0x4 - core index']
  #allocation1 [shape = 'u32[72,128]{1,0:T(1,128)}', space=vmem, size = 0x9000, scoped, tag = 'internal scratch']
  #allocation2 [shape = 'f32[10,10,16]{2,1,0:T(8,128)}', space=vmem, size = 0x14000, scoped, tag = 'scratch operand']
  %s0 = inlined_call_operand.vmem [shape: f32[2,8,8,16], index: 0, kind: input, shape index: {}]
  %s1 = inlined_call_operand.vmem [shape: f32[2,1,1,16], index: 1, kind: input, shape index: {}]
  %s2 = inlined_call_operand.vmem [shape: f32[2,1,1,16], index: 2, kind: input, shape index: {}]
  %s3 = inlined_call_operand.vmem [shape: bf16[4,4,16,32], index: 3, kind: input, shape index: {}]
  %s4 = inlined_call_operand.vmem [shape: f32[1,32], index: 4, kind: input, shape index: {}]
  %s5 = inlined_call_operand.vmem [shape: bf16[2,4,64,32], index: 5, kind: output, shape index: {0}]
  %s6 = inlined_call_operand.vmem [shape: f32[2,1,32], index: 6, kind: output, shape index: {1}]
  %s7 = inlined_call_operand.vmem [shape: f32[2,1,32], index: 7, kind: output, shape index: {2}]
  %8 = xla_tuple %s5, %s6, %s7
  %s9 = sld [smem:[#allocation0]]
  $region69: #{biggan_generator_block.4} parent=0
    _
  %s11 = ssub.s32 1, %s9
  %s12 = scalar_select 0, %s11, %s9
  loop: start=0, step=1, limit=4
  $region2: #{biggan_generator_block.4} parent=0 // loop_pre_header
    _
  $region3: #{biggan_generator_block.4} parent=0 // loop_header
    %s14 = sphi 0, %s18
    %p15 = scmp.ge.s32.totalorder %s14, 4
    %s24 = sphi 0, %s26
    %s27 = sphi 0, %s24
    %s28 = sphi 0, %s27
    %s44 = sphi 0, %s28
    %s50 = sphi 0, %s52
    %s53 = sphi 0, %s50
    %s54 = sphi 0, %s53
    %s70 = sphi 0, %s54
    %s76 = sphi 0, %s78
    %s79 = sphi 0, %s76
    %s80 = sphi 0, %s79
    %s96 = sphi 0, %s80
    %s100 = sphi 0, %s100
    %s102 = sphi 0, %s100
    %s103 = sphi 0, %s102
    %s117 = sphi 0, %s103
    %s121 = sphi 0, %s121
    %s123 = sphi 0, %s121
    %s124 = sphi 0, %s123
    %s138 = sphi 0, %s124
    %s144 = sphi 0, %s146
    %s147 = sphi 0, %s144
    %s148 = sphi 0, %s147
    %s164 = sphi 0, %s148
    %s170 = sphi 0, %s172
    %s173 = sphi 0, %s170
    %s174 = sphi 0, %s173
    %s190 = sphi 0, %s174
    %s196 = sphi 0, %s198
    %s199 = sphi 0, %s196
    %s200 = sphi 0, %s199
    %s216 = sphi 0, %s200
  $region4: #{biggan_generator_block.4} parent=0 // loop_header_branch
    %17 = sbr.rel (%p15) target = $region8
  $region5: #{biggan_generator_block.4} parent=0 // loop_body
    %s19 = ssub.s32 %s14, 1
    %s20 = ssub.s32 %s14, 2
    %s21 = sadd.s32 %s14, 1
    %s22 = ssub.s32 %s14, %s21
    %p23 = scmp.eq.s32.totalorder %s22, 0
    %s25 = sadd.s32 %s24, 1
    %s26 = scalar_select %p23, %s24, %s25
    %p29 = pneg %p23
    %p30 = scmp.eq.s32.totalorder %s14, 1
    %p31 = por %p29, %p30
    %p32 = scmp.ne.s32.totalorder %s24, %s27
    %p33 = scmp.eq.s32.totalorder %s14, 0
    %p34 = por %p32, %p33
    %p35 = scmp.ne.s32.totalorder %s24, %s27
    %p36 = scmp.eq.s32.totalorder %s19, 1
    %p37 = por %p35, %p36
    %p38 = scmp.ne.s32.totalorder %s27, %s28
    %p39 = scmp.eq.s32.totalorder %s19, 0
    %p40 = por %p38, %p39
    %p41 = scmp.ne.s32.totalorder %s27, %s28
    %p42 = scmp.eq.s32.totalorder %s20, 1
    %p43 = por %p41, %p42
    %p45 = scmp.ne.s32.totalorder %s28, %s44
    %p46 = scmp.eq.s32.totalorder %s20, 0
    %p47 = por %p45, %p46
    %s48 = ssub.s32 %s14, %s21
    %p49 = scmp.eq.s32.totalorder %s48, 0
    %s51 = sadd.s32 %s50, 1
    %s52 = scalar_select %p49, %s50, %s51
    %p55 = pneg %p49
    %p56 = scmp.eq.s32.totalorder %s14, 1
    %p57 = por %p55, %p56
    %p58 = scmp.ne.s32.totalorder %s50, %s53
    %p59 = scmp.eq.s32.totalorder %s14, 0
    %p60 = por %p58, %p59
    %p61 = scmp.ne.s32.totalorder %s50, %s53
    %p62 = scmp.eq.s32.totalorder %s19, 1
    %p63 = por %p61, %p62
    %p64 = scmp.ne.s32.totalorder %s53, %s54
    %p65 = scmp.eq.s32.totalorder %s19, 0
    %p66 = por %p64, %p65
    %p67 = scmp.ne.s32.totalorder %s53, %s54
    %p68 = scmp.eq.s32.totalorder %s20, 1
    %p69 = por %p67, %p68
    %p71 = scmp.ne.s32.totalorder %s54, %s70
    %p72 = scmp.eq.s32.totalorder %s20, 0
    %p73 = por %p71, %p72
    %s74 = ssub.s32 %s14, %s21
    %p75 = scmp.eq.s32.totalorder %s74, 0
    %s77 = sadd.s32 %s76, 1
    %s78 = scalar_select %p75, %s76, %s77
    %p81 = pneg %p75
    %p82 = scmp.eq.s32.totalorder %s14, 1
    %p83 = por %p81, %p82
    %p84 = scmp.ne.s32.totalorder %s76, %s79
    %p85 = scmp.eq.s32.totalorder %s14, 0
    %p86 = por %p84, %p85
    %p87 = scmp.ne.s32.totalorder %s76, %s79
    %p88 = scmp.eq.s32.totalorder %s19, 1
    %p89 = por %p87, %p88
    %p90 = scmp.ne.s32.totalorder %s79, %s80
    %p91 = scmp.eq.s32.totalorder %s19, 0
    %p92 = por %p90, %p91
    %p93 = scmp.ne.s32.totalorder %s79, %s80
    %p94 = scmp.eq.s32.totalorder %s20, 1
    %p95 = por %p93, %p94
    %p97 = scmp.ne.s32.totalorder %s80, %s96
    %p98 = scmp.eq.s32.totalorder %s20, 0
    %p99 = por %p97, %p98
    %s101 = sadd.s32 %s100, 1
    %p104 = scmp.eq.s32.totalorder %s14, 1
    %p105 = scmp.ne.s32.totalorder %s100, %s102
    %p106 = scmp.eq.s32.totalorder %s14, 0
    %p107 = por %p105, %p106
    %p108 = scmp.ne.s32.totalorder %s100, %s102
    %p109 = scmp.eq.s32.totalorder %s19, 1
    %p110 = por %p108, %p109
    %p111 = scmp.ne.s32.totalorder %s102, %s103
    %p112 = scmp.eq.s32.totalorder %s19, 0
    %p113 = por %p111, %p112
    %p114 = scmp.ne.s32.totalorder %s102, %s103
    %p115 = scmp.eq.s32.totalorder %s20, 1
    %p116 = por %p114, %p115
    %p118 = scmp.ne.s32.totalorder %s103, %s117
    %p119 = scmp.eq.s32.totalorder %s20, 0
    %p120 = por %p118, %p119
    %s122 = sadd.s32 %s121, 1
    %p125 = scmp.eq.s32.totalorder %s14, 1
    %p126 = scmp.ne.s32.totalorder %s121, %s123
    %p127 = scmp.eq.s32.totalorder %s14, 0
    %p128 = por %p126, %p127
    %p129 = scmp.ne.s32.totalorder %s121, %s123
    %p130 = scmp.eq.s32.totalorder %s19, 1
    %p131 = por %p129, %p130
    %p132 = scmp.ne.s32.totalorder %s123, %s124
    %p133 = scmp.eq.s32.totalorder %s19, 0
    %p134 = por %p132, %p133
    %p135 = scmp.ne.s32.totalorder %s123, %s124
    %p136 = scmp.eq.s32.totalorder %s20, 1
    %p137 = por %p135, %p136
    %p139 = scmp.ne.s32.totalorder %s124, %s138
    %p140 = scmp.eq.s32.totalorder %s20, 0
    %p141 = por %p139, %p140
    %s142 = ssub.s32 %s14, %s21
    %p143 = scmp.eq.s32.totalorder %s142, 0
    %s145 = sadd.s32 %s144, 1
    %s146 = scalar_select %p143, %s144, %s145
    %p149 = pneg %p143
    %p150 = scmp.eq.s32.totalorder %s14, 1
    %p151 = por %p149, %p150
    %p152 = scmp.ne.s32.totalorder %s144, %s147
    %p153 = scmp.eq.s32.totalorder %s14, 0
    %p154 = por %p152, %p153
    %p155 = scmp.ne.s32.totalorder %s144, %s147
    %p156 = scmp.eq.s32.totalorder %s19, 1
    %p157 = por %p155, %p156
    %p158 = scmp.ne.s32.totalorder %s147, %s148
    %p159 = scmp.eq.s32.totalorder %s19, 0
    %p160 = por %p158, %p159
    %p161 = scmp.ne.s32.totalorder %s147, %s148
    %p162 = scmp.eq.s32.totalorder %s20, 1
    %p163 = por %p161, %p162
    %p165 = scmp.ne.s32.totalorder %s148, %s164
    %p166 = scmp.eq.s32.totalorder %s20, 0
    %p167 = por %p165, %p166
    %s168 = ssub.s32 %s14, %s21
    %p169 = scmp.eq.s32.totalorder %s168, 0
    %s171 = sadd.s32 %s170, 1
    %s172 = scalar_select %p169, %s170, %s171
    %p175 = pneg %p169
    %p176 = scmp.eq.s32.totalorder %s14, 1
    %p177 = por %p175, %p176
    %p178 = scmp.ne.s32.totalorder %s170, %s173
    %p179 = scmp.eq.s32.totalorder %s14, 0
    %p180 = por %p178, %p179
    %p181 = scmp.ne.s32.totalorder %s170, %s173
    %p182 = scmp.eq.s32.totalorder %s19, 1
    %p183 = por %p181, %p182
    %p184 = scmp.ne.s32.totalorder %s173, %s174
    %p185 = scmp.eq.s32.totalorder %s19, 0
    %p186 = por %p184, %p185
    %p187 = scmp.ne.s32.totalorder %s173, %s174
    %p188 = scmp.eq.s32.totalorder %s20, 1
    %p189 = por %p187, %p188
    %p191 = scmp.ne.s32.totalorder %s174, %s190
    %p192 = scmp.eq.s32.totalorder %s20, 0
    %p193 = por %p191, %p192
    %s194 = ssub.s32 %s14, %s21
    %p195 = scmp.eq.s32.totalorder %s194, 0
    %s197 = sadd.s32 %s196, 1
    %s198 = scalar_select %p195, %s196, %s197
    %p201 = pneg %p195
    %p202 = scmp.eq.s32.totalorder %s14, 1
    %p203 = por %p201, %p202
    %p204 = scmp.ne.s32.totalorder %s196, %s199
    %p205 = scmp.eq.s32.totalorder %s14, 0
    %p206 = por %p204, %p205
    %p207 = scmp.ne.s32.totalorder %s196, %s199
    %p208 = scmp.eq.s32.totalorder %s19, 1
    %p209 = por %p207, %p208
    %p210 = scmp.ne.s32.totalorder %s199, %s200
    %p211 = scmp.eq.s32.totalorder %s19, 0
    %p212 = por %p210, %p211
    %p213 = scmp.ne.s32.totalorder %s199, %s200
    %p214 = scmp.eq.s32.totalorder %s20, 1
    %p215 = por %p213, %p214
    %p217 = scmp.ne.s32.totalorder %s200, %s216
    %p218 = scmp.eq.s32.totalorder %s20, 0
    %p219 = por %p217, %p218
    %p220 = scmp.le.s32.totalorder 1, %s14
    %p221 = scmp.lt.s32.totalorder %s14, 3
    %p222 = pnand %p220, %p221
    %p223 = pneg %p222
    // Predicated region
    $region9: #{biggan_generator_block.4} parent=5 // pred_check
      _
    $region10: #{biggan_generator_block.4} parent=5 // pred_check_branch
      %225 = sbr.rel (%p222) target = $region12
    $region11: #{biggan_generator_block.4} parent=5 // pred_region
      %s226 = ssub.s32 %s14, 1
      // Predicated region
      $region13: #{biggan_generator_block.4} parent=11 // pred_check
        %p227 = pneg %p113
      $region14: #{biggan_generator_block.4} parent=11 // pred_check_branch
        %229 = sbr.rel (%p227) target = $region16
      $region15: #{biggan_generator_block.4} parent=11 // pred_region
        _
      $region16: #{biggan_generator_block.4} parent=11 // pred_fallthru
        _
      // Predicated region
      $region17: #{biggan_generator_block.4} parent=11 // pred_check
        %p230 = pneg %p134
      $region18: #{biggan_generator_block.4} parent=11 // pred_check_branch
        %232 = sbr.rel (%p230) target = $region20
      $region19: #{biggan_generator_block.4} parent=11 // pred_region
        _
      $region20: #{biggan_generator_block.4} parent=11 // pred_fallthru
        _
    $region12: #{biggan_generator_block.4} parent=5 // pred_fallthru
      _
    %p233 = scmp.lt.s32.totalorder %s14, 2
    // Predicated region
    $region21: #{biggan_generator_block.4} parent=5 // pred_check
      %p234 = pneg %p233
    $region22: #{biggan_generator_block.4} parent=5 // pred_check_branch
      %236 = sbr.rel (%p234) target = $region24
    $region23: #{biggan_generator_block.4} parent=5 // pred_region
      // Predicated region
      $region25: #{biggan_generator_block.4} parent=23 // pred_check
        %p237 = pneg %p34
      $region26: #{biggan_generator_block.4} parent=23 // pred_check_branch
        %239 = sbr.rel (%p237) target = $region28
      $region27: #{biggan_generator_block.4} parent=23 // pred_region
        %p240 = scmp.lt.s32.totalorder %s14, 1
        %s241 = scalar_select %p240, %s14, 1
        %s242 = smul.addr %s241, 8
        %s243 = smul.addr %s242, 8
        %s244 = scalar_lea.vmem %s0, %s243
      $region28: #{biggan_generator_block.4} parent=23 // pred_fallthru
        _
      // Predicated region
      $region29: #{biggan_generator_block.4} parent=23 // pred_check
        %p245 = pneg %p60
      $region30: #{biggan_generator_block.4} parent=23 // pred_check_branch
        %247 = sbr.rel (%p245) target = $region32
      $region31: #{biggan_generator_block.4} parent=23 // pred_region
        %p248 = scmp.lt.s32.totalorder %s14, 1
        %s249 = scalar_select %p248, %s14, 1
        %s250 = scalar_lea.vmem %s1, %s249
      $region32: #{biggan_generator_block.4} parent=23 // pred_fallthru
        _
      // Predicated region
      $region33: #{biggan_generator_block.4} parent=23 // pred_check
        %p251 = pneg %p86
      $region34: #{biggan_generator_block.4} parent=23 // pred_check_branch
        %253 = sbr.rel (%p251) target = $region36
      $region35: #{biggan_generator_block.4} parent=23 // pred_region
        %p254 = scmp.lt.s32.totalorder %s14, 1
        %s255 = scalar_select %p254, %s14, 1
        %s256 = scalar_lea.vmem %s2, %s255
      $region36: #{biggan_generator_block.4} parent=23 // pred_fallthru
        _
    $region24: #{biggan_generator_block.4} parent=5 // pred_fallthru
      _
    %p257 = scmp.le.s32.totalorder 1, %s14
    %p258 = scmp.lt.s32.totalorder %s14, 3
    %p259 = pnand %p257, %p258
    %p260 = pneg %p259
    // Predicated region
    $region37: #{biggan_generator_block.4} parent=5 // pred_check
      _
    $region38: #{biggan_generator_block.4} parent=5 // pred_check_branch
      %262 = sbr.rel (%p259) target = $region40
    $region39: #{biggan_generator_block.4} parent=5 // pred_region
      %s263 = ssub.s32 %s14, 1
      %p264 = scmp.lt.s32.totalorder %s19, 1
      %s265 = scalar_select %p264, %s19, 1
      %s266 = smul.addr %s265, 8
      %s267 = smul.addr %s266, 8
      %s268 = scalar_lea.vmem %s0, %s267
      %p269 = pneg %p40
      %p270 = pneg %p37
      %p271 = scmp.lt.s32.totalorder %s19, 1
      %s272 = scalar_select %p271, %s19, 1
      %s273 = scalar_lea.vmem %s1, %s272
      %p274 = pneg %p66
      %p275 = pneg %p63
      %p276 = scmp.lt.s32.totalorder %s19, 1
      %s277 = scalar_select %p276, %s19, 1
      %s278 = scalar_lea.vmem %s2, %s277
      %p279 = pneg %p92
      %p280 = pneg %p89
      %p281 = pneg %p113
      %p282 = pneg %p110
      %p283 = pneg %p134
      %p284 = pneg %p131
      %p285 = pneg %p160
      %p286 = pneg %p157
      %p287 = scmp.lt.s32.totalorder %s19, 1
      %s288 = scalar_select %p287, %s19, 1
      %s289 = smul.addr %s288, 32
      %s290 = smul.addr %s289, 4
      %s291 = scalar_lea.vmem %s5, %s290
      %p292 = pneg %p186
      %p293 = pneg %p183
      %p294 = scmp.lt.s32.totalorder %s19, 1
      %s295 = scalar_select %p294, %s19, 1
      %s296 = scalar_lea.vmem %s6, %s295
      %p297 = pneg %p212
      %p298 = pneg %p209
      %p299 = scmp.lt.s32.totalorder %s19, 1
      %s300 = scalar_select %p299, %s19, 1
      %s301 = scalar_lea.vmem %s7, %s300
      %p302 = scmp.lt.s32.totalorder %s19, 1
      %s303 = scalar_select %p302, %s19, 1
      %s304 = smul.addr %s303, 8
      %s305 = smul.addr %s304, 8
      %s306 = scalar_lea.vmem %s0, %s305
      %p307 = scmp.lt.s32.totalorder %s19, 1
      %s308 = scalar_select %p307, %s19, 1
      %s309 = scalar_lea.vmem %s1, %s308
      %p310 = scmp.lt.s32.totalorder %s19, 1
      %s311 = scalar_select %p310, %s19, 1
      %s312 = scalar_lea.vmem %s2, %s311
      %p313 = scmp.lt.s32.totalorder %s19, 1
      %s314 = scalar_select %p313, %s19, 1
      %s315 = smul.addr %s314, 32
      %s316 = smul.addr %s315, 4
      %s317 = scalar_lea.vmem %s5, %s316
      %p318 = scmp.lt.s32.totalorder %s19, 1
      %s319 = scalar_select %p318, %s19, 1
      %s320 = scalar_lea.vmem %s6, %s319
      %p321 = scmp.lt.s32.totalorder %s19, 1
      %s322 = scalar_select %p321, %s19, 1
      %s323 = scalar_lea.vmem %s7, %s322
      %vm325 = vcmask 130048
      %326 = vst.msk [vmem:[#allocation2] sm:$0xff] %vm325, 0.0
      %vm327 = vcmask 123904
      %328 = vst.msk [vmem:[#allocation2 + $0x8] sm:$0x3] %vm327, 0.0
      %329 = vst.msk [vmem:[#allocation2 + $0x10] sm:$0xff] %vm325, 0.0
      %330 = vst.msk [vmem:[#allocation2 + $0x18] sm:$0x3] %vm327, 0.0
      %331 = vst.msk [vmem:[#allocation2 + $0x20] sm:$0xff] %vm325, 0.0
      %332 = vst.msk [vmem:[#allocation2 + $0x28] sm:$0x3] %vm327, 0.0
      %333 = vst.msk [vmem:[#allocation2 + $0x30] sm:$0xff] %vm325, 0.0
      %334 = vst.msk [vmem:[#allocation2 + $0x38] sm:$0x3] %vm327, 0.0
      %335 = vst.msk [vmem:[#allocation2 + $0x40] sm:$0xff] %vm325, 0.0
      %336 = vst.msk [vmem:[#allocation2 + $0x48] sm:$0x3] %vm327, 0.0
      %337 = vst.msk [vmem:[#allocation2 + $0x50] sm:$0xff] %vm325, 0.0
      %338 = vst.msk [vmem:[#allocation2 + $0x58] sm:$0x3] %vm327, 0.0
      %339 = vst.msk [vmem:[#allocation2 + $0x60] sm:$0xff] %vm325, 0.0
      %340 = vst.msk [vmem:[#allocation2 + $0x68] sm:$0x3] %vm327, 0.0
      %341 = vst.msk [vmem:[#allocation2 + $0x70] sm:$0xff] %vm325, 0.0
      %342 = vst.msk [vmem:[#allocation2 + $0x78] sm:$0x3] %vm327, 0.0
      %343 = vst.msk [vmem:[#allocation2 + $0x80] sm:$0xff] %vm325, 0.0
      %344 = vst.msk [vmem:[#allocation2 + $0x88] sm:$0x3] %vm327, 0.0
      %345 = vst.msk [vmem:[#allocation2 + $0x90] sm:$0xff] %vm325, 0.0
      %346 = vst.msk [vmem:[#allocation2 + $0x98] sm:$0x3] %vm327, 0.0
      %v347 = vld [vmem:[%s306] sm:$0xff]
      %v348 = vld [vmem:[%s306 + $0x8] sm:$0xff]
      %v349 = vld [vmem:[%s306 + $0x10] sm:$0xff]
      %v350 = vld [vmem:[%s306 + $0x18] sm:$0xff]
      %v351 = vld [vmem:[%s306 + $0x20] sm:$0xff]
      %v352 = vld [vmem:[%s306 + $0x28] sm:$0xff]
      %v353 = vld [vmem:[%s306 + $0x30] sm:$0xff]
      %v354 = vld [vmem:[%s306 + $0x38] sm:$0xff]
      %v355 = vld [vmem:[%s309] sm:$0x1]
      %v357 = vperm.slane %v355, 0
      %v359 = vmul.f32 %v347, %v357
      %v360 = vmul.f32 %v348, %v357
      %v361 = vmul.f32 %v349, %v357
      %v362 = vmul.f32 %v350, %v357
      %v363 = vmul.f32 %v351, %v357
      %v364 = vmul.f32 %v352, %v357
      %v365 = vmul.f32 %v353, %v357
      %v366 = vmul.f32 %v354, %v357
      %v367 = vld [vmem:[%s312] sm:$0x1]
      %v369 = vperm.slane %v367, 0
      %v371 = vadd.f32 %v359, %v369
      %v372 = vadd.f32 %v360, %v369
      %v373 = vadd.f32 %v361, %v369
      %v374 = vadd.f32 %v362, %v369
      %v375 = vadd.f32 %v363, %v369
      %v376 = vadd.f32 %v364, %v369
      %v377 = vadd.f32 %v365, %v369
      %v378 = vadd.f32 %v366, %v369
      %v379 = vmax.f32 %v371, 0.0
      %v380 = vmax.f32 %v372, 0.0
      %v381 = vmax.f32 %v373, 0.0
      %v382 = vmax.f32 %v374, 0.0
      %v383 = vmax.f32 %v375, 0.0
      %v384 = vmax.f32 %v376, 0.0
      %v385 = vmax.f32 %v377, 0.0
      %v386 = vmax.f32 %v378, 0.0
      %s387 = scalar_lea.vmem [#allocation2], 16
      %388 = vst.msk [vmem:[%s387 + $0x1] sm:$0xff] %vm325, %v379
      %389 = vst.msk [vmem:[%s387 + $0x11] sm:$0xff] %vm325, %v380
      %390 = vst.msk [vmem:[%s387 + $0x21] sm:$0xff] %vm325, %v381
      %391 = vst.msk [vmem:[%s387 + $0x31] sm:$0xff] %vm325, %v382
      %392 = vst.msk [vmem:[%s387 + $0x41] sm:$0xff] %vm325, %v383
      %393 = vst.msk [vmem:[%s387 + $0x51] sm:$0xff] %vm325, %v384
      %394 = vst.msk [vmem:[%s387 + $0x61] sm:$0xff] %vm325, %v385
      %395 = vst.msk [vmem:[%s387 + $0x71] sm:$0xff] %vm325, %v386
      %v396 = vld [vmem:[%s4] sm:$0x1]
      %v397 = vld [vmem:[#allocation2] sm:$0xff]
      %v398 = vld [vmem:[#allocation2 + $0x10] sm:$0xff]
      %v399 = vld [vmem:[#allocation2 + $0x20] sm:$0xff]
      %v400 = vld [vmem:[#allocation2 + $0x30] sm:$0xff]
      %v401 = vld [vmem:[#allocation2 + $0x40] sm:$0xff]
      %v402 = vld [vmem:[#allocation2 + $0x50] sm:$0xff]
      %v403 = vld [vmem:[#allocation2 + $0x60] sm:$0xff]
      %v404 = vld [vmem:[#allocation2 + $0x70] sm:$0xff]
      %v405 = vpack.c.bf16 %v398, %v397
      %v406 = vpack.c.bf16 %v400, %v399
      %v407 = vpack.c.bf16 %v402, %v401
      %v408 = vpack.c.bf16 %v404, %v403
      %v409 = vld [vmem:[%s3] sm:$0xf]
      %v410 = vld [vmem:[%s3 + $0x4] sm:$0xf]
      %v411 = vld [vmem:[#allocation2 + $0x1] sm:$0xff]
      %v412 = vld [vmem:[#allocation2 + $0x11] sm:$0xff]
      %v413 = vld [vmem:[#allocation2 + $0x21] sm:$0xff]
      %v414 = vld [vmem:[#allocation2 + $0x31] sm:$0xff]
      %v415 = vld [vmem:[#allocation2 + $0x41] sm:$0xff]
      %v416 = vld [vmem:[#allocation2 + $0x51] sm:$0xff]
      %v417 = vld [vmem:[#allocation2 + $0x61] sm:$0xff]
      %v418 = vld [vmem:[#allocation2 + $0x71] sm:$0xff]
      %v419 = vpack.c.bf16 %v412, %v411
      %v420 = vpack.c.bf16 %v414, %v413
      %v421 = vpack.c.bf16 %v416, %v415
      %v422 = vpack.c.bf16 %v418, %v417
      %s423 = scalar_lea.vmem %s3, 8
      %v424 = vld [vmem:[%s423] sm:$0xf]
      %v425 = vld [vmem:[%s423 + $0x4] sm:$0xf]
      %v428 = vunpack.c.l.b16 %v424
      %v429 = vunpack.c.l.b16 %v425
      %v430 = vpack.c.b16 %v429, %v428
      %v433 = vsel %vm325, %v419, 0
      %v436 = vsel %vm325, %v420, 0
      %v439 = vsel %vm325, %v421, 0
      %v442 = vsel %vm325, %v422, 0
      %444 = vmatpush.bf16.msra.mxu0 0
      %445 = vmatpush.bf16.msra.mxu0 0
      %446 = vmatpush.bf16.msra.mxu0 0
      %447 = vmatpush.bf16.msra.mxu0 0
      %448 = vmatpush.bf16.msra.mxu0 0
      %449 = vmatpush.bf16.msra.mxu0 0
      %450 = vmatpush.bf16.msra.mxu0 0
      %451 = vmatpush.bf16.msra.mxu0 %v430
      %452 = vmatmul.bf16.gmra.mxu0 %v433
      %v453 = vpop.f32.mrf.mxu0
      %v454 = vadd.f32 0.0, %v453
      %v455 = vpop.f32.mrf.mxu0
      %v456 = vadd.f32 0.0, %v455
      %457 = vmatmul.bf16.gmra.mxu0 %v436
      %v458 = vpop.f32.mrf.mxu0
      %v459 = vadd.f32 0.0, %v458
      %v460 = vpop.f32.mrf.mxu0
      %v461 = vadd.f32 0.0, %v460
      %462 = vmatmul.bf16.gmra.mxu0 %v439
      %v463 = vpop.f32.mrf.mxu0
      %v464 = vadd.f32 0.0, %v463
      %v465 = vpop.f32.mrf.mxu0
      %v466 = vadd.f32 0.0, %v465
      %467 = vmatmul.bf16.gmra.mxu0 %v442
      %v468 = vpop.f32.mrf.mxu0
      %v469 = vadd.f32 0.0, %v468
      %v470 = vpop.f32.mrf.mxu0
      %v471 = vadd.f32 0.0, %v470
      %472 = vdwg.mxu0
      %v475 = vunpack.c.l.b16 %v409
      %v476 = vunpack.c.l.b16 %v410
      %v477 = vpack.c.b16 %v476, %v475
      %v480 = vsel %vm325, %v405, 0
      %v483 = vsel %vm325, %v406, 0
      %v486 = vsel %vm325, %v407, 0
      %v489 = vsel %vm325, %v408, 0
      %491 = vmatpush.bf16.msra.mxu0 0
      %492 = vmatpush.bf16.msra.mxu0 0
      %493 = vmatpush.bf16.msra.mxu0 0
      %494 = vmatpush.bf16.msra.mxu0 0
      %495 = vmatpush.bf16.msra.mxu0 0
      %496 = vmatpush.bf16.msra.mxu0 0
      %497 = vmatpush.bf16.msra.mxu0 0
      %498 = vmatpush.bf16.msra.mxu0 %v477
      %499 = vmatmul.bf16.gmra.mxu0 %v480
      %v500 = vpop.f32.mrf.mxu0
      %v501 = vadd.f32 %v454, %v500
      %v502 = vpop.f32.mrf.mxu0
      %v503 = vadd.f32 %v456, %v502
      %504 = vmatmul.bf16.gmra.mxu0 %v483
      %v505 = vpop.f32.mrf.mxu0
      %v506 = vadd.f32 %v459, %v505
      %v507 = vpop.f32.mrf.mxu0
      %v508 = vadd.f32 %v461, %v507
      %509 = vmatmul.bf16.gmra.mxu0 %v486
      %v510 = vpop.f32.mrf.mxu0
      %v511 = vadd.f32 %v464, %v510
      %v512 = vpop.f32.mrf.mxu0
      %v513 = vadd.f32 %v466, %v512
      %514 = vmatmul.bf16.gmra.mxu0 %v489
      %v515 = vpop.f32.mrf.mxu0
      %v516 = vadd.f32 %v469, %v515
      %v517 = vpop.f32.mrf.mxu0
      %v518 = vadd.f32 %v471, %v517
      %519 = vdwg.mxu0
      %v520 = vld [vmem:[%s387] sm:$0xff]
      %v521 = vld [vmem:[%s387 + $0x10] sm:$0xff]
      %v522 = vld [vmem:[%s387 + $0x20] sm:$0xff]
      %v523 = vld [vmem:[%s387 + $0x30] sm:$0xff]
      %v524 = vld [vmem:[%s387 + $0x40] sm:$0xff]
      %v525 = vld [vmem:[%s387 + $0x50] sm:$0xff]
      %v526 = vld [vmem:[%s387 + $0x60] sm:$0xff]
      %v527 = vld [vmem:[%s387 + $0x70] sm:$0xff]
      %v528 = vpack.c.bf16 %v521, %v520
      %v529 = vpack.c.bf16 %v523, %v522
      %v530 = vpack.c.bf16 %v525, %v524
      %v531 = vpack.c.bf16 %v527, %v526
      %s532 = scalar_lea.vmem %s3, 16
      %v533 = vld [vmem:[%s532] sm:$0xf]
      %v534 = vld [vmem:[%s532 + $0x4] sm:$0xf]
      %v537 = vunpack.c.l.b16 %v533
      %v538 = vunpack.c.l.b16 %v534
      %v539 = vpack.c.b16 %v538, %v537
      %v542 = vsel %vm325, %v528, 0
      %v545 = vsel %vm325, %v529, 0
      %v548 = vsel %vm325, %v530, 0
      %v551 = vsel %vm325, %v531, 0
      %553 = vmatpush.bf16.msra.mxu0 0
      %554 = vmatpush.bf16.msra.mxu0 0
      %555 = vmatpush.bf16.msra.mxu0 0
      %556 = vmatpush.bf16.msra.mxu0 0
      %557 = vmatpush.bf16.msra.mxu0 0
      %558 = vmatpush.bf16.msra.mxu0 0
      %559 = vmatpush.bf16.msra.mxu0 0
      %560 = vmatpush.bf16.msra.mxu0 %v539
      %561 = vmatmul.bf16.gmra.mxu0 %v542
      %v562 = vpop.f32.mrf.mxu0
      %v563 = vadd.f32 0.0, %v562
      %v564 = vpop.f32.mrf.mxu0
      %v565 = vadd.f32 0.0, %v564
      %566 = vmatmul.bf16.gmra.mxu0 %v545
      %v567 = vpop.f32.mrf.mxu0
      %v568 = vadd.f32 0.0, %v567
      %v569 = vpop.f32.mrf.mxu0
      %v570 = vadd.f32 0.0, %v569
      %571 = vmatmul.bf16.gmra.mxu0 %v548
      %v572 = vpop.f32.mrf.mxu0
      %v573 = vadd.f32 0.0, %v572
      %v574 = vpop.f32.mrf.mxu0
      %v575 = vadd.f32 0.0, %v574
      %576 = vmatmul.bf16.gmra.mxu0 %v551
      %v577 = vpop.f32.mrf.mxu0
      %v578 = vadd.f32 0.0, %v577
      %v579 = vpop.f32.mrf.mxu0
      %v580 = vadd.f32 0.0, %v579
      %581 = vdwg.mxu0
      %v582 = vadd.f32 %v501, %v563
      %v583 = vadd.f32 %v503, %v565
      %v584 = vadd.f32 %v506, %v568
      %v585 = vadd.f32 %v508, %v570
      %v586 = vadd.f32 %v511, %v573
      %v587 = vadd.f32 %v513, %v575
      %v588 = vadd.f32 %v516, %v578
      %v589 = vadd.f32 %v518, %v580
      %v590 = vld [vmem:[%s387 + $0x1] sm:$0xff]
      %v591 = vld [vmem:[%s387 + $0x11] sm:$0xff]
      %v592 = vld [vmem:[%s387 + $0x21] sm:$0xff]
      %v593 = vld [vmem:[%s387 + $0x31] sm:$0xff]
      %v594 = vld [vmem:[%s387 + $0x41] sm:$0xff]
      %v595 = vld [vmem:[%s387 + $0x51] sm:$0xff]
      %v596 = vld [vmem:[%s387 + $0x61] sm:$0xff]
      %v597 = vld [vmem:[%s387 + $0x71] sm:$0xff]
      %v598 = vpack.c.bf16 %v591, %v590
      %v599 = vpack.c.bf16 %v593, %v592
      %v600 = vpack.c.bf16 %v595, %v594
      %v601 = vpack.c.bf16 %v597, %v596
      %s602 = scalar_lea.vmem %s3, 24
      %v603 = vld [vmem:[%s602] sm:$0xf]
      %v604 = vld [vmem:[%s602 + $0x4] sm:$0xf]
      %v607 = vunpack.c.l.b16 %v603
      %v608 = vunpack.c.l.b16 %v604
      %v609 = vpack.c.b16 %v608, %v607
      %v612 = vsel %vm325, %v598, 0
      %v615 = vsel %vm325, %v599, 0
      %v618 = vsel %vm325, %v600, 0
      %v621 = vsel %vm325, %v601, 0
      %623 = vmatpush.bf16.msra.mxu0 0
      %624 = vmatpush.bf16.msra.mxu0 0
      %625 = vmatpush.bf16.msra.mxu0 0
      %626 = vmatpush.bf16.msra.mxu0 0
      %627 = vmatpush.bf16.msra.mxu0 0
      %628 = vmatpush.bf16.msra.mxu0 0
      %629 = vmatpush.bf16.msra.mxu0 0
      %630 = vmatpush.bf16.msra.mxu0 %v609
      %631 = vmatmul.bf16.gmra.mxu0 %v612
      %v632 = vpop.f32.mrf.mxu0
      %v633 = vadd.f32 0.0, %v632
      %v634 = vpop.f32.mrf.mxu0
      %v635 = vadd.f32 0.0, %v634
      %636 = vmatmul.bf16.gmra.mxu0 %v615
      %v637 = vpop.f32.mrf.mxu0
      %v638 = vadd.f32 0.0, %v637
      %v639 = vpop.f32.mrf.mxu0
      %v640 = vadd.f32 0.0, %v639
      %641 = vmatmul.bf16.gmra.mxu0 %v618
      %v642 = vpop.f32.mrf.mxu0
      %v643 = vadd.f32 0.0, %v642
      %v644 = vpop.f32.mrf.mxu0
      %v645 = vadd.f32 0.0, %v644
      %646 = vmatmul.bf16.gmra.mxu0 %v621
      %v647 = vpop.f32.mrf.mxu0
      %v648 = vadd.f32 0.0, %v647
      %v649 = vpop.f32.mrf.mxu0
      %v650 = vadd.f32 0.0, %v649
      %651 = vdwg.mxu0
      %v652 = vadd.f32 %v582, %v633
      %v653 = vadd.f32 %v583, %v635
      %v654 = vadd.f32 %v584, %v638
      %v655 = vadd.f32 %v585, %v640
      %v656 = vadd.f32 %v586, %v643
      %v657 = vadd.f32 %v587, %v645
      %v658 = vadd.f32 %v588, %v648
      %v659 = vadd.f32 %v589, %v650
      %v661 = vperm.slane %v396, 0
      %v663 = vadd.f32 %v652, %v661
      %v664 = vadd.f32 %v653, %v661
      %v665 = vadd.f32 %v654, %v661
      %v666 = vadd.f32 %v655, %v661
      %v667 = vadd.f32 %v656, %v661
      %v668 = vadd.f32 %v657, %v661
      %v669 = vadd.f32 %v658, %v661
      %v670 = vadd.f32 %v659, %v661
      %v671 = vpack.c.bf16 %v663, %v663
      %v672 = vpack.c.bf16 %v664, %v664
      %v673 = vpack.c.bf16 %v665, %v665
      %v674 = vpack.c.bf16 %v666, %v666
      %v675 = vpack.c.bf16 %v667, %v667
      %v676 = vpack.c.bf16 %v668, %v668
      %v677 = vpack.c.bf16 %v669, %v669
      %v678 = vpack.c.bf16 %v670, %v670
      %vm679 = vcmask 257024
      %680 = vst.msk [vmem:[%s317] sm:$0xf] %vm679, %v671
      %681 = vst.msk [vmem:[%s317 + $0x4] sm:$0xf] %vm679, %v672
      %682 = vst.msk [vmem:[%s317 + $0x8] sm:$0xf] %vm679, %v673
      %683 = vst.msk [vmem:[%s317 + $0xc] sm:$0xf] %vm679, %v674
      %684 = vst.msk [vmem:[%s317 + $0x10] sm:$0xf] %vm679, %v675
      %685 = vst.msk [vmem:[%s317 + $0x14] sm:$0xf] %vm679, %v676
      %686 = vst.msk [vmem:[%s317 + $0x18] sm:$0xf] %vm679, %v677
      %687 = vst.msk [vmem:[%s317 + $0x1c] sm:$0xf] %vm679, %v678
      %vm688 = vcmask 261120
      %v689 = vsel %vm688, %v663, 0.0
      %v690 = vsel %vm688, %v664, 0.0
      %v691 = vadd.f32 %v689, %v690
      %v692 = vsel %vm688, %v665, 0.0
      %v693 = vadd.f32 %v691, %v692
      %v694 = vsel %vm688, %v666, 0.0
      %v695 = vadd.f32 %v693, %v694
      %v696 = vsel %vm688, %v667, 0.0
      %v697 = vadd.f32 %v695, %v696
      %v698 = vsel %vm688, %v668, 0.0
      %v699 = vadd.f32 %v697, %v698
      %v700 = vsel %vm688, %v669, 0.0
      %v701 = vadd.f32 %v699, %v700
      %v702 = vsel %vm688, %v670, 0.0
      %v703 = vadd.f32 %v701, %v702
      %v704 = vrot.slane %v703, 4
      %v705 = vadd.f32 %v703, %v704
      %v706 = vrot.slane %v705, 2
      %v707 = vadd.f32 %v705, %v706
      %v708 = vrot.slane %v707, 1
      %v709 = vadd.f32 %v707, %v708
      %v710 = vadd.f32 %v709, 0.0
      %v711 = vmul.f32 %v663, %v663
      %v712 = vmul.f32 %v664, %v664
      %v713 = vmul.f32 %v665, %v665
      %v714 = vmul.f32 %v666, %v666
      %v715 = vmul.f32 %v667, %v667
      %v716 = vmul.f32 %v668, %v668
      %v717 = vmul.f32 %v669, %v669
      %v718 = vmul.f32 %v670, %v670
      %v719 = vsel %vm688, %v711, 0.0
      %v720 = vsel %vm688, %v712, 0.0
      %v721 = vadd.f32 %v719, %v720
      %v722 = vsel %vm688, %v713, 0.0
      %v723 = vadd.f32 %v721, %v722
      %v724 = vsel %vm688, %v714, 0.0
      %v725 = vadd.f32 %v723, %v724
      %v726 = vsel %vm688, %v715, 0.0
      %v727 = vadd.f32 %v725, %v726
      %v728 = vsel %vm688, %v716, 0.0
      %v729 = vadd.f32 %v727, %v728
      %v730 = vsel %vm688, %v717, 0.0
      %v731 = vadd.f32 %v729, %v730
      %v732 = vsel %vm688, %v718, 0.0
      %v733 = vadd.f32 %v731, %v732
      %v734 = vrot.slane %v733, 4
      %v735 = vadd.f32 %v733, %v734
      %v736 = vrot.slane %v735, 2
      %v737 = vadd.f32 %v735, %v736
      %v738 = vrot.slane %v737, 1
      %v739 = vadd.f32 %v737, %v738
      %v740 = vadd.f32 %v739, 0.0
      %v741 = vld [vmem:[#allocation2 + $0x1] sm:$0xff]
      %v742 = vld [vmem:[#allocation2 + $0x11] sm:$0xff]
      %v743 = vld [vmem:[#allocation2 + $0x21] sm:$0xff]
      %v744 = vld [vmem:[#allocation2 + $0x31] sm:$0xff]
      %v745 = vld [vmem:[#allocation2 + $0x41] sm:$0xff]
      %v746 = vld [vmem:[#allocation2 + $0x51] sm:$0xff]
      %v747 = vld [vmem:[#allocation2 + $0x61] sm:$0xff]
      %v748 = vld [vmem:[#allocation2 + $0x71] sm:$0xff]
      %v749 = vpack.c.bf16 %v742, %v741
      %v750 = vpack.c.bf16 %v744, %v743
      %v751 = vpack.c.bf16 %v746, %v745
      %v752 = vpack.c.bf16 %v748, %v747
      %s753 = scalar_lea.vmem %s3, 32
      %v754 = vld [vmem:[%s753] sm:$0xf]
      %v755 = vld [vmem:[%s753 + $0x4] sm:$0xf]
      %v756 = vld [vmem:[#allocation2 + $0x2] sm:$0xff]
      %v757 = vld [vmem:[#allocation2 + $0x12] sm:$0xff]
      %v758 = vld [vmem:[#allocation2 + $0x22] sm:$0xff]
      %v759 = vld [vmem:[#allocation2 + $0x32] sm:$0xff]
      %v760 = vld [vmem:[#allocation2 + $0x42] sm:$0xff]
      %v761 = vld [vmem:[#allocation2 + $0x52] sm:$0xff]
      %v762 = vld [vmem:[#allocation2 + $0x62] sm:$0xff]
      %v763 = vld [vmem:[#allocation2 + $0x72] sm:$0xff]
      %v764 = vpack.c.bf16 %v757, %v756
      %v765 = vpack.c.bf16 %v759, %v758
      %v766 = vpack.c.bf16 %v761, %v760
      %v767 = vpack.c.bf16 %v763, %v762
      %s768 = scalar_lea.vmem %s3, 40
      %v769 = vld [vmem:[%s768] sm:$0xf]
      %v770 = vld [vmem:[%s768 + $0x4] sm:$0xf]
      %v773 = vunpack.c.l.b16 %v769
      %v774 = vunpack.c.l.b16 %v770
      %v775 = vpack.c.b16 %v774, %v773
      %v778 = vsel %vm325, %v764, 0
      %v781 = vsel %vm325, %v765, 0
      %v784 = vsel %vm325, %v766, 0
      %v787 = vsel %vm325, %v767, 0
      %789 = vmatpush.bf16.msra.mxu0 0
      %790 = vmatpush.bf16.msra.mxu0 0
      %791 = vmatpush.bf16.msra.mxu0 0
      %792 = vmatpush.bf16.msra.mxu0 0
      %793 = vmatpush.bf16.msra.mxu0 0
      %794 = vmatpush.bf16.msra.mxu0 0
      %795 = vmatpush.bf16.msra.mxu0 0
      %796 = vmatpush.bf16.msra.mxu0 %v775
      %797 = vmatmul.bf16.gmra.mxu0 %v778
      %v798 = vpop.f32.mrf.mxu0
      %v799 = vadd.f32 0.0, %v798
      %v800 = vpop.f32.mrf.mxu0
      %v801 = vadd.f32 0.0, %v800
      %802 = vmatmul.bf16.gmra.mxu0 %v781
      %v803 = vpop.f32.mrf.mxu0
      %v804 = vadd.f32 0.0, %v803
      %v805 = vpop.f32.mrf.mxu0
      %v806 = vadd.f32 0.0, %v805
      %807 = vmatmul.bf16.gmra.mxu0 %v784
      %v808 = vpop.f32.mrf.mxu0
      %v809 = vadd.f32 0.0, %v808
      %v810 = vpop.f32.mrf.mxu0
      %v811 = vadd.f32 0.0, %v810
      %812 = vmatmul.bf16.gmra.mxu0 %v787
      %v813 = vpop.f32.mrf.mxu0
      %v814 = vadd.f32 0.0, %v813
      %v815 = vpop.f32.mrf.mxu0
      %v816 = vadd.f32 0.0, %v815
      %817 = vdwg.mxu0
      %v820 = vunpack.c.l.b16 %v754
      %v821 = vunpack.c.l.b16 %v755
      %v822 = vpack.c.b16 %v821, %v820
      %v825 = vsel %vm325, %v749, 0
      %v828 = vsel %vm325, %v750, 0
      %v831 = vsel %vm325, %v751, 0
      %v834 = vsel %vm325, %v752, 0
      %836 = vmatpush.bf16.msra.mxu0 0
      %837 = vmatpush.bf16.msra.mxu0 0
      %838 = vmatpush.bf16.msra.mxu0 0
      %839 = vmatpush.bf16.msra.mxu0 0
      %840 = vmatpush.bf16.msra.mxu0 0
      %841 = vmatpush.bf16.msra.mxu0 0
      %842 = vmatpush.bf16.msra.mxu0 0
      %843 = vmatpush.bf16.msra.mxu0 %v822
      %844 = vmatmul.bf16.gmra.mxu0 %v825
      %v845 = vpop.f32.mrf.mxu0
      %v846 = vadd.f32 %v799, %v845
      %v847 = vpop.f32.mrf.mxu0
      %v848 = vadd.f32 %v801, %v847
      %849 = vmatmul.bf16.gmra.mxu0 %v828
      %v850 = vpop.f32.mrf.mxu0
      %v851 = vadd.f32 %v804, %v850
      %v852 = vpop.f32.mrf.mxu0
      %v853 = vadd.f32 %v806, %v852
      %854 = vmatmul.bf16.gmra.mxu0 %v831
      %v855 = vpop.f32.mrf.mxu0
      %v856 = vadd.f32 %v809, %v855
      %v857 = vpop.f32.mrf.mxu0
      %v858 = vadd.f32 %v811, %v857
      %859 = vmatmul.bf16.gmra.mxu0 %v834
      %v860 = vpop.f32.mrf.mxu0
      %v861 = vadd.f32 %v814, %v860
      %v862 = vpop.f32.mrf.mxu0
      %v863 = vadd.f32 %v816, %v862
      %864 = vdwg.mxu0
      %v865 = vld [vmem:[%s387 + $0x1] sm:$0xff]
      %v866 = vld [vmem:[%s387 + $0x11] sm:$0xff]
      %v867 = vld [vmem:[%s387 + $0x21] sm:$0xff]
      %v868 = vld [vmem:[%s387 + $0x31] sm:$0xff]
      %v869 = vld [vmem:[%s387 + $0x41] sm:$0xff]
      %v870 = vld [vmem:[%s387 + $0x51] sm:$0xff]
      %v871 = vld [vmem:[%s387 + $0x61] sm:$0xff]
      %v872 = vld [vmem:[%s387 + $0x71] sm:$0xff]
      %v873 = vpack.c.bf16 %v866, %v865
      %v874 = vpack.c.bf16 %v868, %v867
      %v875 = vpack.c.bf16 %v870, %v869
      %v876 = vpack.c.bf16 %v872, %v871
      %s877 = scalar_lea.vmem %s3, 48
      %v878 = vld [vmem:[%s877] sm:$0xf]
      %v879 = vld [vmem:[%s877 + $0x4] sm:$0xf]
      %v882 = vunpack.c.l.b16 %v878
      %v883 = vunpack.c.l.b16 %v879
      %v884 = vpack.c.b16 %v883, %v882
      %v887 = vsel %vm325, %v873, 0
      %v890 = vsel %vm325, %v874, 0
      %v893 = vsel %vm325, %v875, 0
      %v896 = vsel %vm325, %v876, 0
      %898 = vmatpush.bf16.msra.mxu0 0
      %899 = vmatpush.bf16.msra.mxu0 0
      %900 = vmatpush.bf16.msra.mxu0 0
      %901 = vmatpush.bf16.msra.mxu0 0
      %902 = vmatpush.bf16.msra.mxu0 0
      %903 = vmatpush.bf16.msra.mxu0 0
      %904 = vmatpush.bf16.msra.mxu0 0
      %905 = vmatpush.bf16.msra.mxu0 %v884
      %906 = vmatmul.bf16.gmra.mxu0 %v887
      %v907 = vpop.f32.mrf.mxu0
      %v908 = vadd.f32 0.0, %v907
      %v909 = vpop.f32.mrf.mxu0
      %v910 = vadd.f32 0.0, %v909
      %911 = vmatmul.bf16.gmra.mxu0 %v890
      %v912 = vpop.f32.mrf.mxu0
      %v913 = vadd.f32 0.0, %v912
      %v914 = vpop.f32.mrf.mxu0
      %v915 = vadd.f32 0.0, %v914
      %916 = vmatmul.bf16.gmra.mxu0 %v893
      %v917 = vpop.f32.mrf.mxu0
      %v918 = vadd.f32 0.0, %v917
      %v919 = vpop.f32.mrf.mxu0
      %v920 = vadd.f32 0.0, %v919
      %921 = vmatmul.bf16.gmra.mxu0 %v896
      %v922 = vpop.f32.mrf.mxu0
      %v923 = vadd.f32 0.0, %v922
      %v924 = vpop.f32.mrf.mxu0
      %v925 = vadd.f32 0.0, %v924
      %926 = vdwg.mxu0
      %v927 = vadd.f32 %v846, %v908
      %v928 = vadd.f32 %v848, %v910
      %v929 = vadd.f32 %v851, %v913
      %v930 = vadd.f32 %v853, %v915
      %v931 = vadd.f32 %v856, %v918
      %v932 = vadd.f32 %v858, %v920
      %v933 = vadd.f32 %v861, %v923
      %v934 = vadd.f32 %v863, %v925
      %v935 = vld [vmem:[%s387 + $0x2] sm:$0xff]
      %v936 = vld [vmem:[%s387 + $0x12] sm:$0xff]
      %v937 = vld [vmem:[%s387 + $0x22] sm:$0xff]
      %v938 = vld [vmem:[%s387 + $0x32] sm:$0xff]
      %v939 = vld [vmem:[%s387 + $0x42] sm:$0xff]
      %v940 = vld [vmem:[%s387 + $0x52] sm:$0xff]
      %v941 = vld [vmem:[%s387 + $0x62] sm:$0xff]
      %v942 = vld [vmem:[%s387 + $0x72] sm:$0xff]
      %v943 = vpack.c.bf16 %v936, %v935
      %v944 = vpack.c.bf16 %v938, %v937
      %v945 = vpack.c.bf16 %v940, %v939
      %v946 = vpack.c.bf16 %v942, %v941
      %s947 = scalar_lea.vmem %s3, 56
      %v948 = vld [vmem:[%s947] sm:$0xf]
      %v949 = vld [vmem:[%s947 + $0x4] sm:$0xf]
      %v952 = vunpack.c.l.b16 %v948
      %v953 = vunpack.c.l.b16 %v949
      %v954 = vpack.c.b16 %v953, %v952
      %v957 = vsel %vm325, %v943, 0
      %v960 = vsel %vm325, %v944, 0
      %v963 = vsel %vm325, %v945, 0
      %v966 = vsel %vm325, %v946, 0
      %968 = vmatpush.bf16.msra.mxu0 0
      %969 = vmatpush.bf16.msra.mxu0 0
      %970 = vmatpush.bf16.msra.mxu0 0
      %971 = vmatpush.bf16.msra.mxu0 0
      %972 = vmatpush.bf16.msra.mxu0 0
      %973 = vmatpush.bf16.msra.mxu0 0
      %974 = vmatpush.bf16.msra.mxu0 0
      %975 = vmatpush.bf16.msra.mxu0 %v954
      %976 = vmatmul.bf16.gmra.mxu0 %v957
      %v977 = vpop.f32.mrf.mxu0
      %v978 = vadd.f32 0.0, %v977
      %v979 = vpop.f32.mrf.mxu0
      %v980 = vadd.f32 0.0, %v979
      %981 = vmatmul.bf16.gmra.mxu0 %v960
      %v982 = vpop.f32.mrf.mxu0
      %v983 = vadd.f32 0.0, %v982
      %v984 = vpop.f32.mrf.mxu0
      %v985 = vadd.f32 0.0, %v984
      %986 = vmatmul.bf16.gmra.mxu0 %v963
      %v987 = vpop.f32.mrf.mxu0
      %v988 = vadd.f32 0.0, %v987
      %v989 = vpop.f32.mrf.mxu0
      %v990 = vadd.f32 0.0, %v989
      %991 = vmatmul.bf16.gmra.mxu0 %v966
      %v992 = vpop.f32.mrf.mxu0
      %v993 = vadd.f32 0.0, %v992
      %v994 = vpop.f32.mrf.mxu0
      %v995 = vadd.f32 0.0, %v994
      %996 = vdwg.mxu0
      %v997 = vadd.f32 %v927, %v978
      %v998 = vadd.f32 %v928, %v980
      %v999 = vadd.f32 %v929, %v983
      %v1000 = vadd.f32 %v930, %v985
      %v1001 = vadd.f32 %v931, %v988
      %v1002 = vadd.f32 %v932, %v990
      %v1003 = vadd.f32 %v933, %v993
      %v1004 = vadd.f32 %v934, %v995
      %v1005 = vadd.f32 %v997, %v661
      %v1006 = vadd.f32 %v998, %v661
      %v1007 = vadd.f32 %v999, %v661
      %v1008 = vadd.f32 %v1000, %v661
      %v1009 = vadd.f32 %v1001, %v661
      %v1010 = vadd.f32 %v1002, %v661
      %v1011 = vadd.f32 %v1003, %v661
      %v1012 = vadd.f32 %v1004, %v661
      %v1013 = vpack.c.bf16 %v1005, %v1005
      %v1014 = vpack.c.bf16 %v1006, %v1006
      %v1015 = vpack.c.bf16 %v1007, %v1007
      %v1016 = vpack.c.bf16 %v1008, %v1008
      %v1017 = vpack.c.bf16 %v1009, %v1009
      %v1018 = vpack.c.bf16 %v1010, %v1010
      %v1019 = vpack.c.bf16 %v1011, %v1011
      %v1020 = vpack.c.bf16 %v1012, %v1012
      %s1021 = scalar_lea.vmem %s317, 32
      %1022 = vst.msk [vmem:[%s1021] sm:$0xf] %vm679, %v1013
      %1023 = vst.msk [vmem:[%s1021 + $0x4] sm:$0xf] %vm679, %v1014
      %1024 = vst.msk [vmem:[%s1021 + $0x8] sm:$0xf] %vm679, %v1015
      %1025 = vst.msk [vmem:[%s1021 + $0xc] sm:$0xf] %vm679, %v1016
      %1026 = vst.msk [vmem:[%s1021 + $0x10] sm:$0xf] %vm679, %v1017
      %1027 = vst.msk [vmem:[%s1021 + $0x14] sm:$0xf] %vm679, %v1018
      %1028 = vst.msk [vmem:[%s1021 + $0x18] sm:$0xf] %vm679, %v1019
      %1029 = vst.msk [vmem:[%s1021 + $0x1c] sm:$0xf] %vm679, %v1020
      %v1030 = vsel %vm688, %v1005, 0.0
      %v1031 = vsel %vm688, %v1006, 0.0
      %v1032 = vadd.f32 %v1030, %v1031
      %v1033 = vsel %vm688, %v1007, 0.0
      %v1034 = vadd.f32 %v1032, %v1033
      %v1035 = vsel %vm688, %v1008, 0.0
      %v1036 = vadd.f32 %v1034, %v1035
      %v1037 = vsel %vm688, %v1009, 0.0
      %v1038 = vadd.f32 %v1036, %v1037
      %v1039 = vsel %vm688, %v1010, 0.0
      %v1040 = vadd.f32 %v1038, %v1039
      %v1041 = vsel %vm688, %v1011, 0.0
      %v1042 = vadd.f32 %v1040, %v1041
      %v1043 = vsel %vm688, %v1012, 0.0
      %v1044 = vadd.f32 %v1042, %v1043
      %v1045 = vrot.slane %v1044, 4
      %v1046 = vadd.f32 %v1044, %v1045
      %v1047 = vrot.slane %v1046, 2
      %v1048 = vadd.f32 %v1046, %v1047
      %v1049 = vrot.slane %v1048, 1
      %v1050 = vadd.f32 %v1048, %v1049
      %v1051 = vadd.f32 %v710, %v1050
      %v1052 = vmul.f32 %v1005, %v1005
      %v1053 = vmul.f32 %v1006, %v1006
      %v1054 = vmul.f32 %v1007, %v1007
      %v1055 = vmul.f32 %v1008, %v1008
      %v1056 = vmul.f32 %v1009, %v1009
      %v1057 = vmul.f32 %v1010, %v1010
      %v1058 = vmul.f32 %v1011, %v1011
      %v1059 = vmul.f32 %v1012, %v1012
      %v1060 = vsel %vm688, %v1052, 0.0
      %v1061 = vsel %vm688, %v1053, 0.0
      %v1062 = vadd.f32 %v1060, %v1061
      %v1063 = vsel %vm688, %v1054, 0.0
      %v1064 = vadd.f32 %v1062, %v1063
      %v1065 = vsel %vm688, %v1055, 0.0
      %v1066 = vadd.f32 %v1064, %v1065
      %v1067 = vsel %vm688, %v1056, 0.0
      %v1068 = vadd.f32 %v1066, %v1067
      %v1069 = vsel %vm688, %v1057, 0.0
      %v1070 = vadd.f32 %v1068, %v1069
      %v1071 = vsel %vm688, %v1058, 0.0
      %v1072 = vadd.f32 %v1070, %v1071
      %v1073 = vsel %vm688, %v1059, 0.0
      %v1074 = vadd.f32 %v1072, %v1073
      %v1075 = vrot.slane %v1074, 4
      %v1076 = vadd.f32 %v1074, %v1075
      %v1077 = vrot.slane %v1076, 2
      %v1078 = vadd.f32 %v1076, %v1077
      %v1079 = vrot.slane %v1078, 1
      %v1080 = vadd.f32 %v1078, %v1079
      %v1081 = vadd.f32 %v740, %v1080
      %v1082 = vld [vmem:[%s387] sm:$0xff]
      %v1083 = vld [vmem:[%s387 + $0x10] sm:$0xff]
      %v1084 = vld [vmem:[%s387 + $0x20] sm:$0xff]
      %v1085 = vld [vmem:[%s387 + $0x30] sm:$0xff]
      %v1086 = vld [vmem:[%s387 + $0x40] sm:$0xff]
      %v1087 = vld [vmem:[%s387 + $0x50] sm:$0xff]
      %v1088 = vld [vmem:[%s387 + $0x60] sm:$0xff]
      %v1089 = vld [vmem:[%s387 + $0x70] sm:$0xff]
      %v1090 = vpack.c.bf16 %v1083, %v1082
      %v1091 = vpack.c.bf16 %v1085, %v1084
      %v1092 = vpack.c.bf16 %v1087, %v1086
      %v1093 = vpack.c.bf16 %v1089, %v1088
      %s1094 = scalar_lea.vmem %s3, 64
      %v1095 = vld [vmem:[%s1094] sm:$0xf]
      %v1096 = vld [vmem:[%s1094 + $0x4] sm:$0xf]
      %v1097 = vld [vmem:[%s387 + $0x1] sm:$0xff]
      %v1098 = vld [vmem:[%s387 + $0x11] sm:$0xff]
      %v1099 = vld [vmem:[%s387 + $0x21] sm:$0xff]
      %v1100 = vld [vmem:[%s387 + $0x31] sm:$0xff]
      %v1101 = vld [vmem:[%s387 + $0x41] sm:$0xff]
      %v1102 = vld [vmem:[%s387 + $0x51] sm:$0xff]
      %v1103 = vld [vmem:[%s387 + $0x61] sm:$0xff]
      %v1104 = vld [vmem:[%s387 + $0x71] sm:$0xff]
      %v1105 = vpack.c.bf16 %v1098, %v1097
      %v1106 = vpack.c.bf16 %v1100, %v1099
      %v1107 = vpack.c.bf16 %v1102, %v1101
      %v1108 = vpack.c.bf16 %v1104, %v1103
      %s1109 = scalar_lea.vmem %s3, 72
      %v1110 = vld [vmem:[%s1109] sm:$0xf]
      %v1111 = vld [vmem:[%s1109 + $0x4] sm:$0xf]
      %v1114 = vunpack.c.l.b16 %v1110
      %v1115 = vunpack.c.l.b16 %v1111
      %v1116 = vpack.c.b16 %v1115, %v1114
      %v1119 = vsel %vm325, %v1105, 0
      %v1122 = vsel %vm325, %v1106, 0
      %v1125 = vsel %vm325, %v1107, 0
      %v1128 = vsel %vm325, %v1108, 0
      %1130 = vmatpush.bf16.msra.mxu0 0
      %1131 = vmatpush.bf16.msra.mxu0 0
      %1132 = vmatpush.bf16.msra.mxu0 0
      %1133 = vmatpush.bf16.msra.mxu0 0
      %1134 = vmatpush.bf16.msra.mxu0 0
      %1135 = vmatpush.bf16.msra.mxu0 0
      %1136 = vmatpush.bf16.msra.mxu0 0
      %1137 = vmatpush.bf16.msra.mxu0 %v1116
      %1138 = vmatmul.bf16.gmra.mxu0 %v1119
      %v1139 = vpop.f32.mrf.mxu0
      %v1140 = vadd.f32 0.0, %v1139
      %v1141 = vpop.f32.mrf.mxu0
      %v1142 = vadd.f32 0.0, %v1141
      %1143 = vmatmul.bf16.gmra.mxu0 %v1122
      %v1144 = vpop.f32.mrf.mxu0
      %v1145 = vadd.f32 0.0, %v1144
      %v1146 = vpop.f32.mrf.mxu0
      %v1147 = vadd.f32 0.0, %v1146
      %1148 = vmatmul.bf16.gmra.mxu0 %v1125
      %v1149 = vpop.f32.mrf.mxu0
      %v1150 = vadd.f32 0.0, %v1149
      %v1151 = vpop.f32.mrf.mxu0
      %v1152 = vadd.f32 0.0, %v1151
      %1153 = vmatmul.bf16.gmra.mxu0 %v1128
      %v1154 = vpop.f32.mrf.mxu0
      %v1155 = vadd.f32 0.0, %v1154
      %v1156 = vpop.f32.mrf.mxu0
      %v1157 = vadd.f32 0.0, %v1156
      %1158 = vdwg.mxu0
      %v1161 = vunpack.c.l.b16 %v1095
      %v1162 = vunpack.c.l.b16 %v1096
      %v1163 = vpack.c.b16 %v1162, %v1161
      %v1166 = vsel %vm325, %v1090, 0
      %v1169 = vsel %vm325, %v1091, 0
      %v1172 = vsel %vm325, %v1092, 0
      %v1175 = vsel %vm325, %v1093, 0
      %1177 = vmatpush.bf16.msra.mxu0 0
      %1178 = vmatpush.bf16.msra.mxu0 0
      %1179 = vmatpush.bf16.msra.mxu0 0
      %1180 = vmatpush.bf16.msra.mxu0 0
      %1181 = vmatpush.bf16.msra.mxu0 0
      %1182 = vmatpush.bf16.msra.mxu0 0
      %1183 = vmatpush.bf16.msra.mxu0 0
      %1184 = vmatpush.bf16.msra.mxu0 %v1163
      %1185 = vmatmul.bf16.gmra.mxu0 %v1166
      %v1186 = vpop.f32.mrf.mxu0
      %v1187 = vadd.f32 %v1140, %v1186
      %v1188 = vpop.f32.mrf.mxu0
      %v1189 = vadd.f32 %v1142, %v1188
      %1190 = vmatmul.bf16.gmra.mxu0 %v1169
      %v1191 = vpop.f32.mrf.mxu0
      %v1192 = vadd.f32 %v1145, %v1191
      %v1193 = vpop.f32.mrf.mxu0
      %v1194 = vadd.f32 %v1147, %v1193
      %1195 = vmatmul.bf16.gmra.mxu0 %v1172
      %v1196 = vpop.f32.mrf.mxu0
      %v1197 = vadd.f32 %v1150, %v1196
      %v1198 = vpop.f32.mrf.mxu0
      %v1199 = vadd.f32 %v1152, %v1198
      %1200 = vmatmul.bf16.gmra.mxu0 %v1175
      %v1201 = vpop.f32.mrf.mxu0
      %v1202 = vadd.f32 %v1155, %v1201
      %v1203 = vpop.f32.mrf.mxu0
      %v1204 = vadd.f32 %v1157, %v1203
      %1205 = vdwg.mxu0
      %s1206 = scalar_lea.vmem [#allocation2], 32
      %v1207 = vld [vmem:[%s1206] sm:$0xff]
      %v1208 = vld [vmem:[%s1206 + $0x10] sm:$0xff]
      %v1209 = vld [vmem:[%s1206 + $0x20] sm:$0xff]
      %v1210 = vld [vmem:[%s1206 + $0x30] sm:$0xff]
      %v1211 = vld [vmem:[%s1206 + $0x40] sm:$0xff]
      %v1212 = vld [vmem:[%s1206 + $0x50] sm:$0xff]
      %v1213 = vld [vmem:[%s1206 + $0x60] sm:$0xff]
      %v1214 = vld [vmem:[%s1206 + $0x70] sm:$0xff]
      %v1215 = vpack.c.bf16 %v1208, %v1207
      %v1216 = vpack.c.bf16 %v1210, %v1209
      %v1217 = vpack.c.bf16 %v1212, %v1211
      %v1218 = vpack.c.bf16 %v1214, %v1213
      %s1219 = scalar_lea.vmem %s3, 80
      %v1220 = vld [vmem:[%s1219] sm:$0xf]
      %v1221 = vld [vmem:[%s1219 + $0x4] sm:$0xf]
      %v1224 = vunpack.c.l.b16 %v1220
      %v1225 = vunpack.c.l.b16 %v1221
      %v1226 = vpack.c.b16 %v1225, %v1224
      %v1229 = vsel %vm325, %v1215, 0
      %v1232 = vsel %vm325, %v1216, 0
      %v1235 = vsel %vm325, %v1217, 0
      %v1238 = vsel %vm325, %v1218, 0
      %1240 = vmatpush.bf16.msra.mxu0 0
      %1241 = vmatpush.bf16.msra.mxu0 0
      %1242 = vmatpush.bf16.msra.mxu0 0
      %1243 = vmatpush.bf16.msra.mxu0 0
      %1244 = vmatpush.bf16.msra.mxu0 0
      %1245 = vmatpush.bf16.msra.mxu0 0
      %1246 = vmatpush.bf16.msra.mxu0 0
      %1247 = vmatpush.bf16.msra.mxu0 %v1226
      %1248 = vmatmul.bf16.gmra.mxu0 %v1229
      %v1249 = vpop.f32.mrf.mxu0
      %v1250 = vadd.f32 0.0, %v1249
      %v1251 = vpop.f32.mrf.mxu0
      %v1252 = vadd.f32 0.0, %v1251
      %1253 = vmatmul.bf16.gmra.mxu0 %v1232
      %v1254 = vpop.f32.mrf.mxu0
      %v1255 = vadd.f32 0.0, %v1254
      %v1256 = vpop.f32.mrf.mxu0
      %v1257 = vadd.f32 0.0, %v1256
      %1258 = vmatmul.bf16.gmra.mxu0 %v1235
      %v1259 = vpop.f32.mrf.mxu0
      %v1260 = vadd.f32 0.0, %v1259
      %v1261 = vpop.f32.mrf.mxu0
      %v1262 = vadd.f32 0.0, %v1261
      %1263 = vmatmul.bf16.gmra.mxu0 %v1238
      %v1264 = vpop.f32.mrf.mxu0
      %v1265 = vadd.f32 0.0, %v1264
      %v1266 = vpop.f32.mrf.mxu0
      %v1267 = vadd.f32 0.0, %v1266
      %1268 = vdwg.mxu0
      %v1269 = vadd.f32 %v1187, %v1250
      %v1270 = vadd.f32 %v1189, %v1252
      %v1271 = vadd.f32 %v1192, %v1255
      %v1272 = vadd.f32 %v1194, %v1257
      %v1273 = vadd.f32 %v1197, %v1260
      %v1274 = vadd.f32 %v1199, %v1262
      %v1275 = vadd.f32 %v1202, %v1265
      %v1276 = vadd.f32 %v1204, %v1267
      %v1277 = vld [vmem:[%s1206 + $0x1] sm:$0xff]
      %v1278 = vld [vmem:[%s1206 + $0x11] sm:$0xff]
      %v1279 = vld [vmem:[%s1206 + $0x21] sm:$0xff]
      %v1280 = vld [vmem:[%s1206 + $0x31] sm:$0xff]
      %v1281 = vld [vmem:[%s1206 + $0x41] sm:$0xff]
      %v1282 = vld [vmem:[%s1206 + $0x51] sm:$0xff]
      %v1283 = vld [vmem:[%s1206 + $0x61] sm:$0xff]
      %v1284 = vld [vmem:[%s1206 + $0x71] sm:$0xff]
      %v1285 = vpack.c.bf16 %v1278, %v1277
      %v1286 = vpack.c.bf16 %v1280, %v1279
      %v1287 = vpack.c.bf16 %v1282, %v1281
      %v1288 = vpack.c.bf16 %v1284, %v1283
      %s1289 = scalar_lea.vmem %s3, 88
      %v1290 = vld [vmem:[%s1289] sm:$0xf]
      %v1291 = vld [vmem:[%s1289 + $0x4] sm:$0xf]
      %v1294 = vunpack.c.l.b16 %v1290
      %v1295 = vunpack.c.l.b16 %v1291
      %v1296 = vpack.c.b16 %v1295, %v1294
      %v1299 = vsel %vm325, %v1285, 0
      %v1302 = vsel %vm325, %v1286, 0
      %v1305 = vsel %vm325, %v1287, 0
      %v1308 = vsel %vm325, %v1288, 0
      %1310 = vmatpush.bf16.msra.mxu0 0
      %1311 = vmatpush.bf16.msra.mxu0 0
      %1312 = vmatpush.bf16.msra.mxu0 0
      %1313 = vmatpush.bf16.msra.mxu0 0
      %1314 = vmatpush.bf16.msra.mxu0 0
      %1315 = vmatpush.bf16.msra.mxu0 0
      %1316 = vmatpush.bf16.msra.mxu0 0
      %1317 = vmatpush.bf16.msra.mxu0 %v1296
      %1318 = vmatmul.bf16.gmra.mxu0 %v1299
      %v1319 = vpop.f32.mrf.mxu0
      %v1320 = vadd.f32 0.0, %v1319
      %v1321 = vpop.f32.mrf.mxu0
      %v1322 = vadd.f32 0.0, %v1321
      %1323 = vmatmul.bf16.gmra.mxu0 %v1302
      %v1324 = vpop.f32.mrf.mxu0
      %v1325 = vadd.f32 0.0, %v1324
      %v1326 = vpop.f32.mrf.mxu0
      %v1327 = vadd.f32 0.0, %v1326
      %1328 = vmatmul.bf16.gmra.mxu0 %v1305
      %v1329 = vpop.f32.mrf.mxu0
      %v1330 = vadd.f32 0.0, %v1329
      %v1331 = vpop.f32.mrf.mxu0
      %v1332 = vadd.f32 0.0, %v1331
      %1333 = vmatmul.bf16.gmra.mxu0 %v1308
      %v1334 = vpop.f32.mrf.mxu0
      %v1335 = vadd.f32 0.0, %v1334
      %v1336 = vpop.f32.mrf.mxu0
      %v1337 = vadd.f32 0.0, %v1336
      %1338 = vdwg.mxu0
      %v1339 = vadd.f32 %v1269, %v1320
      %v1340 = vadd.f32 %v1270, %v1322
      %v1341 = vadd.f32 %v1271, %v1325
      %v1342 = vadd.f32 %v1272, %v1327
      %v1343 = vadd.f32 %v1273, %v1330
      %v1344 = vadd.f32 %v1274, %v1332
      %v1345 = vadd.f32 %v1275, %v1335
      %v1346 = vadd.f32 %v1276, %v1337
      %v1347 = vadd.f32 %v1339, %v661
      %v1348 = vadd.f32 %v1340, %v661
      %v1349 = vadd.f32 %v1341, %v661
      %v1350 = vadd.f32 %v1342, %v661
      %v1351 = vadd.f32 %v1343, %v661
      %v1352 = vadd.f32 %v1344, %v661
      %v1353 = vadd.f32 %v1345, %v661
      %v1354 = vadd.f32 %v1346, %v661
      %v1355 = vpack.c.bf16 %v1347, %v1347
      %v1356 = vpack.c.bf16 %v1348, %v1348
      %v1357 = vpack.c.bf16 %v1349, %v1349
      %v1358 = vpack.c.bf16 %v1350, %v1350
      %v1359 = vpack.c.bf16 %v1351, %v1351
      %v1360 = vpack.c.bf16 %v1352, %v1352
      %v1361 = vpack.c.bf16 %v1353, %v1353
      %v1362 = vpack.c.bf16 %v1354, %v1354
      %s1363 = scalar_lea.vmem %s317, 64
      %1364 = vst.msk [vmem:[%s1363] sm:$0xf] %vm679, %v1355
      %1365 = vst.msk [vmem:[%s1363 + $0x4] sm:$0xf] %vm679, %v1356
      %1366 = vst.msk [vmem:[%s1363 + $0x8] sm:$0xf] %vm679, %v1357
      %1367 = vst.msk [vmem:[%s1363 + $0xc] sm:$0xf] %vm679, %v1358
      %1368 = vst.msk [vmem:[%s1363 + $0x10] sm:$0xf] %vm679, %v1359
      %1369 = vst.msk [vmem:[%s1363 + $0x14] sm:$0xf] %vm679, %v1360
      %1370 = vst.msk [vmem:[%s1363 + $0x18] sm:$0xf] %vm679, %v1361
      %1371 = vst.msk [vmem:[%s1363 + $0x1c] sm:$0xf] %vm679, %v1362
      %v1372 = vsel %vm688, %v1347, 0.0
      %v1373 = vsel %vm688, %v1348, 0.0
      %v1374 = vadd.f32 %v1372, %v1373
      %v1375 = vsel %vm688, %v1349, 0.0
      %v1376 = vadd.f32 %v1374, %v1375
      %v1377 = vsel %vm688, %v1350, 0.0
      %v1378 = vadd.f32 %v1376, %v1377
      %v1379 = vsel %vm688, %v1351, 0.0
      %v1380 = vadd.f32 %v1378, %v1379
      %v1381 = vsel %vm688, %v1352, 0.0
      %v1382 = vadd.f32 %v1380, %v1381
      %v1383 = vsel %vm688, %v1353, 0.0
      %v1384 = vadd.f32 %v1382, %v1383
      %v1385 = vsel %vm688, %v1354, 0.0
      %v1386 = vadd.f32 %v1384, %v1385
      %v1387 = vrot.slane %v1386, 4
      %v1388 = vadd.f32 %v1386, %v1387
      %v1389 = vrot.slane %v1388, 2
      %v1390 = vadd.f32 %v1388, %v1389
      %v1391 = vrot.slane %v1390, 1
      %v1392 = vadd.f32 %v1390, %v1391
      %v1393 = vadd.f32 %v1051, %v1392
      %v1394 = vmul.f32 %v1347, %v1347
      %v1395 = vmul.f32 %v1348, %v1348
      %v1396 = vmul.f32 %v1349, %v1349
      %v1397 = vmul.f32 %v1350, %v1350
      %v1398 = vmul.f32 %v1351, %v1351
      %v1399 = vmul.f32 %v1352, %v1352
      %v1400 = vmul.f32 %v1353, %v1353
      %v1401 = vmul.f32 %v1354, %v1354
      %v1402 = vsel %vm688, %v1394, 0.0
      %v1403 = vsel %vm688, %v1395, 0.0
      %v1404 = vadd.f32 %v1402, %v1403
      %v1405 = vsel %vm688, %v1396, 0.0
      %v1406 = vadd.f32 %v1404, %v1405
      %v1407 = vsel %vm688, %v1397, 0.0
      %v1408 = vadd.f32 %v1406, %v1407
      %v1409 = vsel %vm688, %v1398, 0.0
      %v1410 = vadd.f32 %v1408, %v1409
      %v1411 = vsel %vm688, %v1399, 0.0
      %v1412 = vadd.f32 %v1410, %v1411
      %v1413 = vsel %vm688, %v1400, 0.0
      %v1414 = vadd.f32 %v1412, %v1413
      %v1415 = vsel %vm688, %v1401, 0.0
      %v1416 = vadd.f32 %v1414, %v1415
      %v1417 = vrot.slane %v1416, 4
      %v1418 = vadd.f32 %v1416, %v1417
      %v1419 = vrot.slane %v1418, 2
      %v1420 = vadd.f32 %v1418, %v1419
      %v1421 = vrot.slane %v1420, 1
      %v1422 = vadd.f32 %v1420, %v1421
      %v1423 = vadd.f32 %v1081, %v1422
      %v1424 = vld [vmem:[%s387 + $0x1] sm:$0xff]
      %v1425 = vld [vmem:[%s387 + $0x11] sm:$0xff]
      %v1426 = vld [vmem:[%s387 + $0x21] sm:$0xff]
      %v1427 = vld [vmem:[%s387 + $0x31] sm:$0xff]
      %v1428 = vld [vmem:[%s387 + $0x41] sm:$0xff]
      %v1429 = vld [vmem:[%s387 + $0x51] sm:$0xff]
      %v1430 = vld [vmem:[%s387 + $0x61] sm:$0xff]
      %v1431 = vld [vmem:[%s387 + $0x71] sm:$0xff]
      %v1432 = vpack.c.bf16 %v1425, %v1424
      %v1433 = vpack.c.bf16 %v1427, %v1426
      %v1434 = vpack.c.bf16 %v1429, %v1428
      %v1435 = vpack.c.bf16 %v1431, %v1430
      %s1436 = scalar_lea.vmem %s3, 96
      %v1437 = vld [vmem:[%s1436] sm:$0xf]
      %v1438 = vld [vmem:[%s1436 + $0x4] sm:$0xf]
      %v1439 = vld [vmem:[%s387 + $0x2] sm:$0xff]
      %v1440 = vld [vmem:[%s387 + $0x12] sm:$0xff]
      %v1441 = vld [vmem:[%s387 + $0x22] sm:$0xff]
      %v1442 = vld [vmem:[%s387 + $0x32] sm:$0xff]
      %v1443 = vld [vmem:[%s387 + $0x42] sm:$0xff]
      %v1444 = vld [vmem:[%s387 + $0x52] sm:$0xff]
      %v1445 = vld [vmem:[%s387 + $0x62] sm:$0xff]
      %v1446 = vld [vmem:[%s387 + $0x72] sm:$0xff]
      %v1447 = vpack.c.bf16 %v1440, %v1439
      %v1448 = vpack.c.bf16 %v1442, %v1441
      %v1449 = vpack.c.bf16 %v1444, %v1443
      %v1450 = vpack.c.bf16 %v1446, %v1445
      %s1451 = scalar_lea.vmem %s3, 104
      %v1452 = vld [vmem:[%s1451] sm:$0xf]
      %v1453 = vld [vmem:[%s1451 + $0x4] sm:$0xf]
      %v1456 = vunpack.c.l.b16 %v1452
      %v1457 = vunpack.c.l.b16 %v1453
      %v1458 = vpack.c.b16 %v1457, %v1456
      %v1461 = vsel %vm325, %v1447, 0
      %v1464 = vsel %vm325, %v1448, 0
      %v1467 = vsel %vm325, %v1449, 0
      %v1470 = vsel %vm325, %v1450, 0
      %1472 = vmatpush.bf16.msra.mxu0 0
      %1473 = vmatpush.bf16.msra.mxu0 0
      %1474 = vmatpush.bf16.msra.mxu0 0
      %1475 = vmatpush.bf16.msra.mxu0 0
      %1476 = vmatpush.bf16.msra.mxu0 0
      %1477 = vmatpush.bf16.msra.mxu0 0
      %1478 = vmatpush.bf16.msra.mxu0 0
      %1479 = vmatpush.bf16.msra.mxu0 %v1458
      %1480 = vmatmul.bf16.gmra.mxu0 %v1461
      %v1481 = vpop.f32.mrf.mxu0
      %v1482 = vadd.f32 0.0, %v1481
      %v1483 = vpop.f32.mrf.mxu0
      %v1484 = vadd.f32 0.0, %v1483
      %1485 = vmatmul.bf16.gmra.mxu0 %v1464
      %v1486 = vpop.f32.mrf.mxu0
      %v1487 = vadd.f32 0.0, %v1486
      %v1488 = vpop.f32.mrf.mxu0
      %v1489 = vadd.f32 0.0, %v1488
      %1490 = vmatmul.bf16.gmra.mxu0 %v1467
      %v1491 = vpop.f32.mrf.mxu0
      %v1492 = vadd.f32 0.0, %v1491
      %v1493 = vpop.f32.mrf.mxu0
      %v1494 = vadd.f32 0.0, %v1493
      %1495 = vmatmul.bf16.gmra.mxu0 %v1470
      %v1496 = vpop.f32.mrf.mxu0
      %v1497 = vadd.f32 0.0, %v1496
      %v1498 = vpop.f32.mrf.mxu0
      %v1499 = vadd.f32 0.0, %v1498
      %1500 = vdwg.mxu0
      %v1503 = vunpack.c.l.b16 %v1437
      %v1504 = vunpack.c.l.b16 %v1438
      %v1505 = vpack.c.b16 %v1504, %v1503
      %v1508 = vsel %vm325, %v1432, 0
      %v1511 = vsel %vm325, %v1433, 0
      %v1514 = vsel %vm325, %v1434, 0
      %v1517 = vsel %vm325, %v1435, 0
      %1519 = vmatpush.bf16.msra.mxu0 0
      %1520 = vmatpush.bf16.msra.mxu0 0
      %1521 = vmatpush.bf16.msra.mxu0 0
      %1522 = vmatpush.bf16.msra.mxu0 0
      %1523 = vmatpush.bf16.msra.mxu0 0
      %1524 = vmatpush.bf16.msra.mxu0 0
      %1525 = vmatpush.bf16.msra.mxu0 0
      %1526 = vmatpush.bf16.msra.mxu0 %v1505
      %1527 = vmatmul.bf16.gmra.mxu0 %v1508
      %v1528 = vpop.f32.mrf.mxu0
      %v1529 = vadd.f32 %v1482, %v1528
      %v1530 = vpop.f32.mrf.mxu0
      %v1531 = vadd.f32 %v1484, %v1530
      %1532 = vmatmul.bf16.gmra.mxu0 %v1511
      %v1533 = vpop.f32.mrf.mxu0
      %v1534 = vadd.f32 %v1487, %v1533
      %v1535 = vpop.f32.mrf.mxu0
      %v1536 = vadd.f32 %v1489, %v1535
      %1537 = vmatmul.bf16.gmra.mxu0 %v1514
      %v1538 = vpop.f32.mrf.mxu0
      %v1539 = vadd.f32 %v1492, %v1538
      %v1540 = vpop.f32.mrf.mxu0
      %v1541 = vadd.f32 %v1494, %v1540
      %1542 = vmatmul.bf16.gmra.mxu0 %v1517
      %v1543 = vpop.f32.mrf.mxu0
      %v1544 = vadd.f32 %v1497, %v1543
      %v1545 = vpop.f32.mrf.mxu0
      %v1546 = vadd.f32 %v1499, %v1545
      %1547 = vdwg.mxu0
      %v1548 = vld [vmem:[%s1206 + $0x1] sm:$0xff]
      %v1549 = vld [vmem:[%s1206 + $0x11] sm:$0xff]
      %v1550 = vld [vmem:[%s1206 + $0x21] sm:$0xff]
      %v1551 = vld [vmem:[%s1206 + $0x31] sm:$0xff]
      %v1552 = vld [vmem:[%s1206 + $0x41] sm:$0xff]
      %v1553 = vld [vmem:[%s1206 + $0x51] sm:$0xff]
      %v1554 = vld [vmem:[%s1206 + $0x61] sm:$0xff]
      %v1555 = vld [vmem:[%s1206 + $0x71] sm:$0xff]
      %v1556 = vpack.c.bf16 %v1549, %v1548
      %v1557 = vpack.c.bf16 %v1551, %v1550
      %v1558 = vpack.c.bf16 %v1553, %v1552
      %v1559 = vpack.c.bf16 %v1555, %v1554
      %s1560 = scalar_lea.vmem %s3, 112
      %v1561 = vld [vmem:[%s1560] sm:$0xf]
      %v1562 = vld [vmem:[%s1560 + $0x4] sm:$0xf]
      %v1565 = vunpack.c.l.b16 %v1561
      %v1566 = vunpack.c.l.b16 %v1562
      %v1567 = vpack.c.b16 %v1566, %v1565
      %v1570 = vsel %vm325, %v1556, 0
      %v1573 = vsel %vm325, %v1557, 0
      %v1576 = vsel %vm325, %v1558, 0
      %v1579 = vsel %vm325, %v1559, 0
      %1581 = vmatpush.bf16.msra.mxu0 0
      %1582 = vmatpush.bf16.msra.mxu0 0
      %1583 = vmatpush.bf16.msra.mxu0 0
      %1584 = vmatpush.bf16.msra.mxu0 0
      %1585 = vmatpush.bf16.msra.mxu0 0
      %1586 = vmatpush.bf16.msra.mxu0 0
      %1587 = vmatpush.bf16.msra.mxu0 0
      %1588 = vmatpush.bf16.msra.mxu0 %v1567
      %1589 = vmatmul.bf16.gmra.mxu0 %v1570
      %v1590 = vpop.f32.mrf.mxu0
      %v1591 = vadd.f32 0.0, %v1590
      %v1592 = vpop.f32.mrf.mxu0
      %v1593 = vadd.f32 0.0, %v1592
      %1594 = vmatmul.bf16.gmra.mxu0 %v1573
      %v1595 = vpop.f32.mrf.mxu0
      %v1596 = vadd.f32 0.0, %v1595
      %v1597 = vpop.f32.mrf.mxu0
      %v1598 = vadd.f32 0.0, %v1597
      %1599 = vmatmul.bf16.gmra.mxu0 %v1576
      %v1600 = vpop.f32.mrf.mxu0
      %v1601 = vadd.f32 0.0, %v1600
      %v1602 = vpop.f32.mrf.mxu0
      %v1603 = vadd.f32 0.0, %v1602
      %1604 = vmatmul.bf16.gmra.mxu0 %v1579
      %v1605 = vpop.f32.mrf.mxu0
      %v1606 = vadd.f32 0.0, %v1605
      %v1607 = vpop.f32.mrf.mxu0
      %v1608 = vadd.f32 0.0, %v1607
      %1609 = vdwg.mxu0
      %v1610 = vadd.f32 %v1529, %v1591
      %v1611 = vadd.f32 %v1531, %v1593
      %v1612 = vadd.f32 %v1534, %v1596
      %v1613 = vadd.f32 %v1536, %v1598
      %v1614 = vadd.f32 %v1539, %v1601
      %v1615 = vadd.f32 %v1541, %v1603
      %v1616 = vadd.f32 %v1544, %v1606
      %v1617 = vadd.f32 %v1546, %v1608
      %v1618 = vld [vmem:[%s1206 + $0x2] sm:$0xff]
      %v1619 = vld [vmem:[%s1206 + $0x12] sm:$0xff]
      %v1620 = vld [vmem:[%s1206 + $0x22] sm:$0xff]
      %v1621 = vld [vmem:[%s1206 + $0x32] sm:$0xff]
      %v1622 = vld [vmem:[%s1206 + $0x42] sm:$0xff]
      %v1623 = vld [vmem:[%s1206 + $0x52] sm:$0xff]
      %v1624 = vld [vmem:[%s1206 + $0x62] sm:$0xff]
      %v1625 = vld [vmem:[%s1206 + $0x72] sm:$0xff]
      %v1626 = vpack.c.bf16 %v1619, %v1618
      %v1627 = vpack.c.bf16 %v1621, %v1620
      %v1628 = vpack.c.bf16 %v1623, %v1622
      %v1629 = vpack.c.bf16 %v1625, %v1624
      %s1630 = scalar_lea.vmem %s3, 120
      %v1631 = vld [vmem:[%s1630] sm:$0xf]
      %v1632 = vld [vmem:[%s1630 + $0x4] sm:$0xf]
      %v1635 = vunpack.c.l.b16 %v1631
      %v1636 = vunpack.c.l.b16 %v1632
      %v1637 = vpack.c.b16 %v1636, %v1635
      %v1640 = vsel %vm325, %v1626, 0
      %v1643 = vsel %vm325, %v1627, 0
      %v1646 = vsel %vm325, %v1628, 0
      %v1649 = vsel %vm325, %v1629, 0
      %1651 = vmatpush.bf16.msra.mxu0 0
      %1652 = vmatpush.bf16.msra.mxu0 0
      %1653 = vmatpush.bf16.msra.mxu0 0
      %1654 = vmatpush.bf16.msra.mxu0 0
      %1655 = vmatpush.bf16.msra.mxu0 0
      %1656 = vmatpush.bf16.msra.mxu0 0
      %1657 = vmatpush.bf16.msra.mxu0 0
      %1658 = vmatpush.bf16.msra.mxu0 %v1637
      %1659 = vmatmul.bf16.gmra.mxu0 %v1640
      %v1660 = vpop.f32.mrf.mxu0
      %v1661 = vadd.f32 0.0, %v1660
      %v1662 = vpop.f32.mrf.mxu0
      %v1663 = vadd.f32 0.0, %v1662
      %1664 = vmatmul.bf16.gmra.mxu0 %v1643
      %v1665 = vpop.f32.mrf.mxu0
      %v1666 = vadd.f32 0.0, %v1665
      %v1667 = vpop.f32.mrf.mxu0
      %v1668 = vadd.f32 0.0, %v1667
      %1669 = vmatmul.bf16.gmra.mxu0 %v1646
      %v1670 = vpop.f32.mrf.mxu0
      %v1671 = vadd.f32 0.0, %v1670
      %v1672 = vpop.f32.mrf.mxu0
      %v1673 = vadd.f32 0.0, %v1672
      %1674 = vmatmul.bf16.gmra.mxu0 %v1649
      %v1675 = vpop.f32.mrf.mxu0
      %v1676 = vadd.f32 0.0, %v1675
      %v1677 = vpop.f32.mrf.mxu0
      %v1678 = vadd.f32 0.0, %v1677
      %1679 = vdwg.mxu0
      %v1680 = vadd.f32 %v1610, %v1661
      %v1681 = vadd.f32 %v1611, %v1663
      %v1682 = vadd.f32 %v1612, %v1666
      %v1683 = vadd.f32 %v1613, %v1668
      %v1684 = vadd.f32 %v1614, %v1671
      %v1685 = vadd.f32 %v1615, %v1673
      %v1686 = vadd.f32 %v1616, %v1676
      %v1687 = vadd.f32 %v1617, %v1678
      %v1688 = vadd.f32 %v1680, %v661
      %v1689 = vadd.f32 %v1681, %v661
      %v1690 = vadd.f32 %v1682, %v661
      %v1691 = vadd.f32 %v1683, %v661
      %v1692 = vadd.f32 %v1684, %v661
      %v1693 = vadd.f32 %v1685, %v661
      %v1694 = vadd.f32 %v1686, %v661
      %v1695 = vadd.f32 %v1687, %v661
      %v1696 = vpack.c.bf16 %v1688, %v1688
      %v1697 = vpack.c.bf16 %v1689, %v1689
      %v1698 = vpack.c.bf16 %v1690, %v1690
      %v1699 = vpack.c.bf16 %v1691, %v1691
      %v1700 = vpack.c.bf16 %v1692, %v1692
      %v1701 = vpack.c.bf16 %v1693, %v1693
      %v1702 = vpack.c.bf16 %v1694, %v1694
      %v1703 = vpack.c.bf16 %v1695, %v1695
      %s1704 = scalar_lea.vmem %s317, 96
      %1705 = vst.msk [vmem:[%s1704] sm:$0xf] %vm679, %v1696
      %1706 = vst.msk [vmem:[%s1704 + $0x4] sm:$0xf] %vm679, %v1697
      %1707 = vst.msk [vmem:[%s1704 + $0x8] sm:$0xf] %vm679, %v1698
      %1708 = vst.msk [vmem:[%s1704 + $0xc] sm:$0xf] %vm679, %v1699
      %1709 = vst.msk [vmem:[%s1704 + $0x10] sm:$0xf] %vm679, %v1700
      %1710 = vst.msk [vmem:[%s1704 + $0x14] sm:$0xf] %vm679, %v1701
      %1711 = vst.msk [vmem:[%s1704 + $0x18] sm:$0xf] %vm679, %v1702
      %1712 = vst.msk [vmem:[%s1704 + $0x1c] sm:$0xf] %vm679, %v1703
      %v1713 = vsel %vm688, %v1688, 0.0
      %v1714 = vsel %vm688, %v1689, 0.0
      %v1715 = vadd.f32 %v1713, %v1714
      %v1716 = vsel %vm688, %v1690, 0.0
      %v1717 = vadd.f32 %v1715, %v1716
      %v1718 = vsel %vm688, %v1691, 0.0
      %v1719 = vadd.f32 %v1717, %v1718
      %v1720 = vsel %vm688, %v1692, 0.0
      %v1721 = vadd.f32 %v1719, %v1720
      %v1722 = vsel %vm688, %v1693, 0.0
      %v1723 = vadd.f32 %v1721, %v1722
      %v1724 = vsel %vm688, %v1694, 0.0
      %v1725 = vadd.f32 %v1723, %v1724
      %v1726 = vsel %vm688, %v1695, 0.0
      %v1727 = vadd.f32 %v1725, %v1726
      %v1728 = vrot.slane %v1727, 4
      %v1729 = vadd.f32 %v1727, %v1728
      %v1730 = vrot.slane %v1729, 2
      %v1731 = vadd.f32 %v1729, %v1730
      %v1732 = vrot.slane %v1731, 1
      %v1733 = vadd.f32 %v1731, %v1732
      %v1734 = vadd.f32 %v1393, %v1733
      %v1735 = vmul.f32 %v1688, %v1688
      %v1736 = vmul.f32 %v1689, %v1689
      %v1737 = vmul.f32 %v1690, %v1690
      %v1738 = vmul.f32 %v1691, %v1691
      %v1739 = vmul.f32 %v1692, %v1692
      %v1740 = vmul.f32 %v1693, %v1693
      %v1741 = vmul.f32 %v1694, %v1694
      %v1742 = vmul.f32 %v1695, %v1695
      %v1743 = vsel %vm688, %v1735, 0.0
      %v1744 = vsel %vm688, %v1736, 0.0
      %v1745 = vadd.f32 %v1743, %v1744
      %v1746 = vsel %vm688, %v1737, 0.0
      %v1747 = vadd.f32 %v1745, %v1746
      %v1748 = vsel %vm688, %v1738, 0.0
      %v1749 = vadd.f32 %v1747, %v1748
      %v1750 = vsel %vm688, %v1739, 0.0
      %v1751 = vadd.f32 %v1749, %v1750
      %v1752 = vsel %vm688, %v1740, 0.0
      %v1753 = vadd.f32 %v1751, %v1752
      %v1754 = vsel %vm688, %v1741, 0.0
      %v1755 = vadd.f32 %v1753, %v1754
      %v1756 = vsel %vm688, %v1742, 0.0
      %v1757 = vadd.f32 %v1755, %v1756
      %v1758 = vrot.slane %v1757, 4
      %v1759 = vadd.f32 %v1757, %v1758
      %v1760 = vrot.slane %v1759, 2
      %v1761 = vadd.f32 %v1759, %v1760
      %v1762 = vrot.slane %v1761, 1
      %v1763 = vadd.f32 %v1761, %v1762
      %v1764 = vadd.f32 %v1423, %v1763
      %vm1765 = vcmask 253952
      %1766 = vst.msk [vmem:[%s320] sm:$0x1] %vm1765, %v1734
      %1767 = vst.msk [vmem:[%s323] sm:$0x1] %vm1765, %v1764
      %p1768 = scmp.lt.s32.totalorder %s19, 1
      %s1769 = scalar_select %p1768, %s19, 1
      %s1770 = smul.addr %s1769, 32
      %s1771 = smul.addr %s1770, 4
      %s1772 = scalar_lea.vmem %s5, %s1771
      %p1773 = scmp.lt.s32.totalorder %s19, 1
      %s1774 = scalar_select %p1773, %s19, 1
      %s1775 = scalar_lea.vmem %s6, %s1774
      %p1776 = scmp.lt.s32.totalorder %s19, 1
      %s1777 = scalar_select %p1776, %s19, 1
      %s1778 = scalar_lea.vmem %s7, %s1777
      // Predicated region
      $region41: #{biggan_generator_block.4} parent=39 // pred_check
        %p1779 = pneg %p157
      $region42: #{biggan_generator_block.4} parent=39 // pred_check_branch
        %1781 = sbr.rel (%p1779) target = $region44
      $region43: #{biggan_generator_block.4} parent=39 // pred_region
        _
      $region44: #{biggan_generator_block.4} parent=39 // pred_fallthru
        _
      // Predicated region
      $region45: #{biggan_generator_block.4} parent=39 // pred_check
        %p1782 = pneg %p183
      $region46: #{biggan_generator_block.4} parent=39 // pred_check_branch
        %1784 = sbr.rel (%p1782) target = $region48
      $region47: #{biggan_generator_block.4} parent=39 // pred_region
        _
      $region48: #{biggan_generator_block.4} parent=39 // pred_fallthru
        _
      // Predicated region
      $region49: #{biggan_generator_block.4} parent=39 // pred_check
        %p1785 = pneg %p209
      $region50: #{biggan_generator_block.4} parent=39 // pred_check_branch
        %1787 = sbr.rel (%p1785) target = $region52
      $region51: #{biggan_generator_block.4} parent=39 // pred_region
        _
      $region52: #{biggan_generator_block.4} parent=39 // pred_fallthru
        _
    $region40: #{biggan_generator_block.4} parent=5 // pred_fallthru
      _
    %p1788 = scmp.le.s32.totalorder 2, %s14
    // Predicated region
    $region53: #{biggan_generator_block.4} parent=5 // pred_check
      %p1789 = pneg %p1788
    $region54: #{biggan_generator_block.4} parent=5 // pred_check_branch
      %1791 = sbr.rel (%p1789) target = $region56
    $region55: #{biggan_generator_block.4} parent=5 // pred_region
      %s1792 = ssub.s32 %s14, 2
      // Predicated region
      $region57: #{biggan_generator_block.4} parent=55 // pred_check
        %p1793 = pneg %p163
      $region58: #{biggan_generator_block.4} parent=55 // pred_check_branch
        %1795 = sbr.rel (%p1793) target = $region60
      $region59: #{biggan_generator_block.4} parent=55 // pred_region
        %p1796 = scmp.lt.s32.totalorder %s20, 1
        %s1797 = scalar_select %p1796, %s20, 1
        %s1798 = smul.addr %s1797, 32
        %s1799 = smul.addr %s1798, 4
        %s1800 = scalar_lea.vmem %s5, %s1799
      $region60: #{biggan_generator_block.4} parent=55 // pred_fallthru
        _
      // Predicated region
      $region61: #{biggan_generator_block.4} parent=55 // pred_check
        %p1801 = pneg %p189
      $region62: #{biggan_generator_block.4} parent=55 // pred_check_branch
        %1803 = sbr.rel (%p1801) target = $region64
      $region63: #{biggan_generator_block.4} parent=55 // pred_region
        %p1804 = scmp.lt.s32.totalorder %s20, 1
        %s1805 = scalar_select %p1804, %s20, 1
        %s1806 = scalar_lea.vmem %s6, %s1805
      $region64: #{biggan_generator_block.4} parent=55 // pred_fallthru
        _
      // Predicated region
      $region65: #{biggan_generator_block.4} parent=55 // pred_check
        %p1807 = pneg %p215
      $region66: #{biggan_generator_block.4} parent=55 // pred_check_branch
        %1809 = sbr.rel (%p1807) target = $region68
      $region67: #{biggan_generator_block.4} parent=55 // pred_region
        %p1810 = scmp.lt.s32.totalorder %s20, 1
        %s1811 = scalar_select %p1810, %s20, 1
        %s1812 = scalar_lea.vmem %s7, %s1811
      $region68: #{biggan_generator_block.4} parent=55 // pred_fallthru
        _
    $region56: #{biggan_generator_block.4} parent=5 // pred_fallthru
      _
  $region6: #{biggan_generator_block.4} parent=0 // loop_footer
    %s18 = sadd.s32 1, %s14
  $region7: #{biggan_generator_block.4} parent=0 // loop_footer_branch
    %13 = sbr.rel target = $region3
  $region8: #{biggan_generator_block.4} parent=0 // loop_exit
    _

// kernel: biggan_generator_block.5
$region0: #{biggan_generator_block.5}
  #allocation0 [shape = 'u32[]', space=smem, size = 0x4, offset = 0x4, fixed_abs, tag = 'smem constant byte address 0x4 - core index']
  #allocation1 [shape = 'u32[72,128]{1,0:T(1,128)}', space=vmem, size = 0x9000, scoped, tag = 'internal scratch']
  #allocation2 [shape = 'f32[4,10,10,32]{3,2,1,0:T(8,128)}', space=vmem, size = 0x50000, scoped, tag = 'scratch operand']
  %s0 = inlined_call_operand.vmem [shape: bf16[2,4,64,32], index: 0, kind: input, shape index: {}]
  %s1 = inlined_call_operand.vmem [shape: f32[2,1,32], index: 1, kind: input, shape index: {}]
  %s2 = inlined_call_operand.vmem [shape: f32[2,1,32], index: 2, kind: input, shape index: {}]
  %s3 = inlined_call_operand.vmem [shape: bf16[3,3,32,32], index: 3, kind: input, shape index: {}]
  %s4 = inlined_call_operand.vmem [shape: f32[1,32], index: 4, kind: input, shape index: {}]
  %s5 = inlined_call_operand.vmem [shape: bf16[2,64,32], index: 5, kind: input, shape index: {}]
  %s6 = inlined_call_operand.vmem [shape: f32[2,4,64,32], index: 6, kind: output, shape index: {}]
  %s7 = sld [smem:[#allocation0]]
  $region57: #{biggan_generator_block.5} parent=0
    _
  %s9 = ssub.s32 1, %s7
  %s10 = scalar_select 0, %s9, %s7
  loop: start=0, step=1, limit=4
  $region2: #{biggan_generator_block.5} parent=0 // loop_pre_header
    _
  $region3: #{biggan_generator_block.5} parent=0 // loop_header
    %s12 = sphi 0, %s16
    %p13 = scmp.ge.s32.totalorder %s12, 4
    %s22 = sphi 0, %s24
    %s25 = sphi 0, %s22
    %s26 = sphi 0, %s25
    %s42 = sphi 0, %s26
    %s48 = sphi 0, %s50
    %s51 = sphi 0, %s48
    %s52 = sphi 0, %s51
    %s68 = sphi 0, %s52
    %s74 = sphi 0, %s76
    %s77 = sphi 0, %s74
    %s78 = sphi 0, %s77
    %s94 = sphi 0, %s78
    %s98 = sphi 0, %s98
    %s100 = sphi 0, %s98
    %s101 = sphi 0, %s100
    %s115 = sphi 0, %s101
    %s119 = sphi 0, %s119
    %s121 = sphi 0, %s119
    %s122 = sphi 0, %s121
    %s136 = sphi 0, %s122
    %s142 = sphi 0, %s144
    %s145 = sphi 0, %s142
    %s146 = sphi 0, %s145
    %s162 = sphi 0, %s146
    %s168 = sphi 0, %s170
    %s171 = sphi 0, %s168
    %s172 = sphi 0, %s171
    %s188 = sphi 0, %s172
  $region4: #{biggan_generator_block.5} parent=0 // loop_header_branch
    %15 = sbr.rel (%p13) target = $region8
  $region5: #{biggan_generator_block.5} parent=0 // loop_body
    %s17 = ssub.s32 %s12, 1
    %s18 = ssub.s32 %s12, 2
    %s19 = sadd.s32 %s12, 1
    %s20 = ssub.s32 %s12, %s19
    %p21 = scmp.eq.s32.totalorder %s20, 0
    %s23 = sadd.s32 %s22, 1
    %s24 = scalar_select %p21, %s22, %s23
    %p27 = pneg %p21
    %p28 = scmp.eq.s32.totalorder %s12, 1
    %p29 = por %p27, %p28
    %p30 = scmp.ne.s32.totalorder %s22, %s25
    %p31 = scmp.eq.s32.totalorder %s12, 0
    %p32 = por %p30, %p31
    %p33 = scmp.ne.s32.totalorder %s22, %s25
    %p34 = scmp.eq.s32.totalorder %s17, 1
    %p35 = por %p33, %p34
    %p36 = scmp.ne.s32.totalorder %s25, %s26
    %p37 = scmp.eq.s32.totalorder %s17, 0
    %p38 = por %p36, %p37
    %p39 = scmp.ne.s32.totalorder %s25, %s26
    %p40 = scmp.eq.s32.totalorder %s18, 1
    %p41 = por %p39, %p40
    %p43 = scmp.ne.s32.totalorder %s26, %s42
    %p44 = scmp.eq.s32.totalorder %s18, 0
    %p45 = por %p43, %p44
    %s46 = ssub.s32 %s12, %s19
    %p47 = scmp.eq.s32.totalorder %s46, 0
    %s49 = sadd.s32 %s48, 1
    %s50 = scalar_select %p47, %s48, %s49
    %p53 = pneg %p47
    %p54 = scmp.eq.s32.totalorder %s12, 1
    %p55 = por %p53, %p54
    %p56 = scmp.ne.s32.totalorder %s48, %s51
    %p57 = scmp.eq.s32.totalorder %s12, 0
    %p58 = por %p56, %p57
    %p59 = scmp.ne.s32.totalorder %s48, %s51
    %p60 = scmp.eq.s32.totalorder %s17, 1
    %p61 = por %p59, %p60
    %p62 = scmp.ne.s32.totalorder %s51, %s52
    %p63 = scmp.eq.s32.totalorder %s17, 0
    %p64 = por %p62, %p63
    %p65 = scmp.ne.s32.totalorder %s51, %s52
    %p66 = scmp.eq.s32.totalorder %s18, 1
    %p67 = por %p65, %p66
    %p69 = scmp.ne.s32.totalorder %s52, %s68
    %p70 = scmp.eq.s32.totalorder %s18, 0
    %p71 = por %p69, %p70
    %s72 = ssub.s32 %s12, %s19
    %p73 = scmp.eq.s32.totalorder %s72, 0
    %s75 = sadd.s32 %s74, 1
    %s76 = scalar_select %p73, %s74, %s75
    %p79 = pneg %p73
    %p80 = scmp.eq.s32.totalorder %s12, 1
    %p81 = por %p79, %p80
    %p82 = scmp.ne.s32.totalorder %s74, %s77
    %p83 = scmp.eq.s32.totalorder %s12, 0
    %p84 = por %p82, %p83
    %p85 = scmp.ne.s32.totalorder %s74, %s77
    %p86 = scmp.eq.s32.totalorder %s17, 1
    %p87 = por %p85, %p86
    %p88 = scmp.ne.s32.totalorder %s77, %s78
    %p89 = scmp.eq.s32.totalorder %s17, 0
    %p90 = por %p88, %p89
    %p91 = scmp.ne.s32.totalorder %s77, %s78
    %p92 = scmp.eq.s32.totalorder %s18, 1
    %p93 = por %p91, %p92
    %p95 = scmp.ne.s32.totalorder %s78, %s94
    %p96 = scmp.eq.s32.totalorder %s18, 0
    %p97 = por %p95, %p96
    %s99 = sadd.s32 %s98, 1
    %p102 = scmp.eq.s32.totalorder %s12, 1
    %p103 = scmp.ne.s32.totalorder %s98, %s100
    %p104 = scmp.eq.s32.totalorder %s12, 0
    %p105 = por %p103, %p104
    %p106 = scmp.ne.s32.totalorder %s98, %s100
    %p107 = scmp.eq.s32.totalorder %s17, 1
    %p108 = por %p106, %p107
    %p109 = scmp.ne.s32.totalorder %s100, %s101
    %p110 = scmp.eq.s32.totalorder %s17, 0
    %p111 = por %p109, %p110
    %p112 = scmp.ne.s32.totalorder %s100, %s101
    %p113 = scmp.eq.s32.totalorder %s18, 1
    %p114 = por %p112, %p113
    %p116 = scmp.ne.s32.totalorder %s101, %s115
    %p117 = scmp.eq.s32.totalorder %s18, 0
    %p118 = por %p116, %p117
    %s120 = sadd.s32 %s119, 1
    %p123 = scmp.eq.s32.totalorder %s12, 1
    %p124 = scmp.ne.s32.totalorder %s119, %s121
    %p125 = scmp.eq.s32.totalorder %s12, 0
    %p126 = por %p124, %p125
    %p127 = scmp.ne.s32.totalorder %s119, %s121
    %p128 = scmp.eq.s32.totalorder %s17, 1
    %p129 = por %p127, %p128
    %p130 = scmp.ne.s32.totalorder %s121, %s122
    %p131 = scmp.eq.s32.totalorder %s17, 0
    %p132 = por %p130, %p131
    %p133 = scmp.ne.s32.totalorder %s121, %s122
    %p134 = scmp.eq.s32.totalorder %s18, 1
    %p135 = por %p133, %p134
    %p137 = scmp.ne.s32.totalorder %s122, %s136
    %p138 = scmp.eq.s32.totalorder %s18, 0
    %p139 = por %p137, %p138
    %s140 = ssub.s32 %s12, %s19
    %p141 = scmp.eq.s32.totalorder %s140, 0
    %s143 = sadd.s32 %s142, 1
    %s144 = scalar_select %p141, %s142, %s143
    %p147 = pneg %p141
    %p148 = scmp.eq.s32.totalorder %s12, 1
    %p149 = por %p147, %p148
    %p150 = scmp.ne.s32.totalorder %s142, %s145
    %p151 = scmp.eq.s32.totalorder %s12, 0
    %p152 = por %p150, %p151
    %p153 = scmp.ne.s32.totalorder %s142, %s145
    %p154 = scmp.eq.s32.totalorder %s17, 1
    %p155 = por %p153, %p154
    %p156 = scmp.ne.s32.totalorder %s145, %s146
    %p157 = scmp.eq.s32.totalorder %s17, 0
    %p158 = por %p156, %p157
    %p159 = scmp.ne.s32.totalorder %s145, %s146
    %p160 = scmp.eq.s32.totalorder %s18, 1
    %p161 = por %p159, %p160
    %p163 = scmp.ne.s32.totalorder %s146, %s162
    %p164 = scmp.eq.s32.totalorder %s18, 0
    %p165 = por %p163, %p164
    %s166 = ssub.s32 %s12, %s19
    %p167 = scmp.eq.s32.totalorder %s166, 0
    %s169 = sadd.s32 %s168, 1
    %s170 = scalar_select %p167, %s168, %s169
    %p173 = pneg %p167
    %p174 = scmp.eq.s32.totalorder %s12, 1
    %p175 = por %p173, %p174
    %p176 = scmp.ne.s32.totalorder %s168, %s171
    %p177 = scmp.eq.s32.totalorder %s12, 0
    %p178 = por %p176, %p177
    %p179 = scmp.ne.s32.totalorder %s168, %s171
    %p180 = scmp.eq.s32.totalorder %s17, 1
    %p181 = por %p179, %p180
    %p182 = scmp.ne.s32.totalorder %s171, %s172
    %p183 = scmp.eq.s32.totalorder %s17, 0
    %p184 = por %p182, %p183
    %p185 = scmp.ne.s32.totalorder %s171, %s172
    %p186 = scmp.eq.s32.totalorder %s18, 1
    %p187 = por %p185, %p186
    %p189 = scmp.ne.s32.totalorder %s172, %s188
    %p190 = scmp.eq.s32.totalorder %s18, 0
    %p191 = por %p189, %p190
    %p192 = scmp.le.s32.totalorder 1, %s12
    %p193 = scmp.lt.s32.totalorder %s12, 3
    %p194 = pnand %p192, %p193
    %p195 = pneg %p194
    // Predicated region
    $region9: #{biggan_generator_block.5} parent=5 // pred_check
      _
    $region10: #{biggan_generator_block.5} parent=5 // pred_check_branch
      %197 = sbr.rel (%p194) target = $region12
    $region11: #{biggan_generator_block.5} parent=5 // pred_region
      %s198 = ssub.s32 %s12, 1
      // Predicated region
      $region13: #{biggan_generator_block.5} parent=11 // pred_check
        %p199 = pneg %p111
      $region14: #{biggan_generator_block.5} parent=11 // pred_check_branch
        %201 = sbr.rel (%p199) target = $region16
      $region15: #{biggan_generator_block.5} parent=11 // pred_region
        _
      $region16: #{biggan_generator_block.5} parent=11 // pred_fallthru
        _
      // Predicated region
      $region17: #{biggan_generator_block.5} parent=11 // pred_check
        %p202 = pneg %p132
      $region18: #{biggan_generator_block.5} parent=11 // pred_check_branch
        %204 = sbr.rel (%p202) target = $region20
      $region19: #{biggan_generator_block.5} parent=11 // pred_region
        _
      $region20: #{biggan_generator_block.5} parent=11 // pred_fallthru
        _
    $region12: #{biggan_generator_block.5} parent=5 // pred_fallthru
      _
    %p205 = scmp.lt.s32.totalorder %s12, 2
    // Predicated region
    $region21: #{biggan_generator_block.5} parent=5 // pred_check
      %p206 = pneg %p205
    $region22: #{biggan_generator_block.5} parent=5 // pred_check_branch
      %208 = sbr.rel (%p206) target = $region24
    $region23: #{biggan_generator_block.5} parent=5 // pred_region
      // Predicated region
      $region25: #{biggan_generator_block.5} parent=23 // pred_check
        %p209 = pneg %p32
      $region26: #{biggan_generator_block.5} parent=23 // pred_check_branch
        %211 = sbr.rel (%p209) target = $region28
      $region27: #{biggan_generator_block.5} parent=23 // pred_region
        %p212 = scmp.lt.s32.totalorder %s12, 1
        %s213 = scalar_select %p212, %s12, 1
        %s214 = smul.addr %s213, 32
        %s215 = smul.addr %s214, 4
        %s216 = scalar_lea.vmem %s0, %s215
      $region28: #{biggan_generator_block.5} parent=23 // pred_fallthru
        _
      // Predicated region
      $region29: #{biggan_generator_block.5} parent=23 // pred_check
        %p217 = pneg %p58
      $region30: #{biggan_generator_block.5} parent=23 // pred_check_branch
        %219 = sbr.rel (%p217) target = $region32
      $region31: #{biggan_generator_block.5} parent=23 // pred_region
        %p220 = scmp.lt.s32.totalorder %s12, 1
        %s221 = scalar_select %p220, %s12, 1
        %s222 = scalar_lea.vmem %s1, %s221
      $region32: #{biggan_generator_block.5} parent=23 // pred_fallthru
        _
      // Predicated region
      $region33: #{biggan_generator_block.5} parent=23 // pred_check
        %p223 = pneg %p84
      $region34: #{biggan_generator_block.5} parent=23 // pred_check_branch
        %225 = sbr.rel (%p223) target = $region36
      $region35: #{biggan_generator_block.5} parent=23 // pred_region
        %p226 = scmp.lt.s32.totalorder %s12, 1
        %s227 = scalar_select %p226, %s12, 1
        %s228 = scalar_lea.vmem %s2, %s227
      $region36: #{biggan_generator_block.5} parent=23 // pred_fallthru
        _
      // Predicated region
      $region37: #{biggan_generator_block.5} parent=23 // pred_check
        %p229 = pneg %p152
      $region38: #{biggan_generator_block.5} parent=23 // pred_check_branch
        %231 = sbr.rel (%p229) target = $region40
      $region39: #{biggan_generator_block.5} parent=23 // pred_region
        %p232 = scmp.lt.s32.totalorder %s12, 1
        %s233 = scalar_select %p232, %s12, 1
        %s234 = smul.addr %s233, 8
        %s235 = smul.addr %s234, 4
        %s236 = scalar_lea.vmem %s5, %s235
      $region40: #{biggan_generator_block.5} parent=23 // pred_fallthru
        _
    $region24: #{biggan_generator_block.5} parent=5 // pred_fallthru
      _
    %p237 = scmp.le.s32.totalorder 1, %s12
    %p238 = scmp.lt.s32.totalorder %s12, 3
    %p239 = pnand %p237, %p238
    %p240 = pneg %p239
    // Predicated region
    $region41: #{biggan_generator_block.5} parent=5 // pred_check
      _
    $region42: #{biggan_generator_block.5} parent=5 // pred_check_branch
      %242 = sbr.rel (%p239) target = $region44
    $region43: #{biggan_generator_block.5} parent=5 // pred_region
      %s243 = ssub.s32 %s12, 1
      %p244 = scmp.lt.s32.totalorder %s17, 1
      %s245 = scalar_select %p244, %s17, 1
      %s246 = smul.addr %s245, 32
      %s247 = smul.addr %s246, 4
      %s248 = scalar_lea.vmem %s0, %s247
      %p249 = pneg %p38
      %p250 = pneg %p35
      %p251 = scmp.lt.s32.totalorder %s17, 1
      %s252 = scalar_select %p251, %s17, 1
      %s253 = scalar_lea.vmem %s1, %s252
      %p254 = pneg %p64
      %p255 = pneg %p61
      %p256 = scmp.lt.s32.totalorder %s17, 1
      %s257 = scalar_select %p256, %s17, 1
      %s258 = scalar_lea.vmem %s2, %s257
      %p259 = pneg %p90
      %p260 = pneg %p87
      %p261 = pneg %p111
      %p262 = pneg %p108
      %p263 = pneg %p132
      %p264 = pneg %p129
      %p265 = scmp.lt.s32.totalorder %s17, 1
      %s266 = scalar_select %p265, %s17, 1
      %s267 = smul.addr %s266, 8
      %s268 = smul.addr %s267, 4
      %s269 = scalar_lea.vmem %s5, %s268
      %p270 = pneg %p158
      %p271 = pneg %p155
      %p272 = pneg %p184
      %p273 = pneg %p181
      %p274 = scmp.lt.s32.totalorder %s17, 1
      %s275 = scalar_select %p274, %s17, 1
      %s276 = smul.addr %s275, 32
      %s277 = smul.addr %s276, 8
      %s278 = scalar_lea.vmem %s6, %s277
      %p279 = scmp.lt.s32.totalorder %s17, 1
      %s280 = scalar_select %p279, %s17, 1
      %s281 = smul.addr %s280, 32
      %s282 = smul.addr %s281, 4
      %s283 = scalar_lea.vmem %s0, %s282
      %p284 = scmp.lt.s32.totalorder %s17, 1
      %s285 = scalar_select %p284, %s17, 1
      %s286 = scalar_lea.vmem %s1, %s285
      %p287 = scmp.lt.s32.totalorder %s17, 1
      %s288 = scalar_select %p287, %s17, 1
      %s289 = scalar_lea.vmem %s2, %s288
      %p290 = scmp.lt.s32.totalorder %s17, 1
      %s291 = scalar_select %p290, %s17, 1
      %s292 = smul.addr %s291, 8
      %s293 = smul.addr %s292, 4
      %s294 = scalar_lea.vmem %s5, %s293
      %p295 = scmp.lt.s32.totalorder %s17, 1
      %s296 = scalar_select %p295, %s17, 1
      %s297 = smul.addr %s296, 32
      %s298 = smul.addr %s297, 8
      %s299 = scalar_lea.vmem %s6, %s298
      %vm301 = vcmask 261120
      %302 = vst.msk [vmem:[#allocation2] sm:$0xff] %vm301, 0.0
      %vm303 = vcmask 254976
      %304 = vst.msk [vmem:[#allocation2 + $0x8] sm:$0x3] %vm303, 0.0
      %305 = vst.msk [vmem:[#allocation2 + $0x10] sm:$0xff] %vm301, 0.0
      %306 = vst.msk [vmem:[#allocation2 + $0x18] sm:$0x3] %vm303, 0.0
      %307 = vst.msk [vmem:[#allocation2 + $0x20] sm:$0xff] %vm301, 0.0
      %308 = vst.msk [vmem:[#allocation2 + $0x28] sm:$0x3] %vm303, 0.0
      %309 = vst.msk [vmem:[#allocation2 + $0x30] sm:$0xff] %vm301, 0.0
      %310 = vst.msk [vmem:[#allocation2 + $0x38] sm:$0x3] %vm303, 0.0
      %311 = vst.msk [vmem:[#allocation2 + $0x40] sm:$0xff] %vm301, 0.0
      %312 = vst.msk [vmem:[#allocation2 + $0x48] sm:$0x3] %vm303, 0.0
      %313 = vst.msk [vmem:[#allocation2 + $0x50] sm:$0xff] %vm301, 0.0
      %314 = vst.msk [vmem:[#allocation2 + $0x58] sm:$0x3] %vm303, 0.0
      %315 = vst.msk [vmem:[#allocation2 + $0x60] sm:$0xff] %vm301, 0.0
      %316 = vst.msk [vmem:[#allocation2 + $0x68] sm:$0x3] %vm303, 0.0
      %317 = vst.msk [vmem:[#allocation2 + $0x70] sm:$0xff] %vm301, 0.0
      %318 = vst.msk [vmem:[#allocation2 + $0x78] sm:$0x3] %vm303, 0.0
      %319 = vst.msk [vmem:[#allocation2 + $0x80] sm:$0xff] %vm301, 0.0
      %320 = vst.msk [vmem:[#allocation2 + $0x88] sm:$0x3] %vm303, 0.0
      %321 = vst.msk [vmem:[#allocation2 + $0x90] sm:$0xff] %vm301, 0.0
      %322 = vst.msk [vmem:[#allocation2 + $0x98] sm:$0x3] %vm303, 0.0
      %323 = vst.msk [vmem:[#allocation2 + $0xa0] sm:$0xff] %vm301, 0.0
      %324 = vst.msk [vmem:[#allocation2 + $0xa8] sm:$0x3] %vm303, 0.0
      %325 = vst.msk [vmem:[#allocation2 + $0xb0] sm:$0xff] %vm301, 0.0
      %326 = vst.msk [vmem:[#allocation2 + $0xb8] sm:$0x3] %vm303, 0.0
      %327 = vst.msk [vmem:[#allocation2 + $0xc0] sm:$0xff] %vm301, 0.0
      %328 = vst.msk [vmem:[#allocation2 + $0xc8] sm:$0x3] %vm303, 0.0
      %329 = vst.msk [vmem:[#allocation2 + $0xd0] sm:$0xff] %vm301, 0.0
      %330 = vst.msk [vmem:[#allocation2 + $0xd8] sm:$0x3] %vm303, 0.0
      %331 = vst.msk [vmem:[#allocation2 + $0xe0] sm:$0xff] %vm301, 0.0
      %332 = vst.msk [vmem:[#allocation2 + $0xe8] sm:$0x3] %vm303, 0.0
      %333 = vst.msk [vmem:[#allocation2 + $0xf0] sm:$0xff] %vm301, 0.0
      %334 = vst.msk [vmem:[#allocation2 + $0xf8] sm:$0x3] %vm303, 0.0
      %335 = vst.msk [vmem:[#allocation2 + $0x100] sm:$0xff] %vm301, 0.0
      %336 = vst.msk [vmem:[#allocation2 + $0x108] sm:$0x3] %vm303, 0.0
      %337 = vst.msk [vmem:[#allocation2 + $0x110] sm:$0xff] %vm301, 0.0
      %338 = vst.msk [vmem:[#allocation2 + $0x118] sm:$0x3] %vm303, 0.0
      %339 = vst.msk [vmem:[#allocation2 + $0x120] sm:$0xff] %vm301, 0.0
      %340 = vst.msk [vmem:[#allocation2 + $0x128] sm:$0x3] %vm303, 0.0
      %341 = vst.msk [vmem:[#allocation2 + $0x130] sm:$0xff] %vm301, 0.0
      %342 = vst.msk [vmem:[#allocation2 + $0x138] sm:$0x3] %vm303, 0.0
      %343 = vst.msk [vmem:[#allocation2 + $0x140] sm:$0xff] %vm301, 0.0
      %344 = vst.msk [vmem:[#allocation2 + $0x148] sm:$0x3] %vm303, 0.0
      %345 = vst.msk [vmem:[#allocation2 + $0x150] sm:$0xff] %vm301, 0.0
      %346 = vst.msk [vmem:[#allocation2 + $0x158] sm:$0x3] %vm303, 0.0
      %347 = vst.msk [vmem:[#allocation2 + $0x160] sm:$0xff] %vm301, 0.0
      %348 = vst.msk [vmem:[#allocation2 + $0x168] sm:$0x3] %vm303, 0.0
      %349 = vst.msk [vmem:[#allocation2 + $0x170] sm:$0xff] %vm301, 0.0
      %350 = vst.msk [vmem:[#allocation2 + $0x178] sm:$0x3] %vm303, 0.0
      %351 = vst.msk [vmem:[#allocation2 + $0x180] sm:$0xff] %vm301, 0.0
      %352 = vst.msk [vmem:[#allocation2 + $0x188] sm:$0x3] %vm303, 0.0
      %353 = vst.msk [vmem:[#allocation2 + $0x190] sm:$0xff] %vm301, 0.0
      %354 = vst.msk [vmem:[#allocation2 + $0x198] sm:$0x3] %vm303, 0.0
      %355 = vst.msk [vmem:[#allocation2 + $0x1a0] sm:$0xff] %vm301, 0.0
      %356 = vst.msk [vmem:[#allocation2 + $0x1a8] sm:$0x3] %vm303, 0.0
      %357 = vst.msk [vmem:[#allocation2 + $0x1b0] sm:$0xff] %vm301, 0.0
      %358 = vst.msk [vmem:[#allocation2 + $0x1b8] sm:$0x3] %vm303, 0.0
      %359 = vst.msk [vmem:[#allocation2 + $0x1c0] sm:$0xff] %vm301, 0.0
      %360 = vst.msk [vmem:[#allocation2 + $0x1c8] sm:$0x3] %vm303, 0.0
      %361 = vst.msk [vmem:[#allocation2 + $0x1d0] sm:$0xff] %vm301, 0.0
      %362 = vst.msk [vmem:[#allocation2 + $0x1d8] sm:$0x3] %vm303, 0.0
      %363 = vst.msk [vmem:[#allocation2 + $0x1e0] sm:$0xff] %vm301, 0.0
      %364 = vst.msk [vmem:[#allocation2 + $0x1e8] sm:$0x3] %vm303, 0.0
      %365 = vst.msk [vmem:[#allocation2 + $0x1f0] sm:$0xff] %vm301, 0.0
      %366 = vst.msk [vmem:[#allocation2 + $0x1f8] sm:$0x3] %vm303, 0.0
      %367 = vst.msk [vmem:[#allocation2 + $0x200] sm:$0xff] %vm301, 0.0
      %368 = vst.msk [vmem:[#allocation2 + $0x208] sm:$0x3] %vm303, 0.0
      %369 = vst.msk [vmem:[#allocation2 + $0x210] sm:$0xff] %vm301, 0.0
      %370 = vst.msk [vmem:[#allocation2 + $0x218] sm:$0x3] %vm303, 0.0
      %371 = vst.msk [vmem:[#allocation2 + $0x220] sm:$0xff] %vm301, 0.0
      %372 = vst.msk [vmem:[#allocation2 + $0x228] sm:$0x3] %vm303, 0.0
      %373 = vst.msk [vmem:[#allocation2 + $0x230] sm:$0xff] %vm301, 0.0
      %374 = vst.msk [vmem:[#allocation2 + $0x238] sm:$0x3] %vm303, 0.0
      %375 = vst.msk [vmem:[#allocation2 + $0x240] sm:$0xff] %vm301, 0.0
      %376 = vst.msk [vmem:[#allocation2 + $0x248] sm:$0x3] %vm303, 0.0
      %377 = vst.msk [vmem:[#allocation2 + $0x250] sm:$0xff] %vm301, 0.0
      %378 = vst.msk [vmem:[#allocation2 + $0x258] sm:$0x3] %vm303, 0.0
      %379 = vst.msk [vmem:[#allocation2 + $0x260] sm:$0xff] %vm301, 0.0
      %380 = vst.msk [vmem:[#allocation2 + $0x268] sm:$0x3] %vm303, 0.0
      %381 = vst.msk [vmem:[#allocation2 + $0x270] sm:$0xff] %vm301, 0.0
      %382 = vst.msk [vmem:[#allocation2 + $0x278] sm:$0x3] %vm303, 0.0
      %v383 = vld [vmem:[%s283] sm:$0xf]
      %v384 = vld [vmem:[%s283 + $0x4] sm:$0xf]
      %v385 = vld [vmem:[%s283 + $0x8] sm:$0xf]
      %v386 = vld [vmem:[%s283 + $0xc] sm:$0xf]
      %v387 = vld [vmem:[%s283 + $0x10] sm:$0xf]
      %v388 = vld [vmem:[%s283 + $0x14] sm:$0xf]
      %v389 = vld [vmem:[%s283 + $0x18] sm:$0xf]
      %v390 = vld [vmem:[%s283 + $0x1c] sm:$0xf]
      %v391 = vunpack.c.l.bf16 %v383
      %v392 = vunpack.c.l.bf16 %v384
      %v393 = vunpack.c.l.bf16 %v385
      %v394 = vunpack.c.l.bf16 %v386
      %v395 = vunpack.c.l.bf16 %v387
      %v396 = vunpack.c.l.bf16 %v388
      %v397 = vunpack.c.l.bf16 %v389
      %v398 = vunpack.c.l.bf16 %v390
      %v399 = vld [vmem:[%s286] sm:$0x1]
      %v401 = vperm.slane %v399, 0
      %v403 = vmul.f32 %v391, %v401
      %v404 = vmul.f32 %v392, %v401
      %v405 = vmul.f32 %v393, %v401
      %v406 = vmul.f32 %v394, %v401
      %v407 = vmul.f32 %v395, %v401
      %v408 = vmul.f32 %v396, %v401
      %v409 = vmul.f32 %v397, %v401
      %v410 = vmul.f32 %v398, %v401
      %v411 = vld [vmem:[%s289] sm:$0x1]
      %v413 = vperm.slane %v411, 0
      %v415 = vadd.f32 %v403, %v413
      %v416 = vadd.f32 %v404, %v413
      %v417 = vadd.f32 %v405, %v413
      %v418 = vadd.f32 %v406, %v413
      %v419 = vadd.f32 %v407, %v413
      %v420 = vadd.f32 %v408, %v413
      %v421 = vadd.f32 %v409, %v413
      %v422 = vadd.f32 %v410, %v413
      %v423 = vmax.f32 %v415, 0.0
      %v424 = vmax.f32 %v416, 0.0
      %v425 = vmax.f32 %v417, 0.0
      %v426 = vmax.f32 %v418, 0.0
      %v427 = vmax.f32 %v419, 0.0
      %v428 = vmax.f32 %v420, 0.0
      %v429 = vmax.f32 %v421, 0.0
      %v430 = vmax.f32 %v422, 0.0
      %s431 = scalar_lea.vmem [#allocation2], 16
      %432 = vst.msk [vmem:[%s431 + $0x1] sm:$0xff] %vm301, %v423
      %433 = vst.msk [vmem:[%s431 + $0x11] sm:$0xff] %vm301, %v424
      %434 = vst.msk [vmem:[%s431 + $0x21] sm:$0xff] %vm301, %v425
      %435 = vst.msk [vmem:[%s431 + $0x31] sm:$0xff] %vm301, %v426
      %436 = vst.msk [vmem:[%s431 + $0x41] sm:$0xff] %vm301, %v427
      %437 = vst.msk [vmem:[%s431 + $0x51] sm:$0xff] %vm301, %v428
      %438 = vst.msk [vmem:[%s431 + $0x61] sm:$0xff] %vm301, %v429
      %439 = vst.msk [vmem:[%s431 + $0x71] sm:$0xff] %vm301, %v430
      %s440 = scalar_lea.vmem %s283, 32
      %v441 = vld [vmem:[%s440] sm:$0xf]
      %v442 = vld [vmem:[%s440 + $0x4] sm:$0xf]
      %v443 = vld [vmem:[%s440 + $0x8] sm:$0xf]
      %v444 = vld [vmem:[%s440 + $0xc] sm:$0xf]
      %v445 = vld [vmem:[%s440 + $0x10] sm:$0xf]
      %v446 = vld [vmem:[%s440 + $0x14] sm:$0xf]
      %v447 = vld [vmem:[%s440 + $0x18] sm:$0xf]
      %v448 = vld [vmem:[%s440 + $0x1c] sm:$0xf]
      %v449 = vunpack.c.l.bf16 %v441
      %v450 = vunpack.c.l.bf16 %v442
      %v451 = vunpack.c.l.bf16 %v443
      %v452 = vunpack.c.l.bf16 %v444
      %v453 = vunpack.c.l.bf16 %v445
      %v454 = vunpack.c.l.bf16 %v446
      %v455 = vunpack.c.l.bf16 %v447
      %v456 = vunpack.c.l.bf16 %v448
      %v457 = vld [vmem:[%s286] sm:$0x1]
      %v459 = vperm.slane %v457, 0
      %v461 = vmul.f32 %v449, %v459
      %v462 = vmul.f32 %v450, %v459
      %v463 = vmul.f32 %v451, %v459
      %v464 = vmul.f32 %v452, %v459
      %v465 = vmul.f32 %v453, %v459
      %v466 = vmul.f32 %v454, %v459
      %v467 = vmul.f32 %v455, %v459
      %v468 = vmul.f32 %v456, %v459
      %v469 = vld [vmem:[%s289] sm:$0x1]
      %v471 = vperm.slane %v469, 0
      %v473 = vadd.f32 %v461, %v471
      %v474 = vadd.f32 %v462, %v471
      %v475 = vadd.f32 %v463, %v471
      %v476 = vadd.f32 %v464, %v471
      %v477 = vadd.f32 %v465, %v471
      %v478 = vadd.f32 %v466, %v471
      %v479 = vadd.f32 %v467, %v471
      %v480 = vadd.f32 %v468, %v471
      %v481 = vmax.f32 %v473, 0.0
      %v482 = vmax.f32 %v474, 0.0
      %v483 = vmax.f32 %v475, 0.0
      %v484 = vmax.f32 %v476, 0.0
      %v485 = vmax.f32 %v477, 0.0
      %v486 = vmax.f32 %v478, 0.0
      %v487 = vmax.f32 %v479, 0.0
      %v488 = vmax.f32 %v480, 0.0
      %s489 = scalar_lea.vmem [#allocation2], 176
      %490 = vst.msk [vmem:[%s489 + $0x1] sm:$0xff] %vm301, %v481
      %491 = vst.msk [vmem:[%s489 + $0x11] sm:$0xff] %vm301, %v482
      %492 = vst.msk [vmem:[%s489 + $0x21] sm:$0xff] %vm301, %v483
      %493 = vst.msk [vmem:[%s489 + $0x31] sm:$0xff] %vm301, %v484
      %494 = vst.msk [vmem:[%s489 + $0x41] sm:$0xff] %vm301, %v485
      %495 = vst.msk [vmem:[%s489 + $0x51] sm:$0xff] %vm301, %v486
      %496 = vst.msk [vmem:[%s489 + $0x61] sm:$0xff] %vm301, %v487
      %497 = vst.msk [vmem:[%s489 + $0x71] sm:$0xff] %vm301, %v488
      %s498 = scalar_lea.vmem %s283, 64
      %v499 = vld [vmem:[%s498] sm:$0xf]
      %v500 = vld [vmem:[%s498 + $0x4] sm:$0xf]
      %v501 = vld [vmem:[%s498 + $0x8] sm:$0xf]
      %v502 = vld [vmem:[%s498 + $0xc] sm:$0xf]
      %v503 = vld [vmem:[%s498 + $0x10] sm:$0xf]
      %v504 = vld [vmem:[%s498 + $0x14] sm:$0xf]
      %v505 = vld [vmem:[%s498 + $0x18] sm:$0xf]
      %v506 = vld [vmem:[%s498 + $0x1c] sm:$0xf]
      %v507 = vunpack.c.l.bf16 %v499
      %v508 = vunpack.c.l.bf16 %v500
      %v509 = vunpack.c.l.bf16 %v501
      %v510 = vunpack.c.l.bf16 %v502
      %v511 = vunpack.c.l.bf16 %v503
      %v512 = vunpack.c.l.bf16 %v504
      %v513 = vunpack.c.l.bf16 %v505
      %v514 = vunpack.c.l.bf16 %v506
      %v515 = vld [vmem:[%s286] sm:$0x1]
      %v517 = vperm.slane %v515, 0
      %v519 = vmul.f32 %v507, %v517
      %v520 = vmul.f32 %v508, %v517
      %v521 = vmul.f32 %v509, %v517
      %v522 = vmul.f32 %v510, %v517
      %v523 = vmul.f32 %v511, %v517
      %v524 = vmul.f32 %v512, %v517
      %v525 = vmul.f32 %v513, %v517
      %v526 = vmul.f32 %v514, %v517
      %v527 = vld [vmem:[%s289] sm:$0x1]
      %v529 = vperm.slane %v527, 0
      %v531 = vadd.f32 %v519, %v529
      %v532 = vadd.f32 %v520, %v529
      %v533 = vadd.f32 %v521, %v529
      %v534 = vadd.f32 %v522, %v529
      %v535 = vadd.f32 %v523, %v529
      %v536 = vadd.f32 %v524, %v529
      %v537 = vadd.f32 %v525, %v529
      %v538 = vadd.f32 %v526, %v529
      %v539 = vmax.f32 %v531, 0.0
      %v540 = vmax.f32 %v532, 0.0
      %v541 = vmax.f32 %v533, 0.0
      %v542 = vmax.f32 %v534, 0.0
      %v543 = vmax.f32 %v535, 0.0
      %v544 = vmax.f32 %v536, 0.0
      %v545 = vmax.f32 %v537, 0.0
      %v546 = vmax.f32 %v538, 0.0
      %s547 = scalar_lea.vmem [#allocation2], 336
      %548 = vst.msk [vmem:[%s547 + $0x1] sm:$0xff] %vm301, %v539
      %549 = vst.msk [vmem:[%s547 + $0x11] sm:$0xff] %vm301, %v540
      %550 = vst.msk [vmem:[%s547 + $0x21] sm:$0xff] %vm301, %v541
      %551 = vst.msk [vmem:[%s547 + $0x31] sm:$0xff] %vm301, %v542
      %552 = vst.msk [vmem:[%s547 + $0x41] sm:$0xff] %vm301, %v543
      %553 = vst.msk [vmem:[%s547 + $0x51] sm:$0xff] %vm301, %v544
      %554 = vst.msk [vmem:[%s547 + $0x61] sm:$0xff] %vm301, %v545
      %555 = vst.msk [vmem:[%s547 + $0x71] sm:$0xff] %vm301, %v546
      %s556 = scalar_lea.vmem %s283, 96
      %v557 = vld [vmem:[%s556] sm:$0xf]
      %v558 = vld [vmem:[%s556 + $0x4] sm:$0xf]
      %v559 = vld [vmem:[%s556 + $0x8] sm:$0xf]
      %v560 = vld [vmem:[%s556 + $0xc] sm:$0xf]
      %v561 = vld [vmem:[%s556 + $0x10] sm:$0xf]
      %v562 = vld [vmem:[%s556 + $0x14] sm:$0xf]
      %v563 = vld [vmem:[%s556 + $0x18] sm:$0xf]
      %v564 = vld [vmem:[%s556 + $0x1c] sm:$0xf]
      %v565 = vunpack.c.l.bf16 %v557
      %v566 = vunpack.c.l.bf16 %v558
      %v567 = vunpack.c.l.bf16 %v559
      %v568 = vunpack.c.l.bf16 %v560
      %v569 = vunpack.c.l.bf16 %v561
      %v570 = vunpack.c.l.bf16 %v562
      %v571 = vunpack.c.l.bf16 %v563
      %v572 = vunpack.c.l.bf16 %v564
      %v573 = vld [vmem:[%s286] sm:$0x1]
      %v575 = vperm.slane %v573, 0
      %v577 = vmul.f32 %v565, %v575
      %v578 = vmul.f32 %v566, %v575
      %v579 = vmul.f32 %v567, %v575
      %v580 = vmul.f32 %v568, %v575
      %v581 = vmul.f32 %v569, %v575
      %v582 = vmul.f32 %v570, %v575
      %v583 = vmul.f32 %v571, %v575
      %v584 = vmul.f32 %v572, %v575
      %v585 = vld [vmem:[%s289] sm:$0x1]
      %v587 = vperm.slane %v585, 0
      %v589 = vadd.f32 %v577, %v587
      %v590 = vadd.f32 %v578, %v587
      %v591 = vadd.f32 %v579, %v587
      %v592 = vadd.f32 %v580, %v587
      %v593 = vadd.f32 %v581, %v587
      %v594 = vadd.f32 %v582, %v587
      %v595 = vadd.f32 %v583, %v587
      %v596 = vadd.f32 %v584, %v587
      %v597 = vmax.f32 %v589, 0.0
      %v598 = vmax.f32 %v590, 0.0
      %v599 = vmax.f32 %v591, 0.0
      %v600 = vmax.f32 %v592, 0.0
      %v601 = vmax.f32 %v593, 0.0
      %v602 = vmax.f32 %v594, 0.0
      %v603 = vmax.f32 %v595, 0.0
      %v604 = vmax.f32 %v596, 0.0
      %s605 = scalar_lea.vmem [#allocation2], 496
      %606 = vst.msk [vmem:[%s605 + $0x1] sm:$0xff] %vm301, %v597
      %607 = vst.msk [vmem:[%s605 + $0x11] sm:$0xff] %vm301, %v598
      %608 = vst.msk [vmem:[%s605 + $0x21] sm:$0xff] %vm301, %v599
      %609 = vst.msk [vmem:[%s605 + $0x31] sm:$0xff] %vm301, %v600
      %610 = vst.msk [vmem:[%s605 + $0x41] sm:$0xff] %vm301, %v601
      %611 = vst.msk [vmem:[%s605 + $0x51] sm:$0xff] %vm301, %v602
      %612 = vst.msk [vmem:[%s605 + $0x61] sm:$0xff] %vm301, %v603
      %613 = vst.msk [vmem:[%s605 + $0x71] sm:$0xff] %vm301, %v604
      %v614 = vld [vmem:[%s4] sm:$0x1]
      %v615 = vld [vmem:[%s294] sm:$0xf]
      %v616 = vld [vmem:[%s294 + $0x4] sm:$0xf]
      %v617 = vld [vmem:[%s294 + $0x8] sm:$0xf]
      %v618 = vld [vmem:[%s294 + $0xc] sm:$0xf]
      %v619 = vld [vmem:[%s294 + $0x10] sm:$0xf]
      %v620 = vld [vmem:[%s294 + $0x14] sm:$0xf]
      %v621 = vld [vmem:[%s294 + $0x18] sm:$0xf]
      %v622 = vld [vmem:[%s294 + $0x1c] sm:$0xf]
      %v623 = vunpack.c.l.bf16 %v615
      %v624 = vunpack.c.l.bf16 %v616
      %v625 = vunpack.c.l.bf16 %v617
      %v626 = vunpack.c.l.bf16 %v618
      %v627 = vunpack.c.l.bf16 %v619
      %v628 = vunpack.c.l.bf16 %v620
      %v629 = vunpack.c.l.bf16 %v621
      %v630 = vunpack.c.l.bf16 %v622
      %s631 = scalar_lea.vmem [#allocation2], 480
      %v632 = vld [vmem:[%s631] sm:$0xff]
      %v633 = vld [vmem:[%s631 + $0x10] sm:$0xff]
      %v634 = vld [vmem:[%s631 + $0x20] sm:$0xff]
      %v635 = vld [vmem:[%s631 + $0x30] sm:$0xff]
      %v636 = vld [vmem:[%s631 + $0x40] sm:$0xff]
      %v637 = vld [vmem:[%s631 + $0x50] sm:$0xff]
      %v638 = vld [vmem:[%s631 + $0x60] sm:$0xff]
      %v639 = vld [vmem:[%s631 + $0x70] sm:$0xff]
      %v640 = vpack.c.bf16 %v633, %v632
      %v641 = vpack.c.bf16 %v635, %v634
      %v642 = vpack.c.bf16 %v637, %v636
      %v643 = vpack.c.bf16 %v639, %v638
      %v644 = vld [vmem:[%s3] sm:$0xf]
      %v645 = vld [vmem:[%s3 + $0x4] sm:$0xf]
      %v646 = vld [vmem:[%s3 + $0x8] sm:$0xf]
      %v647 = vld [vmem:[%s3 + $0xc] sm:$0xf]
      %s648 = scalar_lea.vmem [#allocation2], 320
      %v649 = vld [vmem:[%s648 + $0x1] sm:$0xff]
      %v650 = vld [vmem:[%s648 + $0x11] sm:$0xff]
      %v651 = vld [vmem:[%s648 + $0x21] sm:$0xff]
      %v652 = vld [vmem:[%s648 + $0x31] sm:$0xff]
      %v653 = vld [vmem:[%s648 + $0x41] sm:$0xff]
      %v654 = vld [vmem:[%s648 + $0x51] sm:$0xff]
      %v655 = vld [vmem:[%s648 + $0x61] sm:$0xff]
      %v656 = vld [vmem:[%s648 + $0x71] sm:$0xff]
      %v657 = vpack.c.bf16 %v650, %v649
      %v658 = vpack.c.bf16 %v652, %v651
      %v659 = vpack.c.bf16 %v654, %v653
      %v660 = vpack.c.bf16 %v656, %v655
      %s661 = scalar_lea.vmem %s3, 16
      %v662 = vld [vmem:[%s661] sm:$0xf]
      %v663 = vld [vmem:[%s661 + $0x4] sm:$0xf]
      %v664 = vld [vmem:[%s661 + $0x8] sm:$0xf]
      %v665 = vld [vmem:[%s661 + $0xc] sm:$0xf]
      %v670 = vunpack.c.l.b16 %v662
      %v671 = vunpack.c.l.b16 %v663
      %v672 = vunpack.c.l.b16 %v664
      %v673 = vunpack.c.l.b16 %v665
      %v674 = vpack.c.b16 %v671, %v670
      %v675 = vpack.c.b16 %v673, %v672
      %v679 = vsel %vm301, %v657, 0
      %v682 = vsel %vm301, %v658, 0
      %v685 = vsel %vm301, %v659, 0
      %v688 = vsel %vm301, %v660, 0
      %690 = vmatpush.bf16.msra.mxu0 0
      %691 = vmatpush.bf16.msra.mxu0 0
      %692 = vmatpush.bf16.msra.mxu0 0
      %693 = vmatpush.bf16.msra.mxu0 0
      %694 = vmatpush.bf16.msra.mxu0 0
      %695 = vmatpush.bf16.msra.mxu0 0
      %696 = vmatpush.bf16.msra.mxu0 %v675
      %697 = vmatpush.bf16.msra.mxu0 %v674
      %698 = vmatmul.bf16.gmra.mxu0 %v679
      %v699 = vpop.f32.mrf.mxu0
      %v700 = vadd.f32 0.0, %v699
      %v701 = vpop.f32.mrf.mxu0
      %v702 = vadd.f32 0.0, %v701
      %703 = vmatmul.bf16.gmra.mxu0 %v682
      %v704 = vpop.f32.mrf.mxu0
      %v705 = vadd.f32 0.0, %v704
      %v706 = vpop.f32.mrf.mxu0
      %v707 = vadd.f32 0.0, %v706
      %708 = vmatmul.bf16.gmra.mxu0 %v685
      %v709 = vpop.f32.mrf.mxu0
      %v710 = vadd.f32 0.0, %v709
      %v711 = vpop.f32.mrf.mxu0
      %v712 = vadd.f32 0.0, %v711
      %713 = vmatmul.bf16.gmra.mxu0 %v688
      %v714 = vpop.f32.mrf.mxu0
      %v715 = vadd.f32 0.0, %v714
      %v716 = vpop.f32.mrf.mxu0
      %v717 = vadd.f32 0.0, %v716
      %718 = vdwg.mxu0
      %v723 = vunpack.c.l.b16 %v644
      %v724 = vunpack.c.l.b16 %v645
      %v725 = vunpack.c.l.b16 %v646
      %v726 = vunpack.c.l.b16 %v647
      %v727 = vpack.c.b16 %v724, %v723
      %v728 = vpack.c.b16 %v726, %v725
      %v732 = vsel %vm301, %v640, 0
      %v735 = vsel %vm301, %v641, 0
      %v738 = vsel %vm301, %v642, 0
      %v741 = vsel %vm301, %v643, 0
      %743 = vmatpush.bf16.msra.mxu0 0
      %744 = vmatpush.bf16.msra.mxu0 0
      %745 = vmatpush.bf16.msra.mxu0 0
      %746 = vmatpush.bf16.msra.mxu0 0
      %747 = vmatpush.bf16.msra.mxu0 0
      %748 = vmatpush.bf16.msra.mxu0 0
      %749 = vmatpush.bf16.msra.mxu0 %v728
      %750 = vmatpush.bf16.msra.mxu0 %v727
      %751 = vmatmul.bf16.gmra.mxu0 %v732
      %v752 = vpop.f32.mrf.mxu0
      %v753 = vadd.f32 %v700, %v752
      %v754 = vpop.f32.mrf.mxu0
      %v755 = vadd.f32 %v702, %v754
      %756 = vmatmul.bf16.gmra.mxu0 %v735
      %v757 = vpop.f32.mrf.mxu0
      %v758 = vadd.f32 %v705, %v757
      %v759 = vpop.f32.mrf.mxu0
      %v760 = vadd.f32 %v707, %v759
      %761 = vmatmul.bf16.gmra.mxu0 %v738
      %v762 = vpop.f32.mrf.mxu0
      %v763 = vadd.f32 %v710, %v762
      %v764 = vpop.f32.mrf.mxu0
      %v765 = vadd.f32 %v712, %v764
      %766 = vmatmul.bf16.gmra.mxu0 %v741
      %v767 = vpop.f32.mrf.mxu0
      %v768 = vadd.f32 %v715, %v767
      %v769 = vpop.f32.mrf.mxu0
      %v770 = vadd.f32 %v717, %v769
      %771 = vdwg.mxu0
      %v772 = vld [vmem:[%s631 + $0x1] sm:$0xff]
      %v773 = vld [vmem:[%s631 + $0x11] sm:$0xff]
      %v774 = vld [vmem:[%s631 + $0x21] sm:$0xff]
      %v775 = vld [vmem:[%s631 + $0x31] sm:$0xff]
      %v776 = vld [vmem:[%s631 + $0x41] sm:$0xff]
      %v777 = vld [vmem:[%s631 + $0x51] sm:$0xff]
      %v778 = vld [vmem:[%s631 + $0x61] sm:$0xff]
      %v779 = vld [vmem:[%s631 + $0x71] sm:$0xff]
      %v780 = vpack.c.bf16 %v773, %v772
      %v781 = vpack.c.bf16 %v775, %v774
      %v782 = vpack.c.bf16 %v777, %v776
      %v783 = vpack.c.bf16 %v779, %v778
      %s784 = scalar_lea.vmem %s3, 32
      %v785 = vld [vmem:[%s784] sm:$0xf]
      %v786 = vld [vmem:[%s784 + $0x4] sm:$0xf]
      %v787 = vld [vmem:[%s784 + $0x8] sm:$0xf]
      %v788 = vld [vmem:[%s784 + $0xc] sm:$0xf]
      %v793 = vunpack.c.l.b16 %v785
      %v794 = vunpack.c.l.b16 %v786
      %v795 = vunpack.c.l.b16 %v787
      %v796 = vunpack.c.l.b16 %v788
      %v797 = vpack.c.b16 %v794, %v793
      %v798 = vpack.c.b16 %v796, %v795
      %v802 = vsel %vm301, %v780, 0
      %v805 = vsel %vm301, %v781, 0
      %v808 = vsel %vm301, %v782, 0
      %v811 = vsel %vm301, %v783, 0
      %813 = vmatpush.bf16.msra.mxu0 0
      %814 = vmatpush.bf16.msra.mxu0 0
      %815 = vmatpush.bf16.msra.mxu0 0
      %816 = vmatpush.bf16.msra.mxu0 0
      %817 = vmatpush.bf16.msra.mxu0 0
      %818 = vmatpush.bf16.msra.mxu0 0
      %819 = vmatpush.bf16.msra.mxu0 %v798
      %820 = vmatpush.bf16.msra.mxu0 %v797
      %821 = vmatmul.bf16.gmra.mxu0 %v802
      %v822 = vpop.f32.mrf.mxu0
      %v823 = vadd.f32 0.0, %v822
      %v824 = vpop.f32.mrf.mxu0
      %v825 = vadd.f32 0.0, %v824
      %826 = vmatmul.bf16.gmra.mxu0 %v805
      %v827 = vpop.f32.mrf.mxu0
      %v828 = vadd.f32 0.0, %v827
      %v829 = vpop.f32.mrf.mxu0
      %v830 = vadd.f32 0.0, %v829
      %831 = vmatmul.bf16.gmra.mxu0 %v808
      %v832 = vpop.f32.mrf.mxu0
      %v833 = vadd.f32 0.0, %v832
      %v834 = vpop.f32.mrf.mxu0
      %v835 = vadd.f32 0.0, %v834
      %836 = vmatmul.bf16.gmra.mxu0 %v811
      %v837 = vpop.f32.mrf.mxu0
      %v838 = vadd.f32 0.0, %v837
      %v839 = vpop.f32.mrf.mxu0
      %v840 = vadd.f32 0.0, %v839
      %841 = vdwg.mxu0
      %v842 = vadd.f32 %v753, %v823
      %v843 = vadd.f32 %v755, %v825
      %v844 = vadd.f32 %v758, %v828
      %v845 = vadd.f32 %v760, %v830
      %v846 = vadd.f32 %v763, %v833
      %v847 = vadd.f32 %v765, %v835
      %v848 = vadd.f32 %v768, %v838
      %v849 = vadd.f32 %v770, %v840
      %v850 = vld [vmem:[%s489] sm:$0xff]
      %v851 = vld [vmem:[%s489 + $0x10] sm:$0xff]
      %v852 = vld [vmem:[%s489 + $0x20] sm:$0xff]
      %v853 = vld [vmem:[%s489 + $0x30] sm:$0xff]
      %v854 = vld [vmem:[%s489 + $0x40] sm:$0xff]
      %v855 = vld [vmem:[%s489 + $0x50] sm:$0xff]
      %v856 = vld [vmem:[%s489 + $0x60] sm:$0xff]
      %v857 = vld [vmem:[%s489 + $0x70] sm:$0xff]
      %v858 = vpack.c.bf16 %v851, %v850
      %v859 = vpack.c.bf16 %v853, %v852
      %v860 = vpack.c.bf16 %v855, %v854
      %v861 = vpack.c.bf16 %v857, %v856
      %s862 = scalar_lea.vmem %s3, 48
      %v863 = vld [vmem:[%s862] sm:$0xf]
      %v864 = vld [vmem:[%s862 + $0x4] sm:$0xf]
      %v865 = vld [vmem:[%s862 + $0x8] sm:$0xf]
      %v866 = vld [vmem:[%s862 + $0xc] sm:$0xf]
      %v871 = vunpack.c.l.b16 %v863
      %v872 = vunpack.c.l.b16 %v864
      %v873 = vunpack.c.l.b16 %v865
      %v874 = vunpack.c.l.b16 %v866
      %v875 = vpack.c.b16 %v872, %v871
      %v876 = vpack.c.b16 %v874, %v873
      %v880 = vsel %vm301, %v858, 0
      %v883 = vsel %vm301, %v859, 0
      %v886 = vsel %vm301, %v860, 0
      %v889 = vsel %vm301, %v861, 0
      %891 = vmatpush.bf16.msra.mxu0 0
      %892 = vmatpush.bf16.msra.mxu0 0
      %893 = vmatpush.bf16.msra.mxu0 0
      %894 = vmatpush.bf16.msra.mxu0 0
      %895 = vmatpush.bf16.msra.mxu0 0
      %896 = vmatpush.bf16.msra.mxu0 0
      %897 = vmatpush.bf16.msra.mxu0 %v876
      %898 = vmatpush.bf16.msra.mxu0 %v875
      %899 = vmatmul.bf16.gmra.mxu0 %v880
      %v900 = vpop.f32.mrf.mxu0
      %v901 = vadd.f32 0.0, %v900
      %v902 = vpop.f32.mrf.mxu0
      %v903 = vadd.f32 0.0, %v902
      %904 = vmatmul.bf16.gmra.mxu0 %v883
      %v905 = vpop.f32.mrf.mxu0
      %v906 = vadd.f32 0.0, %v905
      %v907 = vpop.f32.mrf.mxu0
      %v908 = vadd.f32 0.0, %v907
      %909 = vmatmul.bf16.gmra.mxu0 %v886
      %v910 = vpop.f32.mrf.mxu0
      %v911 = vadd.f32 0.0, %v910
      %v912 = vpop.f32.mrf.mxu0
      %v913 = vadd.f32 0.0, %v912
      %914 = vmatmul.bf16.gmra.mxu0 %v889
      %v915 = vpop.f32.mrf.mxu0
      %v916 = vadd.f32 0.0, %v915
      %v917 = vpop.f32.mrf.mxu0
      %v918 = vadd.f32 0.0, %v917
      %919 = vdwg.mxu0
      %v920 = vadd.f32 %v842, %v901
      %v921 = vadd.f32 %v843, %v903
      %v922 = vadd.f32 %v844, %v906
      %v923 = vadd.f32 %v845, %v908
      %v924 = vadd.f32 %v846, %v911
      %v925 = vadd.f32 %v847, %v913
      %v926 = vadd.f32 %v848, %v916
      %v927 = vadd.f32 %v849, %v918
      %v928 = vld [vmem:[%s431 + $0x1] sm:$0xff]
      %v929 = vld [vmem:[%s431 + $0x11] sm:$0xff]
      %v930 = vld [vmem:[%s431 + $0x21] sm:$0xff]
      %v931 = vld [vmem:[%s431 + $0x31] sm:$0xff]
      %v932 = vld [vmem:[%s431 + $0x41] sm:$0xff]
      %v933 = vld [vmem:[%s431 + $0x51] sm:$0xff]
      %v934 = vld [vmem:[%s431 + $0x61] sm:$0xff]
      %v935 = vld [vmem:[%s431 + $0x71] sm:$0xff]
      %v936 = vpack.c.bf16 %v929, %v928
      %v937 = vpack.c.bf16 %v931, %v930
      %v938 = vpack.c.bf16 %v933, %v932
      %v939 = vpack.c.bf16 %v935, %v934
      %s940 = scalar_lea.vmem %s3, 64
      %v941 = vld [vmem:[%s940] sm:$0xf]
      %v942 = vld [vmem:[%s940 + $0x4] sm:$0xf]
      %v943 = vld [vmem:[%s940 + $0x8] sm:$0xf]
      %v944 = vld [vmem:[%s940 + $0xc] sm:$0xf]
      %v949 = vunpack.c.l.b16 %v941
      %v950 = vunpack.c.l.b16 %v942
      %v951 = vunpack.c.l.b16 %v943
      %v952 = vunpack.c.l.b16 %v944
      %v953 = vpack.c.b16 %v950, %v949
      %v954 = vpack.c.b16 %v952, %v951
      %v958 = vsel %vm301, %v936, 0
      %v961 = vsel %vm301, %v937, 0
      %v964 = vsel %vm301, %v938, 0
      %v967 = vsel %vm301, %v939, 0
      %969 = vmatpush.bf16.msra.mxu0 0
      %970 = vmatpush.bf16.msra.mxu0 0
      %971 = vmatpush.bf16.msra.mxu0 0
      %972 = vmatpush.bf16.msra.mxu0 0
      %973 = vmatpush.bf16.msra.mxu0 0
      %974 = vmatpush.bf16.msra.mxu0 0
      %975 = vmatpush.bf16.msra.mxu0 %v954
      %976 = vmatpush.bf16.msra.mxu0 %v953
      %977 = vmatmul.bf16.gmra.mxu0 %v958
      %v978 = vpop.f32.mrf.mxu0
      %v979 = vadd.f32 0.0, %v978
      %v980 = vpop.f32.mrf.mxu0
      %v981 = vadd.f32 0.0, %v980
      %982 = vmatmul.bf16.gmra.mxu0 %v961
      %v983 = vpop.f32.mrf.mxu0
      %v984 = vadd.f32 0.0, %v983
      %v985 = vpop.f32.mrf.mxu0
      %v986 = vadd.f32 0.0, %v985
      %987 = vmatmul.bf16.gmra.mxu0 %v964
      %v988 = vpop.f32.mrf.mxu0
      %v989 = vadd.f32 0.0, %v988
      %v990 = vpop.f32.mrf.mxu0
      %v991 = vadd.f32 0.0, %v990
      %992 = vmatmul.bf16.gmra.mxu0 %v967
      %v993 = vpop.f32.mrf.mxu0
      %v994 = vadd.f32 0.0, %v993
      %v995 = vpop.f32.mrf.mxu0
      %v996 = vadd.f32 0.0, %v995
      %997 = vdwg.mxu0
      %v998 = vadd.f32 %v920, %v979
      %v999 = vadd.f32 %v921, %v981
      %v1000 = vadd.f32 %v922, %v984
      %v1001 = vadd.f32 %v923, %v986
      %v1002 = vadd.f32 %v924, %v989
      %v1003 = vadd.f32 %v925, %v991
      %v1004 = vadd.f32 %v926, %v994
      %v1005 = vadd.f32 %v927, %v996
      %v1006 = vld [vmem:[%s489 + $0x1] sm:$0xff]
      %v1007 = vld [vmem:[%s489 + $0x11] sm:$0xff]
      %v1008 = vld [vmem:[%s489 + $0x21] sm:$0xff]
      %v1009 = vld [vmem:[%s489 + $0x31] sm:$0xff]
      %v1010 = vld [vmem:[%s489 + $0x41] sm:$0xff]
      %v1011 = vld [vmem:[%s489 + $0x51] sm:$0xff]
      %v1012 = vld [vmem:[%s489 + $0x61] sm:$0xff]
      %v1013 = vld [vmem:[%s489 + $0x71] sm:$0xff]
      %v1014 = vpack.c.bf16 %v1007, %v1006
      %v1015 = vpack.c.bf16 %v1009, %v1008
      %v1016 = vpack.c.bf16 %v1011, %v1010
      %v1017 = vpack.c.bf16 %v1013, %v1012
      %s1018 = scalar_lea.vmem %s3, 80
      %v1019 = vld [vmem:[%s1018] sm:$0xf]
      %v1020 = vld [vmem:[%s1018 + $0x4] sm:$0xf]
      %v1021 = vld [vmem:[%s1018 + $0x8] sm:$0xf]
      %v1022 = vld [vmem:[%s1018 + $0xc] sm:$0xf]
      %v1027 = vunpack.c.l.b16 %v1019
      %v1028 = vunpack.c.l.b16 %v1020
      %v1029 = vunpack.c.l.b16 %v1021
      %v1030 = vunpack.c.l.b16 %v1022
      %v1031 = vpack.c.b16 %v1028, %v1027
      %v1032 = vpack.c.b16 %v1030, %v1029
      %v1036 = vsel %vm301, %v1014, 0
      %v1039 = vsel %vm301, %v1015, 0
      %v1042 = vsel %vm301, %v1016, 0
      %v1045 = vsel %vm301, %v1017, 0
      %1047 = vmatpush.bf16.msra.mxu0 0
      %1048 = vmatpush.bf16.msra.mxu0 0
      %1049 = vmatpush.bf16.msra.mxu0 0
      %1050 = vmatpush.bf16.msra.mxu0 0
      %1051 = vmatpush.bf16.msra.mxu0 0
      %1052 = vmatpush.bf16.msra.mxu0 0
      %1053 = vmatpush.bf16.msra.mxu0 %v1032
      %1054 = vmatpush.bf16.msra.mxu0 %v1031
      %1055 = vmatmul.bf16.gmra.mxu0 %v1036
      %v1056 = vpop.f32.mrf.mxu0
      %v1057 = vadd.f32 0.0, %v1056
      %v1058 = vpop.f32.mrf.mxu0
      %v1059 = vadd.f32 0.0, %v1058
      %1060 = vmatmul.bf16.gmra.mxu0 %v1039
      %v1061 = vpop.f32.mrf.mxu0
      %v1062 = vadd.f32 0.0, %v1061
      %v1063 = vpop.f32.mrf.mxu0
      %v1064 = vadd.f32 0.0, %v1063
      %1065 = vmatmul.bf16.gmra.mxu0 %v1042
      %v1066 = vpop.f32.mrf.mxu0
      %v1067 = vadd.f32 0.0, %v1066
      %v1068 = vpop.f32.mrf.mxu0
      %v1069 = vadd.f32 0.0, %v1068
      %1070 = vmatmul.bf16.gmra.mxu0 %v1045
      %v1071 = vpop.f32.mrf.mxu0
      %v1072 = vadd.f32 0.0, %v1071
      %v1073 = vpop.f32.mrf.mxu0
      %v1074 = vadd.f32 0.0, %v1073
      %1075 = vdwg.mxu0
      %v1076 = vadd.f32 %v998, %v1057
      %v1077 = vadd.f32 %v999, %v1059
      %v1078 = vadd.f32 %v1000, %v1062
      %v1079 = vadd.f32 %v1001, %v1064
      %v1080 = vadd.f32 %v1002, %v1067
      %v1081 = vadd.f32 %v1003, %v1069
      %v1082 = vadd.f32 %v1004, %v1072
      %v1083 = vadd.f32 %v1005, %v1074
      %v1084 = vld [vmem:[%s605] sm:$0xff]
      %v1085 = vld [vmem:[%s605 + $0x10] sm:$0xff]
      %v1086 = vld [vmem:[%s605 + $0x20] sm:$0xff]
      %v1087 = vld [vmem:[%s605 + $0x30] sm:$0xff]
      %v1088 = vld [vmem:[%s605 + $0x40] sm:$0xff]
      %v1089 = vld [vmem:[%s605 + $0x50] sm:$0xff]
      %v1090 = vld [vmem:[%s605 + $0x60] sm:$0xff]
      %v1091 = vld [vmem:[%s605 + $0x70] sm:$0xff]
      %v1092 = vpack.c.bf16 %v1085, %v1084
      %v1093 = vpack.c.bf16 %v1087, %v1086
      %v1094 = vpack.c.bf16 %v1089, %v1088
      %v1095 = vpack.c.bf16 %v1091, %v1090
      %s1096 = scalar_lea.vmem %s3, 96
      %v1097 = vld [vmem:[%s1096] sm:$0xf]
      %v1098 = vld [vmem:[%s1096 + $0x4] sm:$0xf]
      %v1099 = vld [vmem:[%s1096 + $0x8] sm:$0xf]
      %v1100 = vld [vmem:[%s1096 + $0xc] sm:$0xf]
      %v1105 = vunpack.c.l.b16 %v1097
      %v1106 = vunpack.c.l.b16 %v1098
      %v1107 = vunpack.c.l.b16 %v1099
      %v1108 = vunpack.c.l.b16 %v1100
      %v1109 = vpack.c.b16 %v1106, %v1105
      %v1110 = vpack.c.b16 %v1108, %v1107
      %v1114 = vsel %vm301, %v1092, 0
      %v1117 = vsel %vm301, %v1093, 0
      %v1120 = vsel %vm301, %v1094, 0
      %v1123 = vsel %vm301, %v1095, 0
      %1125 = vmatpush.bf16.msra.mxu0 0
      %1126 = vmatpush.bf16.msra.mxu0 0
      %1127 = vmatpush.bf16.msra.mxu0 0
      %1128 = vmatpush.bf16.msra.mxu0 0
      %1129 = vmatpush.bf16.msra.mxu0 0
      %1130 = vmatpush.bf16.msra.mxu0 0
      %1131 = vmatpush.bf16.msra.mxu0 %v1110
      %1132 = vmatpush.bf16.msra.mxu0 %v1109
      %1133 = vmatmul.bf16.gmra.mxu0 %v1114
      %v1134 = vpop.f32.mrf.mxu0
      %v1135 = vadd.f32 0.0, %v1134
      %v1136 = vpop.f32.mrf.mxu0
      %v1137 = vadd.f32 0.0, %v1136
      %1138 = vmatmul.bf16.gmra.mxu0 %v1117
      %v1139 = vpop.f32.mrf.mxu0
      %v1140 = vadd.f32 0.0, %v1139
      %v1141 = vpop.f32.mrf.mxu0
      %v1142 = vadd.f32 0.0, %v1141
      %1143 = vmatmul.bf16.gmra.mxu0 %v1120
      %v1144 = vpop.f32.mrf.mxu0
      %v1145 = vadd.f32 0.0, %v1144
      %v1146 = vpop.f32.mrf.mxu0
      %v1147 = vadd.f32 0.0, %v1146
      %1148 = vmatmul.bf16.gmra.mxu0 %v1123
      %v1149 = vpop.f32.mrf.mxu0
      %v1150 = vadd.f32 0.0, %v1149
      %v1151 = vpop.f32.mrf.mxu0
      %v1152 = vadd.f32 0.0, %v1151
      %1153 = vdwg.mxu0
      %v1154 = vadd.f32 %v1076, %v1135
      %v1155 = vadd.f32 %v1077, %v1137
      %v1156 = vadd.f32 %v1078, %v1140
      %v1157 = vadd.f32 %v1079, %v1142
      %v1158 = vadd.f32 %v1080, %v1145
      %v1159 = vadd.f32 %v1081, %v1147
      %v1160 = vadd.f32 %v1082, %v1150
      %v1161 = vadd.f32 %v1083, %v1152
      %v1162 = vld [vmem:[%s547 + $0x1] sm:$0xff]
      %v1163 = vld [vmem:[%s547 + $0x11] sm:$0xff]
      %v1164 = vld [vmem:[%s547 + $0x21] sm:$0xff]
      %v1165 = vld [vmem:[%s547 + $0x31] sm:$0xff]
      %v1166 = vld [vmem:[%s547 + $0x41] sm:$0xff]
      %v1167 = vld [vmem:[%s547 + $0x51] sm:$0xff]
      %v1168 = vld [vmem:[%s547 + $0x61] sm:$0xff]
      %v1169 = vld [vmem:[%s547 + $0x71] sm:$0xff]
      %v1170 = vpack.c.bf16 %v1163, %v1162
      %v1171 = vpack.c.bf16 %v1165, %v1164
      %v1172 = vpack.c.bf16 %v1167, %v1166
      %v1173 = vpack.c.bf16 %v1169, %v1168
      %s1174 = scalar_lea.vmem %s3, 112
      %v1175 = vld [vmem:[%s1174] sm:$0xf]
      %v1176 = vld [vmem:[%s1174 + $0x4] sm:$0xf]
      %v1177 = vld [vmem:[%s1174 + $0x8] sm:$0xf]
      %v1178 = vld [vmem:[%s1174 + $0xc] sm:$0xf]
      %v1183 = vunpack.c.l.b16 %v1175
      %v1184 = vunpack.c.l.b16 %v1176
      %v1185 = vunpack.c.l.b16 %v1177
      %v1186 = vunpack.c.l.b16 %v1178
      %v1187 = vpack.c.b16 %v1184, %v1183
      %v1188 = vpack.c.b16 %v1186, %v1185
      %v1192 = vsel %vm301, %v1170, 0
      %v1195 = vsel %vm301, %v1171, 0
      %v1198 = vsel %vm301, %v1172, 0
      %v1201 = vsel %vm301, %v1173, 0
      %1203 = vmatpush.bf16.msra.mxu0 0
      %1204 = vmatpush.bf16.msra.mxu0 0
      %1205 = vmatpush.bf16.msra.mxu0 0
      %1206 = vmatpush.bf16.msra.mxu0 0
      %1207 = vmatpush.bf16.msra.mxu0 0
      %1208 = vmatpush.bf16.msra.mxu0 0
      %1209 = vmatpush.bf16.msra.mxu0 %v1188
      %1210 = vmatpush.bf16.msra.mxu0 %v1187
      %1211 = vmatmul.bf16.gmra.mxu0 %v1192
      %v1212 = vpop.f32.mrf.mxu0
      %v1213 = vadd.f32 0.0, %v1212
      %v1214 = vpop.f32.mrf.mxu0
      %v1215 = vadd.f32 0.0, %v1214
      %1216 = vmatmul.bf16.gmra.mxu0 %v1195
      %v1217 = vpop.f32.mrf.mxu0
      %v1218 = vadd.f32 0.0, %v1217
      %v1219 = vpop.f32.mrf.mxu0
      %v1220 = vadd.f32 0.0, %v1219
      %1221 = vmatmul.bf16.gmra.mxu0 %v1198
      %v1222 = vpop.f32.mrf.mxu0
      %v1223 = vadd.f32 0.0, %v1222
      %v1224 = vpop.f32.mrf.mxu0
      %v1225 = vadd.f32 0.0, %v1224
      %1226 = vmatmul.bf16.gmra.mxu0 %v1201
      %v1227 = vpop.f32.mrf.mxu0
      %v1228 = vadd.f32 0.0, %v1227
      %v1229 = vpop.f32.mrf.mxu0
      %v1230 = vadd.f32 0.0, %v1229
      %1231 = vdwg.mxu0
      %v1232 = vadd.f32 %v1154, %v1213
      %v1233 = vadd.f32 %v1155, %v1215
      %v1234 = vadd.f32 %v1156, %v1218
      %v1235 = vadd.f32 %v1157, %v1220
      %v1236 = vadd.f32 %v1158, %v1223
      %v1237 = vadd.f32 %v1159, %v1225
      %v1238 = vadd.f32 %v1160, %v1228
      %v1239 = vadd.f32 %v1161, %v1230
      %v1240 = vld [vmem:[%s605 + $0x1] sm:$0xff]
      %v1241 = vld [vmem:[%s605 + $0x11] sm:$0xff]
      %v1242 = vld [vmem:[%s605 + $0x21] sm:$0xff]
      %v1243 = vld [vmem:[%s605 + $0x31] sm:$0xff]
      %v1244 = vld [vmem:[%s605 + $0x41] sm:$0xff]
      %v1245 = vld [vmem:[%s605 + $0x51] sm:$0xff]
      %v1246 = vld [vmem:[%s605 + $0x61] sm:$0xff]
      %v1247 = vld [vmem:[%s605 + $0x71] sm:$0xff]
      %v1248 = vpack.c.bf16 %v1241, %v1240
      %v1249 = vpack.c.bf16 %v1243, %v1242
      %v1250 = vpack.c.bf16 %v1245, %v1244
      %v1251 = vpack.c.bf16 %v1247, %v1246
      %s1252 = scalar_lea.vmem %s3, 128
      %v1253 = vld [vmem:[%s1252] sm:$0xf]
      %v1254 = vld [vmem:[%s1252 + $0x4] sm:$0xf]
      %v1255 = vld [vmem:[%s1252 + $0x8] sm:$0xf]
      %v1256 = vld [vmem:[%s1252 + $0xc] sm:$0xf]
      %v1261 = vunpack.c.l.b16 %v1253
      %v1262 = vunpack.c.l.b16 %v1254
      %v1263 = vunpack.c.l.b16 %v1255
      %v1264 = vunpack.c.l.b16 %v1256
      %v1265 = vpack.c.b16 %v1262, %v1261
      %v1266 = vpack.c.b16 %v1264, %v1263
      %v1270 = vsel %vm301, %v1248, 0
      %v1273 = vsel %vm301, %v1249, 0
      %v1276 = vsel %vm301, %v1250, 0
      %v1279 = vsel %vm301, %v1251, 0
      %1281 = vmatpush.bf16.msra.mxu0 0
      %1282 = vmatpush.bf16.msra.mxu0 0
      %1283 = vmatpush.bf16.msra.mxu0 0
      %1284 = vmatpush.bf16.msra.mxu0 0
      %1285 = vmatpush.bf16.msra.mxu0 0
      %1286 = vmatpush.bf16.msra.mxu0 0
      %1287 = vmatpush.bf16.msra.mxu0 %v1266
      %1288 = vmatpush.bf16.msra.mxu0 %v1265
      %1289 = vmatmul.bf16.gmra.mxu0 %v1270
      %v1290 = vpop.f32.mrf.mxu0
      %v1291 = vadd.f32 0.0, %v1290
      %v1292 = vpop.f32.mrf.mxu0
      %v1293 = vadd.f32 0.0, %v1292
      %1294 = vmatmul.bf16.gmra.mxu0 %v1273
      %v1295 = vpop.f32.mrf.mxu0
      %v1296 = vadd.f32 0.0, %v1295
      %v1297 = vpop.f32.mrf.mxu0
      %v1298 = vadd.f32 0.0, %v1297
      %1299 = vmatmul.bf16.gmra.mxu0 %v1276
      %v1300 = vpop.f32.mrf.mxu0
      %v1301 = vadd.f32 0.0, %v1300
      %v1302 = vpop.f32.mrf.mxu0
      %v1303 = vadd.f32 0.0, %v1302
      %1304 = vmatmul.bf16.gmra.mxu0 %v1279
      %v1305 = vpop.f32.mrf.mxu0
      %v1306 = vadd.f32 0.0, %v1305
      %v1307 = vpop.f32.mrf.mxu0
      %v1308 = vadd.f32 0.0, %v1307
      %1309 = vdwg.mxu0
      %v1310 = vadd.f32 %v1232, %v1291
      %v1311 = vadd.f32 %v1233, %v1293
      %v1312 = vadd.f32 %v1234, %v1296
      %v1313 = vadd.f32 %v1235, %v1298
      %v1314 = vadd.f32 %v1236, %v1301
      %v1315 = vadd.f32 %v1237, %v1303
      %v1316 = vadd.f32 %v1238, %v1306
      %v1317 = vadd.f32 %v1239, %v1308
      %v1319 = vperm.slane %v614, 0
      %v1321 = vadd.f32 %v1310, %v1319
      %v1322 = vadd.f32 %v1311, %v1319
      %v1323 = vadd.f32 %v1312, %v1319
      %v1324 = vadd.f32 %v1313, %v1319
      %v1325 = vadd.f32 %v1314, %v1319
      %v1326 = vadd.f32 %v1315, %v1319
      %v1327 = vadd.f32 %v1316, %v1319
      %v1328 = vadd.f32 %v1317, %v1319
      %v1329 = vadd.f32 %v1321, %v623
      %v1330 = vadd.f32 %v1322, %v624
      %v1331 = vadd.f32 %v1323, %v625
      %v1332 = vadd.f32 %v1324, %v626
      %v1333 = vadd.f32 %v1325, %v627
      %v1334 = vadd.f32 %v1326, %v628
      %v1335 = vadd.f32 %v1327, %v629
      %v1336 = vadd.f32 %v1328, %v630
      %1337 = vst.msk [vmem:[%s299] sm:$0xff] %vm301, %v1329
      %1338 = vst.msk [vmem:[%s299 + $0x8] sm:$0xff] %vm301, %v1330
      %1339 = vst.msk [vmem:[%s299 + $0x10] sm:$0xff] %vm301, %v1331
      %1340 = vst.msk [vmem:[%s299 + $0x18] sm:$0xff] %vm301, %v1332
      %1341 = vst.msk [vmem:[%s299 + $0x20] sm:$0xff] %vm301, %v1333
      %1342 = vst.msk [vmem:[%s299 + $0x28] sm:$0xff] %vm301, %v1334
      %1343 = vst.msk [vmem:[%s299 + $0x30] sm:$0xff] %vm301, %v1335
      %1344 = vst.msk [vmem:[%s299 + $0x38] sm:$0xff] %vm301, %v1336
      %v1345 = vld [vmem:[%s648 + $0x1] sm:$0xff]
      %v1346 = vld [vmem:[%s648 + $0x11] sm:$0xff]
      %v1347 = vld [vmem:[%s648 + $0x21] sm:$0xff]
      %v1348 = vld [vmem:[%s648 + $0x31] sm:$0xff]
      %v1349 = vld [vmem:[%s648 + $0x41] sm:$0xff]
      %v1350 = vld [vmem:[%s648 + $0x51] sm:$0xff]
      %v1351 = vld [vmem:[%s648 + $0x61] sm:$0xff]
      %v1352 = vld [vmem:[%s648 + $0x71] sm:$0xff]
      %v1353 = vpack.c.bf16 %v1346, %v1345
      %v1354 = vpack.c.bf16 %v1348, %v1347
      %v1355 = vpack.c.bf16 %v1350, %v1349
      %v1356 = vpack.c.bf16 %v1352, %v1351
      %v1357 = vld [vmem:[%s3] sm:$0xf]
      %v1358 = vld [vmem:[%s3 + $0x4] sm:$0xf]
      %v1359 = vld [vmem:[%s3 + $0x8] sm:$0xf]
      %v1360 = vld [vmem:[%s3 + $0xc] sm:$0xf]
      %v1361 = vld [vmem:[%s631 + $0x1] sm:$0xff]
      %v1362 = vld [vmem:[%s631 + $0x11] sm:$0xff]
      %v1363 = vld [vmem:[%s631 + $0x21] sm:$0xff]
      %v1364 = vld [vmem:[%s631 + $0x31] sm:$0xff]
      %v1365 = vld [vmem:[%s631 + $0x41] sm:$0xff]
      %v1366 = vld [vmem:[%s631 + $0x51] sm:$0xff]
      %v1367 = vld [vmem:[%s631 + $0x61] sm:$0xff]
      %v1368 = vld [vmem:[%s631 + $0x71] sm:$0xff]
      %v1369 = vpack.c.bf16 %v1362, %v1361
      %v1370 = vpack.c.bf16 %v1364, %v1363
      %v1371 = vpack.c.bf16 %v1366, %v1365
      %v1372 = vpack.c.bf16 %v1368, %v1367
      %v1373 = vld [vmem:[%s661] sm:$0xf]
      %v1374 = vld [vmem:[%s661 + $0x4] sm:$0xf]
      %v1375 = vld [vmem:[%s661 + $0x8] sm:$0xf]
      %v1376 = vld [vmem:[%s661 + $0xc] sm:$0xf]
      %v1381 = vunpack.c.l.b16 %v1373
      %v1382 = vunpack.c.l.b16 %v1374
      %v1383 = vunpack.c.l.b16 %v1375
      %v1384 = vunpack.c.l.b16 %v1376
      %v1385 = vpack.c.b16 %v1382, %v1381
      %v1386 = vpack.c.b16 %v1384, %v1383
      %v1390 = vsel %vm301, %v1369, 0
      %v1393 = vsel %vm301, %v1370, 0
      %v1396 = vsel %vm301, %v1371, 0
      %v1399 = vsel %vm301, %v1372, 0
      %1401 = vmatpush.bf16.msra.mxu0 0
      %1402 = vmatpush.bf16.msra.mxu0 0
      %1403 = vmatpush.bf16.msra.mxu0 0
      %1404 = vmatpush.bf16.msra.mxu0 0
      %1405 = vmatpush.bf16.msra.mxu0 0
      %1406 = vmatpush.bf16.msra.mxu0 0
      %1407 = vmatpush.bf16.msra.mxu0 %v1386
      %1408 = vmatpush.bf16.msra.mxu0 %v1385
      %1409 = vmatmul.bf16.gmra.mxu0 %v1390
      %v1410 = vpop.f32.mrf.mxu0
      %v1411 = vadd.f32 0.0, %v1410
      %v1412 = vpop.f32.mrf.mxu0
      %v1413 = vadd.f32 0.0, %v1412
      %1414 = vmatmul.bf16.gmra.mxu0 %v1393
      %v1415 = vpop.f32.mrf.mxu0
      %v1416 = vadd.f32 0.0, %v1415
      %v1417 = vpop.f32.mrf.mxu0
      %v1418 = vadd.f32 0.0, %v1417
      %1419 = vmatmul.bf16.gmra.mxu0 %v1396
      %v1420 = vpop.f32.mrf.mxu0
      %v1421 = vadd.f32 0.0, %v1420
      %v1422 = vpop.f32.mrf.mxu0
      %v1423 = vadd.f32 0.0, %v1422
      %1424 = vmatmul.bf16.gmra.mxu0 %v1399
      %v1425 = vpop.f32.mrf.mxu0
      %v1426 = vadd.f32 0.0, %v1425
      %v1427 = vpop.f32.mrf.mxu0
      %v1428 = vadd.f32 0.0, %v1427
      %1429 = vdwg.mxu0
      %v1434 = vunpack.c.l.b16 %v1357
      %v1435 = vunpack.c.l.b16 %v1358
      %v1436 = vunpack.c.l.b16 %v1359
      %v1437 = vunpack.c.l.b16 %v1360
      %v1438 = vpack.c.b16 %v1435, %v1434
      %v1439 = vpack.c.b16 %v1437, %v1436
      %v1443 = vsel %vm301, %v1353, 0
      %v1446 = vsel %vm301, %v1354, 0
      %v1449 = vsel %vm301, %v1355, 0
      %v1452 = vsel %vm301, %v1356, 0
      %1454 = vmatpush.bf16.msra.mxu0 0
      %1455 = vmatpush.bf16.msra.mxu0 0
      %1456 = vmatpush.bf16.msra.mxu0 0
      %1457 = vmatpush.bf16.msra.mxu0 0
      %1458 = vmatpush.bf16.msra.mxu0 0
      %1459 = vmatpush.bf16.msra.mxu0 0
      %1460 = vmatpush.bf16.msra.mxu0 %v1439
      %1461 = vmatpush.bf16.msra.mxu0 %v1438
      %1462 = vmatmul.bf16.gmra.mxu0 %v1443
      %v1463 = vpop.f32.mrf.mxu0
      %v1464 = vadd.f32 %v1411, %v1463
      %v1465 = vpop.f32.mrf.mxu0
      %v1466 = vadd.f32 %v1413, %v1465
      %1467 = vmatmul.bf16.gmra.mxu0 %v1446
      %v1468 = vpop.f32.mrf.mxu0
      %v1469 = vadd.f32 %v1416, %v1468
      %v1470 = vpop.f32.mrf.mxu0
      %v1471 = vadd.f32 %v1418, %v1470
      %1472 = vmatmul.bf16.gmra.mxu0 %v1449
      %v1473 = vpop.f32.mrf.mxu0
      %v1474 = vadd.f32 %v1421, %v1473
      %v1475 = vpop.f32.mrf.mxu0
      %v1476 = vadd.f32 %v1423, %v1475
      %1477 = vmatmul.bf16.gmra.mxu0 %v1452
      %v1478 = vpop.f32.mrf.mxu0
      %v1479 = vadd.f32 %v1426, %v1478
      %v1480 = vpop.f32.mrf.mxu0
      %v1481 = vadd.f32 %v1428, %v1480
      %1482 = vdwg.mxu0
      %v1483 = vld [vmem:[%s648 + $0x2] sm:$0xff]
      %v1484 = vld [vmem:[%s648 + $0x12] sm:$0xff]
      %v1485 = vld [vmem:[%s648 + $0x22] sm:$0xff]
      %v1486 = vld [vmem:[%s648 + $0x32] sm:$0xff]
      %v1487 = vld [vmem:[%s648 + $0x42] sm:$0xff]
      %v1488 = vld [vmem:[%s648 + $0x52] sm:$0xff]
      %v1489 = vld [vmem:[%s648 + $0x62] sm:$0xff]
      %v1490 = vld [vmem:[%s648 + $0x72] sm:$0xff]
      %v1491 = vpack.c.bf16 %v1484, %v1483
      %v1492 = vpack.c.bf16 %v1486, %v1485
      %v1493 = vpack.c.bf16 %v1488, %v1487
      %v1494 = vpack.c.bf16 %v1490, %v1489
      %v1495 = vld [vmem:[%s784] sm:$0xf]
      %v1496 = vld [vmem:[%s784 + $0x4] sm:$0xf]
      %v1497 = vld [vmem:[%s784 + $0x8] sm:$0xf]
      %v1498 = vld [vmem:[%s784 + $0xc] sm:$0xf]
      %v1503 = vunpack.c.l.b16 %v1495
      %v1504 = vunpack.c.l.b16 %v1496
      %v1505 = vunpack.c.l.b16 %v1497
      %v1506 = vunpack.c.l.b16 %v1498
      %v1507 = vpack.c.b16 %v1504, %v1503
      %v1508 = vpack.c.b16 %v1506, %v1505
      %v1512 = vsel %vm301, %v1491, 0
      %v1515 = vsel %vm301, %v1492, 0
      %v1518 = vsel %vm301, %v1493, 0
      %v1521 = vsel %vm301, %v1494, 0
      %1523 = vmatpush.bf16.msra.mxu0 0
      %1524 = vmatpush.bf16.msra.mxu0 0
      %1525 = vmatpush.bf16.msra.mxu0 0
      %1526 = vmatpush.bf16.msra.mxu0 0
      %1527 = vmatpush.bf16.msra.mxu0 0
      %1528 = vmatpush.bf16.msra.mxu0 0
      %1529 = vmatpush.bf16.msra.mxu0 %v1508
      %1530 = vmatpush.bf16.msra.mxu0 %v1507
      %1531 = vmatmul.bf16.gmra.mxu0 %v1512
      %v1532 = vpop.f32.mrf.mxu0
      %v1533 = vadd.f32 0.0, %v1532
      %v1534 = vpop.f32.mrf.mxu0
      %v1535 = vadd.f32 0.0, %v1534
      %1536 = vmatmul.bf16.gmra.mxu0 %v1515
      %v1537 = vpop.f32.mrf.mxu0
      %v1538 = vadd.f32 0.0, %v1537
      %v1539 = vpop.f32.mrf.mxu0
      %v1540 = vadd.f32 0.0, %v1539
      %1541 = vmatmul.bf16.gmra.mxu0 %v1518
      %v1542 = vpop.f32.mrf.mxu0
      %v1543 = vadd.f32 0.0, %v1542
      %v1544 = vpop.f32.mrf.mxu0
      %v1545 = vadd.f32 0.0, %v1544
      %1546 = vmatmul.bf16.gmra.mxu0 %v1521
      %v1547 = vpop.f32.mrf.mxu0
      %v1548 = vadd.f32 0.0, %v1547
      %v1549 = vpop.f32.mrf.mxu0
      %v1550 = vadd.f32 0.0, %v1549
      %1551 = vdwg.mxu0
      %v1552 = vadd.f32 %v1464, %v1533
      %v1553 = vadd.f32 %v1466, %v1535
      %v1554 = vadd.f32 %v1469, %v1538
      %v1555 = vadd.f32 %v1471, %v1540
      %v1556 = vadd.f32 %v1474, %v1543
      %v1557 = vadd.f32 %v1476, %v1545
      %v1558 = vadd.f32 %v1479, %v1548
      %v1559 = vadd.f32 %v1481, %v1550
      %v1560 = vld [vmem:[%s431 + $0x1] sm:$0xff]
      %v1561 = vld [vmem:[%s431 + $0x11] sm:$0xff]
      %v1562 = vld [vmem:[%s431 + $0x21] sm:$0xff]
      %v1563 = vld [vmem:[%s431 + $0x31] sm:$0xff]
      %v1564 = vld [vmem:[%s431 + $0x41] sm:$0xff]
      %v1565 = vld [vmem:[%s431 + $0x51] sm:$0xff]
      %v1566 = vld [vmem:[%s431 + $0x61] sm:$0xff]
      %v1567 = vld [vmem:[%s431 + $0x71] sm:$0xff]
      %v1568 = vpack.c.bf16 %v1561, %v1560
      %v1569 = vpack.c.bf16 %v1563, %v1562
      %v1570 = vpack.c.bf16 %v1565, %v1564
      %v1571 = vpack.c.bf16 %v1567, %v1566
      %v1572 = vld [vmem:[%s862] sm:$0xf]
      %v1573 = vld [vmem:[%s862 + $0x4] sm:$0xf]
      %v1574 = vld [vmem:[%s862 + $0x8] sm:$0xf]
      %v1575 = vld [vmem:[%s862 + $0xc] sm:$0xf]
      %v1580 = vunpack.c.l.b16 %v1572
      %v1581 = vunpack.c.l.b16 %v1573
      %v1582 = vunpack.c.l.b16 %v1574
      %v1583 = vunpack.c.l.b16 %v1575
      %v1584 = vpack.c.b16 %v1581, %v1580
      %v1585 = vpack.c.b16 %v1583, %v1582
      %v1589 = vsel %vm301, %v1568, 0
      %v1592 = vsel %vm301, %v1569, 0
      %v1595 = vsel %vm301, %v1570, 0
      %v1598 = vsel %vm301, %v1571, 0
      %1600 = vmatpush.bf16.msra.mxu0 0
      %1601 = vmatpush.bf16.msra.mxu0 0
      %1602 = vmatpush.bf16.msra.mxu0 0
      %1603 = vmatpush.bf16.msra.mxu0 0
      %1604 = vmatpush.bf16.msra.mxu0 0
      %1605 = vmatpush.bf16.msra.mxu0 0
      %1606 = vmatpush.bf16.msra.mxu0 %v1585
      %1607 = vmatpush.bf16.msra.mxu0 %v1584
      %1608 = vmatmul.bf16.gmra.mxu0 %v1589
      %v1609 = vpop.f32.mrf.mxu0
      %v1610 = vadd.f32 0.0, %v1609
      %v1611 = vpop.f32.mrf.mxu0
      %v1612 = vadd.f32 0.0, %v1611
      %1613 = vmatmul.bf16.gmra.mxu0 %v1592
      %v1614 = vpop.f32.mrf.mxu0
      %v1615 = vadd.f32 0.0, %v1614
      %v1616 = vpop.f32.mrf.mxu0
      %v1617 = vadd.f32 0.0, %v1616
      %1618 = vmatmul.bf16.gmra.mxu0 %v1595
      %v1619 = vpop.f32.mrf.mxu0
      %v1620 = vadd.f32 0.0, %v1619
      %v1621 = vpop.f32.mrf.mxu0
      %v1622 = vadd.f32 0.0, %v1621
      %1623 = vmatmul.bf16.gmra.mxu0 %v1598
      %v1624 = vpop.f32.mrf.mxu0
      %v1625 = vadd.f32 0.0, %v1624
      %v1626 = vpop.f32.mrf.mxu0
      %v1627 = vadd.f32 0.0, %v1626
      %1628 = vdwg.mxu0
      %v1629 = vadd.f32 %v1552, %v1610
      %v1630 = vadd.f32 %v1553, %v1612
      %v1631 = vadd.f32 %v1554, %v1615
      %v1632 = vadd.f32 %v1555, %v1617
      %v1633 = vadd.f32 %v1556, %v1620
      %v1634 = vadd.f32 %v1557, %v1622
      %v1635 = vadd.f32 %v1558, %v1625
      %v1636 = vadd.f32 %v1559, %v1627
      %v1637 = vld [vmem:[%s489 + $0x1] sm:$0xff]
      %v1638 = vld [vmem:[%s489 + $0x11] sm:$0xff]
      %v1639 = vld [vmem:[%s489 + $0x21] sm:$0xff]
      %v1640 = vld [vmem:[%s489 + $0x31] sm:$0xff]
      %v1641 = vld [vmem:[%s489 + $0x41] sm:$0xff]
      %v1642 = vld [vmem:[%s489 + $0x51] sm:$0xff]
      %v1643 = vld [vmem:[%s489 + $0x61] sm:$0xff]
      %v1644 = vld [vmem:[%s489 + $0x71] sm:$0xff]
      %v1645 = vpack.c.bf16 %v1638, %v1637
      %v1646 = vpack.c.bf16 %v1640, %v1639
      %v1647 = vpack.c.bf16 %v1642, %v1641
      %v1648 = vpack.c.bf16 %v1644, %v1643
      %v1649 = vld [vmem:[%s940] sm:$0xf]
      %v1650 = vld [vmem:[%s940 + $0x4] sm:$0xf]
      %v1651 = vld [vmem:[%s940 + $0x8] sm:$0xf]
      %v1652 = vld [vmem:[%s940 + $0xc] sm:$0xf]
      %v1657 = vunpack.c.l.b16 %v1649
      %v1658 = vunpack.c.l.b16 %v1650
      %v1659 = vunpack.c.l.b16 %v1651
      %v1660 = vunpack.c.l.b16 %v1652
      %v1661 = vpack.c.b16 %v1658, %v1657
      %v1662 = vpack.c.b16 %v1660, %v1659
      %v1666 = vsel %vm301, %v1645, 0
      %v1669 = vsel %vm301, %v1646, 0
      %v1672 = vsel %vm301, %v1647, 0
      %v1675 = vsel %vm301, %v1648, 0
      %1677 = vmatpush.bf16.msra.mxu0 0
      %1678 = vmatpush.bf16.msra.mxu0 0
      %1679 = vmatpush.bf16.msra.mxu0 0
      %1680 = vmatpush.bf16.msra.mxu0 0
      %1681 = vmatpush.bf16.msra.mxu0 0
      %1682 = vmatpush.bf16.msra.mxu0 0
      %1683 = vmatpush.bf16.msra.mxu0 %v1662
      %1684 = vmatpush.bf16.msra.mxu0 %v1661
      %1685 = vmatmul.bf16.gmra.mxu0 %v1666
      %v1686 = vpop.f32.mrf.mxu0
      %v1687 = vadd.f32 0.0, %v1686
      %v1688 = vpop.f32.mrf.mxu0
      %v1689 = vadd.f32 0.0, %v1688
      %1690 = vmatmul.bf16.gmra.mxu0 %v1669
      %v1691 = vpop.f32.mrf.mxu0
      %v1692 = vadd.f32 0.0, %v1691
      %v1693 = vpop.f32.mrf.mxu0
      %v1694 = vadd.f32 0.0, %v1693
      %1695 = vmatmul.bf16.gmra.mxu0 %v1672
      %v1696 = vpop.f32.mrf.mxu0
      %v1697 = vadd.f32 0.0, %v1696
      %v1698 = vpop.f32.mrf.mxu0
      %v1699 = vadd.f32 0.0, %v1698
      %1700 = vmatmul.bf16.gmra.mxu0 %v1675
      %v1701 = vpop.f32.mrf.mxu0
      %v1702 = vadd.f32 0.0, %v1701
      %v1703 = vpop.f32.mrf.mxu0
      %v1704 = vadd.f32 0.0, %v1703
      %1705 = vdwg.mxu0
      %v1706 = vadd.f32 %v1629, %v1687
      %v1707 = vadd.f32 %v1630, %v1689
      %v1708 = vadd.f32 %v1631, %v1692
      %v1709 = vadd.f32 %v1632, %v1694
      %v1710 = vadd.f32 %v1633, %v1697
      %v1711 = vadd.f32 %v1634, %v1699
      %v1712 = vadd.f32 %v1635, %v1702
      %v1713 = vadd.f32 %v1636, %v1704
      %v1714 = vld [vmem:[%s431 + $0x2] sm:$0xff]
      %v1715 = vld [vmem:[%s431 + $0x12] sm:$0xff]
      %v1716 = vld [vmem:[%s431 + $0x22] sm:$0xff]
      %v1717 = vld [vmem:[%s431 + $0x32] sm:$0xff]
      %v1718 = vld [vmem:[%s431 + $0x42] sm:$0xff]
      %v1719 = vld [vmem:[%s431 + $0x52] sm:$0xff]
      %v1720 = vld [vmem:[%s431 + $0x62] sm:$0xff]
      %v1721 = vld [vmem:[%s431 + $0x72] sm:$0xff]
      %v1722 = vpack.c.bf16 %v1715, %v1714
      %v1723 = vpack.c.bf16 %v1717, %v1716
      %v1724 = vpack.c.bf16 %v1719, %v1718
      %v1725 = vpack.c.bf16 %v1721, %v1720
      %v1726 = vld [vmem:[%s1018] sm:$0xf]
      %v1727 = vld [vmem:[%s1018 + $0x4] sm:$0xf]
      %v1728 = vld [vmem:[%s1018 + $0x8] sm:$0xf]
      %v1729 = vld [vmem:[%s1018 + $0xc] sm:$0xf]
      %v1734 = vunpack.c.l.b16 %v1726
      %v1735 = vunpack.c.l.b16 %v1727
      %v1736 = vunpack.c.l.b16 %v1728
      %v1737 = vunpack.c.l.b16 %v1729
      %v1738 = vpack.c.b16 %v1735, %v1734
      %v1739 = vpack.c.b16 %v1737, %v1736
      %v1743 = vsel %vm301, %v1722, 0
      %v1746 = vsel %vm301, %v1723, 0
      %v1749 = vsel %vm301, %v1724, 0
      %v1752 = vsel %vm301, %v1725, 0
      %1754 = vmatpush.bf16.msra.mxu0 0
      %1755 = vmatpush.bf16.msra.mxu0 0
      %1756 = vmatpush.bf16.msra.mxu0 0
      %1757 = vmatpush.bf16.msra.mxu0 0
      %1758 = vmatpush.bf16.msra.mxu0 0
      %1759 = vmatpush.bf16.msra.mxu0 0
      %1760 = vmatpush.bf16.msra.mxu0 %v1739
      %1761 = vmatpush.bf16.msra.mxu0 %v1738
      %1762 = vmatmul.bf16.gmra.mxu0 %v1743
      %v1763 = vpop.f32.mrf.mxu0
      %v1764 = vadd.f32 0.0, %v1763
      %v1765 = vpop.f32.mrf.mxu0
      %v1766 = vadd.f32 0.0, %v1765
      %1767 = vmatmul.bf16.gmra.mxu0 %v1746
      %v1768 = vpop.f32.mrf.mxu0
      %v1769 = vadd.f32 0.0, %v1768
      %v1770 = vpop.f32.mrf.mxu0
      %v1771 = vadd.f32 0.0, %v1770
      %1772 = vmatmul.bf16.gmra.mxu0 %v1749
      %v1773 = vpop.f32.mrf.mxu0
      %v1774 = vadd.f32 0.0, %v1773
      %v1775 = vpop.f32.mrf.mxu0
      %v1776 = vadd.f32 0.0, %v1775
      %1777 = vmatmul.bf16.gmra.mxu0 %v1752
      %v1778 = vpop.f32.mrf.mxu0
      %v1779 = vadd.f32 0.0, %v1778
      %v1780 = vpop.f32.mrf.mxu0
      %v1781 = vadd.f32 0.0, %v1780
      %1782 = vdwg.mxu0
      %v1783 = vadd.f32 %v1706, %v1764
      %v1784 = vadd.f32 %v1707, %v1766
      %v1785 = vadd.f32 %v1708, %v1769
      %v1786 = vadd.f32 %v1709, %v1771
      %v1787 = vadd.f32 %v1710, %v1774
      %v1788 = vadd.f32 %v1711, %v1776
      %v1789 = vadd.f32 %v1712, %v1779
      %v1790 = vadd.f32 %v1713, %v1781
      %v1791 = vld [vmem:[%s547 + $0x1] sm:$0xff]
      %v1792 = vld [vmem:[%s547 + $0x11] sm:$0xff]
      %v1793 = vld [vmem:[%s547 + $0x21] sm:$0xff]
      %v1794 = vld [vmem:[%s547 + $0x31] sm:$0xff]
      %v1795 = vld [vmem:[%s547 + $0x41] sm:$0xff]
      %v1796 = vld [vmem:[%s547 + $0x51] sm:$0xff]
      %v1797 = vld [vmem:[%s547 + $0x61] sm:$0xff]
      %v1798 = vld [vmem:[%s547 + $0x71] sm:$0xff]
      %v1799 = vpack.c.bf16 %v1792, %v1791
      %v1800 = vpack.c.bf16 %v1794, %v1793
      %v1801 = vpack.c.bf16 %v1796, %v1795
      %v1802 = vpack.c.bf16 %v1798, %v1797
      %v1803 = vld [vmem:[%s1096] sm:$0xf]
      %v1804 = vld [vmem:[%s1096 + $0x4] sm:$0xf]
      %v1805 = vld [vmem:[%s1096 + $0x8] sm:$0xf]
      %v1806 = vld [vmem:[%s1096 + $0xc] sm:$0xf]
      %v1811 = vunpack.c.l.b16 %v1803
      %v1812 = vunpack.c.l.b16 %v1804
      %v1813 = vunpack.c.l.b16 %v1805
      %v1814 = vunpack.c.l.b16 %v1806
      %v1815 = vpack.c.b16 %v1812, %v1811
      %v1816 = vpack.c.b16 %v1814, %v1813
      %v1820 = vsel %vm301, %v1799, 0
      %v1823 = vsel %vm301, %v1800, 0
      %v1826 = vsel %vm301, %v1801, 0
      %v1829 = vsel %vm301, %v1802, 0
      %1831 = vmatpush.bf16.msra.mxu0 0
      %1832 = vmatpush.bf16.msra.mxu0 0
      %1833 = vmatpush.bf16.msra.mxu0 0
      %1834 = vmatpush.bf16.msra.mxu0 0
      %1835 = vmatpush.bf16.msra.mxu0 0
      %1836 = vmatpush.bf16.msra.mxu0 0
      %1837 = vmatpush.bf16.msra.mxu0 %v1816
      %1838 = vmatpush.bf16.msra.mxu0 %v1815
      %1839 = vmatmul.bf16.gmra.mxu0 %v1820
      %v1840 = vpop.f32.mrf.mxu0
      %v1841 = vadd.f32 0.0, %v1840
      %v1842 = vpop.f32.mrf.mxu0
      %v1843 = vadd.f32 0.0, %v1842
      %1844 = vmatmul.bf16.gmra.mxu0 %v1823
      %v1845 = vpop.f32.mrf.mxu0
      %v1846 = vadd.f32 0.0, %v1845
      %v1847 = vpop.f32.mrf.mxu0
      %v1848 = vadd.f32 0.0, %v1847
      %1849 = vmatmul.bf16.gmra.mxu0 %v1826
      %v1850 = vpop.f32.mrf.mxu0
      %v1851 = vadd.f32 0.0, %v1850
      %v1852 = vpop.f32.mrf.mxu0
      %v1853 = vadd.f32 0.0, %v1852
      %1854 = vmatmul.bf16.gmra.mxu0 %v1829
      %v1855 = vpop.f32.mrf.mxu0
      %v1856 = vadd.f32 0.0, %v1855
      %v1857 = vpop.f32.mrf.mxu0
      %v1858 = vadd.f32 0.0, %v1857
      %1859 = vdwg.mxu0
      %v1860 = vadd.f32 %v1783, %v1841
      %v1861 = vadd.f32 %v1784, %v1843
      %v1862 = vadd.f32 %v1785, %v1846
      %v1863 = vadd.f32 %v1786, %v1848
      %v1864 = vadd.f32 %v1787, %v1851
      %v1865 = vadd.f32 %v1788, %v1853
      %v1866 = vadd.f32 %v1789, %v1856
      %v1867 = vadd.f32 %v1790, %v1858
      %v1868 = vld [vmem:[%s605 + $0x1] sm:$0xff]
      %v1869 = vld [vmem:[%s605 + $0x11] sm:$0xff]
      %v1870 = vld [vmem:[%s605 + $0x21] sm:$0xff]
      %v1871 = vld [vmem:[%s605 + $0x31] sm:$0xff]
      %v1872 = vld [vmem:[%s605 + $0x41] sm:$0xff]
      %v1873 = vld [vmem:[%s605 + $0x51] sm:$0xff]
      %v1874 = vld [vmem:[%s605 + $0x61] sm:$0xff]
      %v1875 = vld [vmem:[%s605 + $0x71] sm:$0xff]
      %v1876 = vpack.c.bf16 %v1869, %v1868
      %v1877 = vpack.c.bf16 %v1871, %v1870
      %v1878 = vpack.c.bf16 %v1873, %v1872
      %v1879 = vpack.c.bf16 %v1875, %v1874
      %v1880 = vld [vmem:[%s1174] sm:$0xf]
      %v1881 = vld [vmem:[%s1174 + $0x4] sm:$0xf]
      %v1882 = vld [vmem:[%s1174 + $0x8] sm:$0xf]
      %v1883 = vld [vmem:[%s1174 + $0xc] sm:$0xf]
      %v1888 = vunpack.c.l.b16 %v1880
      %v1889 = vunpack.c.l.b16 %v1881
      %v1890 = vunpack.c.l.b16 %v1882
      %v1891 = vunpack.c.l.b16 %v1883
      %v1892 = vpack.c.b16 %v1889, %v1888
      %v1893 = vpack.c.b16 %v1891, %v1890
      %v1897 = vsel %vm301, %v1876, 0
      %v1900 = vsel %vm301, %v1877, 0
      %v1903 = vsel %vm301, %v1878, 0
      %v1906 = vsel %vm301, %v1879, 0
      %1908 = vmatpush.bf16.msra.mxu0 0
      %1909 = vmatpush.bf16.msra.mxu0 0
      %1910 = vmatpush.bf16.msra.mxu0 0
      %1911 = vmatpush.bf16.msra.mxu0 0
      %1912 = vmatpush.bf16.msra.mxu0 0
      %1913 = vmatpush.bf16.msra.mxu0 0
      %1914 = vmatpush.bf16.msra.mxu0 %v1893
      %1915 = vmatpush.bf16.msra.mxu0 %v1892
      %1916 = vmatmul.bf16.gmra.mxu0 %v1897
      %v1917 = vpop.f32.mrf.mxu0
      %v1918 = vadd.f32 0.0, %v1917
      %v1919 = vpop.f32.mrf.mxu0
      %v1920 = vadd.f32 0.0, %v1919
      %1921 = vmatmul.bf16.gmra.mxu0 %v1900
      %v1922 = vpop.f32.mrf.mxu0
      %v1923 = vadd.f32 0.0, %v1922
      %v1924 = vpop.f32.mrf.mxu0
      %v1925 = vadd.f32 0.0, %v1924
      %1926 = vmatmul.bf16.gmra.mxu0 %v1903
      %v1927 = vpop.f32.mrf.mxu0
      %v1928 = vadd.f32 0.0, %v1927
      %v1929 = vpop.f32.mrf.mxu0
      %v1930 = vadd.f32 0.0, %v1929
      %1931 = vmatmul.bf16.gmra.mxu0 %v1906
      %v1932 = vpop.f32.mrf.mxu0
      %v1933 = vadd.f32 0.0, %v1932
      %v1934 = vpop.f32.mrf.mxu0
      %v1935 = vadd.f32 0.0, %v1934
      %1936 = vdwg.mxu0
      %v1937 = vadd.f32 %v1860, %v1918
      %v1938 = vadd.f32 %v1861, %v1920
      %v1939 = vadd.f32 %v1862, %v1923
      %v1940 = vadd.f32 %v1863, %v1925
      %v1941 = vadd.f32 %v1864, %v1928
      %v1942 = vadd.f32 %v1865, %v1930
      %v1943 = vadd.f32 %v1866, %v1933
      %v1944 = vadd.f32 %v1867, %v1935
      %v1945 = vld [vmem:[%s547 + $0x2] sm:$0xff]
      %v1946 = vld [vmem:[%s547 + $0x12] sm:$0xff]
      %v1947 = vld [vmem:[%s547 + $0x22] sm:$0xff]
      %v1948 = vld [vmem:[%s547 + $0x32] sm:$0xff]
      %v1949 = vld [vmem:[%s547 + $0x42] sm:$0xff]
      %v1950 = vld [vmem:[%s547 + $0x52] sm:$0xff]
      %v1951 = vld [vmem:[%s547 + $0x62] sm:$0xff]
      %v1952 = vld [vmem:[%s547 + $0x72] sm:$0xff]
      %v1953 = vpack.c.bf16 %v1946, %v1945
      %v1954 = vpack.c.bf16 %v1948, %v1947
      %v1955 = vpack.c.bf16 %v1950, %v1949
      %v1956 = vpack.c.bf16 %v1952, %v1951
      %v1957 = vld [vmem:[%s1252] sm:$0xf]
      %v1958 = vld [vmem:[%s1252 + $0x4] sm:$0xf]
      %v1959 = vld [vmem:[%s1252 + $0x8] sm:$0xf]
      %v1960 = vld [vmem:[%s1252 + $0xc] sm:$0xf]
      %v1965 = vunpack.c.l.b16 %v1957
      %v1966 = vunpack.c.l.b16 %v1958
      %v1967 = vunpack.c.l.b16 %v1959
      %v1968 = vunpack.c.l.b16 %v1960
      %v1969 = vpack.c.b16 %v1966, %v1965
      %v1970 = vpack.c.b16 %v1968, %v1967
      %v1974 = vsel %vm301, %v1953, 0
      %v1977 = vsel %vm301, %v1954, 0
      %v1980 = vsel %vm301, %v1955, 0
      %v1983 = vsel %vm301, %v1956, 0
      %1985 = vmatpush.bf16.msra.mxu0 0
      %1986 = vmatpush.bf16.msra.mxu0 0
      %1987 = vmatpush.bf16.msra.mxu0 0
      %1988 = vmatpush.bf16.msra.mxu0 0
      %1989 = vmatpush.bf16.msra.mxu0 0
      %1990 = vmatpush.bf16.msra.mxu0 0
      %1991 = vmatpush.bf16.msra.mxu0 %v1970
      %1992 = vmatpush.bf16.msra.mxu0 %v1969
      %1993 = vmatmul.bf16.gmra.mxu0 %v1974
      %v1994 = vpop.f32.mrf.mxu0
      %v1995 = vadd.f32 0.0, %v1994
      %v1996 = vpop.f32.mrf.mxu0
      %v1997 = vadd.f32 0.0, %v1996
      %1998 = vmatmul.bf16.gmra.mxu0 %v1977
      %v1999 = vpop.f32.mrf.mxu0
      %v2000 = vadd.f32 0.0, %v1999
      %v2001 = vpop.f32.mrf.mxu0
      %v2002 = vadd.f32 0.0, %v2001
      %2003 = vmatmul.bf16.gmra.mxu0 %v1980
      %v2004 = vpop.f32.mrf.mxu0
      %v2005 = vadd.f32 0.0, %v2004
      %v2006 = vpop.f32.mrf.mxu0
      %v2007 = vadd.f32 0.0, %v2006
      %2008 = vmatmul.bf16.gmra.mxu0 %v1983
      %v2009 = vpop.f32.mrf.mxu0
      %v2010 = vadd.f32 0.0, %v2009
      %v2011 = vpop.f32.mrf.mxu0
      %v2012 = vadd.f32 0.0, %v2011
      %2013 = vdwg.mxu0
      %v2014 = vadd.f32 %v1937, %v1995
      %v2015 = vadd.f32 %v1938, %v1997
      %v2016 = vadd.f32 %v1939, %v2000
      %v2017 = vadd.f32 %v1940, %v2002
      %v2018 = vadd.f32 %v1941, %v2005
      %v2019 = vadd.f32 %v1942, %v2007
      %v2020 = vadd.f32 %v1943, %v2010
      %v2021 = vadd.f32 %v1944, %v2012
      %v2022 = vadd.f32 %v2014, %v1319
      %v2023 = vadd.f32 %v2015, %v1319
      %v2024 = vadd.f32 %v2016, %v1319
      %v2025 = vadd.f32 %v2017, %v1319
      %v2026 = vadd.f32 %v2018, %v1319
      %v2027 = vadd.f32 %v2019, %v1319
      %v2028 = vadd.f32 %v2020, %v1319
      %v2029 = vadd.f32 %v2021, %v1319
      %v2030 = vadd.f32 %v2022, %v623
      %v2031 = vadd.f32 %v2023, %v624
      %v2032 = vadd.f32 %v2024, %v625
      %v2033 = vadd.f32 %v2025, %v626
      %v2034 = vadd.f32 %v2026, %v627
      %v2035 = vadd.f32 %v2027, %v628
      %v2036 = vadd.f32 %v2028, %v629
      %v2037 = vadd.f32 %v2029, %v630
      %s2038 = scalar_lea.vmem %s299, 64
      %2039 = vst.msk [vmem:[%s2038] sm:$0xff] %vm301, %v2030
      %2040 = vst.msk [vmem:[%s2038 + $0x8] sm:$0xff] %vm301, %v2031
      %2041 = vst.msk [vmem:[%s2038 + $0x10] sm:$0xff] %vm301, %v2032
      %2042 = vst.msk [vmem:[%s2038 + $0x18] sm:$0xff] %vm301, %v2033
      %2043 = vst.msk [vmem:[%s2038 + $0x20] sm:$0xff] %vm301, %v2034
      %2044 = vst.msk [vmem:[%s2038 + $0x28] sm:$0xff] %vm301, %v2035
      %2045 = vst.msk [vmem:[%s2038 + $0x30] sm:$0xff] %vm301, %v2036
      %2046 = vst.msk [vmem:[%s2038 + $0x38] sm:$0xff] %vm301, %v2037
      %v2047 = vld [vmem:[%s489] sm:$0xff]
      %v2048 = vld [vmem:[%s489 + $0x10] sm:$0xff]
      %v2049 = vld [vmem:[%s489 + $0x20] sm:$0xff]
      %v2050 = vld [vmem:[%s489 + $0x30] sm:$0xff]
      %v2051 = vld [vmem:[%s489 + $0x40] sm:$0xff]
      %v2052 = vld [vmem:[%s489 + $0x50] sm:$0xff]
      %v2053 = vld [vmem:[%s489 + $0x60] sm:$0xff]
      %v2054 = vld [vmem:[%s489 + $0x70] sm:$0xff]
      %v2055 = vpack.c.bf16 %v2048, %v2047
      %v2056 = vpack.c.bf16 %v2050, %v2049
      %v2057 = vpack.c.bf16 %v2052, %v2051
      %v2058 = vpack.c.bf16 %v2054, %v2053
      %v2059 = vld [vmem:[%s3] sm:$0xf]
      %v2060 = vld [vmem:[%s3 + $0x4] sm:$0xf]
      %v2061 = vld [vmem:[%s3 + $0x8] sm:$0xf]
      %v2062 = vld [vmem:[%s3 + $0xc] sm:$0xf]
      %v2063 = vld [vmem:[%s431 + $0x1] sm:$0xff]
      %v2064 = vld [vmem:[%s431 + $0x11] sm:$0xff]
      %v2065 = vld [vmem:[%s431 + $0x21] sm:$0xff]
      %v2066 = vld [vmem:[%s431 + $0x31] sm:$0xff]
      %v2067 = vld [vmem:[%s431 + $0x41] sm:$0xff]
      %v2068 = vld [vmem:[%s431 + $0x51] sm:$0xff]
      %v2069 = vld [vmem:[%s431 + $0x61] sm:$0xff]
      %v2070 = vld [vmem:[%s431 + $0x71] sm:$0xff]
      %v2071 = vpack.c.bf16 %v2064, %v2063
      %v2072 = vpack.c.bf16 %v2066, %v2065
      %v2073 = vpack.c.bf16 %v2068, %v2067
      %v2074 = vpack.c.bf16 %v2070, %v2069
      %v2075 = vld [vmem:[%s661] sm:$0xf]
      %v2076 = vld [vmem:[%s661 + $0x4] sm:$0xf]
      %v2077 = vld [vmem:[%s661 + $0x8] sm:$0xf]
      %v2078 = vld [vmem:[%s661 + $0xc] sm:$0xf]
      %v2083 = vunpack.c.l.b16 %v2075
      %v2084 = vunpack.c.l.b16 %v2076
      %v2085 = vunpack.c.l.b16 %v2077
      %v2086 = vunpack.c.l.b16 %v2078
      %v2087 = vpack.c.b16 %v2084, %v2083
      %v2088 = vpack.c.b16 %v2086, %v2085
      %v2092 = vsel %vm301, %v2071, 0
      %v2095 = vsel %vm301, %v2072, 0
      %v2098 = vsel %vm301, %v2073, 0
      %v2101 = vsel %vm301, %v2074, 0
      %2103 = vmatpush.bf16.msra.mxu0 0
      %2104 = vmatpush.bf16.msra.mxu0 0
      %2105 = vmatpush.bf16.msra.mxu0 0
      %2106 = vmatpush.bf16.msra.mxu0 0
      %2107 = vmatpush.bf16.msra.mxu0 0
      %2108 = vmatpush.bf16.msra.mxu0 0
      %2109 = vmatpush.bf16.msra.mxu0 %v2088
      %2110 = vmatpush.bf16.msra.mxu0 %v2087
      %2111 = vmatmul.bf16.gmra.mxu0 %v2092
      %v2112 = vpop.f32.mrf.mxu0
      %v2113 = vadd.f32 0.0, %v2112
      %v2114 = vpop.f32.mrf.mxu0
      %v2115 = vadd.f32 0.0, %v2114
      %2116 = vmatmul.bf16.gmra.mxu0 %v2095
      %v2117 = vpop.f32.mrf.mxu0
      %v2118 = vadd.f32 0.0, %v2117
      %v2119 = vpop.f32.mrf.mxu0
      %v2120 = vadd.f32 0.0, %v2119
      %2121 = vmatmul.bf16.gmra.mxu0 %v2098
      %v2122 = vpop.f32.mrf.mxu0
      %v2123 = vadd.f32 0.0, %v2122
      %v2124 = vpop.f32.mrf.mxu0
      %v2125 = vadd.f32 0.0, %v2124
      %2126 = vmatmul.bf16.gmra.mxu0 %v2101
      %v2127 = vpop.f32.mrf.mxu0
      %v2128 = vadd.f32 0.0, %v2127
      %v2129 = vpop.f32.mrf.mxu0
      %v2130 = vadd.f32 0.0, %v2129
      %2131 = vdwg.mxu0
      %v2136 = vunpack.c.l.b16 %v2059
      %v2137 = vunpack.c.l.b16 %v2060
      %v2138 = vunpack.c.l.b16 %v2061
      %v2139 = vunpack.c.l.b16 %v2062
      %v2140 = vpack.c.b16 %v2137, %v2136
      %v2141 = vpack.c.b16 %v2139, %v2138
      %v2145 = vsel %vm301, %v2055, 0
      %v2148 = vsel %vm301, %v2056, 0
      %v2151 = vsel %vm301, %v2057, 0
      %v2154 = vsel %vm301, %v2058, 0
      %2156 = vmatpush.bf16.msra.mxu0 0
      %2157 = vmatpush.bf16.msra.mxu0 0
      %2158 = vmatpush.bf16.msra.mxu0 0
      %2159 = vmatpush.bf16.msra.mxu0 0
      %2160 = vmatpush.bf16.msra.mxu0 0
      %2161 = vmatpush.bf16.msra.mxu0 0
      %2162 = vmatpush.bf16.msra.mxu0 %v2141
      %2163 = vmatpush.bf16.msra.mxu0 %v2140
      %2164 = vmatmul.bf16.gmra.mxu0 %v2145
      %v2165 = vpop.f32.mrf.mxu0
      %v2166 = vadd.f32 %v2113, %v2165
      %v2167 = vpop.f32.mrf.mxu0
      %v2168 = vadd.f32 %v2115, %v2167
      %2169 = vmatmul.bf16.gmra.mxu0 %v2148
      %v2170 = vpop.f32.mrf.mxu0
      %v2171 = vadd.f32 %v2118, %v2170
      %v2172 = vpop.f32.mrf.mxu0
      %v2173 = vadd.f32 %v2120, %v2172
      %2174 = vmatmul.bf16.gmra.mxu0 %v2151
      %v2175 = vpop.f32.mrf.mxu0
      %v2176 = vadd.f32 %v2123, %v2175
      %v2177 = vpop.f32.mrf.mxu0
      %v2178 = vadd.f32 %v2125, %v2177
      %2179 = vmatmul.bf16.gmra.mxu0 %v2154
      %v2180 = vpop.f32.mrf.mxu0
      %v2181 = vadd.f32 %v2128, %v2180
      %v2182 = vpop.f32.mrf.mxu0
      %v2183 = vadd.f32 %v2130, %v2182
      %2184 = vdwg.mxu0
      %v2185 = vld [vmem:[%s489 + $0x1] sm:$0xff]
      %v2186 = vld [vmem:[%s489 + $0x11] sm:$0xff]
      %v2187 = vld [vmem:[%s489 + $0x21] sm:$0xff]
      %v2188 = vld [vmem:[%s489 + $0x31] sm:$0xff]
      %v2189 = vld [vmem:[%s489 + $0x41] sm:$0xff]
      %v2190 = vld [vmem:[%s489 + $0x51] sm:$0xff]
      %v2191 = vld [vmem:[%s489 + $0x61] sm:$0xff]
      %v2192 = vld [vmem:[%s489 + $0x71] sm:$0xff]
      %v2193 = vpack.c.bf16 %v2186, %v2185
      %v2194 = vpack.c.bf16 %v2188, %v2187
      %v2195 = vpack.c.bf16 %v2190, %v2189
      %v2196 = vpack.c.bf16 %v2192, %v2191
      %v2197 = vld [vmem:[%s784] sm:$0xf]
      %v2198 = vld [vmem:[%s784 + $0x4] sm:$0xf]
      %v2199 = vld [vmem:[%s784 + $0x8] sm:$0xf]
      %v2200 = vld [vmem:[%s784 + $0xc] sm:$0xf]
      %v2205 = vunpack.c.l.b16 %v2197
      %v2206 = vunpack.c.l.b16 %v2198
      %v2207 = vunpack.c.l.b16 %v2199
      %v2208 = vunpack.c.l.b16 %v2200
      %v2209 = vpack.c.b16 %v2206, %v2205
      %v2210 = vpack.c.b16 %v2208, %v2207
      %v2214 = vsel %vm301, %v2193, 0
      %v2217 = vsel %vm301, %v2194, 0
      %v2220 = vsel %vm301, %v2195, 0
      %v2223 = vsel %vm301, %v2196, 0
      %2225 = vmatpush.bf16.msra.mxu0 0
      %2226 = vmatpush.bf16.msra.mxu0 0
      %2227 = vmatpush.bf16.msra.mxu0 0
      %2228 = vmatpush.bf16.msra.mxu0 0
      %2229 = vmatpush.bf16.msra.mxu0 0
      %2230 = vmatpush.bf16.msra.mxu0 0
      %2231 = vmatpush.bf16.msra.mxu0 %v2210
      %2232 = vmatpush.bf16.msra.mxu0 %v2209
      %2233 = vmatmul.bf16.gmra.mxu0 %v2214
      %v2234 = vpop.f32.mrf.mxu0
      %v2235 = vadd.f32 0.0, %v2234
      %v2236 = vpop.f32.mrf.mxu0
      %v2237 = vadd.f32 0.0, %v2236
      %2238 = vmatmul.bf16.gmra.mxu0 %v2217
      %v2239 = vpop.f32.mrf.mxu0
      %v2240 = vadd.f32 0.0, %v2239
      %v2241 = vpop.f32.mrf.mxu0
      %v2242 = vadd.f32 0.0, %v2241
      %2243 = vmatmul.bf16.gmra.mxu0 %v2220
      %v2244 = vpop.f32.mrf.mxu0
      %v2245 = vadd.f32 0.0, %v2244
      %v2246 = vpop.f32.mrf.mxu0
      %v2247 = vadd.f32 0.0, %v2246
      %2248 = vmatmul.bf16.gmra.mxu0 %v2223
      %v2249 = vpop.f32.mrf.mxu0
      %v2250 = vadd.f32 0.0, %v2249
      %v2251 = vpop.f32.mrf.mxu0
      %v2252 = vadd.f32 0.0, %v2251
      %2253 = vdwg.mxu0
      %v2254 = vadd.f32 %v2166, %v2235
      %v2255 = vadd.f32 %v2168, %v2237
      %v2256 = vadd.f32 %v2171, %v2240
      %v2257 = vadd.f32 %v2173, %v2242
      %v2258 = vadd.f32 %v2176, %v2245
      %v2259 = vadd.f32 %v2178, %v2247
      %v2260 = vadd.f32 %v2181, %v2250
      %v2261 = vadd.f32 %v2183, %v2252
      %v2262 = vld [vmem:[%s605] sm:$0xff]
      %v2263 = vld [vmem:[%s605 + $0x10] sm:$0xff]
      %v2264 = vld [vmem:[%s605 + $0x20] sm:$0xff]
      %v2265 = vld [vmem:[%s605 + $0x30] sm:$0xff]
      %v2266 = vld [vmem:[%s605 + $0x40] sm:$0xff]
      %v2267 = vld [vmem:[%s605 + $0x50] sm:$0xff]
      %v2268 = vld [vmem:[%s605 + $0x60] sm:$0xff]
      %v2269 = vld [vmem:[%s605 + $0x70] sm:$0xff]
      %v2270 = vpack.c.bf16 %v2263, %v2262
      %v2271 = vpack.c.bf16 %v2265, %v2264
      %v2272 = vpack.c.bf16 %v2267, %v2266
      %v2273 = vpack.c.bf16 %v2269, %v2268
      %v2274 = vld [vmem:[%s862] sm:$0xf]
      %v2275 = vld [vmem:[%s862 + $0x4] sm:$0xf]
      %v2276 = vld [vmem:[%s862 + $0x8] sm:$0xf]
      %v2277 = vld [vmem:[%s862 + $0xc] sm:$0xf]
      %v2282 = vunpack.c.l.b16 %v2274
      %v2283 = vunpack.c.l.b16 %v2275
      %v2284 = vunpack.c.l.b16 %v2276
      %v2285 = vunpack.c.l.b16 %v2277
      %v2286 = vpack.c.b16 %v2283, %v2282
      %v2287 = vpack.c.b16 %v2285, %v2284
      %v2291 = vsel %vm301, %v2270, 0
      %v2294 = vsel %vm301, %v2271, 0
      %v2297 = vsel %vm301, %v2272, 0
      %v2300 = vsel %vm301, %v2273, 0
      %2302 = vmatpush.bf16.msra.mxu0 0
      %2303 = vmatpush.bf16.msra.mxu0 0
      %2304 = vmatpush.bf16.msra.mxu0 0
      %2305 = vmatpush.bf16.msra.mxu0 0
      %2306 = vmatpush.bf16.msra.mxu0 0
      %2307 = vmatpush.bf16.msra.mxu0 0
      %2308 = vmatpush.bf16.msra.mxu0 %v2287
      %2309 = vmatpush.bf16.msra.mxu0 %v2286
      %2310 = vmatmul.bf16.gmra.mxu0 %v2291
      %v2311 = vpop.f32.mrf.mxu0
      %v2312 = vadd.f32 0.0, %v2311
      %v2313 = vpop.f32.mrf.mxu0
      %v2314 = vadd.f32 0.0, %v2313
      %2315 = vmatmul.bf16.gmra.mxu0 %v2294
      %v2316 = vpop.f32.mrf.mxu0
      %v2317 = vadd.f32 0.0, %v2316
      %v2318 = vpop.f32.mrf.mxu0
      %v2319 = vadd.f32 0.0, %v2318
      %2320 = vmatmul.bf16.gmra.mxu0 %v2297
      %v2321 = vpop.f32.mrf.mxu0
      %v2322 = vadd.f32 0.0, %v2321
      %v2323 = vpop.f32.mrf.mxu0
      %v2324 = vadd.f32 0.0, %v2323
      %2325 = vmatmul.bf16.gmra.mxu0 %v2300
      %v2326 = vpop.f32.mrf.mxu0
      %v2327 = vadd.f32 0.0, %v2326
      %v2328 = vpop.f32.mrf.mxu0
      %v2329 = vadd.f32 0.0, %v2328
      %2330 = vdwg.mxu0
      %v2331 = vadd.f32 %v2254, %v2312
      %v2332 = vadd.f32 %v2255, %v2314
      %v2333 = vadd.f32 %v2256, %v2317
      %v2334 = vadd.f32 %v2257, %v2319
      %v2335 = vadd.f32 %v2258, %v2322
      %v2336 = vadd.f32 %v2259, %v2324
      %v2337 = vadd.f32 %v2260, %v2327
      %v2338 = vadd.f32 %v2261, %v2329
      %v2339 = vld [vmem:[%s547 + $0x1] sm:$0xff]
      %v2340 = vld [vmem:[%s547 + $0x11] sm:$0xff]
      %v2341 = vld [vmem:[%s547 + $0x21] sm:$0xff]
      %v2342 = vld [vmem:[%s547 + $0x31] sm:$0xff]
      %v2343 = vld [vmem:[%s547 + $0x41] sm:$0xff]
      %v2344 = vld [vmem:[%s547 + $0x51] sm:$0xff]
      %v2345 = vld [vmem:[%s547 + $0x61] sm:$0xff]
      %v2346 = vld [vmem:[%s547 + $0x71] sm:$0xff]
      %v2347 = vpack.c.bf16 %v2340, %v2339
      %v2348 = vpack.c.bf16 %v2342, %v2341
      %v2349 = vpack.c.bf16 %v2344, %v2343
      %v2350 = vpack.c.bf16 %v2346, %v2345
      %v2351 = vld [vmem:[%s940] sm:$0xf]
      %v2352 = vld [vmem:[%s940 + $0x4] sm:$0xf]
      %v2353 = vld [vmem:[%s940 + $0x8] sm:$0xf]
      %v2354 = vld [vmem:[%s940 + $0xc] sm:$0xf]
      %v2359 = vunpack.c.l.b16 %v2351
      %v2360 = vunpack.c.l.b16 %v2352
      %v2361 = vunpack.c.l.b16 %v2353
      %v2362 = vunpack.c.l.b16 %v2354
      %v2363 = vpack.c.b16 %v2360, %v2359
      %v2364 = vpack.c.b16 %v2362, %v2361
      %v2368 = vsel %vm301, %v2347, 0
      %v2371 = vsel %vm301, %v2348, 0
      %v2374 = vsel %vm301, %v2349, 0
      %v2377 = vsel %vm301, %v2350, 0
      %2379 = vmatpush.bf16.msra.mxu0 0
      %2380 = vmatpush.bf16.msra.mxu0 0
      %2381 = vmatpush.bf16.msra.mxu0 0
      %2382 = vmatpush.bf16.msra.mxu0 0
      %2383 = vmatpush.bf16.msra.mxu0 0
      %2384 = vmatpush.bf16.msra.mxu0 0
      %2385 = vmatpush.bf16.msra.mxu0 %v2364
      %2386 = vmatpush.bf16.msra.mxu0 %v2363
      %2387 = vmatmul.bf16.gmra.mxu0 %v2368
      %v2388 = vpop.f32.mrf.mxu0
      %v2389 = vadd.f32 0.0, %v2388
      %v2390 = vpop.f32.mrf.mxu0
      %v2391 = vadd.f32 0.0, %v2390
      %2392 = vmatmul.bf16.gmra.mxu0 %v2371
      %v2393 = vpop.f32.mrf.mxu0
      %v2394 = vadd.f32 0.0, %v2393
      %v2395 = vpop.f32.mrf.mxu0
      %v2396 = vadd.f32 0.0, %v2395
      %2397 = vmatmul.bf16.gmra.mxu0 %v2374
      %v2398 = vpop.f32.mrf.mxu0
      %v2399 = vadd.f32 0.0, %v2398
      %v2400 = vpop.f32.mrf.mxu0
      %v2401 = vadd.f32 0.0, %v2400
      %2402 = vmatmul.bf16.gmra.mxu0 %v2377
      %v2403 = vpop.f32.mrf.mxu0
      %v2404 = vadd.f32 0.0, %v2403
      %v2405 = vpop.f32.mrf.mxu0
      %v2406 = vadd.f32 0.0, %v2405
      %2407 = vdwg.mxu0
      %v2408 = vadd.f32 %v2331, %v2389
      %v2409 = vadd.f32 %v2332, %v2391
      %v2410 = vadd.f32 %v2333, %v2394
      %v2411 = vadd.f32 %v2334, %v2396
      %v2412 = vadd.f32 %v2335, %v2399
      %v2413 = vadd.f32 %v2336, %v2401
      %v2414 = vadd.f32 %v2337, %v2404
      %v2415 = vadd.f32 %v2338, %v2406
      %v2416 = vld [vmem:[%s605 + $0x1] sm:$0xff]
      %v2417 = vld [vmem:[%s605 + $0x11] sm:$0xff]
      %v2418 = vld [vmem:[%s605 + $0x21] sm:$0xff]
      %v2419 = vld [vmem:[%s605 + $0x31] sm:$0xff]
      %v2420 = vld [vmem:[%s605 + $0x41] sm:$0xff]
      %v2421 = vld [vmem:[%s605 + $0x51] sm:$0xff]
      %v2422 = vld [vmem:[%s605 + $0x61] sm:$0xff]
      %v2423 = vld [vmem:[%s605 + $0x71] sm:$0xff]
      %v2424 = vpack.c.bf16 %v2417, %v2416
      %v2425 = vpack.c.bf16 %v2419, %v2418
      %v2426 = vpack.c.bf16 %v2421, %v2420
      %v2427 = vpack.c.bf16 %v2423, %v2422
      %v2428 = vld [vmem:[%s1018] sm:$0xf]
      %v2429 = vld [vmem:[%s1018 + $0x4] sm:$0xf]
      %v2430 = vld [vmem:[%s1018 + $0x8] sm:$0xf]
      %v2431 = vld [vmem:[%s1018 + $0xc] sm:$0xf]
      %v2436 = vunpack.c.l.b16 %v2428
      %v2437 = vunpack.c.l.b16 %v2429
      %v2438 = vunpack.c.l.b16 %v2430
      %v2439 = vunpack.c.l.b16 %v2431
      %v2440 = vpack.c.b16 %v2437, %v2436
      %v2441 = vpack.c.b16 %v2439, %v2438
      %v2445 = vsel %vm301, %v2424, 0
      %v2448 = vsel %vm301, %v2425, 0
      %v2451 = vsel %vm301, %v2426, 0
      %v2454 = vsel %vm301, %v2427, 0
      %2456 = vmatpush.bf16.msra.mxu0 0
      %2457 = vmatpush.bf16.msra.mxu0 0
      %2458 = vmatpush.bf16.msra.mxu0 0
      %2459 = vmatpush.bf16.msra.mxu0 0
      %2460 = vmatpush.bf16.msra.mxu0 0
      %2461 = vmatpush.bf16.msra.mxu0 0
      %2462 = vmatpush.bf16.msra.mxu0 %v2441
      %2463 = vmatpush.bf16.msra.mxu0 %v2440
      %2464 = vmatmul.bf16.gmra.mxu0 %v2445
      %v2465 = vpop.f32.mrf.mxu0
      %v2466 = vadd.f32 0.0, %v2465
      %v2467 = vpop.f32.mrf.mxu0
      %v2468 = vadd.f32 0.0, %v2467
      %2469 = vmatmul.bf16.gmra.mxu0 %v2448
      %v2470 = vpop.f32.mrf.mxu0
      %v2471 = vadd.f32 0.0, %v2470
      %v2472 = vpop.f32.mrf.mxu0
      %v2473 = vadd.f32 0.0, %v2472
      %2474 = vmatmul.bf16.gmra.mxu0 %v2451
      %v2475 = vpop.f32.mrf.mxu0
      %v2476 = vadd.f32 0.0, %v2475
      %v2477 = vpop.f32.mrf.mxu0
      %v2478 = vadd.f32 0.0, %v2477
      %2479 = vmatmul.bf16.gmra.mxu0 %v2454
      %v2480 = vpop.f32.mrf.mxu0
      %v2481 = vadd.f32 0.0, %v2480
      %v2482 = vpop.f32.mrf.mxu0
      %v2483 = vadd.f32 0.0, %v2482
      %2484 = vdwg.mxu0
      %v2485 = vadd.f32 %v2408, %v2466
      %v2486 = vadd.f32 %v2409, %v2468
      %v2487 = vadd.f32 %v2410, %v2471
      %v2488 = vadd.f32 %v2411, %v2473
      %v2489 = vadd.f32 %v2412, %v2476
      %v2490 = vadd.f32 %v2413, %v2478
      %v2491 = vadd.f32 %v2414, %v2481
      %v2492 = vadd.f32 %v2415, %v2483
      %s2493 = scalar_lea.vmem [#allocation2], 192
      %v2494 = vld [vmem:[%s2493] sm:$0xff]
      %v2495 = vld [vmem:[%s2493 + $0x10] sm:$0xff]
      %v2496 = vld [vmem:[%s2493 + $0x20] sm:$0xff]
      %v2497 = vld [vmem:[%s2493 + $0x30] sm:$0xff]
      %v2498 = vld [vmem:[%s2493 + $0x40] sm:$0xff]
      %v2499 = vld [vmem:[%s2493 + $0x50] sm:$0xff]
      %v2500 = vld [vmem:[%s2493 + $0x60] sm:$0xff]
      %v2501 = vld [vmem:[%s2493 + $0x70] sm:$0xff]
      %v2502 = vpack.c.bf16 %v2495, %v2494
      %v2503 = vpack.c.bf16 %v2497, %v2496
      %v2504 = vpack.c.bf16 %v2499, %v2498
      %v2505 = vpack.c.bf16 %v2501, %v2500
      %v2506 = vld [vmem:[%s1096] sm:$0xf]
      %v2507 = vld [vmem:[%s1096 + $0x4] sm:$0xf]
      %v2508 = vld [vmem:[%s1096 + $0x8] sm:$0xf]
      %v2509 = vld [vmem:[%s1096 + $0xc] sm:$0xf]
      %v2514 = vunpack.c.l.b16 %v2506
      %v2515 = vunpack.c.l.b16 %v2507
      %v2516 = vunpack.c.l.b16 %v2508
      %v2517 = vunpack.c.l.b16 %v2509
      %v2518 = vpack.c.b16 %v2515, %v2514
      %v2519 = vpack.c.b16 %v2517, %v2516
      %v2523 = vsel %vm301, %v2502, 0
      %v2526 = vsel %vm301, %v2503, 0
      %v2529 = vsel %vm301, %v2504, 0
      %v2532 = vsel %vm301, %v2505, 0
      %2534 = vmatpush.bf16.msra.mxu0 0
      %2535 = vmatpush.bf16.msra.mxu0 0
      %2536 = vmatpush.bf16.msra.mxu0 0
      %2537 = vmatpush.bf16.msra.mxu0 0
      %2538 = vmatpush.bf16.msra.mxu0 0
      %2539 = vmatpush.bf16.msra.mxu0 0
      %2540 = vmatpush.bf16.msra.mxu0 %v2519
      %2541 = vmatpush.bf16.msra.mxu0 %v2518
      %2542 = vmatmul.bf16.gmra.mxu0 %v2523
      %v2543 = vpop.f32.mrf.mxu0
      %v2544 = vadd.f32 0.0, %v2543
      %v2545 = vpop.f32.mrf.mxu0
      %v2546 = vadd.f32 0.0, %v2545
      %2547 = vmatmul.bf16.gmra.mxu0 %v2526
      %v2548 = vpop.f32.mrf.mxu0
      %v2549 = vadd.f32 0.0, %v2548
      %v2550 = vpop.f32.mrf.mxu0
      %v2551 = vadd.f32 0.0, %v2550
      %2552 = vmatmul.bf16.gmra.mxu0 %v2529
      %v2553 = vpop.f32.mrf.mxu0
      %v2554 = vadd.f32 0.0, %v2553
      %v2555 = vpop.f32.mrf.mxu0
      %v2556 = vadd.f32 0.0, %v2555
      %2557 = vmatmul.bf16.gmra.mxu0 %v2532
      %v2558 = vpop.f32.mrf.mxu0
      %v2559 = vadd.f32 0.0, %v2558
      %v2560 = vpop.f32.mrf.mxu0
      %v2561 = vadd.f32 0.0, %v2560
      %2562 = vdwg.mxu0
      %v2563 = vadd.f32 %v2485, %v2544
      %v2564 = vadd.f32 %v2486, %v2546
      %v2565 = vadd.f32 %v2487, %v2549
      %v2566 = vadd.f32 %v2488, %v2551
      %v2567 = vadd.f32 %v2489, %v2554
      %v2568 = vadd.f32 %v2490, %v2556
      %v2569 = vadd.f32 %v2491, %v2559
      %v2570 = vadd.f32 %v2492, %v2561
      %s2571 = scalar_lea.vmem [#allocation2], 32
      %v2572 = vld [vmem:[%s2571 + $0x1] sm:$0xff]
      %v2573 = vld [vmem:[%s2571 + $0x11] sm:$0xff]
      %v2574 = vld [vmem:[%s2571 + $0x21] sm:$0xff]
      %v2575 = vld [vmem:[%s2571 + $0x31] sm:$0xff]
      %v2576 = vld [vmem:[%s2571 + $0x41] sm:$0xff]
      %v2577 = vld [vmem:[%s2571 + $0x51] sm:$0xff]
      %v2578 = vld [vmem:[%s2571 + $0x61] sm:$0xff]
      %v2579 = vld [vmem:[%s2571 + $0x71] sm:$0xff]
      %v2580 = vpack.c.bf16 %v2573, %v2572
      %v2581 = vpack.c.bf16 %v2575, %v2574
      %v2582 = vpack.c.bf16 %v2577, %v2576
      %v2583 = vpack.c.bf16 %v2579, %v2578
      %v2584 = vld [vmem:[%s1174] sm:$0xf]
      %v2585 = vld [vmem:[%s1174 + $0x4] sm:$0xf]
      %v2586 = vld [vmem:[%s1174 + $0x8] sm:$0xf]
      %v2587 = vld [vmem:[%s1174 + $0xc] sm:$0xf]
      %v2592 = vunpack.c.l.b16 %v2584
      %v2593 = vunpack.c.l.b16 %v2585
      %v2594 = vunpack.c.l.b16 %v2586
      %v2595 = vunpack.c.l.b16 %v2587
      %v2596 = vpack.c.b16 %v2593, %v2592
      %v2597 = vpack.c.b16 %v2595, %v2594
      %v2601 = vsel %vm301, %v2580, 0
      %v2604 = vsel %vm301, %v2581, 0
      %v2607 = vsel %vm301, %v2582, 0
      %v2610 = vsel %vm301, %v2583, 0
      %2612 = vmatpush.bf16.msra.mxu0 0
      %2613 = vmatpush.bf16.msra.mxu0 0
      %2614 = vmatpush.bf16.msra.mxu0 0
      %2615 = vmatpush.bf16.msra.mxu0 0
      %2616 = vmatpush.bf16.msra.mxu0 0
      %2617 = vmatpush.bf16.msra.mxu0 0
      %2618 = vmatpush.bf16.msra.mxu0 %v2597
      %2619 = vmatpush.bf16.msra.mxu0 %v2596
      %2620 = vmatmul.bf16.gmra.mxu0 %v2601
      %v2621 = vpop.f32.mrf.mxu0
      %v2622 = vadd.f32 0.0, %v2621
      %v2623 = vpop.f32.mrf.mxu0
      %v2624 = vadd.f32 0.0, %v2623
      %2625 = vmatmul.bf16.gmra.mxu0 %v2604
      %v2626 = vpop.f32.mrf.mxu0
      %v2627 = vadd.f32 0.0, %v2626
      %v2628 = vpop.f32.mrf.mxu0
      %v2629 = vadd.f32 0.0, %v2628
      %2630 = vmatmul.bf16.gmra.mxu0 %v2607
      %v2631 = vpop.f32.mrf.mxu0
      %v2632 = vadd.f32 0.0, %v2631
      %v2633 = vpop.f32.mrf.mxu0
      %v2634 = vadd.f32 0.0, %v2633
      %2635 = vmatmul.bf16.gmra.mxu0 %v2610
      %v2636 = vpop.f32.mrf.mxu0
      %v2637 = vadd.f32 0.0, %v2636
      %v2638 = vpop.f32.mrf.mxu0
      %v2639 = vadd.f32 0.0, %v2638
      %2640 = vdwg.mxu0
      %v2641 = vadd.f32 %v2563, %v2622
      %v2642 = vadd.f32 %v2564, %v2624
      %v2643 = vadd.f32 %v2565, %v2627
      %v2644 = vadd.f32 %v2566, %v2629
      %v2645 = vadd.f32 %v2567, %v2632
      %v2646 = vadd.f32 %v2568, %v2634
      %v2647 = vadd.f32 %v2569, %v2637
      %v2648 = vadd.f32 %v2570, %v2639
      %v2649 = vld [vmem:[%s2493 + $0x1] sm:$0xff]
      %v2650 = vld [vmem:[%s2493 + $0x11] sm:$0xff]
      %v2651 = vld [vmem:[%s2493 + $0x21] sm:$0xff]
      %v2652 = vld [vmem:[%s2493 + $0x31] sm:$0xff]
      %v2653 = vld [vmem:[%s2493 + $0x41] sm:$0xff]
      %v2654 = vld [vmem:[%s2493 + $0x51] sm:$0xff]
      %v2655 = vld [vmem:[%s2493 + $0x61] sm:$0xff]
      %v2656 = vld [vmem:[%s2493 + $0x71] sm:$0xff]
      %v2657 = vpack.c.bf16 %v2650, %v2649
      %v2658 = vpack.c.bf16 %v2652, %v2651
      %v2659 = vpack.c.bf16 %v2654, %v2653
      %v2660 = vpack.c.bf16 %v2656, %v2655
      %v2661 = vld [vmem:[%s1252] sm:$0xf]
      %v2662 = vld [vmem:[%s1252 + $0x4] sm:$0xf]
      %v2663 = vld [vmem:[%s1252 + $0x8] sm:$0xf]
      %v2664 = vld [vmem:[%s1252 + $0xc] sm:$0xf]
      %v2669 = vunpack.c.l.b16 %v2661
      %v2670 = vunpack.c.l.b16 %v2662
      %v2671 = vunpack.c.l.b16 %v2663
      %v2672 = vunpack.c.l.b16 %v2664
      %v2673 = vpack.c.b16 %v2670, %v2669
      %v2674 = vpack.c.b16 %v2672, %v2671
      %v2678 = vsel %vm301, %v2657, 0
      %v2681 = vsel %vm301, %v2658, 0
      %v2684 = vsel %vm301, %v2659, 0
      %v2687 = vsel %vm301, %v2660, 0
      %2689 = vmatpush.bf16.msra.mxu0 0
      %2690 = vmatpush.bf16.msra.mxu0 0
      %2691 = vmatpush.bf16.msra.mxu0 0
      %2692 = vmatpush.bf16.msra.mxu0 0
      %2693 = vmatpush.bf16.msra.mxu0 0
      %2694 = vmatpush.bf16.msra.mxu0 0
      %2695 = vmatpush.bf16.msra.mxu0 %v2674
      %2696 = vmatpush.bf16.msra.mxu0 %v2673
      %2697 = vmatmul.bf16.gmra.mxu0 %v2678
      %v2698 = vpop.f32.mrf.mxu0
      %v2699 = vadd.f32 0.0, %v2698
      %v2700 = vpop.f32.mrf.mxu0
      %v2701 = vadd.f32 0.0, %v2700
      %2702 = vmatmul.bf16.gmra.mxu0 %v2681
      %v2703 = vpop.f32.mrf.mxu0
      %v2704 = vadd.f32 0.0, %v2703
      %v2705 = vpop.f32.mrf.mxu0
      %v2706 = vadd.f32 0.0, %v2705
      %2707 = vmatmul.bf16.gmra.mxu0 %v2684
      %v2708 = vpop.f32.mrf.mxu0
      %v2709 = vadd.f32 0.0, %v2708
      %v2710 = vpop.f32.mrf.mxu0
      %v2711 = vadd.f32 0.0, %v2710
      %2712 = vmatmul.bf16.gmra.mxu0 %v2687
      %v2713 = vpop.f32.mrf.mxu0
      %v2714 = vadd.f32 0.0, %v2713
      %v2715 = vpop.f32.mrf.mxu0
      %v2716 = vadd.f32 0.0, %v2715
      %2717 = vdwg.mxu0
      %v2718 = vadd.f32 %v2641, %v2699
      %v2719 = vadd.f32 %v2642, %v2701
      %v2720 = vadd.f32 %v2643, %v2704
      %v2721 = vadd.f32 %v2644, %v2706
      %v2722 = vadd.f32 %v2645, %v2709
      %v2723 = vadd.f32 %v2646, %v2711
      %v2724 = vadd.f32 %v2647, %v2714
      %v2725 = vadd.f32 %v2648, %v2716
      %v2726 = vadd.f32 %v2718, %v1319
      %v2727 = vadd.f32 %v2719, %v1319
      %v2728 = vadd.f32 %v2720, %v1319
      %v2729 = vadd.f32 %v2721, %v1319
      %v2730 = vadd.f32 %v2722, %v1319
      %v2731 = vadd.f32 %v2723, %v1319
      %v2732 = vadd.f32 %v2724, %v1319
      %v2733 = vadd.f32 %v2725, %v1319
      %v2734 = vadd.f32 %v2726, %v623
      %v2735 = vadd.f32 %v2727, %v624
      %v2736 = vadd.f32 %v2728, %v625
      %v2737 = vadd.f32 %v2729, %v626
      %v2738 = vadd.f32 %v2730, %v627
      %v2739 = vadd.f32 %v2731, %v628
      %v2740 = vadd.f32 %v2732, %v629
      %v2741 = vadd.f32 %v2733, %v630
      %s2742 = scalar_lea.vmem %s299, 128
      %2743 = vst.msk [vmem:[%s2742] sm:$0xff] %vm301, %v2734
      %2744 = vst.msk [vmem:[%s2742 + $0x8] sm:$0xff] %vm301, %v2735
      %2745 = vst.msk [vmem:[%s2742 + $0x10] sm:$0xff] %vm301, %v2736
      %2746 = vst.msk [vmem:[%s2742 + $0x18] sm:$0xff] %vm301, %v2737
      %2747 = vst.msk [vmem:[%s2742 + $0x20] sm:$0xff] %vm301, %v2738
      %2748 = vst.msk [vmem:[%s2742 + $0x28] sm:$0xff] %vm301, %v2739
      %2749 = vst.msk [vmem:[%s2742 + $0x30] sm:$0xff] %vm301, %v2740
      %2750 = vst.msk [vmem:[%s2742 + $0x38] sm:$0xff] %vm301, %v2741
      %v2751 = vld [vmem:[%s431 + $0x1] sm:$0xff]
      %v2752 = vld [vmem:[%s431 + $0x11] sm:$0xff]
      %v2753 = vld [vmem:[%s431 + $0x21] sm:$0xff]
      %v2754 = vld [vmem:[%s431 + $0x31] sm:$0xff]
      %v2755 = vld [vmem:[%s431 + $0x41] sm:$0xff]
      %v2756 = vld [vmem:[%s431 + $0x51] sm:$0xff]
      %v2757 = vld [vmem:[%s431 + $0x61] sm:$0xff]
      %v2758 = vld [vmem:[%s431 + $0x71] sm:$0xff]
      %v2759 = vpack.c.bf16 %v2752, %v2751
      %v2760 = vpack.c.bf16 %v2754, %v2753
      %v2761 = vpack.c.bf16 %v2756, %v2755
      %v2762 = vpack.c.bf16 %v2758, %v2757
      %v2763 = vld [vmem:[%s3] sm:$0xf]
      %v2764 = vld [vmem:[%s3 + $0x4] sm:$0xf]
      %v2765 = vld [vmem:[%s3 + $0x8] sm:$0xf]
      %v2766 = vld [vmem:[%s3 + $0xc] sm:$0xf]
      %v2767 = vld [vmem:[%s489 + $0x1] sm:$0xff]
      %v2768 = vld [vmem:[%s489 + $0x11] sm:$0xff]
      %v2769 = vld [vmem:[%s489 + $0x21] sm:$0xff]
      %v2770 = vld [vmem:[%s489 + $0x31] sm:$0xff]
      %v2771 = vld [vmem:[%s489 + $0x41] sm:$0xff]
      %v2772 = vld [vmem:[%s489 + $0x51] sm:$0xff]
      %v2773 = vld [vmem:[%s489 + $0x61] sm:$0xff]
      %v2774 = vld [vmem:[%s489 + $0x71] sm:$0xff]
      %v2775 = vpack.c.bf16 %v2768, %v2767
      %v2776 = vpack.c.bf16 %v2770, %v2769
      %v2777 = vpack.c.bf16 %v2772, %v2771
      %v2778 = vpack.c.bf16 %v2774, %v2773
      %v2779 = vld [vmem:[%s661] sm:$0xf]
      %v2780 = vld [vmem:[%s661 + $0x4] sm:$0xf]
      %v2781 = vld [vmem:[%s661 + $0x8] sm:$0xf]
      %v2782 = vld [vmem:[%s661 + $0xc] sm:$0xf]
      %v2787 = vunpack.c.l.b16 %v2779
      %v2788 = vunpack.c.l.b16 %v2780
      %v2789 = vunpack.c.l.b16 %v2781
      %v2790 = vunpack.c.l.b16 %v2782
      %v2791 = vpack.c.b16 %v2788, %v2787
      %v2792 = vpack.c.b16 %v2790, %v2789
      %v2796 = vsel %vm301, %v2775, 0
      %v2799 = vsel %vm301, %v2776, 0
      %v2802 = vsel %vm301, %v2777, 0
      %v2805 = vsel %vm301, %v2778, 0
      %2807 = vmatpush.bf16.msra.mxu0 0
      %2808 = vmatpush.bf16.msra.mxu0 0
      %2809 = vmatpush.bf16.msra.mxu0 0
      %2810 = vmatpush.bf16.msra.mxu0 0
      %2811 = vmatpush.bf16.msra.mxu0 0
      %2812 = vmatpush.bf16.msra.mxu0 0
      %2813 = vmatpush.bf16.msra.mxu0 %v2792
      %2814 = vmatpush.bf16.msra.mxu0 %v2791
      %2815 = vmatmul.bf16.gmra.mxu0 %v2796
      %v2816 = vpop.f32.mrf.mxu0
      %v2817 = vadd.f32 0.0, %v2816
      %v2818 = vpop.f32.mrf.mxu0
      %v2819 = vadd.f32 0.0, %v2818
      %2820 = vmatmul.bf16.gmra.mxu0 %v2799
      %v2821 = vpop.f32.mrf.mxu0
      %v2822 = vadd.f32 0.0, %v2821
      %v2823 = vpop.f32.mrf.mxu0
      %v2824 = vadd.f32 0.0, %v2823
      %2825 = vmatmul.bf16.gmra.mxu0 %v2802
      %v2826 = vpop.f32.mrf.mxu0
      %v2827 = vadd.f32 0.0, %v2826
      %v2828 = vpop.f32.mrf.mxu0
      %v2829 = vadd.f32 0.0, %v2828
      %2830 = vmatmul.bf16.gmra.mxu0 %v2805
      %v2831 = vpop.f32.mrf.mxu0
      %v2832 = vadd.f32 0.0, %v2831
      %v2833 = vpop.f32.mrf.mxu0
      %v2834 = vadd.f32 0.0, %v2833
      %2835 = vdwg.mxu0
      %v2840 = vunpack.c.l.b16 %v2763
      %v2841 = vunpack.c.l.b16 %v2764
      %v2842 = vunpack.c.l.b16 %v2765
      %v2843 = vunpack.c.l.b16 %v2766
      %v2844 = vpack.c.b16 %v2841, %v2840
      %v2845 = vpack.c.b16 %v2843, %v2842
      %v2849 = vsel %vm301, %v2759, 0
      %v2852 = vsel %vm301, %v2760, 0
      %v2855 = vsel %vm301, %v2761, 0
      %v2858 = vsel %vm301, %v2762, 0
      %2860 = vmatpush.bf16.msra.mxu0 0
      %2861 = vmatpush.bf16.msra.mxu0 0
      %2862 = vmatpush.bf16.msra.mxu0 0
      %2863 = vmatpush.bf16.msra.mxu0 0
      %2864 = vmatpush.bf16.msra.mxu0 0
      %2865 = vmatpush.bf16.msra.mxu0 0
      %2866 = vmatpush.bf16.msra.mxu0 %v2845
      %2867 = vmatpush.bf16.msra.mxu0 %v2844
      %2868 = vmatmul.bf16.gmra.mxu0 %v2849
      %v2869 = vpop.f32.mrf.mxu0
      %v2870 = vadd.f32 %v2817, %v2869
      %v2871 = vpop.f32.mrf.mxu0
      %v2872 = vadd.f32 %v2819, %v2871
      %2873 = vmatmul.bf16.gmra.mxu0 %v2852
      %v2874 = vpop.f32.mrf.mxu0
      %v2875 = vadd.f32 %v2822, %v2874
      %v2876 = vpop.f32.mrf.mxu0
      %v2877 = vadd.f32 %v2824, %v2876
      %2878 = vmatmul.bf16.gmra.mxu0 %v2855
      %v2879 = vpop.f32.mrf.mxu0
      %v2880 = vadd.f32 %v2827, %v2879
      %v2881 = vpop.f32.mrf.mxu0
      %v2882 = vadd.f32 %v2829, %v2881
      %2883 = vmatmul.bf16.gmra.mxu0 %v2858
      %v2884 = vpop.f32.mrf.mxu0
      %v2885 = vadd.f32 %v2832, %v2884
      %v2886 = vpop.f32.mrf.mxu0
      %v2887 = vadd.f32 %v2834, %v2886
      %2888 = vdwg.mxu0
      %v2889 = vld [vmem:[%s431 + $0x2] sm:$0xff]
      %v2890 = vld [vmem:[%s431 + $0x12] sm:$0xff]
      %v2891 = vld [vmem:[%s431 + $0x22] sm:$0xff]
      %v2892 = vld [vmem:[%s431 + $0x32] sm:$0xff]
      %v2893 = vld [vmem:[%s431 + $0x42] sm:$0xff]
      %v2894 = vld [vmem:[%s431 + $0x52] sm:$0xff]
      %v2895 = vld [vmem:[%s431 + $0x62] sm:$0xff]
      %v2896 = vld [vmem:[%s431 + $0x72] sm:$0xff]
      %v2897 = vpack.c.bf16 %v2890, %v2889
      %v2898 = vpack.c.bf16 %v2892, %v2891
      %v2899 = vpack.c.bf16 %v2894, %v2893
      %v2900 = vpack.c.bf16 %v2896, %v2895
      %v2901 = vld [vmem:[%s784] sm:$0xf]
      %v2902 = vld [vmem:[%s784 + $0x4] sm:$0xf]
      %v2903 = vld [vmem:[%s784 + $0x8] sm:$0xf]
      %v2904 = vld [vmem:[%s784 + $0xc] sm:$0xf]
      %v2909 = vunpack.c.l.b16 %v2901
      %v2910 = vunpack.c.l.b16 %v2902
      %v2911 = vunpack.c.l.b16 %v2903
      %v2912 = vunpack.c.l.b16 %v2904
      %v2913 = vpack.c.b16 %v2910, %v2909
      %v2914 = vpack.c.b16 %v2912, %v2911
      %v2918 = vsel %vm301, %v2897, 0
      %v2921 = vsel %vm301, %v2898, 0
      %v2924 = vsel %vm301, %v2899, 0
      %v2927 = vsel %vm301, %v2900, 0
      %2929 = vmatpush.bf16.msra.mxu0 0
      %2930 = vmatpush.bf16.msra.mxu0 0
      %2931 = vmatpush.bf16.msra.mxu0 0
      %2932 = vmatpush.bf16.msra.mxu0 0
      %2933 = vmatpush.bf16.msra.mxu0 0
      %2934 = vmatpush.bf16.msra.mxu0 0
      %2935 = vmatpush.bf16.msra.mxu0 %v2914
      %2936 = vmatpush.bf16.msra.mxu0 %v2913
      %2937 = vmatmul.bf16.gmra.mxu0 %v2918
      %v2938 = vpop.f32.mrf.mxu0
      %v2939 = vadd.f32 0.0, %v2938
      %v2940 = vpop.f32.mrf.mxu0
      %v2941 = vadd.f32 0.0, %v2940
      %2942 = vmatmul.bf16.gmra.mxu0 %v2921
      %v2943 = vpop.f32.mrf.mxu0
      %v2944 = vadd.f32 0.0, %v2943
      %v2945 = vpop.f32.mrf.mxu0
      %v2946 = vadd.f32 0.0, %v2945
      %2947 = vmatmul.bf16.gmra.mxu0 %v2924
      %v2948 = vpop.f32.mrf.mxu0
      %v2949 = vadd.f32 0.0, %v2948
      %v2950 = vpop.f32.mrf.mxu0
      %v2951 = vadd.f32 0.0, %v2950
      %2952 = vmatmul.bf16.gmra.mxu0 %v2927
      %v2953 = vpop.f32.mrf.mxu0
      %v2954 = vadd.f32 0.0, %v2953
      %v2955 = vpop.f32.mrf.mxu0
      %v2956 = vadd.f32 0.0, %v2955
      %2957 = vdwg.mxu0
      %v2958 = vadd.f32 %v2870, %v2939
      %v2959 = vadd.f32 %v2872, %v2941
      %v2960 = vadd.f32 %v2875, %v2944
      %v2961 = vadd.f32 %v2877, %v2946
      %v2962 = vadd.f32 %v2880, %v2949
      %v2963 = vadd.f32 %v2882, %v2951
      %v2964 = vadd.f32 %v2885, %v2954
      %v2965 = vadd.f32 %v2887, %v2956
      %v2966 = vld [vmem:[%s547 + $0x1] sm:$0xff]
      %v2967 = vld [vmem:[%s547 + $0x11] sm:$0xff]
      %v2968 = vld [vmem:[%s547 + $0x21] sm:$0xff]
      %v2969 = vld [vmem:[%s547 + $0x31] sm:$0xff]
      %v2970 = vld [vmem:[%s547 + $0x41] sm:$0xff]
      %v2971 = vld [vmem:[%s547 + $0x51] sm:$0xff]
      %v2972 = vld [vmem:[%s547 + $0x61] sm:$0xff]
      %v2973 = vld [vmem:[%s547 + $0x71] sm:$0xff]
      %v2974 = vpack.c.bf16 %v2967, %v2966
      %v2975 = vpack.c.bf16 %v2969, %v2968
      %v2976 = vpack.c.bf16 %v2971, %v2970
      %v2977 = vpack.c.bf16 %v2973, %v2972
      %v2978 = vld [vmem:[%s862] sm:$0xf]
      %v2979 = vld [vmem:[%s862 + $0x4] sm:$0xf]
      %v2980 = vld [vmem:[%s862 + $0x8] sm:$0xf]
      %v2981 = vld [vmem:[%s862 + $0xc] sm:$0xf]
      %v2986 = vunpack.c.l.b16 %v2978
      %v2987 = vunpack.c.l.b16 %v2979
      %v2988 = vunpack.c.l.b16 %v2980
      %v2989 = vunpack.c.l.b16 %v2981
      %v2990 = vpack.c.b16 %v2987, %v2986
      %v2991 = vpack.c.b16 %v2989, %v2988
      %v2995 = vsel %vm301, %v2974, 0
      %v2998 = vsel %vm301, %v2975, 0
      %v3001 = vsel %vm301, %v2976, 0
      %v3004 = vsel %vm301, %v2977, 0
      %3006 = vmatpush.bf16.msra.mxu0 0
      %3007 = vmatpush.bf16.msra.mxu0 0
      %3008 = vmatpush.bf16.msra.mxu0 0
      %3009 = vmatpush.bf16.msra.mxu0 0
      %3010 = vmatpush.bf16.msra.mxu0 0
      %3011 = vmatpush.bf16.msra.mxu0 0
      %3012 = vmatpush.bf16.msra.mxu0 %v2991
      %3013 = vmatpush.bf16.msra.mxu0 %v2990
      %3014 = vmatmul.bf16.gmra.mxu0 %v2995
      %v3015 = vpop.f32.mrf.mxu0
      %v3016 = vadd.f32 0.0, %v3015
      %v3017 = vpop.f32.mrf.mxu0
      %v3018 = vadd.f32 0.0, %v3017
      %3019 = vmatmul.bf16.gmra.mxu0 %v2998
      %v3020 = vpop.f32.mrf.mxu0
      %v3021 = vadd.f32 0.0, %v3020
      %v3022 = vpop.f32.mrf.mxu0
      %v3023 = vadd.f32 0.0, %v3022
      %3024 = vmatmul.bf16.gmra.mxu0 %v3001
      %v3025 = vpop.f32.mrf.mxu0
      %v3026 = vadd.f32 0.0, %v3025
      %v3027 = vpop.f32.mrf.mxu0
      %v3028 = vadd.f32 0.0, %v3027
      %3029 = vmatmul.bf16.gmra.mxu0 %v3004
      %v3030 = vpop.f32.mrf.mxu0
      %v3031 = vadd.f32 0.0, %v3030
      %v3032 = vpop.f32.mrf.mxu0
      %v3033 = vadd.f32 0.0, %v3032
      %3034 = vdwg.mxu0
      %v3035 = vadd.f32 %v2958, %v3016
      %v3036 = vadd.f32 %v2959, %v3018
      %v3037 = vadd.f32 %v2960, %v3021
      %v3038 = vadd.f32 %v2961, %v3023
      %v3039 = vadd.f32 %v2962, %v3026
      %v3040 = vadd.f32 %v2963, %v3028
      %v3041 = vadd.f32 %v2964, %v3031
      %v3042 = vadd.f32 %v2965, %v3033
      %v3043 = vld [vmem:[%s605 + $0x1] sm:$0xff]
      %v3044 = vld [vmem:[%s605 + $0x11] sm:$0xff]
      %v3045 = vld [vmem:[%s605 + $0x21] sm:$0xff]
      %v3046 = vld [vmem:[%s605 + $0x31] sm:$0xff]
      %v3047 = vld [vmem:[%s605 + $0x41] sm:$0xff]
      %v3048 = vld [vmem:[%s605 + $0x51] sm:$0xff]
      %v3049 = vld [vmem:[%s605 + $0x61] sm:$0xff]
      %v3050 = vld [vmem:[%s605 + $0x71] sm:$0xff]
      %v3051 = vpack.c.bf16 %v3044, %v3043
      %v3052 = vpack.c.bf16 %v3046, %v3045
      %v3053 = vpack.c.bf16 %v3048, %v3047
      %v3054 = vpack.c.bf16 %v3050, %v3049
      %v3055 = vld [vmem:[%s940] sm:$0xf]
      %v3056 = vld [vmem:[%s940 + $0x4] sm:$0xf]
      %v3057 = vld [vmem:[%s940 + $0x8] sm:$0xf]
      %v3058 = vld [vmem:[%s940 + $0xc] sm:$0xf]
      %v3063 = vunpack.c.l.b16 %v3055
      %v3064 = vunpack.c.l.b16 %v3056
      %v3065 = vunpack.c.l.b16 %v3057
      %v3066 = vunpack.c.l.b16 %v3058
      %v3067 = vpack.c.b16 %v3064, %v3063
      %v3068 = vpack.c.b16 %v3066, %v3065
      %v3072 = vsel %vm301, %v3051, 0
      %v3075 = vsel %vm301, %v3052, 0
      %v3078 = vsel %vm301, %v3053, 0
      %v3081 = vsel %vm301, %v3054, 0
      %3083 = vmatpush.bf16.msra.mxu0 0
      %3084 = vmatpush.bf16.msra.mxu0 0
      %3085 = vmatpush.bf16.msra.mxu0 0
      %3086 = vmatpush.bf16.msra.mxu0 0
      %3087 = vmatpush.bf16.msra.mxu0 0
      %3088 = vmatpush.bf16.msra.mxu0 0
      %3089 = vmatpush.bf16.msra.mxu0 %v3068
      %3090 = vmatpush.bf16.msra.mxu0 %v3067
      %3091 = vmatmul.bf16.gmra.mxu0 %v3072
      %v3092 = vpop.f32.mrf.mxu0
      %v3093 = vadd.f32 0.0, %v3092
      %v3094 = vpop.f32.mrf.mxu0
      %v3095 = vadd.f32 0.0, %v3094
      %3096 = vmatmul.bf16.gmra.mxu0 %v3075
      %v3097 = vpop.f32.mrf.mxu0
      %v3098 = vadd.f32 0.0, %v3097
      %v3099 = vpop.f32.mrf.mxu0
      %v3100 = vadd.f32 0.0, %v3099
      %3101 = vmatmul.bf16.gmra.mxu0 %v3078
      %v3102 = vpop.f32.mrf.mxu0
      %v3103 = vadd.f32 0.0, %v3102
      %v3104 = vpop.f32.mrf.mxu0
      %v3105 = vadd.f32 0.0, %v3104
      %3106 = vmatmul.bf16.gmra.mxu0 %v3081
      %v3107 = vpop.f32.mrf.mxu0
      %v3108 = vadd.f32 0.0, %v3107
      %v3109 = vpop.f32.mrf.mxu0
      %v3110 = vadd.f32 0.0, %v3109
      %3111 = vdwg.mxu0
      %v3112 = vadd.f32 %v3035, %v3093
      %v3113 = vadd.f32 %v3036, %v3095
      %v3114 = vadd.f32 %v3037, %v3098
      %v3115 = vadd.f32 %v3038, %v3100
      %v3116 = vadd.f32 %v3039, %v3103
      %v3117 = vadd.f32 %v3040, %v3105
      %v3118 = vadd.f32 %v3041, %v3108
      %v3119 = vadd.f32 %v3042, %v3110
      %v3120 = vld [vmem:[%s547 + $0x2] sm:$0xff]
      %v3121 = vld [vmem:[%s547 + $0x12] sm:$0xff]
      %v3122 = vld [vmem:[%s547 + $0x22] sm:$0xff]
      %v3123 = vld [vmem:[%s547 + $0x32] sm:$0xff]
      %v3124 = vld [vmem:[%s547 + $0x42] sm:$0xff]
      %v3125 = vld [vmem:[%s547 + $0x52] sm:$0xff]
      %v3126 = vld [vmem:[%s547 + $0x62] sm:$0xff]
      %v3127 = vld [vmem:[%s547 + $0x72] sm:$0xff]
      %v3128 = vpack.c.bf16 %v3121, %v3120
      %v3129 = vpack.c.bf16 %v3123, %v3122
      %v3130 = vpack.c.bf16 %v3125, %v3124
      %v3131 = vpack.c.bf16 %v3127, %v3126
      %v3132 = vld [vmem:[%s1018] sm:$0xf]
      %v3133 = vld [vmem:[%s1018 + $0x4] sm:$0xf]
      %v3134 = vld [vmem:[%s1018 + $0x8] sm:$0xf]
      %v3135 = vld [vmem:[%s1018 + $0xc] sm:$0xf]
      %v3140 = vunpack.c.l.b16 %v3132
      %v3141 = vunpack.c.l.b16 %v3133
      %v3142 = vunpack.c.l.b16 %v3134
      %v3143 = vunpack.c.l.b16 %v3135
      %v3144 = vpack.c.b16 %v3141, %v3140
      %v3145 = vpack.c.b16 %v3143, %v3142
      %v3149 = vsel %vm301, %v3128, 0
      %v3152 = vsel %vm301, %v3129, 0
      %v3155 = vsel %vm301, %v3130, 0
      %v3158 = vsel %vm301, %v3131, 0
      %3160 = vmatpush.bf16.msra.mxu0 0
      %3161 = vmatpush.bf16.msra.mxu0 0
      %3162 = vmatpush.bf16.msra.mxu0 0
      %3163 = vmatpush.bf16.msra.mxu0 0
      %3164 = vmatpush.bf16.msra.mxu0 0
      %3165 = vmatpush.bf16.msra.mxu0 0
      %3166 = vmatpush.bf16.msra.mxu0 %v3145
      %3167 = vmatpush.bf16.msra.mxu0 %v3144
      %3168 = vmatmul.bf16.gmra.mxu0 %v3149
      %v3169 = vpop.f32.mrf.mxu0
      %v3170 = vadd.f32 0.0, %v3169
      %v3171 = vpop.f32.mrf.mxu0
      %v3172 = vadd.f32 0.0, %v3171
      %3173 = vmatmul.bf16.gmra.mxu0 %v3152
      %v3174 = vpop.f32.mrf.mxu0
      %v3175 = vadd.f32 0.0, %v3174
      %v3176 = vpop.f32.mrf.mxu0
      %v3177 = vadd.f32 0.0, %v3176
      %3178 = vmatmul.bf16.gmra.mxu0 %v3155
      %v3179 = vpop.f32.mrf.mxu0
      %v3180 = vadd.f32 0.0, %v3179
      %v3181 = vpop.f32.mrf.mxu0
      %v3182 = vadd.f32 0.0, %v3181
      %3183 = vmatmul.bf16.gmra.mxu0 %v3158
      %v3184 = vpop.f32.mrf.mxu0
      %v3185 = vadd.f32 0.0, %v3184
      %v3186 = vpop.f32.mrf.mxu0
      %v3187 = vadd.f32 0.0, %v3186
      %3188 = vdwg.mxu0
      %v3189 = vadd.f32 %v3112, %v3170
      %v3190 = vadd.f32 %v3113, %v3172
      %v3191 = vadd.f32 %v3114, %v3175
      %v3192 = vadd.f32 %v3115, %v3177
      %v3193 = vadd.f32 %v3116, %v3180
      %v3194 = vadd.f32 %v3117, %v3182
      %v3195 = vadd.f32 %v3118, %v3185
      %v3196 = vadd.f32 %v3119, %v3187
      %v3197 = vld [vmem:[%s2571 + $0x1] sm:$0xff]
      %v3198 = vld [vmem:[%s2571 + $0x11] sm:$0xff]
      %v3199 = vld [vmem:[%s2571 + $0x21] sm:$0xff]
      %v3200 = vld [vmem:[%s2571 + $0x31] sm:$0xff]
      %v3201 = vld [vmem:[%s2571 + $0x41] sm:$0xff]
      %v3202 = vld [vmem:[%s2571 + $0x51] sm:$0xff]
      %v3203 = vld [vmem:[%s2571 + $0x61] sm:$0xff]
      %v3204 = vld [vmem:[%s2571 + $0x71] sm:$0xff]
      %v3205 = vpack.c.bf16 %v3198, %v3197
      %v3206 = vpack.c.bf16 %v3200, %v3199
      %v3207 = vpack.c.bf16 %v3202, %v3201
      %v3208 = vpack.c.bf16 %v3204, %v3203
      %v3209 = vld [vmem:[%s1096] sm:$0xf]
      %v3210 = vld [vmem:[%s1096 + $0x4] sm:$0xf]
      %v3211 = vld [vmem:[%s1096 + $0x8] sm:$0xf]
      %v3212 = vld [vmem:[%s1096 + $0xc] sm:$0xf]
      %v3217 = vunpack.c.l.b16 %v3209
      %v3218 = vunpack.c.l.b16 %v3210
      %v3219 = vunpack.c.l.b16 %v3211
      %v3220 = vunpack.c.l.b16 %v3212
      %v3221 = vpack.c.b16 %v3218, %v3217
      %v3222 = vpack.c.b16 %v3220, %v3219
      %v3226 = vsel %vm301, %v3205, 0
      %v3229 = vsel %vm301, %v3206, 0
      %v3232 = vsel %vm301, %v3207, 0
      %v3235 = vsel %vm301, %v3208, 0
      %3237 = vmatpush.bf16.msra.mxu0 0
      %3238 = vmatpush.bf16.msra.mxu0 0
      %3239 = vmatpush.bf16.msra.mxu0 0
      %3240 = vmatpush.bf16.msra.mxu0 0
      %3241 = vmatpush.bf16.msra.mxu0 0
      %3242 = vmatpush.bf16.msra.mxu0 0
      %3243 = vmatpush.bf16.msra.mxu0 %v3222
      %3244 = vmatpush.bf16.msra.mxu0 %v3221
      %3245 = vmatmul.bf16.gmra.mxu0 %v3226
      %v3246 = vpop.f32.mrf.mxu0
      %v3247 = vadd.f32 0.0, %v3246
      %v3248 = vpop.f32.mrf.mxu0
      %v3249 = vadd.f32 0.0, %v3248
      %3250 = vmatmul.bf16.gmra.mxu0 %v3229
      %v3251 = vpop.f32.mrf.mxu0
      %v3252 = vadd.f32 0.0, %v3251
      %v3253 = vpop.f32.mrf.mxu0
      %v3254 = vadd.f32 0.0, %v3253
      %3255 = vmatmul.bf16.gmra.mxu0 %v3232
      %v3256 = vpop.f32.mrf.mxu0
      %v3257 = vadd.f32 0.0, %v3256
      %v3258 = vpop.f32.mrf.mxu0
      %v3259 = vadd.f32 0.0, %v3258
      %3260 = vmatmul.bf16.gmra.mxu0 %v3235
      %v3261 = vpop.f32.mrf.mxu0
      %v3262 = vadd.f32 0.0, %v3261
      %v3263 = vpop.f32.mrf.mxu0
      %v3264 = vadd.f32 0.0, %v3263
      %3265 = vdwg.mxu0
      %v3266 = vadd.f32 %v3189, %v3247
      %v3267 = vadd.f32 %v3190, %v3249
      %v3268 = vadd.f32 %v3191, %v3252
      %v3269 = vadd.f32 %v3192, %v3254
      %v3270 = vadd.f32 %v3193, %v3257
      %v3271 = vadd.f32 %v3194, %v3259
      %v3272 = vadd.f32 %v3195, %v3262
      %v3273 = vadd.f32 %v3196, %v3264
      %v3274 = vld [vmem:[%s2493 + $0x1] sm:$0xff]
      %v3275 = vld [vmem:[%s2493 + $0x11] sm:$0xff]
      %v3276 = vld [vmem:[%s2493 + $0x21] sm:$0xff]
      %v3277 = vld [vmem:[%s2493 + $0x31] sm:$0xff]
      %v3278 = vld [vmem:[%s2493 + $0x41] sm:$0xff]
      %v3279 = vld [vmem:[%s2493 + $0x51] sm:$0xff]
      %v3280 = vld [vmem:[%s2493 + $0x61] sm:$0xff]
      %v3281 = vld [vmem:[%s2493 + $0x71] sm:$0xff]
      %v3282 = vpack.c.bf16 %v3275, %v3274
      %v3283 = vpack.c.bf16 %v3277, %v3276
      %v3284 = vpack.c.bf16 %v3279, %v3278
      %v3285 = vpack.c.bf16 %v3281, %v3280
      %v3286 = vld [vmem:[%s1174] sm:$0xf]
      %v3287 = vld [vmem:[%s1174 + $0x4] sm:$0xf]
      %v3288 = vld [vmem:[%s1174 + $0x8] sm:$0xf]
      %v3289 = vld [vmem:[%s1174 + $0xc] sm:$0xf]
      %v3294 = vunpack.c.l.b16 %v3286
      %v3295 = vunpack.c.l.b16 %v3287
      %v3296 = vunpack.c.l.b16 %v3288
      %v3297 = vunpack.c.l.b16 %v3289
      %v3298 = vpack.c.b16 %v3295, %v3294
      %v3299 = vpack.c.b16 %v3297, %v3296
      %v3303 = vsel %vm301, %v3282, 0
      %v3306 = vsel %vm301, %v3283, 0
      %v3309 = vsel %vm301, %v3284, 0
      %v3312 = vsel %vm301, %v3285, 0
      %3314 = vmatpush.bf16.msra.mxu0 0
      %3315 = vmatpush.bf16.msra.mxu0 0
      %3316 = vmatpush.bf16.msra.mxu0 0
      %3317 = vmatpush.bf16.msra.mxu0 0
      %3318 = vmatpush.bf16.msra.mxu0 0
      %3319 = vmatpush.bf16.msra.mxu0 0
      %3320 = vmatpush.bf16.msra.mxu0 %v3299
      %3321 = vmatpush.bf16.msra.mxu0 %v3298
      %3322 = vmatmul.bf16.gmra.mxu0 %v3303
      %v3323 = vpop.f32.mrf.mxu0
      %v3324 = vadd.f32 0.0, %v3323
      %v3325 = vpop.f32.mrf.mxu0
      %v3326 = vadd.f32 0.0, %v3325
      %3327 = vmatmul.bf16.gmra.mxu0 %v3306
      %v3328 = vpop.f32.mrf.mxu0
      %v3329 = vadd.f32 0.0, %v3328
      %v3330 = vpop.f32.mrf.mxu0
      %v3331 = vadd.f32 0.0, %v3330
      %3332 = vmatmul.bf16.gmra.mxu0 %v3309
      %v3333 = vpop.f32.mrf.mxu0
      %v3334 = vadd.f32 0.0, %v3333
      %v3335 = vpop.f32.mrf.mxu0
      %v3336 = vadd.f32 0.0, %v3335
      %3337 = vmatmul.bf16.gmra.mxu0 %v3312
      %v3338 = vpop.f32.mrf.mxu0
      %v3339 = vadd.f32 0.0, %v3338
      %v3340 = vpop.f32.mrf.mxu0
      %v3341 = vadd.f32 0.0, %v3340
      %3342 = vdwg.mxu0
      %v3343 = vadd.f32 %v3266, %v3324
      %v3344 = vadd.f32 %v3267, %v3326
      %v3345 = vadd.f32 %v3268, %v3329
      %v3346 = vadd.f32 %v3269, %v3331
      %v3347 = vadd.f32 %v3270, %v3334
      %v3348 = vadd.f32 %v3271, %v3336
      %v3349 = vadd.f32 %v3272, %v3339
      %v3350 = vadd.f32 %v3273, %v3341
      %v3351 = vld [vmem:[%s2571 + $0x2] sm:$0xff]
      %v3352 = vld [vmem:[%s2571 + $0x12] sm:$0xff]
      %v3353 = vld [vmem:[%s2571 + $0x22] sm:$0xff]
      %v3354 = vld [vmem:[%s2571 + $0x32] sm:$0xff]
      %v3355 = vld [vmem:[%s2571 + $0x42] sm:$0xff]
      %v3356 = vld [vmem:[%s2571 + $0x52] sm:$0xff]
      %v3357 = vld [vmem:[%s2571 + $0x62] sm:$0xff]
      %v3358 = vld [vmem:[%s2571 + $0x72] sm:$0xff]
      %v3359 = vpack.c.bf16 %v3352, %v3351
      %v3360 = vpack.c.bf16 %v3354, %v3353
      %v3361 = vpack.c.bf16 %v3356, %v3355
      %v3362 = vpack.c.bf16 %v3358, %v3357
      %v3363 = vld [vmem:[%s1252] sm:$0xf]
      %v3364 = vld [vmem:[%s1252 + $0x4] sm:$0xf]
      %v3365 = vld [vmem:[%s1252 + $0x8] sm:$0xf]
      %v3366 = vld [vmem:[%s1252 + $0xc] sm:$0xf]
      %v3371 = vunpack.c.l.b16 %v3363
      %v3372 = vunpack.c.l.b16 %v3364
      %v3373 = vunpack.c.l.b16 %v3365
      %v3374 = vunpack.c.l.b16 %v3366
      %v3375 = vpack.c.b16 %v3372, %v3371
      %v3376 = vpack.c.b16 %v3374, %v3373
      %v3380 = vsel %vm301, %v3359, 0
      %v3383 = vsel %vm301, %v3360, 0
      %v3386 = vsel %vm301, %v3361, 0
      %v3389 = vsel %vm301, %v3362, 0
      %3391 = vmatpush.bf16.msra.mxu0 0
      %3392 = vmatpush.bf16.msra.mxu0 0
      %3393 = vmatpush.bf16.msra.mxu0 0
      %3394 = vmatpush.bf16.msra.mxu0 0
      %3395 = vmatpush.bf16.msra.mxu0 0
      %3396 = vmatpush.bf16.msra.mxu0 0
      %3397 = vmatpush.bf16.msra.mxu0 %v3376
      %3398 = vmatpush.bf16.msra.mxu0 %v3375
      %3399 = vmatmul.bf16.gmra.mxu0 %v3380
      %v3400 = vpop.f32.mrf.mxu0
      %v3401 = vadd.f32 0.0, %v3400
      %v3402 = vpop.f32.mrf.mxu0
      %v3403 = vadd.f32 0.0, %v3402
      %3404 = vmatmul.bf16.gmra.mxu0 %v3383
      %v3405 = vpop.f32.mrf.mxu0
      %v3406 = vadd.f32 0.0, %v3405
      %v3407 = vpop.f32.mrf.mxu0
      %v3408 = vadd.f32 0.0, %v3407
      %3409 = vmatmul.bf16.gmra.mxu0 %v3386
      %v3410 = vpop.f32.mrf.mxu0
      %v3411 = vadd.f32 0.0, %v3410
      %v3412 = vpop.f32.mrf.mxu0
      %v3413 = vadd.f32 0.0, %v3412
      %3414 = vmatmul.bf16.gmra.mxu0 %v3389
      %v3415 = vpop.f32.mrf.mxu0
      %v3416 = vadd.f32 0.0, %v3415
      %v3417 = vpop.f32.mrf.mxu0
      %v3418 = vadd.f32 0.0, %v3417
      %3419 = vdwg.mxu0
      %v3420 = vadd.f32 %v3343, %v3401
      %v3421 = vadd.f32 %v3344, %v3403
      %v3422 = vadd.f32 %v3345, %v3406
      %v3423 = vadd.f32 %v3346, %v3408
      %v3424 = vadd.f32 %v3347, %v3411
      %v3425 = vadd.f32 %v3348, %v3413
      %v3426 = vadd.f32 %v3349, %v3416
      %v3427 = vadd.f32 %v3350, %v3418
      %v3428 = vadd.f32 %v3420, %v1319
      %v3429 = vadd.f32 %v3421, %v1319
      %v3430 = vadd.f32 %v3422, %v1319
      %v3431 = vadd.f32 %v3423, %v1319
      %v3432 = vadd.f32 %v3424, %v1319
      %v3433 = vadd.f32 %v3425, %v1319
      %v3434 = vadd.f32 %v3426, %v1319
      %v3435 = vadd.f32 %v3427, %v1319
      %v3436 = vadd.f32 %v3428, %v623
      %v3437 = vadd.f32 %v3429, %v624
      %v3438 = vadd.f32 %v3430, %v625
      %v3439 = vadd.f32 %v3431, %v626
      %v3440 = vadd.f32 %v3432, %v627
      %v3441 = vadd.f32 %v3433, %v628
      %v3442 = vadd.f32 %v3434, %v629
      %v3443 = vadd.f32 %v3435, %v630
      %s3444 = scalar_lea.vmem %s299, 192
      %3445 = vst.msk [vmem:[%s3444] sm:$0xff] %vm301, %v3436
      %3446 = vst.msk [vmem:[%s3444 + $0x8] sm:$0xff] %vm301, %v3437
      %3447 = vst.msk [vmem:[%s3444 + $0x10] sm:$0xff] %vm301, %v3438
      %3448 = vst.msk [vmem:[%s3444 + $0x18] sm:$0xff] %vm301, %v3439
      %3449 = vst.msk [vmem:[%s3444 + $0x20] sm:$0xff] %vm301, %v3440
      %3450 = vst.msk [vmem:[%s3444 + $0x28] sm:$0xff] %vm301, %v3441
      %3451 = vst.msk [vmem:[%s3444 + $0x30] sm:$0xff] %vm301, %v3442
      %3452 = vst.msk [vmem:[%s3444 + $0x38] sm:$0xff] %vm301, %v3443
      %p3453 = scmp.lt.s32.totalorder %s17, 1
      %s3454 = scalar_select %p3453, %s17, 1
      %s3455 = smul.addr %s3454, 32
      %s3456 = smul.addr %s3455, 8
      %s3457 = scalar_lea.vmem %s6, %s3456
      // Predicated region
      $region45: #{biggan_generator_block.5} parent=43 // pred_check
        %p3458 = pneg %p181
      $region46: #{biggan_generator_block.5} parent=43 // pred_check_branch
        %3460 = sbr.rel (%p3458) target = $region48
      $region47: #{biggan_generator_block.5} parent=43 // pred_region
        _
      $region48: #{biggan_generator_block.5} parent=43 // pred_fallthru
        _
    $region44: #{biggan_generator_block.5} parent=5 // pred_fallthru
      _
    %p3461 = scmp.le.s32.totalorder 2, %s12
    // Predicated region
    $region49: #{biggan_generator_block.5} parent=5 // pred_check
      %p3462 = pneg %p3461
    $region50: #{biggan_generator_block.5} parent=5 // pred_check_branch
      %3464 = sbr.rel (%p3462) target = $region52
    $region51: #{biggan_generator_block.5} parent=5 // pred_region
      %s3465 = ssub.s32 %s12, 2
      // Predicated region
      $region53: #{biggan_generator_block.5} parent=51 // pred_check
        %p3466 = pneg %p187
      $region54: #{biggan_generator_block.5} parent=51 // pred_check_branch
        %3468 = sbr.rel (%p3466) target = $region56
      $region55: #{biggan_generator_block.5} parent=51 // pred_region
        %p3469 = scmp.lt.s32.totalorder %s18, 1
        %s3470 = scalar_select %p3469, %s18, 1
        %s3471 = smul.addr %s3470, 32
        %s3472 = smul.addr %s3471, 8
        %s3473 = scalar_lea.vmem %s6, %s3472
      $region56: #{biggan_generator_block.5} parent=51 // pred_fallthru
        _
    $region52: #{biggan_generator_block.5} parent=5 // pred_fallthru
      _
  $region6: #{biggan_generator_block.5} parent=0 // loop_footer
    %s16 = sadd.s32 1, %s12
  $region7: #{biggan_generator_block.5} parent=0 // loop_footer_branch
    %11 = sbr.rel target = $region3
  $region8: #{biggan_generator_block.5} parent=0 // loop_exit
    _

</llo_original>
